<compile_context>
chip_gen: v6e
topology: v6e:2x2x1
jax: 0.10.0
libtpu: 0.0.40
codegen_flags: <defaults>
</compile_context>

<pallas_src>
import functools

import numpy as np
import jax
import jax.numpy as jnp
from jax.experimental import pallas as pl
from jax.experimental.pallas import tpu as pltpu

NEURONS = 32          # hidden width H
BATCH = 8             # per-instance batch (rows normalized together by BatchNorm1d)
IN_DIM = 6
N_BN_LAYERS = 10      # ten (Linear -> BatchNorm1d -> ReLU) blocks
EPS = 1e-5
MAX_G_BLOCK = 512     # max instances stacked per grid step (review: 256-512; was 16)


def _pick_lane_pack():
    """Instances packed side-by-side along the lane axis.
    4 -> 128-wide operands (fills the v5e 128x128 MXU and all 128 lanes);
    8 -> 256-wide operands (matches the v6e/v7x 2x256 MXU)."""
    try:
        kind = jax.devices()[0].device_kind.lower()
    except Exception:
        return 4
    if "v6" in kind or "v7" in kind or "7x" in kind:
        return 8
    return 4


def _block_diag(w, p):
    """(k, n) -> (p*k, p*n): the same w repeated on the diagonal, zeros elsewhere."""
    k, n = w.shape
    eye = jnp.eye(p, dtype=w.dtype)
    return (eye[:, None, :, None] * w[None, :, None, :]).reshape(p * k, p * n)


def _largest_divisor_leq(n, cap):
    cap = max(1, min(n, cap))
    for d in range(cap, 0, -1):
        if n % d == 0:
            return d
    return 1


def mlp_kernel(x_ref, w_in_ref, w_hid_ref, gamma_ref, beta_ref, w_out_ref,
               out_ref, *, groups, lane_pack):
    B = BATCH
    wdim = lane_pack * NEURONS       # packed (lane-dense) hidden width: 128 or 256
    rows = groups * B

    h = x_ref[...]                                             # (rows, P*6)
    for i in range(N_BN_LAYERS):                               # unrolled at trace time
        # Linear on the MXU with a block-diagonal packed weight. The nn.Linear bias is
        # omitted: a per-feature constant is erased by training-mode BatchNorm.
        w = w_in_ref[...] if i == 0 else w_hid_ref[i - 1]      # static parameter reads
        h = jnp.dot(h, w, preferred_element_type=jnp.float32)  # (rows, wdim)

        # Training-mode BatchNorm1d, per instance: each instance owns its own 8-sublane
        # batch and its own lane group, so two sublane-sum reduces give per-instance
        # statistics; 1/B and 1/B^2 are folded into the fused scale/shift.
        h3 = h.reshape(groups, B, wdim)                        # free, tile-aligned split
        s1 = jnp.sum(h3, axis=1, keepdims=True)                # (G, 1, wdim)  sum h
        s2 = jnp.sum(h3 * h3, axis=1, keepdims=True)           # (G, 1, wdim)  sum h^2
        var_b2 = jnp.maximum(B * s2 - s1 * s1, 0.0)            # B^2 * var, clamped >= 0
        inv = jax.lax.rsqrt(var_b2 + (B * B) * EPS)            # EUP rsqrt
        gi = gamma_ref[i:i + 1, :] * inv                       # (G, 1, wdim)
        scale = float(B) * gi
        shift = beta_ref[i:i + 1, :] - s1 * gi
        h = jnp.maximum(h3 * scale + shift, 0.0).reshape(rows, wdim)   # BN + ReLU

    # Final Linear(H, 1), lane-dense: out[p, r] = sum_f w_out[f] * h[r, p*H + f]
    out = jax.lax.dot_general(
        w_out_ref[...], h,                                     # (P, wdim) x (rows, wdim)
        dimension_numbers=(((1,), (1,)), ((), ())),
        preferred_element_type=jnp.float32)                    # (P, rows)
    out_ref[0] = out


@functools.partial(jax.jit, static_argnames=("lane_pack",))
def mlp_forward(x, params, lane_pack=4):
    """x: (G, BATCH, 6) -- G independent instances; each instance is one (BATCH, 6)
    input to the PyTorch module (BN statistics over that instance's own batch)."""
    w_in, _b_in, w_hid, _b_hid, gamma, beta, w_out, b_out = params
    G, B, D = x.shape
    assert B == BATCH and D == IN_DIM

    P = lane_pack
    while P > 1 and G % P:           # fall back if G does not divide the pack factor
        P //= 2
    NG = G // P                      # packed groups (P instances side by side in lanes)
    wdim = P * NEURONS               # packed hidden width (128 on v5e, 256 on v6e/v7x)

    # Groups per grid step: big blocks amortize per-step pipeline overhead, but keep
    # >= 2 grid steps when possible so the parallel axis shards across v7x's 2 TCs.
    gpb = _largest_divisor_leq(NG, min(max(1, MAX_G_BLOCK // P), max(1, NG // 2)))
    num_blocks = NG // gpb
    rows = gpb * B                   # sublane rows per grid step

    # ---- one-time repacking (tiny arrays, done by XLA in the wrapper) ----
    # Lane-pack P consecutive instances: xp[q, r, p*6 + d] = x[q*P + p, r, d]
    xp = x.reshape(NG, P, B, IN_DIM).transpose(0, 2, 1, 3).reshape(NG * B, P * IN_DIM)
    w_in_p = _block_diag(w_in, P)                              # (P*6, wdim)
    w_hid_p = jax.vmap(lambda w: _block_diag(w, P))(w_hid)     # (9, wdim, wdim)
    gamma_p = jnp.tile(gamma, (1, P))                          # (10, wdim)
    beta_p = jnp.tile(beta, (1, P))                            # (10, wdim)
    w_out_p = _block_diag(w_out.T, P)                          # (P, wdim)

    grid_spec = pltpu.PrefetchScalarGridSpec(
        num_scalar_prefetch=0,
        grid=(num_blocks,),
        in_specs=[
            # Only activations stream per grid step ...
            pl.BlockSpec((rows, P * IN_DIM), lambda g: (g, 0)),
            # ... weights / BN params stay VMEM-resident (constant block index).
            pl.BlockSpec((P * IN_DIM, wdim), lambda g: (0, 0)),
            pl.BlockSpec((N_BN_LAYERS - 1, wdim, wdim), lambda g: (0, 0, 0)),
            pl.BlockSpec((N_BN_LAYERS, wdim), lambda g: (0, 0)),
            pl.BlockSpec((N_BN_LAYERS, wdim), lambda g: (0, 0)),
            pl.BlockSpec((P, wdim), lambda g: (0, 0)),
        ],
        out_specs=pl.BlockSpec((1, P, rows), lambda g: (g, 0, 0)),
    )

    out = pl.pallas_call(
        functools.partial(mlp_kernel, groups=gpb, lane_pack=P),
        out_shape=jax.ShapeDtypeStruct((num_blocks, P, rows), jnp.float32),
        grid_spec=grid_spec,
        # Default scoped-VMEM limits are ample for <= 512 instances/step at this layout;
        # bump vmem_limit_bytes here only if MAX_G_BLOCK is pushed well past 512 on v5e.
        compiler_params=pltpu.CompilerParams(
            dimension_semantics=("parallel",)),    # megacore sharding on v7x
    )(xp, w_in_p, w_hid_p, gamma_p, beta_p, w_out_p)

    # Unpack: out[g, p, gi*B + r] -> instance (g*gpb + gi)*P + p, batch row r.
    out = out.reshape(num_blocks, P, gpb, B).transpose(0, 2, 1, 3).reshape(G, B, 1)
    return out + b_out[0, 0]         # final Linear bias folded in the wrapper


def init_params(key, neurons=NEURONS):
    def linear(k, fan_in, fan_out):
        kw, kb = jax.random.split(k)
        bound = 1.0 / np.sqrt(fan_in)
        w = jax.random.uniform(kw, (fan_in, fan_out), jnp.float32, -bound, bound)
        b = jax.random.uniform(kb, (1, fan_out), jnp.float32, -bound, bound)
        return w, b

    keys = jax.random.split(key, 13)
    w_in, b_in = linear(keys[0], IN_DIM, neurons)                    # Linear(6, H)
    hid = [linear(keys[i], neurons, neurons) for i in range(1, 10)]  # 9 x Linear(H, H)
    w_hid = jnp.stack([w for w, _ in hid])                           # (9, H, H)
    b_hid = jnp.concatenate([b for _, b in hid], axis=0)             # (9, H)
    # BatchNorm affine (PyTorch default is gamma=1, beta=0; perturb so the fused
    # scale/shift path is genuinely exercised by the check).
    gamma = 1.0 + 0.1 * jax.random.normal(keys[10], (N_BN_LAYERS, neurons), jnp.float32)
    beta = 0.1 * jax.random.normal(keys[11], (N_BN_LAYERS, neurons), jnp.float32)
    w_out, b_out = linear(keys[12], neurons, 1)                      # Linear(H, 1)
    return (w_in, b_in, w_hid, b_hid, gamma, beta, w_out, b_out)


@jax.jit
def mlp_reference(x, params):
    """Per-instance reference identical to the PyTorch module in train mode (keeps the
    pre-BN linear biases; they are mathematical no-ops under training-mode BN). Uses the
    same default TPU matmul precision as the kernel for an apples-to-apples comparison."""
    w_in, b_in, w_hid, b_hid, gamma, beta, w_out, b_out = params

    def one_instance(xi):
        h = xi
        for i in range(N_BN_LAYERS):
            if i == 0:
                w, b = w_in, b_in
            else:
                w, b = w_hid[i - 1], b_hid[i - 1][None, :]
            h = jnp.dot(h, w) + b
            mean = jnp.mean(h, axis=0, keepdims=True)
            var = jnp.mean((h - mean) ** 2, axis=0, keepdims=True)
            h = (h - mean) / jnp.sqrt(var + EPS) * gamma[i][None, :] + beta[i][None, :]
            h = jnp.maximum(h, 0.0)
        return jnp.dot(h, w_out) + b_out

    return jax.vmap(one_instance)(x)


if __name__ == "__main__":
    key = jax.random.PRNGKey(0)
    kx, kp = jax.random.split(key)

    G = 128                                         # instances; small, but >= 2 grid steps
    x = jax.random.normal(kx, (G, BATCH, IN_DIM), jnp.float32)
    params = init_params(kp)
    lane_pack = _pick_lane_pack()

    out = jax.block_until_ready(mlp_forward(x, params, lane_pack=lane_pack))
    assert out.shape == (G, BATCH, 1)

    ref = mlp_reference(x, params)
    # Both paths use the TPU default matmul precision (bf16-rounded MXU operands);
    # the tolerance covers rounding drift compounded across the 10-layer chain
    # (typical agreement is ~1e-3 or better).
    np.testing.assert_allclose(np.asarray(out), np.asarray(ref), rtol=2e-2, atol=2e-2)
    print("KERNEL_OK")
</pallas_src>

<mosaic_0001>
module attributes {stable_mosaic.version = 11 : i64} {
  func.func @mlp_kernel(%arg0: i32, %arg1: memref<128x24xf32, #tpu.memory_space<vmem>>, %arg2: memref<24x128xf32, #tpu.memory_space<vmem>>, %arg3: memref<9x128x128xf32, #tpu.memory_space<vmem>>, %arg4: memref<10x128xf32, #tpu.memory_space<vmem>>, %arg5: memref<10x128xf32, #tpu.memory_space<vmem>>, %arg6: memref<4x128xf32, #tpu.memory_space<vmem>>, %arg7: memref<1x4x128xf32, #tpu.memory_space<vmem>>) attributes {dimension_semantics = [#tpu.dimension_semantics<parallel>], iteration_bounds = array<i64: 2>, scalar_prefetch = 0 : i64, scratch_operands = 0 : i64, tpu.core_type = #tpu.core_type<tc>, window_params = [{transform_indices = @transform_0, window_bounds = array<i64: 128, 24>}, {pipeline_mode = #tpu.pipeline_mode<synchronous>, transform_indices = @transform_1, window_bounds = array<i64: 24, 128>}, {pipeline_mode = #tpu.pipeline_mode<synchronous>, transform_indices = @transform_2, window_bounds = array<i64: 9, 128, 128>}, {pipeline_mode = #tpu.pipeline_mode<synchronous>, transform_indices = @transform_3, window_bounds = array<i64: 10, 128>}, {pipeline_mode = #tpu.pipeline_mode<synchronous>, transform_indices = @transform_4, window_bounds = array<i64: 10, 128>}, {pipeline_mode = #tpu.pipeline_mode<synchronous>, transform_indices = @transform_5, window_bounds = array<i64: 4, 128>}, {transform_indices = @transform_6, window_bounds = array<i64: 1, 4, 128>}]} {
    %c0 = arith.constant 0 : index
    %c0_0 = arith.constant 0 : index
    %0 = vector.load %arg1[%c0, %c0_0] : memref<128x24xf32, #tpu.memory_space<vmem>>, vector<128x24xf32>
    %c0_1 = arith.constant 0 : index
    %c0_2 = arith.constant 0 : index
    %1 = vector.load %arg2[%c0_1, %c0_2] : memref<24x128xf32, #tpu.memory_space<vmem>>, vector<24x128xf32>
    %cst = arith.constant dense<0.000000e+00> : vector<128x128xf32>
    %2 = tpu.matmul %0, %1, %cst {dimension_numbers = #tpu.dot_dimension_numbers<[1], [0], [0], [1], [0, 0, 1, 1], [], []>} : vector<128x24xf32>, vector<24x128xf32>, vector<128x128xf32> -> vector<128x128xf32>
    %3 = vector.shape_cast %2 : vector<128x128xf32> to vector<16x8x128xf32>
    %cst_3 = arith.constant dense<0.000000e+00> : vector<16x128xf32>
    %4 = vector.multi_reduction <add>, %3, %cst_3 [1] : vector<16x8x128xf32> to vector<16x128xf32>
    %5 = vector.shape_cast %4 : vector<16x128xf32> to vector<16x1x128xf32>
    %6 = arith.mulf %3, %3 : vector<16x8x128xf32>
    %cst_4 = arith.constant dense<0.000000e+00> : vector<16x128xf32>
    %7 = vector.multi_reduction <add>, %6, %cst_4 [1] : vector<16x8x128xf32> to vector<16x128xf32>
    %8 = vector.shape_cast %7 : vector<16x128xf32> to vector<16x1x128xf32>
    %cst_5 = arith.constant 8.000000e+00 : f32
    %9 = vector.broadcast %cst_5 : f32 to vector<16x1x128xf32>
    %10 = arith.mulf %9, %8 : vector<16x1x128xf32>
    %11 = arith.mulf %5, %5 : vector<16x1x128xf32>
    %12 = arith.subf %10, %11 : vector<16x1x128xf32>
    %cst_6 = arith.constant 0.000000e+00 : f32
    %13 = vector.broadcast %cst_6 : f32 to vector<16x1x128xf32>
    %14 = arith.maximumf %12, %13 : vector<16x1x128xf32>
    %cst_7 = arith.constant 6.400000e-04 : f32
    %15 = vector.broadcast %cst_7 : f32 to vector<16x1x128xf32>
    %16 = arith.addf %14, %15 : vector<16x1x128xf32>
    %17 = math.rsqrt %16 : vector<16x1x128xf32>
    %c0_8 = arith.constant 0 : index
    %c0_9 = arith.constant 0 : index
    %18 = vector.load %arg4[%c0_8, %c0_9] : memref<10x128xf32, #tpu.memory_space<vmem>>, vector<1x128xf32>
    %19 = vector.shape_cast %18 : vector<1x128xf32> to vector<1x1x128xf32>
    %20 = vector.broadcast %19 : vector<1x1x128xf32> to vector<16x1x128xf32>
    %21 = arith.mulf %20, %17 : vector<16x1x128xf32>
    %cst_10 = arith.constant 8.000000e+00 : f32
    %22 = vector.broadcast %cst_10 : f32 to vector<16x1x128xf32>
    %23 = arith.mulf %22, %21 : vector<16x1x128xf32>
    %c0_11 = arith.constant 0 : index
    %c0_12 = arith.constant 0 : index
    %24 = vector.load %arg5[%c0_11, %c0_12] : memref<10x128xf32, #tpu.memory_space<vmem>>, vector<1x128xf32>
    %25 = arith.mulf %5, %21 : vector<16x1x128xf32>
    %26 = vector.shape_cast %24 : vector<1x128xf32> to vector<1x1x128xf32>
    %27 = vector.broadcast %26 : vector<1x1x128xf32> to vector<16x1x128xf32>
    %28 = arith.subf %27, %25 : vector<16x1x128xf32>
    %29 = vector.broadcast %23 : vector<16x1x128xf32> to vector<16x8x128xf32>
    %30 = arith.mulf %3, %29 : vector<16x8x128xf32>
    %31 = vector.broadcast %28 : vector<16x1x128xf32> to vector<16x8x128xf32>
    %32 = arith.addf %30, %31 : vector<16x8x128xf32>
    %cst_13 = arith.constant 0.000000e+00 : f32
    %33 = vector.broadcast %cst_13 : f32 to vector<16x8x128xf32>
    %34 = arith.maximumf %32, %33 : vector<16x8x128xf32>
    %35 = vector.shape_cast %34 : vector<16x8x128xf32> to vector<128x128xf32>
    %c0_14 = arith.constant 0 : index
    %c0_15 = arith.constant 0 : index
    %c0_16 = arith.constant 0 : index
    %36 = vector.load %arg3[%c0_14, %c0_15, %c0_16] : memref<9x128x128xf32, #tpu.memory_space<vmem>>, vector<1x128x128xf32>
    %37 = vector.shape_cast %36 : vector<1x128x128xf32> to vector<128x128xf32>
    %cst_17 = arith.constant dense<0.000000e+00> : vector<128x128xf32>
    %38 = tpu.matmul %35, %37, %cst_17 {dimension_numbers = #tpu.dot_dimension_numbers<[1], [0], [0], [1], [0, 0, 1, 1], [], []>} : vector<128x128xf32>, vector<128x128xf32>, vector<128x128xf32> -> vector<128x128xf32>
    %39 = vector.shape_cast %38 : vector<128x128xf32> to vector<16x8x128xf32>
    %cst_18 = arith.constant dense<0.000000e+00> : vector<16x128xf32>
    %40 = vector.multi_reduction <add>, %39, %cst_18 [1] : vector<16x8x128xf32> to vector<16x128xf32>
    %41 = vector.shape_cast %40 : vector<16x128xf32> to vector<16x1x128xf32>
    %42 = arith.mulf %39, %39 : vector<16x8x128xf32>
    %cst_19 = arith.constant dense<0.000000e+00> : vector<16x128xf32>
    %43 = vector.multi_reduction <add>, %42, %cst_19 [1] : vector<16x8x128xf32> to vector<16x128xf32>
    %44 = vector.shape_cast %43 : vector<16x128xf32> to vector<16x1x128xf32>
    %cst_20 = arith.constant 8.000000e+00 : f32
    %45 = vector.broadcast %cst_20 : f32 to vector<16x1x128xf32>
    %46 = arith.mulf %45, %44 : vector<16x1x128xf32>
    %47 = arith.mulf %41, %41 : vector<16x1x128xf32>
    %48 = arith.subf %46, %47 : vector<16x1x128xf32>
    %cst_21 = arith.constant 0.000000e+00 : f32
    %49 = vector.broadcast %cst_21 : f32 to vector<16x1x128xf32>
    %50 = arith.maximumf %48, %49 : vector<16x1x128xf32>
    %cst_22 = arith.constant 6.400000e-04 : f32
    %51 = vector.broadcast %cst_22 : f32 to vector<16x1x128xf32>
    %52 = arith.addf %50, %51 : vector<16x1x128xf32>
    %53 = math.rsqrt %52 : vector<16x1x128xf32>
    %c1 = arith.constant 1 : index
    %c0_23 = arith.constant 0 : index
    %54 = vector.load %arg4[%c1, %c0_23] : memref<10x128xf32, #tpu.memory_space<vmem>>, vector<1x128xf32>
    %55 = vector.shape_cast %54 : vector<1x128xf32> to vector<1x1x128xf32>
    %56 = vector.broadcast %55 : vector<1x1x128xf32> to vector<16x1x128xf32>
    %57 = arith.mulf %56, %53 : vector<16x1x128xf32>
    %cst_24 = arith.constant 8.000000e+00 : f32
    %58 = vector.broadcast %cst_24 : f32 to vector<16x1x128xf32>
    %59 = arith.mulf %58, %57 : vector<16x1x128xf32>
    %c1_25 = arith.constant 1 : index
    %c0_26 = arith.constant 0 : index
    %60 = vector.load %arg5[%c1_25, %c0_26] : memref<10x128xf32, #tpu.memory_space<vmem>>, vector<1x128xf32>
    %61 = arith.mulf %41, %57 : vector<16x1x128xf32>
    %62 = vector.shape_cast %60 : vector<1x128xf32> to vector<1x1x128xf32>
    %63 = vector.broadcast %62 : vector<1x1x128xf32> to vector<16x1x128xf32>
    %64 = arith.subf %63, %61 : vector<16x1x128xf32>
    %65 = vector.broadcast %59 : vector<16x1x128xf32> to vector<16x8x128xf32>
    %66 = arith.mulf %39, %65 : vector<16x8x128xf32>
    %67 = vector.broadcast %64 : vector<16x1x128xf32> to vector<16x8x128xf32>
    %68 = arith.addf %66, %67 : vector<16x8x128xf32>
    %cst_27 = arith.constant 0.000000e+00 : f32
    %69 = vector.broadcast %cst_27 : f32 to vector<16x8x128xf32>
    %70 = arith.maximumf %68, %69 : vector<16x8x128xf32>
    %71 = vector.shape_cast %70 : vector<16x8x128xf32> to vector<128x128xf32>
    %c1_28 = arith.constant 1 : index
    %c0_29 = arith.constant 0 : index
    %c0_30 = arith.constant 0 : index
    %72 = vector.load %arg3[%c1_28, %c0_29, %c0_30] : memref<9x128x128xf32, #tpu.memory_space<vmem>>, vector<1x128x128xf32>
    %73 = vector.shape_cast %72 : vector<1x128x128xf32> to vector<128x128xf32>
    %cst_31 = arith.constant dense<0.000000e+00> : vector<128x128xf32>
    %74 = tpu.matmul %71, %73, %cst_31 {dimension_numbers = #tpu.dot_dimension_numbers<[1], [0], [0], [1], [0, 0, 1, 1], [], []>} : vector<128x128xf32>, vector<128x128xf32>, vector<128x128xf32> -> vector<128x128xf32>
    %75 = vector.shape_cast %74 : vector<128x128xf32> to vector<16x8x128xf32>
    %cst_32 = arith.constant dense<0.000000e+00> : vector<16x128xf32>
    %76 = vector.multi_reduction <add>, %75, %cst_32 [1] : vector<16x8x128xf32> to vector<16x128xf32>
    %77 = vector.shape_cast %76 : vector<16x128xf32> to vector<16x1x128xf32>
    %78 = arith.mulf %75, %75 : vector<16x8x128xf32>
    %cst_33 = arith.constant dense<0.000000e+00> : vector<16x128xf32>
    %79 = vector.multi_reduction <add>, %78, %cst_33 [1] : vector<16x8x128xf32> to vector<16x128xf32>
    %80 = vector.shape_cast %79 : vector<16x128xf32> to vector<16x1x128xf32>
    %cst_34 = arith.constant 8.000000e+00 : f32
    %81 = vector.broadcast %cst_34 : f32 to vector<16x1x128xf32>
    %82 = arith.mulf %81, %80 : vector<16x1x128xf32>
    %83 = arith.mulf %77, %77 : vector<16x1x128xf32>
    %84 = arith.subf %82, %83 : vector<16x1x128xf32>
    %cst_35 = arith.constant 0.000000e+00 : f32
    %85 = vector.broadcast %cst_35 : f32 to vector<16x1x128xf32>
    %86 = arith.maximumf %84, %85 : vector<16x1x128xf32>
    %cst_36 = arith.constant 6.400000e-04 : f32
    %87 = vector.broadcast %cst_36 : f32 to vector<16x1x128xf32>
    %88 = arith.addf %86, %87 : vector<16x1x128xf32>
    %89 = math.rsqrt %88 : vector<16x1x128xf32>
    %c2 = arith.constant 2 : index
    %c0_37 = arith.constant 0 : index
    %90 = vector.load %arg4[%c2, %c0_37] : memref<10x128xf32, #tpu.memory_space<vmem>>, vector<1x128xf32>
    %91 = vector.shape_cast %90 : vector<1x128xf32> to vector<1x1x128xf32>
    %92 = vector.broadcast %91 : vector<1x1x128xf32> to vector<16x1x128xf32>
    %93 = arith.mulf %92, %89 : vector<16x1x128xf32>
    %cst_38 = arith.constant 8.000000e+00 : f32
    %94 = vector.broadcast %cst_38 : f32 to vector<16x1x128xf32>
    %95 = arith.mulf %94, %93 : vector<16x1x128xf32>
    %c2_39 = arith.constant 2 : index
    %c0_40 = arith.constant 0 : index
    %96 = vector.load %arg5[%c2_39, %c0_40] : memref<10x128xf32, #tpu.memory_space<vmem>>, vector<1x128xf32>
    %97 = arith.mulf %77, %93 : vector<16x1x128xf32>
    %98 = vector.shape_cast %96 : vector<1x128xf32> to vector<1x1x128xf32>
    %99 = vector.broadcast %98 : vector<1x1x128xf32> to vector<16x1x128xf32>
    %100 = arith.subf %99, %97 : vector<16x1x128xf32>
    %101 = vector.broadcast %95 : vector<16x1x128xf32> to vector<16x8x128xf32>
    %102 = arith.mulf %75, %101 : vector<16x8x128xf32>
    %103 = vector.broadcast %100 : vector<16x1x128xf32> to vector<16x8x128xf32>
    %104 = arith.addf %102, %103 : vector<16x8x128xf32>
    %cst_41 = arith.constant 0.000000e+00 : f32
    %105 = vector.broadcast %cst_41 : f32 to vector<16x8x128xf32>
    %106 = arith.maximumf %104, %105 : vector<16x8x128xf32>
    %107 = vector.shape_cast %106 : vector<16x8x128xf32> to vector<128x128xf32>
    %c2_42 = arith.constant 2 : index
    %c0_43 = arith.constant 0 : index
    %c0_44 = arith.constant 0 : index
    %108 = vector.load %arg3[%c2_42, %c0_43, %c0_44] : memref<9x128x128xf32, #tpu.memory_space<vmem>>, vector<1x128x128xf32>
    %109 = vector.shape_cast %108 : vector<1x128x128xf32> to vector<128x128xf32>
    %cst_45 = arith.constant dense<0.000000e+00> : vector<128x128xf32>
    %110 = tpu.matmul %107, %109, %cst_45 {dimension_numbers = #tpu.dot_dimension_numbers<[1], [0], [0], [1], [0, 0, 1, 1], [], []>} : vector<128x128xf32>, vector<128x128xf32>, vector<128x128xf32> -> vector<128x128xf32>
    %111 = vector.shape_cast %110 : vector<128x128xf32> to vector<16x8x128xf32>
    %cst_46 = arith.constant dense<0.000000e+00> : vector<16x128xf32>
    %112 = vector.multi_reduction <add>, %111, %cst_46 [1] : vector<16x8x128xf32> to vector<16x128xf32>
    %113 = vector.shape_cast %112 : vector<16x128xf32> to vector<16x1x128xf32>
    %114 = arith.mulf %111, %111 : vector<16x8x128xf32>
    %cst_47 = arith.constant dense<0.000000e+00> : vector<16x128xf32>
    %115 = vector.multi_reduction <add>, %114, %cst_47 [1] : vector<16x8x128xf32> to vector<16x128xf32>
    %116 = vector.shape_cast %115 : vector<16x128xf32> to vector<16x1x128xf32>
    %cst_48 = arith.constant 8.000000e+00 : f32
    %117 = vector.broadcast %cst_48 : f32 to vector<16x1x128xf32>
    %118 = arith.mulf %117, %116 : vector<16x1x128xf32>
    %119 = arith.mulf %113, %113 : vector<16x1x128xf32>
    %120 = arith.subf %118, %119 : vector<16x1x128xf32>
    %cst_49 = arith.constant 0.000000e+00 : f32
    %121 = vector.broadcast %cst_49 : f32 to vector<16x1x128xf32>
    %122 = arith.maximumf %120, %121 : vector<16x1x128xf32>
    %cst_50 = arith.constant 6.400000e-04 : f32
    %123 = vector.broadcast %cst_50 : f32 to vector<16x1x128xf32>
    %124 = arith.addf %122, %123 : vector<16x1x128xf32>
    %125 = math.rsqrt %124 : vector<16x1x128xf32>
    %c3 = arith.constant 3 : index
    %c0_51 = arith.constant 0 : index
    %126 = vector.load %arg4[%c3, %c0_51] : memref<10x128xf32, #tpu.memory_space<vmem>>, vector<1x128xf32>
    %127 = vector.shape_cast %126 : vector<1x128xf32> to vector<1x1x128xf32>
    %128 = vector.broadcast %127 : vector<1x1x128xf32> to vector<16x1x128xf32>
    %129 = arith.mulf %128, %125 : vector<16x1x128xf32>
    %cst_52 = arith.constant 8.000000e+00 : f32
    %130 = vector.broadcast %cst_52 : f32 to vector<16x1x128xf32>
    %131 = arith.mulf %130, %129 : vector<16x1x128xf32>
    %c3_53 = arith.constant 3 : index
    %c0_54 = arith.constant 0 : index
    %132 = vector.load %arg5[%c3_53, %c0_54] : memref<10x128xf32, #tpu.memory_space<vmem>>, vector<1x128xf32>
    %133 = arith.mulf %113, %129 : vector<16x1x128xf32>
    %134 = vector.shape_cast %132 : vector<1x128xf32> to vector<1x1x128xf32>
    %135 = vector.broadcast %134 : vector<1x1x128xf32> to vector<16x1x128xf32>
    %136 = arith.subf %135, %133 : vector<16x1x128xf32>
    %137 = vector.broadcast %131 : vector<16x1x128xf32> to vector<16x8x128xf32>
    %138 = arith.mulf %111, %137 : vector<16x8x128xf32>
    %139 = vector.broadcast %136 : vector<16x1x128xf32> to vector<16x8x128xf32>
    %140 = arith.addf %138, %139 : vector<16x8x128xf32>
    %cst_55 = arith.constant 0.000000e+00 : f32
    %141 = vector.broadcast %cst_55 : f32 to vector<16x8x128xf32>
    %142 = arith.maximumf %140, %141 : vector<16x8x128xf32>
    %143 = vector.shape_cast %142 : vector<16x8x128xf32> to vector<128x128xf32>
    %c3_56 = arith.constant 3 : index
    %c0_57 = arith.constant 0 : index
    %c0_58 = arith.constant 0 : index
    %144 = vector.load %arg3[%c3_56, %c0_57, %c0_58] : memref<9x128x128xf32, #tpu.memory_space<vmem>>, vector<1x128x128xf32>
    %145 = vector.shape_cast %144 : vector<1x128x128xf32> to vector<128x128xf32>
    %cst_59 = arith.constant dense<0.000000e+00> : vector<128x128xf32>
    %146 = tpu.matmul %143, %145, %cst_59 {dimension_numbers = #tpu.dot_dimension_numbers<[1], [0], [0], [1], [0, 0, 1, 1], [], []>} : vector<128x128xf32>, vector<128x128xf32>, vector<128x128xf32> -> vector<128x128xf32>
    %147 = vector.shape_cast %146 : vector<128x128xf32> to vector<16x8x128xf32>
    %cst_60 = arith.constant dense<0.000000e+00> : vector<16x128xf32>
    %148 = vector.multi_reduction <add>, %147, %cst_60 [1] : vector<16x8x128xf32> to vector<16x128xf32>
    %149 = vector.shape_cast %148 : vector<16x128xf32> to vector<16x1x128xf32>
    %150 = arith.mulf %147, %147 : vector<16x8x128xf32>
    %cst_61 = arith.constant dense<0.000000e+00> : vector<16x128xf32>
    %151 = vector.multi_reduction <add>, %150, %cst_61 [1] : vector<16x8x128xf32> to vector<16x128xf32>
    %152 = vector.shape_cast %151 : vector<16x128xf32> to vector<16x1x128xf32>
    %cst_62 = arith.constant 8.000000e+00 : f32
    %153 = vector.broadcast %cst_62 : f32 to vector<16x1x128xf32>
    %154 = arith.mulf %153, %152 : vector<16x1x128xf32>
    %155 = arith.mulf %149, %149 : vector<16x1x128xf32>
    %156 = arith.subf %154, %155 : vector<16x1x128xf32>
    %cst_63 = arith.constant 0.000000e+00 : f32
    %157 = vector.broadcast %cst_63 : f32 to vector<16x1x128xf32>
    %158 = arith.maximumf %156, %157 : vector<16x1x128xf32>
    %cst_64 = arith.constant 6.400000e-04 : f32
    %159 = vector.broadcast %cst_64 : f32 to vector<16x1x128xf32>
    %160 = arith.addf %158, %159 : vector<16x1x128xf32>
    %161 = math.rsqrt %160 : vector<16x1x128xf32>
    %c4 = arith.constant 4 : index
    %c0_65 = arith.constant 0 : index
    %162 = vector.load %arg4[%c4, %c0_65] : memref<10x128xf32, #tpu.memory_space<vmem>>, vector<1x128xf32>
    %163 = vector.shape_cast %162 : vector<1x128xf32> to vector<1x1x128xf32>
    %164 = vector.broadcast %163 : vector<1x1x128xf32> to vector<16x1x128xf32>
    %165 = arith.mulf %164, %161 : vector<16x1x128xf32>
    %cst_66 = arith.constant 8.000000e+00 : f32
    %166 = vector.broadcast %cst_66 : f32 to vector<16x1x128xf32>
    %167 = arith.mulf %166, %165 : vector<16x1x128xf32>
    %c4_67 = arith.constant 4 : index
    %c0_68 = arith.constant 0 : index
    %168 = vector.load %arg5[%c4_67, %c0_68] : memref<10x128xf32, #tpu.memory_space<vmem>>, vector<1x128xf32>
    %169 = arith.mulf %149, %165 : vector<16x1x128xf32>
    %170 = vector.shape_cast %168 : vector<1x128xf32> to vector<1x1x128xf32>
    %171 = vector.broadcast %170 : vector<1x1x128xf32> to vector<16x1x128xf32>
    %172 = arith.subf %171, %169 : vector<16x1x128xf32>
    %173 = vector.broadcast %167 : vector<16x1x128xf32> to vector<16x8x128xf32>
    %174 = arith.mulf %147, %173 : vector<16x8x128xf32>
    %175 = vector.broadcast %172 : vector<16x1x128xf32> to vector<16x8x128xf32>
    %176 = arith.addf %174, %175 : vector<16x8x128xf32>
    %cst_69 = arith.constant 0.000000e+00 : f32
    %177 = vector.broadcast %cst_69 : f32 to vector<16x8x128xf32>
    %178 = arith.maximumf %176, %177 : vector<16x8x128xf32>
    %179 = vector.shape_cast %178 : vector<16x8x128xf32> to vector<128x128xf32>
    %c4_70 = arith.constant 4 : index
    %c0_71 = arith.constant 0 : index
    %c0_72 = arith.constant 0 : index
    %180 = vector.load %arg3[%c4_70, %c0_71, %c0_72] : memref<9x128x128xf32, #tpu.memory_space<vmem>>, vector<1x128x128xf32>
    %181 = vector.shape_cast %180 : vector<1x128x128xf32> to vector<128x128xf32>
    %cst_73 = arith.constant dense<0.000000e+00> : vector<128x128xf32>
    %182 = tpu.matmul %179, %181, %cst_73 {dimension_numbers = #tpu.dot_dimension_numbers<[1], [0], [0], [1], [0, 0, 1, 1], [], []>} : vector<128x128xf32>, vector<128x128xf32>, vector<128x128xf32> -> vector<128x128xf32>
    %183 = vector.shape_cast %182 : vector<128x128xf32> to vector<16x8x128xf32>
    %cst_74 = arith.constant dense<0.000000e+00> : vector<16x128xf32>
    %184 = vector.multi_reduction <add>, %183, %cst_74 [1] : vector<16x8x128xf32> to vector<16x128xf32>
    %185 = vector.shape_cast %184 : vector<16x128xf32> to vector<16x1x128xf32>
    %186 = arith.mulf %183, %183 : vector<16x8x128xf32>
    %cst_75 = arith.constant dense<0.000000e+00> : vector<16x128xf32>
    %187 = vector.multi_reduction <add>, %186, %cst_75 [1] : vector<16x8x128xf32> to vector<16x128xf32>
    %188 = vector.shape_cast %187 : vector<16x128xf32> to vector<16x1x128xf32>
    %cst_76 = arith.constant 8.000000e+00 : f32
    %189 = vector.broadcast %cst_76 : f32 to vector<16x1x128xf32>
    %190 = arith.mulf %189, %188 : vector<16x1x128xf32>
    %191 = arith.mulf %185, %185 : vector<16x1x128xf32>
    %192 = arith.subf %190, %191 : vector<16x1x128xf32>
    %cst_77 = arith.constant 0.000000e+00 : f32
    %193 = vector.broadcast %cst_77 : f32 to vector<16x1x128xf32>
    %194 = arith.maximumf %192, %193 : vector<16x1x128xf32>
    %cst_78 = arith.constant 6.400000e-04 : f32
    %195 = vector.broadcast %cst_78 : f32 to vector<16x1x128xf32>
    %196 = arith.addf %194, %195 : vector<16x1x128xf32>
    %197 = math.rsqrt %196 : vector<16x1x128xf32>
    %c5 = arith.constant 5 : index
    %c0_79 = arith.constant 0 : index
    %198 = vector.load %arg4[%c5, %c0_79] : memref<10x128xf32, #tpu.memory_space<vmem>>, vector<1x128xf32>
    %199 = vector.shape_cast %198 : vector<1x128xf32> to vector<1x1x128xf32>
    %200 = vector.broadcast %199 : vector<1x1x128xf32> to vector<16x1x128xf32>
    %201 = arith.mulf %200, %197 : vector<16x1x128xf32>
    %cst_80 = arith.constant 8.000000e+00 : f32
    %202 = vector.broadcast %cst_80 : f32 to vector<16x1x128xf32>
    %203 = arith.mulf %202, %201 : vector<16x1x128xf32>
    %c5_81 = arith.constant 5 : index
    %c0_82 = arith.constant 0 : index
    %204 = vector.load %arg5[%c5_81, %c0_82] : memref<10x128xf32, #tpu.memory_space<vmem>>, vector<1x128xf32>
    %205 = arith.mulf %185, %201 : vector<16x1x128xf32>
    %206 = vector.shape_cast %204 : vector<1x128xf32> to vector<1x1x128xf32>
    %207 = vector.broadcast %206 : vector<1x1x128xf32> to vector<16x1x128xf32>
    %208 = arith.subf %207, %205 : vector<16x1x128xf32>
    %209 = vector.broadcast %203 : vector<16x1x128xf32> to vector<16x8x128xf32>
    %210 = arith.mulf %183, %209 : vector<16x8x128xf32>
    %211 = vector.broadcast %208 : vector<16x1x128xf32> to vector<16x8x128xf32>
    %212 = arith.addf %210, %211 : vector<16x8x128xf32>
    %cst_83 = arith.constant 0.000000e+00 : f32
    %213 = vector.broadcast %cst_83 : f32 to vector<16x8x128xf32>
    %214 = arith.maximumf %212, %213 : vector<16x8x128xf32>
    %215 = vector.shape_cast %214 : vector<16x8x128xf32> to vector<128x128xf32>
    %c5_84 = arith.constant 5 : index
    %c0_85 = arith.constant 0 : index
    %c0_86 = arith.constant 0 : index
    %216 = vector.load %arg3[%c5_84, %c0_85, %c0_86] : memref<9x128x128xf32, #tpu.memory_space<vmem>>, vector<1x128x128xf32>
    %217 = vector.shape_cast %216 : vector<1x128x128xf32> to vector<128x128xf32>
    %cst_87 = arith.constant dense<0.000000e+00> : vector<128x128xf32>
    %218 = tpu.matmul %215, %217, %cst_87 {dimension_numbers = #tpu.dot_dimension_numbers<[1], [0], [0], [1], [0, 0, 1, 1], [], []>} : vector<128x128xf32>, vector<128x128xf32>, vector<128x128xf32> -> vector<128x128xf32>
    %219 = vector.shape_cast %218 : vector<128x128xf32> to vector<16x8x128xf32>
    %cst_88 = arith.constant dense<0.000000e+00> : vector<16x128xf32>
    %220 = vector.multi_reduction <add>, %219, %cst_88 [1] : vector<16x8x128xf32> to vector<16x128xf32>
    %221 = vector.shape_cast %220 : vector<16x128xf32> to vector<16x1x128xf32>
    %222 = arith.mulf %219, %219 : vector<16x8x128xf32>
    %cst_89 = arith.constant dense<0.000000e+00> : vector<16x128xf32>
    %223 = vector.multi_reduction <add>, %222, %cst_89 [1] : vector<16x8x128xf32> to vector<16x128xf32>
    %224 = vector.shape_cast %223 : vector<16x128xf32> to vector<16x1x128xf32>
    %cst_90 = arith.constant 8.000000e+00 : f32
    %225 = vector.broadcast %cst_90 : f32 to vector<16x1x128xf32>
    %226 = arith.mulf %225, %224 : vector<16x1x128xf32>
    %227 = arith.mulf %221, %221 : vector<16x1x128xf32>
    %228 = arith.subf %226, %227 : vector<16x1x128xf32>
    %cst_91 = arith.constant 0.000000e+00 : f32
    %229 = vector.broadcast %cst_91 : f32 to vector<16x1x128xf32>
    %230 = arith.maximumf %228, %229 : vector<16x1x128xf32>
    %cst_92 = arith.constant 6.400000e-04 : f32
    %231 = vector.broadcast %cst_92 : f32 to vector<16x1x128xf32>
    %232 = arith.addf %230, %231 : vector<16x1x128xf32>
    %233 = math.rsqrt %232 : vector<16x1x128xf32>
    %c6 = arith.constant 6 : index
    %c0_93 = arith.constant 0 : index
    %234 = vector.load %arg4[%c6, %c0_93] : memref<10x128xf32, #tpu.memory_space<vmem>>, vector<1x128xf32>
    %235 = vector.shape_cast %234 : vector<1x128xf32> to vector<1x1x128xf32>
    %236 = vector.broadcast %235 : vector<1x1x128xf32> to vector<16x1x128xf32>
    %237 = arith.mulf %236, %233 : vector<16x1x128xf32>
    %cst_94 = arith.constant 8.000000e+00 : f32
    %238 = vector.broadcast %cst_94 : f32 to vector<16x1x128xf32>
    %239 = arith.mulf %238, %237 : vector<16x1x128xf32>
    %c6_95 = arith.constant 6 : index
    %c0_96 = arith.constant 0 : index
    %240 = vector.load %arg5[%c6_95, %c0_96] : memref<10x128xf32, #tpu.memory_space<vmem>>, vector<1x128xf32>
    %241 = arith.mulf %221, %237 : vector<16x1x128xf32>
    %242 = vector.shape_cast %240 : vector<1x128xf32> to vector<1x1x128xf32>
    %243 = vector.broadcast %242 : vector<1x1x128xf32> to vector<16x1x128xf32>
    %244 = arith.subf %243, %241 : vector<16x1x128xf32>
    %245 = vector.broadcast %239 : vector<16x1x128xf32> to vector<16x8x128xf32>
    %246 = arith.mulf %219, %245 : vector<16x8x128xf32>
    %247 = vector.broadcast %244 : vector<16x1x128xf32> to vector<16x8x128xf32>
    %248 = arith.addf %246, %247 : vector<16x8x128xf32>
    %cst_97 = arith.constant 0.000000e+00 : f32
    %249 = vector.broadcast %cst_97 : f32 to vector<16x8x128xf32>
    %250 = arith.maximumf %248, %249 : vector<16x8x128xf32>
    %251 = vector.shape_cast %250 : vector<16x8x128xf32> to vector<128x128xf32>
    %c6_98 = arith.constant 6 : index
    %c0_99 = arith.constant 0 : index
    %c0_100 = arith.constant 0 : index
    %252 = vector.load %arg3[%c6_98, %c0_99, %c0_100] : memref<9x128x128xf32, #tpu.memory_space<vmem>>, vector<1x128x128xf32>
    %253 = vector.shape_cast %252 : vector<1x128x128xf32> to vector<128x128xf32>
    %cst_101 = arith.constant dense<0.000000e+00> : vector<128x128xf32>
    %254 = tpu.matmul %251, %253, %cst_101 {dimension_numbers = #tpu.dot_dimension_numbers<[1], [0], [0], [1], [0, 0, 1, 1], [], []>} : vector<128x128xf32>, vector<128x128xf32>, vector<128x128xf32> -> vector<128x128xf32>
    %255 = vector.shape_cast %254 : vector<128x128xf32> to vector<16x8x128xf32>
    %cst_102 = arith.constant dense<0.000000e+00> : vector<16x128xf32>
    %256 = vector.multi_reduction <add>, %255, %cst_102 [1] : vector<16x8x128xf32> to vector<16x128xf32>
    %257 = vector.shape_cast %256 : vector<16x128xf32> to vector<16x1x128xf32>
    %258 = arith.mulf %255, %255 : vector<16x8x128xf32>
    %cst_103 = arith.constant dense<0.000000e+00> : vector<16x128xf32>
    %259 = vector.multi_reduction <add>, %258, %cst_103 [1] : vector<16x8x128xf32> to vector<16x128xf32>
    %260 = vector.shape_cast %259 : vector<16x128xf32> to vector<16x1x128xf32>
    %cst_104 = arith.constant 8.000000e+00 : f32
    %261 = vector.broadcast %cst_104 : f32 to vector<16x1x128xf32>
    %262 = arith.mulf %261, %260 : vector<16x1x128xf32>
    %263 = arith.mulf %257, %257 : vector<16x1x128xf32>
    %264 = arith.subf %262, %263 : vector<16x1x128xf32>
    %cst_105 = arith.constant 0.000000e+00 : f32
    %265 = vector.broadcast %cst_105 : f32 to vector<16x1x128xf32>
    %266 = arith.maximumf %264, %265 : vector<16x1x128xf32>
    %cst_106 = arith.constant 6.400000e-04 : f32
    %267 = vector.broadcast %cst_106 : f32 to vector<16x1x128xf32>
    %268 = arith.addf %266, %267 : vector<16x1x128xf32>
    %269 = math.rsqrt %268 : vector<16x1x128xf32>
    %c7 = arith.constant 7 : index
    %c0_107 = arith.constant 0 : index
    %270 = vector.load %arg4[%c7, %c0_107] : memref<10x128xf32, #tpu.memory_space<vmem>>, vector<1x128xf32>
    %271 = vector.shape_cast %270 : vector<1x128xf32> to vector<1x1x128xf32>
    %272 = vector.broadcast %271 : vector<1x1x128xf32> to vector<16x1x128xf32>
    %273 = arith.mulf %272, %269 : vector<16x1x128xf32>
    %cst_108 = arith.constant 8.000000e+00 : f32
    %274 = vector.broadcast %cst_108 : f32 to vector<16x1x128xf32>
    %275 = arith.mulf %274, %273 : vector<16x1x128xf32>
    %c7_109 = arith.constant 7 : index
    %c0_110 = arith.constant 0 : index
    %276 = vector.load %arg5[%c7_109, %c0_110] : memref<10x128xf32, #tpu.memory_space<vmem>>, vector<1x128xf32>
    %277 = arith.mulf %257, %273 : vector<16x1x128xf32>
    %278 = vector.shape_cast %276 : vector<1x128xf32> to vector<1x1x128xf32>
    %279 = vector.broadcast %278 : vector<1x1x128xf32> to vector<16x1x128xf32>
    %280 = arith.subf %279, %277 : vector<16x1x128xf32>
    %281 = vector.broadcast %275 : vector<16x1x128xf32> to vector<16x8x128xf32>
    %282 = arith.mulf %255, %281 : vector<16x8x128xf32>
    %283 = vector.broadcast %280 : vector<16x1x128xf32> to vector<16x8x128xf32>
    %284 = arith.addf %282, %283 : vector<16x8x128xf32>
    %cst_111 = arith.constant 0.000000e+00 : f32
    %285 = vector.broadcast %cst_111 : f32 to vector<16x8x128xf32>
    %286 = arith.maximumf %284, %285 : vector<16x8x128xf32>
    %287 = vector.shape_cast %286 : vector<16x8x128xf32> to vector<128x128xf32>
    %c7_112 = arith.constant 7 : index
    %c0_113 = arith.constant 0 : index
    %c0_114 = arith.constant 0 : index
    %288 = vector.load %arg3[%c7_112, %c0_113, %c0_114] : memref<9x128x128xf32, #tpu.memory_space<vmem>>, vector<1x128x128xf32>
    %289 = vector.shape_cast %288 : vector<1x128x128xf32> to vector<128x128xf32>
    %cst_115 = arith.constant dense<0.000000e+00> : vector<128x128xf32>
    %290 = tpu.matmul %287, %289, %cst_115 {dimension_numbers = #tpu.dot_dimension_numbers<[1], [0], [0], [1], [0, 0, 1, 1], [], []>} : vector<128x128xf32>, vector<128x128xf32>, vector<128x128xf32> -> vector<128x128xf32>
    %291 = vector.shape_cast %290 : vector<128x128xf32> to vector<16x8x128xf32>
    %cst_116 = arith.constant dense<0.000000e+00> : vector<16x128xf32>
    %292 = vector.multi_reduction <add>, %291, %cst_116 [1] : vector<16x8x128xf32> to vector<16x128xf32>
    %293 = vector.shape_cast %292 : vector<16x128xf32> to vector<16x1x128xf32>
    %294 = arith.mulf %291, %291 : vector<16x8x128xf32>
    %cst_117 = arith.constant dense<0.000000e+00> : vector<16x128xf32>
    %295 = vector.multi_reduction <add>, %294, %cst_117 [1] : vector<16x8x128xf32> to vector<16x128xf32>
    %296 = vector.shape_cast %295 : vector<16x128xf32> to vector<16x1x128xf32>
    %cst_118 = arith.constant 8.000000e+00 : f32
    %297 = vector.broadcast %cst_118 : f32 to vector<16x1x128xf32>
    %298 = arith.mulf %297, %296 : vector<16x1x128xf32>
    %299 = arith.mulf %293, %293 : vector<16x1x128xf32>
    %300 = arith.subf %298, %299 : vector<16x1x128xf32>
    %cst_119 = arith.constant 0.000000e+00 : f32
    %301 = vector.broadcast %cst_119 : f32 to vector<16x1x128xf32>
    %302 = arith.maximumf %300, %301 : vector<16x1x128xf32>
    %cst_120 = arith.constant 6.400000e-04 : f32
    %303 = vector.broadcast %cst_120 : f32 to vector<16x1x128xf32>
    %304 = arith.addf %302, %303 : vector<16x1x128xf32>
    %305 = math.rsqrt %304 : vector<16x1x128xf32>
    %c8 = arith.constant 8 : index
    %c0_121 = arith.constant 0 : index
    %306 = vector.load %arg4[%c8, %c0_121] : memref<10x128xf32, #tpu.memory_space<vmem>>, vector<1x128xf32>
    %307 = vector.shape_cast %306 : vector<1x128xf32> to vector<1x1x128xf32>
    %308 = vector.broadcast %307 : vector<1x1x128xf32> to vector<16x1x128xf32>
    %309 = arith.mulf %308, %305 : vector<16x1x128xf32>
    %cst_122 = arith.constant 8.000000e+00 : f32
    %310 = vector.broadcast %cst_122 : f32 to vector<16x1x128xf32>
    %311 = arith.mulf %310, %309 : vector<16x1x128xf32>
    %c8_123 = arith.constant 8 : index
    %c0_124 = arith.constant 0 : index
    %312 = vector.load %arg5[%c8_123, %c0_124] : memref<10x128xf32, #tpu.memory_space<vmem>>, vector<1x128xf32>
    %313 = arith.mulf %293, %309 : vector<16x1x128xf32>
    %314 = vector.shape_cast %312 : vector<1x128xf32> to vector<1x1x128xf32>
    %315 = vector.broadcast %314 : vector<1x1x128xf32> to vector<16x1x128xf32>
    %316 = arith.subf %315, %313 : vector<16x1x128xf32>
    %317 = vector.broadcast %311 : vector<16x1x128xf32> to vector<16x8x128xf32>
    %318 = arith.mulf %291, %317 : vector<16x8x128xf32>
    %319 = vector.broadcast %316 : vector<16x1x128xf32> to vector<16x8x128xf32>
    %320 = arith.addf %318, %319 : vector<16x8x128xf32>
    %cst_125 = arith.constant 0.000000e+00 : f32
    %321 = vector.broadcast %cst_125 : f32 to vector<16x8x128xf32>
    %322 = arith.maximumf %320, %321 : vector<16x8x128xf32>
    %323 = vector.shape_cast %322 : vector<16x8x128xf32> to vector<128x128xf32>
    %c8_126 = arith.constant 8 : index
    %c0_127 = arith.constant 0 : index
    %c0_128 = arith.constant 0 : index
    %324 = vector.load %arg3[%c8_126, %c0_127, %c0_128] : memref<9x128x128xf32, #tpu.memory_space<vmem>>, vector<1x128x128xf32>
    %325 = vector.shape_cast %324 : vector<1x128x128xf32> to vector<128x128xf32>
    %cst_129 = arith.constant dense<0.000000e+00> : vector<128x128xf32>
    %326 = tpu.matmul %323, %325, %cst_129 {dimension_numbers = #tpu.dot_dimension_numbers<[1], [0], [0], [1], [0, 0, 1, 1], [], []>} : vector<128x128xf32>, vector<128x128xf32>, vector<128x128xf32> -> vector<128x128xf32>
    %327 = vector.shape_cast %326 : vector<128x128xf32> to vector<16x8x128xf32>
    %cst_130 = arith.constant dense<0.000000e+00> : vector<16x128xf32>
    %328 = vector.multi_reduction <add>, %327, %cst_130 [1] : vector<16x8x128xf32> to vector<16x128xf32>
    %329 = vector.shape_cast %328 : vector<16x128xf32> to vector<16x1x128xf32>
    %330 = arith.mulf %327, %327 : vector<16x8x128xf32>
    %cst_131 = arith.constant dense<0.000000e+00> : vector<16x128xf32>
    %331 = vector.multi_reduction <add>, %330, %cst_131 [1] : vector<16x8x128xf32> to vector<16x128xf32>
    %332 = vector.shape_cast %331 : vector<16x128xf32> to vector<16x1x128xf32>
    %cst_132 = arith.constant 8.000000e+00 : f32
    %333 = vector.broadcast %cst_132 : f32 to vector<16x1x128xf32>
    %334 = arith.mulf %333, %332 : vector<16x1x128xf32>
    %335 = arith.mulf %329, %329 : vector<16x1x128xf32>
    %336 = arith.subf %334, %335 : vector<16x1x128xf32>
    %cst_133 = arith.constant 0.000000e+00 : f32
    %337 = vector.broadcast %cst_133 : f32 to vector<16x1x128xf32>
    %338 = arith.maximumf %336, %337 : vector<16x1x128xf32>
    %cst_134 = arith.constant 6.400000e-04 : f32
    %339 = vector.broadcast %cst_134 : f32 to vector<16x1x128xf32>
    %340 = arith.addf %338, %339 : vector<16x1x128xf32>
    %341 = math.rsqrt %340 : vector<16x1x128xf32>
    %c9 = arith.constant 9 : index
    %c0_135 = arith.constant 0 : index
    %342 = vector.load %arg4[%c9, %c0_135] : memref<10x128xf32, #tpu.memory_space<vmem>>, vector<1x128xf32>
    %343 = vector.shape_cast %342 : vector<1x128xf32> to vector<1x1x128xf32>
    %344 = vector.broadcast %343 : vector<1x1x128xf32> to vector<16x1x128xf32>
    %345 = arith.mulf %344, %341 : vector<16x1x128xf32>
    %cst_136 = arith.constant 8.000000e+00 : f32
    %346 = vector.broadcast %cst_136 : f32 to vector<16x1x128xf32>
    %347 = arith.mulf %346, %345 : vector<16x1x128xf32>
    %c9_137 = arith.constant 9 : index
    %c0_138 = arith.constant 0 : index
    %348 = vector.load %arg5[%c9_137, %c0_138] : memref<10x128xf32, #tpu.memory_space<vmem>>, vector<1x128xf32>
    %349 = arith.mulf %329, %345 : vector<16x1x128xf32>
    %350 = vector.shape_cast %348 : vector<1x128xf32> to vector<1x1x128xf32>
    %351 = vector.broadcast %350 : vector<1x1x128xf32> to vector<16x1x128xf32>
    %352 = arith.subf %351, %349 : vector<16x1x128xf32>
    %353 = vector.broadcast %347 : vector<16x1x128xf32> to vector<16x8x128xf32>
    %354 = arith.mulf %327, %353 : vector<16x8x128xf32>
    %355 = vector.broadcast %352 : vector<16x1x128xf32> to vector<16x8x128xf32>
    %356 = arith.addf %354, %355 : vector<16x8x128xf32>
    %cst_139 = arith.constant 0.000000e+00 : f32
    %357 = vector.broadcast %cst_139 : f32 to vector<16x8x128xf32>
    %358 = arith.maximumf %356, %357 : vector<16x8x128xf32>
    %359 = vector.shape_cast %358 : vector<16x8x128xf32> to vector<128x128xf32>
    %c0_140 = arith.constant 0 : index
    %c0_141 = arith.constant 0 : index
    %360 = vector.load %arg6[%c0_140, %c0_141] : memref<4x128xf32, #tpu.memory_space<vmem>>, vector<4x128xf32>
    %cst_142 = arith.constant dense<0.000000e+00> : vector<4x128xf32>
    %361 = tpu.matmul %360, %359, %cst_142 {dimension_numbers = #tpu.dot_dimension_numbers<[1], [1], [0], [0], [0, 0, 1, 0], [], []>} : vector<4x128xf32>, vector<128x128xf32>, vector<4x128xf32> -> vector<4x128xf32>
    %c0_143 = arith.constant 0 : index
    %c0_144 = arith.constant 0 : index
    %c0_145 = arith.constant 0 : index
    %362 = vector.load %arg7[%c0_143, %c0_144, %c0_145] : memref<1x4x128xf32, #tpu.memory_space<vmem>>, vector<1x4x128xf32>
    %363 = vector.shape_cast %362 : vector<1x4x128xf32> to vector<4x128xf32>
    %364 = vector.shape_cast %361 : vector<4x128xf32> to vector<1x4x128xf32>
    tpu.vector_store %arg7[%c0_143, %c0_144, %c0_145], %364 {strides = array<i32>} : memref<1x4x128xf32, #tpu.memory_space<vmem>>, vector<1x4x128xf32>,
    return
  }
  func.func @transform_0(%arg0: i32) -> (i32, i32) {
    %c0_i32 = arith.constant 0 : i32
    %c0_i32_0 = arith.constant 0 : i32
    return %arg0, %c0_i32 : i32, i32
  }
  func.func @transform_1(%arg0: i32) -> (i32, i32) {
    %c0_i32 = arith.constant 0 : i32
    %c0_i32_0 = arith.constant 0 : i32
    %c0_i32_1 = arith.constant 0 : i32
    return %c0_i32, %c0_i32_0 : i32, i32
  }
  func.func @transform_2(%arg0: i32) -> (i32, i32, i32) {
    %c0_i32 = arith.constant 0 : i32
    %c0_i32_0 = arith.constant 0 : i32
    %c0_i32_1 = arith.constant 0 : i32
    %c0_i32_2 = arith.constant 0 : i32
    return %c0_i32, %c0_i32_0, %c0_i32_1 : i32, i32, i32
  }
  func.func @transform_3(%arg0: i32) -> (i32, i32) {
    %c0_i32 = arith.constant 0 : i32
    %c0_i32_0 = arith.constant 0 : i32
    %c0_i32_1 = arith.constant 0 : i32
    return %c0_i32, %c0_i32_0 : i32, i32
  }
  func.func @transform_4(%arg0: i32) -> (i32, i32) {
    %c0_i32 = arith.constant 0 : i32
    %c0_i32_0 = arith.constant 0 : i32
    %c0_i32_1 = arith.constant 0 : i32
    return %c0_i32, %c0_i32_0 : i32, i32
  }
  func.func @transform_5(%arg0: i32) -> (i32, i32) {
    %c0_i32 = arith.constant 0 : i32
    %c0_i32_0 = arith.constant 0 : i32
    %c0_i32_1 = arith.constant 0 : i32
    return %c0_i32, %c0_i32_0 : i32, i32
  }
  func.func @transform_6(%arg0: i32) -> (i32, i32, i32) {
    %c0_i32 = arith.constant 0 : i32
    %c0_i32_0 = arith.constant 0 : i32
    %c0_i32_1 = arith.constant 0 : i32
    return %arg0, %c0_i32, %c0_i32_0 : i32, i32, i32
  }
}

</mosaic_0001>

<llo_original>
// kernel: tile.14
$region0: #{tile.14}
  %s0 = inlined_call_operand.vmem [shape: f32[10,4,32], index: 0, kind: input, shape index: {}]
  %s1 = inlined_call_operand.vmem [shape: f32[10,128], index: 1, kind: output, shape index: {}]
  $region1: #{tile.14} parent=0
    #allocation0 [shape = 'u8[40960]{0}', space=vmem, size = 0xa000, scoped, tag = 'scoped mem for input reshape']
    %s3 = sshll.u32 1, 4
    %s4 = ssub.s32 %s3, 1
    %s5 = smul.addr 4, 9
    %s6 = scalar_lea.vmem %s0, %s5
    %v7 = vld [vmem:[%s6] sm:%s4]
    %s8 = scalar_lea.vmem [#allocation0], 72
    %9 = vst [vmem:[%s8] sm:%s4] %v7
    %s10 = smul.addr 4, 8
    %s11 = scalar_lea.vmem %s0, %s10
    %v12 = vld [vmem:[%s11] sm:%s4]
    %s13 = scalar_lea.vmem [#allocation0], 64
    %14 = vst [vmem:[%s13] sm:%s4] %v12
    %s15 = smul.addr 4, 7
    %s16 = scalar_lea.vmem %s0, %s15
    %v17 = vld [vmem:[%s16] sm:%s4]
    %s18 = scalar_lea.vmem [#allocation0], 56
    %19 = vst [vmem:[%s18] sm:%s4] %v17
    %s20 = smul.addr 4, 6
    %s21 = scalar_lea.vmem %s0, %s20
    %v22 = vld [vmem:[%s21] sm:%s4]
    %s23 = scalar_lea.vmem [#allocation0], 48
    %24 = vst [vmem:[%s23] sm:%s4] %v22
    %s25 = smul.addr 4, 5
    %s26 = scalar_lea.vmem %s0, %s25
    %v27 = vld [vmem:[%s26] sm:%s4]
    %s28 = scalar_lea.vmem [#allocation0], 40
    %29 = vst [vmem:[%s28] sm:%s4] %v27
    %s30 = smul.addr 4, 4
    %s31 = scalar_lea.vmem %s0, %s30
    %v32 = vld [vmem:[%s31] sm:%s4]
    %s33 = scalar_lea.vmem [#allocation0], 32
    %34 = vst [vmem:[%s33] sm:%s4] %v32
    %s35 = smul.addr 4, 3
    %s36 = scalar_lea.vmem %s0, %s35
    %v37 = vld [vmem:[%s36] sm:%s4]
    %s38 = scalar_lea.vmem [#allocation0], 24
    %39 = vst [vmem:[%s38] sm:%s4] %v37
    %s40 = smul.addr 4, 2
    %s41 = scalar_lea.vmem %s0, %s40
    %v42 = vld [vmem:[%s41] sm:%s4]
    %s43 = scalar_lea.vmem [#allocation0], 16
    %44 = vst [vmem:[%s43] sm:%s4] %v42
    %s45 = scalar_lea.vmem %s0, 4
    %v46 = vld [vmem:[%s45] sm:%s4]
    %s47 = scalar_lea.vmem [#allocation0], 8
    %48 = vst [vmem:[%s47] sm:%s4] %v46
    %v49 = vld [vmem:[%s0] sm:%s4]
    %50 = vst [vmem:[#allocation0] sm:%s4] %v49
    %v51 = vld [vmem:[#allocation0] ss:$8 sm:$0xf]
    %v52 = vld [vmem:[#allocation0] ss:$8 sm:$0xf0]
    %vm53 = vcmask 1047556
    %v54 = vsel %vm53, %v52, %v51
    %vm55 = vcmask 261120
    %56 = vst.msk [vmem:[%s1] sm:$0xff] %vm55, %v54
    %s57 = scalar_lea.vmem [#allocation0], 64
    %s58 = smov 3
    %v59 = vld [vmem:[%s57] ss:$8 sm:%s58]
    %vm60 = vcmask 261120
    %s61 = scalar_lea.vmem %s1, 8
    %62 = vst.msk [vmem:[%s61] sm:$0x3] %vm60, %v59
    %s63 = scalar_lea.vmem [#allocation0], 3
    %v64 = vld [vmem:[%s63] ss:$8 sm:$0xf]
    %s65 = scalar_lea.vmem [#allocation0], 3
    %v66 = vld [vmem:[%s65] ss:$8 sm:$0xf0]
    %vm67 = vcmask 1047556
    %v68 = vsel %vm67, %v66, %v64
    %69 = vrot.lane.b32.xlu0 %v68, 96
    %v70 = vpop.permute.xlu0 %69
    %vm71 = vcmask 1048320
    %72 = vst.msk [vmem:[%s1] sm:$0xff] %vm71, %v70
    %s73 = scalar_lea.vmem [#allocation0], 67
    %s74 = smov 3
    %v75 = vld [vmem:[%s73] ss:$8 sm:%s74]
    %76 = vrot.lane.b32.xlu0 %v75, 96
    %v77 = vpop.permute.xlu0 %76
    %vm78 = vcmask 1048320
    %s79 = scalar_lea.vmem %s1, 8
    %80 = vst.msk [vmem:[%s79] sm:$0x3] %vm78, %v77
    %s81 = scalar_lea.vmem [#allocation0], 2
    %v82 = vld [vmem:[%s81] ss:$8 sm:$0xf]
    %s83 = scalar_lea.vmem [#allocation0], 2
    %v84 = vld [vmem:[%s83] ss:$8 sm:$0xf0]
    %vm85 = vcmask 1047556
    %v86 = vsel %vm85, %v84, %v82
    %87 = vrot.lane.b32.xlu0 %v86, 64
    %v88 = vpop.permute.xlu0 %87
    %vm89 = vcmask 785920
    %90 = vst.msk [vmem:[%s1] sm:$0xff] %vm89, %v88
    %s91 = scalar_lea.vmem [#allocation0], 66
    %s92 = smov 3
    %v93 = vld [vmem:[%s91] ss:$8 sm:%s92]
    %94 = vrot.lane.b32.xlu0 %v93, 64
    %v95 = vpop.permute.xlu0 %94
    %vm96 = vcmask 785920
    %s97 = scalar_lea.vmem %s1, 8
    %98 = vst.msk [vmem:[%s97] sm:$0x3] %vm96, %v95
    %s99 = scalar_lea.vmem [#allocation0], 1
    %v100 = vld [vmem:[%s99] ss:$8 sm:$0xf]
    %s101 = scalar_lea.vmem [#allocation0], 1
    %v102 = vld [vmem:[%s101] ss:$8 sm:$0xf0]
    %vm103 = vcmask 1047556
    %v104 = vsel %vm103, %v102, %v100
    %105 = vrot.lane.b32.xlu0 %v104, 32
    %v106 = vpop.permute.xlu0 %105
    %vm107 = vcmask 523520
    %108 = vst.msk [vmem:[%s1] sm:$0xff] %vm107, %v106
    %s109 = scalar_lea.vmem [#allocation0], 65
    %s110 = smov 3
    %v111 = vld [vmem:[%s109] ss:$8 sm:%s110]
    %112 = vrot.lane.b32.xlu0 %v111, 32
    %v113 = vpop.permute.xlu0 %112
    %vm114 = vcmask 523520
    %s115 = scalar_lea.vmem %s1, 8
    %116 = vst.msk [vmem:[%s115] sm:$0x3] %vm114, %v113

// kernel: mlp_forward.1
$region0: #{mlp_forward.1}
  #allocation0 [shape = 'u32[]', space=smem, size = 0x4, offset = 0x4, fixed_abs, tag = 'smem constant byte address 0x4 - core index']
  #allocation1 [shape = 'u32[144,128]{1,0:T(1,128)}', space=vmem, size = 0x12000, scoped, tag = 'internal scratch']
  %s0 = inlined_call_operand.vmem [shape: f32[256,24], index: 0, kind: input, shape index: {}]
  %s1 = inlined_call_operand.vmem [shape: f32[24,128], index: 1, kind: input, shape index: {}]
  %s2 = inlined_call_operand.vmem [shape: f32[9,128,128], index: 2, kind: input, shape index: {}]
  %s3 = inlined_call_operand.vmem [shape: f32[10,128], index: 3, kind: input, shape index: {}]
  %s4 = inlined_call_operand.vmem [shape: f32[10,128], index: 4, kind: input, shape index: {}]
  %s5 = inlined_call_operand.vmem [shape: f32[4,128], index: 5, kind: input, shape index: {}]
  %s6 = inlined_call_operand.vmem [shape: f32[2,4,128], index: 6, kind: output, shape index: {}]
  %s7 = sld [smem:[#allocation0]]
  $region57: #{mlp_forward.1} parent=0
    _
  %s9 = ssub.s32 1, %s7
  %s10 = scalar_select 0, %s9, %s7
  loop: start=0, step=1, limit=4
  $region2: #{mlp_forward.1} parent=0 // loop_pre_header
    _
  $region3: #{mlp_forward.1} parent=0 // loop_header
    %s12 = sphi 0, %s16
    %p13 = scmp.ge.s32.totalorder %s12, 4
    %s22 = sphi 0, %s24
    %s25 = sphi 0, %s22
    %s26 = sphi 0, %s25
    %s42 = sphi 0, %s26
    %s46 = sphi 0, %s46
    %s48 = sphi 0, %s46
    %s49 = sphi 0, %s48
    %s63 = sphi 0, %s49
    %s67 = sphi 0, %s67
    %s69 = sphi 0, %s67
    %s70 = sphi 0, %s69
    %s84 = sphi 0, %s70
    %s88 = sphi 0, %s88
    %s90 = sphi 0, %s88
    %s91 = sphi 0, %s90
    %s105 = sphi 0, %s91
    %s109 = sphi 0, %s109
    %s111 = sphi 0, %s109
    %s112 = sphi 0, %s111
    %s126 = sphi 0, %s112
    %s130 = sphi 0, %s130
    %s132 = sphi 0, %s130
    %s133 = sphi 0, %s132
    %s147 = sphi 0, %s133
    %s153 = sphi 0, %s155
    %s156 = sphi 0, %s153
    %s157 = sphi 0, %s156
    %s173 = sphi 0, %s157
  $region4: #{mlp_forward.1} parent=0 // loop_header_branch
    %15 = sbr.rel (%p13) target = $region8
  $region5: #{mlp_forward.1} parent=0 // loop_body
    %s17 = ssub.s32 %s12, 1
    %s18 = ssub.s32 %s12, 2
    %s19 = sadd.s32 %s12, 1
    %s20 = ssub.s32 %s12, %s19
    %p21 = scmp.eq.s32.totalorder %s20, 0
    %s23 = sadd.s32 %s22, 1
    %s24 = scalar_select %p21, %s22, %s23
    %p27 = pneg %p21
    %p28 = scmp.eq.s32.totalorder %s12, 1
    %p29 = por %p27, %p28
    %p30 = scmp.ne.s32.totalorder %s22, %s25
    %p31 = scmp.eq.s32.totalorder %s12, 0
    %p32 = por %p30, %p31
    %p33 = scmp.ne.s32.totalorder %s22, %s25
    %p34 = scmp.eq.s32.totalorder %s17, 1
    %p35 = por %p33, %p34
    %p36 = scmp.ne.s32.totalorder %s25, %s26
    %p37 = scmp.eq.s32.totalorder %s17, 0
    %p38 = por %p36, %p37
    %p39 = scmp.ne.s32.totalorder %s25, %s26
    %p40 = scmp.eq.s32.totalorder %s18, 1
    %p41 = por %p39, %p40
    %p43 = scmp.ne.s32.totalorder %s26, %s42
    %p44 = scmp.eq.s32.totalorder %s18, 0
    %p45 = por %p43, %p44
    %s47 = sadd.s32 %s46, 1
    %p50 = scmp.eq.s32.totalorder %s12, 1
    %p51 = scmp.ne.s32.totalorder %s46, %s48
    %p52 = scmp.eq.s32.totalorder %s12, 0
    %p53 = por %p51, %p52
    %p54 = scmp.ne.s32.totalorder %s46, %s48
    %p55 = scmp.eq.s32.totalorder %s17, 1
    %p56 = por %p54, %p55
    %p57 = scmp.ne.s32.totalorder %s48, %s49
    %p58 = scmp.eq.s32.totalorder %s17, 0
    %p59 = por %p57, %p58
    %p60 = scmp.ne.s32.totalorder %s48, %s49
    %p61 = scmp.eq.s32.totalorder %s18, 1
    %p62 = por %p60, %p61
    %p64 = scmp.ne.s32.totalorder %s49, %s63
    %p65 = scmp.eq.s32.totalorder %s18, 0
    %p66 = por %p64, %p65
    %s68 = sadd.s32 %s67, 1
    %p71 = scmp.eq.s32.totalorder %s12, 1
    %p72 = scmp.ne.s32.totalorder %s67, %s69
    %p73 = scmp.eq.s32.totalorder %s12, 0
    %p74 = por %p72, %p73
    %p75 = scmp.ne.s32.totalorder %s67, %s69
    %p76 = scmp.eq.s32.totalorder %s17, 1
    %p77 = por %p75, %p76
    %p78 = scmp.ne.s32.totalorder %s69, %s70
    %p79 = scmp.eq.s32.totalorder %s17, 0
    %p80 = por %p78, %p79
    %p81 = scmp.ne.s32.totalorder %s69, %s70
    %p82 = scmp.eq.s32.totalorder %s18, 1
    %p83 = por %p81, %p82
    %p85 = scmp.ne.s32.totalorder %s70, %s84
    %p86 = scmp.eq.s32.totalorder %s18, 0
    %p87 = por %p85, %p86
    %s89 = sadd.s32 %s88, 1
    %p92 = scmp.eq.s32.totalorder %s12, 1
    %p93 = scmp.ne.s32.totalorder %s88, %s90
    %p94 = scmp.eq.s32.totalorder %s12, 0
    %p95 = por %p93, %p94
    %p96 = scmp.ne.s32.totalorder %s88, %s90
    %p97 = scmp.eq.s32.totalorder %s17, 1
    %p98 = por %p96, %p97
    %p99 = scmp.ne.s32.totalorder %s90, %s91
    %p100 = scmp.eq.s32.totalorder %s17, 0
    %p101 = por %p99, %p100
    %p102 = scmp.ne.s32.totalorder %s90, %s91
    %p103 = scmp.eq.s32.totalorder %s18, 1
    %p104 = por %p102, %p103
    %p106 = scmp.ne.s32.totalorder %s91, %s105
    %p107 = scmp.eq.s32.totalorder %s18, 0
    %p108 = por %p106, %p107
    %s110 = sadd.s32 %s109, 1
    %p113 = scmp.eq.s32.totalorder %s12, 1
    %p114 = scmp.ne.s32.totalorder %s109, %s111
    %p115 = scmp.eq.s32.totalorder %s12, 0
    %p116 = por %p114, %p115
    %p117 = scmp.ne.s32.totalorder %s109, %s111
    %p118 = scmp.eq.s32.totalorder %s17, 1
    %p119 = por %p117, %p118
    %p120 = scmp.ne.s32.totalorder %s111, %s112
    %p121 = scmp.eq.s32.totalorder %s17, 0
    %p122 = por %p120, %p121
    %p123 = scmp.ne.s32.totalorder %s111, %s112
    %p124 = scmp.eq.s32.totalorder %s18, 1
    %p125 = por %p123, %p124
    %p127 = scmp.ne.s32.totalorder %s112, %s126
    %p128 = scmp.eq.s32.totalorder %s18, 0
    %p129 = por %p127, %p128
    %s131 = sadd.s32 %s130, 1
    %p134 = scmp.eq.s32.totalorder %s12, 1
    %p135 = scmp.ne.s32.totalorder %s130, %s132
    %p136 = scmp.eq.s32.totalorder %s12, 0
    %p137 = por %p135, %p136
    %p138 = scmp.ne.s32.totalorder %s130, %s132
    %p139 = scmp.eq.s32.totalorder %s17, 1
    %p140 = por %p138, %p139
    %p141 = scmp.ne.s32.totalorder %s132, %s133
    %p142 = scmp.eq.s32.totalorder %s17, 0
    %p143 = por %p141, %p142
    %p144 = scmp.ne.s32.totalorder %s132, %s133
    %p145 = scmp.eq.s32.totalorder %s18, 1
    %p146 = por %p144, %p145
    %p148 = scmp.ne.s32.totalorder %s133, %s147
    %p149 = scmp.eq.s32.totalorder %s18, 0
    %p150 = por %p148, %p149
    %s151 = ssub.s32 %s12, %s19
    %p152 = scmp.eq.s32.totalorder %s151, 0
    %s154 = sadd.s32 %s153, 1
    %s155 = scalar_select %p152, %s153, %s154
    %p158 = pneg %p152
    %p159 = scmp.eq.s32.totalorder %s12, 1
    %p160 = por %p158, %p159
    %p161 = scmp.ne.s32.totalorder %s153, %s156
    %p162 = scmp.eq.s32.totalorder %s12, 0
    %p163 = por %p161, %p162
    %p164 = scmp.ne.s32.totalorder %s153, %s156
    %p165 = scmp.eq.s32.totalorder %s17, 1
    %p166 = por %p164, %p165
    %p167 = scmp.ne.s32.totalorder %s156, %s157
    %p168 = scmp.eq.s32.totalorder %s17, 0
    %p169 = por %p167, %p168
    %p170 = scmp.ne.s32.totalorder %s156, %s157
    %p171 = scmp.eq.s32.totalorder %s18, 1
    %p172 = por %p170, %p171
    %p174 = scmp.ne.s32.totalorder %s157, %s173
    %p175 = scmp.eq.s32.totalorder %s18, 0
    %p176 = por %p174, %p175
    %p177 = scmp.le.s32.totalorder 1, %s12
    %p178 = scmp.lt.s32.totalorder %s12, 3
    %p179 = pnand %p177, %p178
    %p180 = pneg %p179
    // Predicated region
    $region9: #{mlp_forward.1} parent=5 // pred_check
      _
    $region10: #{mlp_forward.1} parent=5 // pred_check_branch
      %182 = sbr.rel (%p179) target = $region12
    $region11: #{mlp_forward.1} parent=5 // pred_region
      %s183 = ssub.s32 %s12, 1
      // Predicated region
      $region13: #{mlp_forward.1} parent=11 // pred_check
        %p184 = pneg %p59
      $region14: #{mlp_forward.1} parent=11 // pred_check_branch
        %186 = sbr.rel (%p184) target = $region16
      $region15: #{mlp_forward.1} parent=11 // pred_region
        _
      $region16: #{mlp_forward.1} parent=11 // pred_fallthru
        _
      // Predicated region
      $region17: #{mlp_forward.1} parent=11 // pred_check
        %p187 = pneg %p80
      $region18: #{mlp_forward.1} parent=11 // pred_check_branch
        %189 = sbr.rel (%p187) target = $region20
      $region19: #{mlp_forward.1} parent=11 // pred_region
        _
      $region20: #{mlp_forward.1} parent=11 // pred_fallthru
        _
      // Predicated region
      $region21: #{mlp_forward.1} parent=11 // pred_check
        %p190 = pneg %p101
      $region22: #{mlp_forward.1} parent=11 // pred_check_branch
        %192 = sbr.rel (%p190) target = $region24
      $region23: #{mlp_forward.1} parent=11 // pred_region
        _
      $region24: #{mlp_forward.1} parent=11 // pred_fallthru
        _
      // Predicated region
      $region25: #{mlp_forward.1} parent=11 // pred_check
        %p193 = pneg %p122
      $region26: #{mlp_forward.1} parent=11 // pred_check_branch
        %195 = sbr.rel (%p193) target = $region28
      $region27: #{mlp_forward.1} parent=11 // pred_region
        _
      $region28: #{mlp_forward.1} parent=11 // pred_fallthru
        _
      // Predicated region
      $region29: #{mlp_forward.1} parent=11 // pred_check
        %p196 = pneg %p143
      $region30: #{mlp_forward.1} parent=11 // pred_check_branch
        %198 = sbr.rel (%p196) target = $region32
      $region31: #{mlp_forward.1} parent=11 // pred_region
        _
      $region32: #{mlp_forward.1} parent=11 // pred_fallthru
        _
    $region12: #{mlp_forward.1} parent=5 // pred_fallthru
      _
    %p199 = scmp.lt.s32.totalorder %s12, 2
    // Predicated region
    $region33: #{mlp_forward.1} parent=5 // pred_check
      %p200 = pneg %p199
    $region34: #{mlp_forward.1} parent=5 // pred_check_branch
      %202 = sbr.rel (%p200) target = $region36
    $region35: #{mlp_forward.1} parent=5 // pred_region
      // Predicated region
      $region37: #{mlp_forward.1} parent=35 // pred_check
        %p203 = pneg %p32
      $region38: #{mlp_forward.1} parent=35 // pred_check_branch
        %205 = sbr.rel (%p203) target = $region40
      $region39: #{mlp_forward.1} parent=35 // pred_region
        %s206 = smul.u32 16, %s12
        %p207 = scmp.lt.s32.totalorder %s206, 31
        %s208 = scalar_select %p207, %s206, 31
        %s209 = smul.addr %s208, 8
        %s210 = scalar_lea.vmem %s0, %s209
        %s211 = smul.u32 16, %s12
      $region40: #{mlp_forward.1} parent=35 // pred_fallthru
        _
    $region36: #{mlp_forward.1} parent=5 // pred_fallthru
      _
    %p212 = scmp.le.s32.totalorder 1, %s12
    %p213 = scmp.lt.s32.totalorder %s12, 3
    %p214 = pnand %p212, %p213
    %p215 = pneg %p214
    // Predicated region
    $region41: #{mlp_forward.1} parent=5 // pred_check
      _
    $region42: #{mlp_forward.1} parent=5 // pred_check_branch
      %217 = sbr.rel (%p214) target = $region44
    $region43: #{mlp_forward.1} parent=5 // pred_region
      %s218 = ssub.s32 %s12, 1
      %s219 = smul.u32 16, %s17
      %p220 = scmp.lt.s32.totalorder %s219, 31
      %s221 = scalar_select %p220, %s219, 31
      %s222 = smul.addr %s221, 8
      %s223 = scalar_lea.vmem %s0, %s222
      %p224 = pneg %p38
      %p225 = pneg %p35
      %p226 = pneg %p59
      %p227 = pneg %p56
      %p228 = pneg %p80
      %p229 = pneg %p77
      %p230 = pneg %p101
      %p231 = pneg %p98
      %p232 = pneg %p122
      %p233 = pneg %p119
      %p234 = pneg %p143
      %p235 = pneg %p140
      %p236 = pneg %p169
      %p237 = pneg %p166
      %p238 = scmp.lt.s32.totalorder %s17, 1
      %s239 = scalar_select %p238, %s17, 1
      %s240 = smul.addr %s239, 4
      %s241 = scalar_lea.vmem %s6, %s240
      %s242 = smul.u32 16, %s17
      %p243 = scmp.lt.s32.totalorder %s242, 31
      %s244 = scalar_select %p243, %s242, 31
      %s245 = smul.addr %s244, 8
      %s246 = scalar_lea.vmem %s0, %s245
      %s247 = smul.u32 16, %s17
      %p248 = scmp.lt.s32.totalorder %s17, 1
      %s249 = scalar_select %p248, %s17, 1
      %s250 = smul.addr %s249, 4
      %s251 = scalar_lea.vmem %s6, %s250
      %v252 = vld [vmem:[%s246] sm:$0xff]
      %v253 = vld [vmem:[%s246 + $0x8] sm:$0xff]
      %v254 = vld [vmem:[%s246 + $0x10] sm:$0xff]
      %v255 = vld [vmem:[%s246 + $0x18] sm:$0xff]
      %v256 = vld [vmem:[%s246 + $0x20] sm:$0xff]
      %v257 = vld [vmem:[%s246 + $0x28] sm:$0xff]
      %v258 = vld [vmem:[%s246 + $0x30] sm:$0xff]
      %v259 = vld [vmem:[%s246 + $0x38] sm:$0xff]
      %v260 = vld [vmem:[%s246 + $0x40] sm:$0xff]
      %v261 = vld [vmem:[%s246 + $0x48] sm:$0xff]
      %v262 = vld [vmem:[%s246 + $0x50] sm:$0xff]
      %v263 = vld [vmem:[%s246 + $0x58] sm:$0xff]
      %v264 = vld [vmem:[%s246 + $0x60] sm:$0xff]
      %v265 = vld [vmem:[%s246 + $0x68] sm:$0xff]
      %v266 = vld [vmem:[%s246 + $0x70] sm:$0xff]
      %v267 = vld [vmem:[%s246 + $0x78] sm:$0xff]
      %v268 = vld [vmem:[%s1] sm:$0xff]
      %v269 = vld [vmem:[%s1 + $0x8] sm:$0xff]
      %v270 = vld [vmem:[%s1 + $0x10] sm:$0xff]
      %vm271 = vcmask 195584
      %v273 = vsel %vm271, %v252, 0
      %v276 = vsel %vm271, %v253, 0
      %v279 = vsel %vm271, %v254, 0
      %v282 = vsel %vm271, %v255, 0
      %v285 = vsel %vm271, %v256, 0
      %v288 = vsel %vm271, %v257, 0
      %v291 = vsel %vm271, %v258, 0
      %v294 = vsel %vm271, %v259, 0
      %v297 = vsel %vm271, %v260, 0
      %v300 = vsel %vm271, %v261, 0
      %v303 = vsel %vm271, %v262, 0
      %v306 = vsel %vm271, %v263, 0
      %v309 = vsel %vm271, %v264, 0
      %v312 = vsel %vm271, %v265, 0
      %v315 = vsel %vm271, %v266, 0
      %v318 = vsel %vm271, %v267, 0
      %320 = vmatprep.subr.mxu0 0.0
      %321 = vmatpush1.msra.mxu0 0.0
      %322 = vmatprep.subr.mxu0 0.0
      %323 = vmatpush1.msra.mxu0 0.0
      %324 = vmatprep.subr.mxu0 0.0
      %325 = vmatpush1.msra.mxu0 0.0
      %326 = vmatprep.subr.mxu0 0.0
      %327 = vmatpush1.msra.mxu0 0.0
      %328 = vmatprep.subr.mxu0 0.0
      %329 = vmatpush1.msra.mxu0 0.0
      %330 = vmatprep.subr.mxu0 0.0
      %331 = vmatpush1.msra.mxu0 0.0
      %332 = vmatprep.subr.mxu0 0.0
      %333 = vmatpush1.msra.mxu0 0.0
      %334 = vmatprep.subr.mxu0 0.0
      %335 = vmatpush1.msra.mxu0 0.0
      %336 = vmatprep.subr.mxu0 0.0
      %337 = vmatpush1.msra.mxu0 0.0
      %338 = vmatprep.subr.mxu0 0.0
      %339 = vmatpush1.msra.mxu0 0.0
      %340 = vmatprep.subr.mxu0 0.0
      %341 = vmatpush1.msra.mxu0 0.0
      %342 = vmatprep.subr.mxu0 0.0
      %343 = vmatpush1.msra.mxu0 0.0
      %344 = vmatprep.subr.mxu0 0.0
      %345 = vmatpush1.msra.mxu0 0.0
      %346 = vmatprep.subr.mxu0 0.0
      %347 = vmatpush1.msra.mxu0 %v270
      %348 = vmatprep.subr.mxu0 0.0
      %349 = vmatpush1.msra.mxu0 %v269
      %350 = vmatprep.subr.mxu0 0.0
      %351 = vmatpush1.msra.mxu0 %v268
      %352 = vmatprep.subr.mxu0 0.0
      %353 = vmatpush2.msra.mxu0 0.0
      %354 = vmatprep.subr.mxu0 0.0
      %355 = vmatpush2.msra.mxu0 0.0
      %356 = vmatprep.subr.mxu0 0.0
      %357 = vmatpush2.msra.mxu0 0.0
      %358 = vmatprep.subr.mxu0 0.0
      %359 = vmatpush2.msra.mxu0 0.0
      %360 = vmatprep.subr.mxu0 0.0
      %361 = vmatpush2.msra.mxu0 0.0
      %362 = vmatprep.subr.mxu0 0.0
      %363 = vmatpush2.msra.mxu0 0.0
      %364 = vmatprep.subr.mxu0 0.0
      %365 = vmatpush2.msra.mxu0 0.0
      %366 = vmatprep.subr.mxu0 0.0
      %367 = vmatpush2.msra.mxu0 0.0
      %368 = vmatprep.subr.mxu0 0.0
      %369 = vmatpush2.msra.mxu0 0.0
      %370 = vmatprep.subr.mxu0 0.0
      %371 = vmatpush2.msra.mxu0 0.0
      %372 = vmatprep.subr.mxu0 0.0
      %373 = vmatpush2.msra.mxu0 0.0
      %374 = vmatprep.subr.mxu0 0.0
      %375 = vmatpush2.msra.mxu0 0.0
      %376 = vmatprep.subr.mxu0 0.0
      %377 = vmatpush2.msra.mxu0 0.0
      %378 = vmatprep.subr.mxu0 0.0
      %379 = vmatpush2.msra.mxu0 0.0
      %380 = vmatprep.subr.mxu0 0.0
      %381 = vmatpush2.msra.mxu0 0.0
      %382 = vmatprep.subr.mxu0 0.0
      %383 = vmatpush2.msra.mxu0 0.0
      %384 = vmatprep.mubr.f32.mxu0 0.0
      %385 = vmatmul.mubr.f32.gmra.mxu0 %v273
      %v386 = vpop.f32.mrf.mxu0
      %v387 = vadd.f32 0.0, %v386
      %v388 = vpop.f32.mrf.mxu0
      %389 = vmatprep.mubr.f32.mxu0 0.0
      %390 = vmatmul.mubr.f32.gmra.mxu0 %v276
      %v391 = vpop.f32.mrf.mxu0
      %v392 = vadd.f32 0.0, %v391
      %v393 = vpop.f32.mrf.mxu0
      %394 = vmatprep.mubr.f32.mxu0 0.0
      %395 = vmatmul.mubr.f32.gmra.mxu0 %v279
      %v396 = vpop.f32.mrf.mxu0
      %v397 = vadd.f32 0.0, %v396
      %v398 = vpop.f32.mrf.mxu0
      %399 = vmatprep.mubr.f32.mxu0 0.0
      %400 = vmatmul.mubr.f32.gmra.mxu0 %v282
      %v401 = vpop.f32.mrf.mxu0
      %v402 = vadd.f32 0.0, %v401
      %v403 = vpop.f32.mrf.mxu0
      %404 = vmatprep.mubr.f32.mxu0 0.0
      %405 = vmatmul.mubr.f32.gmra.mxu0 %v285
      %v406 = vpop.f32.mrf.mxu0
      %v407 = vadd.f32 0.0, %v406
      %v408 = vpop.f32.mrf.mxu0
      %409 = vmatprep.mubr.f32.mxu0 0.0
      %410 = vmatmul.mubr.f32.gmra.mxu0 %v288
      %v411 = vpop.f32.mrf.mxu0
      %v412 = vadd.f32 0.0, %v411
      %v413 = vpop.f32.mrf.mxu0
      %414 = vmatprep.mubr.f32.mxu0 0.0
      %415 = vmatmul.mubr.f32.gmra.mxu0 %v291
      %v416 = vpop.f32.mrf.mxu0
      %v417 = vadd.f32 0.0, %v416
      %v418 = vpop.f32.mrf.mxu0
      %419 = vmatprep.mubr.f32.mxu0 0.0
      %420 = vmatmul.mubr.f32.gmra.mxu0 %v294
      %v421 = vpop.f32.mrf.mxu0
      %v422 = vadd.f32 0.0, %v421
      %v423 = vpop.f32.mrf.mxu0
      %424 = vmatprep.mubr.f32.mxu0 0.0
      %425 = vmatmul.mubr.f32.gmra.mxu0 %v297
      %v426 = vpop.f32.mrf.mxu0
      %v427 = vadd.f32 0.0, %v426
      %v428 = vpop.f32.mrf.mxu0
      %429 = vmatprep.mubr.f32.mxu0 0.0
      %430 = vmatmul.mubr.f32.gmra.mxu0 %v300
      %v431 = vpop.f32.mrf.mxu0
      %v432 = vadd.f32 0.0, %v431
      %v433 = vpop.f32.mrf.mxu0
      %434 = vmatprep.mubr.f32.mxu0 0.0
      %435 = vmatmul.mubr.f32.gmra.mxu0 %v303
      %v436 = vpop.f32.mrf.mxu0
      %v437 = vadd.f32 0.0, %v436
      %v438 = vpop.f32.mrf.mxu0
      %439 = vmatprep.mubr.f32.mxu0 0.0
      %440 = vmatmul.mubr.f32.gmra.mxu0 %v306
      %v441 = vpop.f32.mrf.mxu0
      %v442 = vadd.f32 0.0, %v441
      %v443 = vpop.f32.mrf.mxu0
      %444 = vmatprep.mubr.f32.mxu0 0.0
      %445 = vmatmul.mubr.f32.gmra.mxu0 %v309
      %v446 = vpop.f32.mrf.mxu0
      %v447 = vadd.f32 0.0, %v446
      %v448 = vpop.f32.mrf.mxu0
      %449 = vmatprep.mubr.f32.mxu0 0.0
      %450 = vmatmul.mubr.f32.gmra.mxu0 %v312
      %v451 = vpop.f32.mrf.mxu0
      %v452 = vadd.f32 0.0, %v451
      %v453 = vpop.f32.mrf.mxu0
      %454 = vmatprep.mubr.f32.mxu0 0.0
      %455 = vmatmul.mubr.f32.gmra.mxu0 %v315
      %v456 = vpop.f32.mrf.mxu0
      %v457 = vadd.f32 0.0, %v456
      %v458 = vpop.f32.mrf.mxu0
      %459 = vmatprep.mubr.f32.mxu0 0.0
      %460 = vmatmul.mubr.f32.gmra.mxu0 %v318
      %v461 = vpop.f32.mrf.mxu0
      %v462 = vadd.f32 0.0, %v461
      %v463 = vpop.f32.mrf.mxu0
      %464 = vdwg.mxu0
      %v465 = vrot.slane %v387, 4
      %v466 = vadd.f32 %v387, %v465
      %v467 = vrot.slane %v466, 2
      %v468 = vadd.f32 %v466, %v467
      %v469 = vrot.slane %v468, 1
      %v470 = vadd.f32 %v468, %v469
      %v471 = vrot.slane %v392, 4
      %v472 = vadd.f32 %v392, %v471
      %v473 = vrot.slane %v472, 2
      %v474 = vadd.f32 %v472, %v473
      %v475 = vrot.slane %v474, 1
      %v476 = vadd.f32 %v474, %v475
      %v477 = vrot.slane %v397, 4
      %v478 = vadd.f32 %v397, %v477
      %v479 = vrot.slane %v478, 2
      %v480 = vadd.f32 %v478, %v479
      %v481 = vrot.slane %v480, 1
      %v482 = vadd.f32 %v480, %v481
      %v483 = vrot.slane %v402, 4
      %v484 = vadd.f32 %v402, %v483
      %v485 = vrot.slane %v484, 2
      %v486 = vadd.f32 %v484, %v485
      %v487 = vrot.slane %v486, 1
      %v488 = vadd.f32 %v486, %v487
      %v489 = vrot.slane %v407, 4
      %v490 = vadd.f32 %v407, %v489
      %v491 = vrot.slane %v490, 2
      %v492 = vadd.f32 %v490, %v491
      %v493 = vrot.slane %v492, 1
      %v494 = vadd.f32 %v492, %v493
      %v495 = vrot.slane %v412, 4
      %v496 = vadd.f32 %v412, %v495
      %v497 = vrot.slane %v496, 2
      %v498 = vadd.f32 %v496, %v497
      %v499 = vrot.slane %v498, 1
      %v500 = vadd.f32 %v498, %v499
      %v501 = vrot.slane %v417, 4
      %v502 = vadd.f32 %v417, %v501
      %v503 = vrot.slane %v502, 2
      %v504 = vadd.f32 %v502, %v503
      %v505 = vrot.slane %v504, 1
      %v506 = vadd.f32 %v504, %v505
      %v507 = vrot.slane %v422, 4
      %v508 = vadd.f32 %v422, %v507
      %v509 = vrot.slane %v508, 2
      %v510 = vadd.f32 %v508, %v509
      %v511 = vrot.slane %v510, 1
      %v512 = vadd.f32 %v510, %v511
      %v513 = vrot.slane %v427, 4
      %v514 = vadd.f32 %v427, %v513
      %v515 = vrot.slane %v514, 2
      %v516 = vadd.f32 %v514, %v515
      %v517 = vrot.slane %v516, 1
      %v518 = vadd.f32 %v516, %v517
      %v519 = vrot.slane %v432, 4
      %v520 = vadd.f32 %v432, %v519
      %v521 = vrot.slane %v520, 2
      %v522 = vadd.f32 %v520, %v521
      %v523 = vrot.slane %v522, 1
      %v524 = vadd.f32 %v522, %v523
      %v525 = vrot.slane %v437, 4
      %v526 = vadd.f32 %v437, %v525
      %v527 = vrot.slane %v526, 2
      %v528 = vadd.f32 %v526, %v527
      %v529 = vrot.slane %v528, 1
      %v530 = vadd.f32 %v528, %v529
      %v531 = vrot.slane %v442, 4
      %v532 = vadd.f32 %v442, %v531
      %v533 = vrot.slane %v532, 2
      %v534 = vadd.f32 %v532, %v533
      %v535 = vrot.slane %v534, 1
      %v536 = vadd.f32 %v534, %v535
      %v537 = vrot.slane %v447, 4
      %v538 = vadd.f32 %v447, %v537
      %v539 = vrot.slane %v538, 2
      %v540 = vadd.f32 %v538, %v539
      %v541 = vrot.slane %v540, 1
      %v542 = vadd.f32 %v540, %v541
      %v543 = vrot.slane %v452, 4
      %v544 = vadd.f32 %v452, %v543
      %v545 = vrot.slane %v544, 2
      %v546 = vadd.f32 %v544, %v545
      %v547 = vrot.slane %v546, 1
      %v548 = vadd.f32 %v546, %v547
      %v549 = vrot.slane %v457, 4
      %v550 = vadd.f32 %v457, %v549
      %v551 = vrot.slane %v550, 2
      %v552 = vadd.f32 %v550, %v551
      %v553 = vrot.slane %v552, 1
      %v554 = vadd.f32 %v552, %v553
      %v555 = vrot.slane %v462, 4
      %v556 = vadd.f32 %v462, %v555
      %v557 = vrot.slane %v556, 2
      %v558 = vadd.f32 %v556, %v557
      %v559 = vrot.slane %v558, 1
      %v560 = vadd.f32 %v558, %v559
      %v561 = vmul.f32 %v387, %v387
      %v562 = vmul.f32 %v392, %v392
      %v563 = vmul.f32 %v397, %v397
      %v564 = vmul.f32 %v402, %v402
      %v565 = vmul.f32 %v407, %v407
      %v566 = vmul.f32 %v412, %v412
      %v567 = vmul.f32 %v417, %v417
      %v568 = vmul.f32 %v422, %v422
      %v569 = vmul.f32 %v427, %v427
      %v570 = vmul.f32 %v432, %v432
      %v571 = vmul.f32 %v437, %v437
      %v572 = vmul.f32 %v442, %v442
      %v573 = vmul.f32 %v447, %v447
      %v574 = vmul.f32 %v452, %v452
      %v575 = vmul.f32 %v457, %v457
      %v576 = vmul.f32 %v462, %v462
      %v577 = vrot.slane %v561, 4
      %v578 = vadd.f32 %v561, %v577
      %v579 = vrot.slane %v578, 2
      %v580 = vadd.f32 %v578, %v579
      %v581 = vrot.slane %v580, 1
      %v582 = vadd.f32 %v580, %v581
      %v583 = vrot.slane %v562, 4
      %v584 = vadd.f32 %v562, %v583
      %v585 = vrot.slane %v584, 2
      %v586 = vadd.f32 %v584, %v585
      %v587 = vrot.slane %v586, 1
      %v588 = vadd.f32 %v586, %v587
      %v589 = vrot.slane %v563, 4
      %v590 = vadd.f32 %v563, %v589
      %v591 = vrot.slane %v590, 2
      %v592 = vadd.f32 %v590, %v591
      %v593 = vrot.slane %v592, 1
      %v594 = vadd.f32 %v592, %v593
      %v595 = vrot.slane %v564, 4
      %v596 = vadd.f32 %v564, %v595
      %v597 = vrot.slane %v596, 2
      %v598 = vadd.f32 %v596, %v597
      %v599 = vrot.slane %v598, 1
      %v600 = vadd.f32 %v598, %v599
      %v601 = vrot.slane %v565, 4
      %v602 = vadd.f32 %v565, %v601
      %v603 = vrot.slane %v602, 2
      %v604 = vadd.f32 %v602, %v603
      %v605 = vrot.slane %v604, 1
      %v606 = vadd.f32 %v604, %v605
      %v607 = vrot.slane %v566, 4
      %v608 = vadd.f32 %v566, %v607
      %v609 = vrot.slane %v608, 2
      %v610 = vadd.f32 %v608, %v609
      %v611 = vrot.slane %v610, 1
      %v612 = vadd.f32 %v610, %v611
      %v613 = vrot.slane %v567, 4
      %v614 = vadd.f32 %v567, %v613
      %v615 = vrot.slane %v614, 2
      %v616 = vadd.f32 %v614, %v615
      %v617 = vrot.slane %v616, 1
      %v618 = vadd.f32 %v616, %v617
      %v619 = vrot.slane %v568, 4
      %v620 = vadd.f32 %v568, %v619
      %v621 = vrot.slane %v620, 2
      %v622 = vadd.f32 %v620, %v621
      %v623 = vrot.slane %v622, 1
      %v624 = vadd.f32 %v622, %v623
      %v625 = vrot.slane %v569, 4
      %v626 = vadd.f32 %v569, %v625
      %v627 = vrot.slane %v626, 2
      %v628 = vadd.f32 %v626, %v627
      %v629 = vrot.slane %v628, 1
      %v630 = vadd.f32 %v628, %v629
      %v631 = vrot.slane %v570, 4
      %v632 = vadd.f32 %v570, %v631
      %v633 = vrot.slane %v632, 2
      %v634 = vadd.f32 %v632, %v633
      %v635 = vrot.slane %v634, 1
      %v636 = vadd.f32 %v634, %v635
      %v637 = vrot.slane %v571, 4
      %v638 = vadd.f32 %v571, %v637
      %v639 = vrot.slane %v638, 2
      %v640 = vadd.f32 %v638, %v639
      %v641 = vrot.slane %v640, 1
      %v642 = vadd.f32 %v640, %v641
      %v643 = vrot.slane %v572, 4
      %v644 = vadd.f32 %v572, %v643
      %v645 = vrot.slane %v644, 2
      %v646 = vadd.f32 %v644, %v645
      %v647 = vrot.slane %v646, 1
      %v648 = vadd.f32 %v646, %v647
      %v649 = vrot.slane %v573, 4
      %v650 = vadd.f32 %v573, %v649
      %v651 = vrot.slane %v650, 2
      %v652 = vadd.f32 %v650, %v651
      %v653 = vrot.slane %v652, 1
      %v654 = vadd.f32 %v652, %v653
      %v655 = vrot.slane %v574, 4
      %v656 = vadd.f32 %v574, %v655
      %v657 = vrot.slane %v656, 2
      %v658 = vadd.f32 %v656, %v657
      %v659 = vrot.slane %v658, 1
      %v660 = vadd.f32 %v658, %v659
      %v661 = vrot.slane %v575, 4
      %v662 = vadd.f32 %v575, %v661
      %v663 = vrot.slane %v662, 2
      %v664 = vadd.f32 %v662, %v663
      %v665 = vrot.slane %v664, 1
      %v666 = vadd.f32 %v664, %v665
      %v667 = vrot.slane %v576, 4
      %v668 = vadd.f32 %v576, %v667
      %v669 = vrot.slane %v668, 2
      %v670 = vadd.f32 %v668, %v669
      %v671 = vrot.slane %v670, 1
      %v672 = vadd.f32 %v670, %v671
      %v673 = vmul.f32 %v582, 8.0
      %v674 = vmul.f32 %v588, 8.0
      %v675 = vmul.f32 %v594, 8.0
      %v676 = vmul.f32 %v600, 8.0
      %v677 = vmul.f32 %v606, 8.0
      %v678 = vmul.f32 %v612, 8.0
      %v679 = vmul.f32 %v618, 8.0
      %v680 = vmul.f32 %v624, 8.0
      %v681 = vmul.f32 %v630, 8.0
      %v682 = vmul.f32 %v636, 8.0
      %v683 = vmul.f32 %v642, 8.0
      %v684 = vmul.f32 %v648, 8.0
      %v685 = vmul.f32 %v654, 8.0
      %v686 = vmul.f32 %v660, 8.0
      %v687 = vmul.f32 %v666, 8.0
      %v688 = vmul.f32 %v672, 8.0
      %v689 = vmul.f32 %v470, %v470
      %v690 = vmul.f32 %v476, %v476
      %v691 = vmul.f32 %v482, %v482
      %v692 = vmul.f32 %v488, %v488
      %v693 = vmul.f32 %v494, %v494
      %v694 = vmul.f32 %v500, %v500
      %v695 = vmul.f32 %v506, %v506
      %v696 = vmul.f32 %v512, %v512
      %v697 = vmul.f32 %v518, %v518
      %v698 = vmul.f32 %v524, %v524
      %v699 = vmul.f32 %v530, %v530
      %v700 = vmul.f32 %v536, %v536
      %v701 = vmul.f32 %v542, %v542
      %v702 = vmul.f32 %v548, %v548
      %v703 = vmul.f32 %v554, %v554
      %v704 = vmul.f32 %v560, %v560
      %v705 = vsub.f32 %v673, %v689
      %v706 = vsub.f32 %v674, %v690
      %v707 = vsub.f32 %v675, %v691
      %v708 = vsub.f32 %v676, %v692
      %v709 = vsub.f32 %v677, %v693
      %v710 = vsub.f32 %v678, %v694
      %v711 = vsub.f32 %v679, %v695
      %v712 = vsub.f32 %v680, %v696
      %v713 = vsub.f32 %v681, %v697
      %v714 = vsub.f32 %v682, %v698
      %v715 = vsub.f32 %v683, %v699
      %v716 = vsub.f32 %v684, %v700
      %v717 = vsub.f32 %v685, %v701
      %v718 = vsub.f32 %v686, %v702
      %v719 = vsub.f32 %v687, %v703
      %v720 = vsub.f32 %v688, %v704
      %v721 = vmax.f32 %v705, 0.0
      %v722 = vmax.f32 %v706, 0.0
      %v723 = vmax.f32 %v707, 0.0
      %v724 = vmax.f32 %v708, 0.0
      %v725 = vmax.f32 %v709, 0.0
      %v726 = vmax.f32 %v710, 0.0
      %v727 = vmax.f32 %v711, 0.0
      %v728 = vmax.f32 %v712, 0.0
      %v729 = vmax.f32 %v713, 0.0
      %v730 = vmax.f32 %v714, 0.0
      %v731 = vmax.f32 %v715, 0.0
      %v732 = vmax.f32 %v716, 0.0
      %v733 = vmax.f32 %v717, 0.0
      %v734 = vmax.f32 %v718, 0.0
      %v735 = vmax.f32 %v719, 0.0
      %v736 = vmax.f32 %v720, 0.0
      %v737 = vadd.f32 %v721, 0.00064
      %v738 = vadd.f32 %v722, 0.00064
      %v739 = vadd.f32 %v723, 0.00064
      %v740 = vadd.f32 %v724, 0.00064
      %v741 = vadd.f32 %v725, 0.00064
      %v742 = vadd.f32 %v726, 0.00064
      %v743 = vadd.f32 %v727, 0.00064
      %v744 = vadd.f32 %v728, 0.00064
      %v745 = vadd.f32 %v729, 0.00064
      %v746 = vadd.f32 %v730, 0.00064
      %v747 = vadd.f32 %v731, 0.00064
      %v748 = vadd.f32 %v732, 0.00064
      %v749 = vadd.f32 %v733, 0.00064
      %v750 = vadd.f32 %v734, 0.00064
      %v751 = vadd.f32 %v735, 0.00064
      %v752 = vadd.f32 %v736, 0.00064
      %v753 = vrsqrt.pop %v737
      %v754 = vrsqrt.pop %v738
      %v755 = vrsqrt.pop %v739
      %v756 = vrsqrt.pop %v740
      %v757 = vrsqrt.pop %v741
      %v758 = vrsqrt.pop %v742
      %v759 = vrsqrt.pop %v743
      %v760 = vrsqrt.pop %v744
      %v761 = vrsqrt.pop %v745
      %v762 = vrsqrt.pop %v746
      %v763 = vrsqrt.pop %v747
      %v764 = vrsqrt.pop %v748
      %v765 = vrsqrt.pop %v749
      %v766 = vrsqrt.pop %v750
      %v767 = vrsqrt.pop %v751
      %v768 = vrsqrt.pop %v752
      %v769 = vld [vmem:[%s3] sm:$0x1]
      %v770 = vmul.f32 %v769, %v753
      %v771 = vmul.f32 %v769, %v754
      %v772 = vmul.f32 %v769, %v755
      %v773 = vmul.f32 %v769, %v756
      %v774 = vmul.f32 %v769, %v757
      %v775 = vmul.f32 %v769, %v758
      %v776 = vmul.f32 %v769, %v759
      %v777 = vmul.f32 %v769, %v760
      %v778 = vmul.f32 %v769, %v761
      %v779 = vmul.f32 %v769, %v762
      %v780 = vmul.f32 %v769, %v763
      %v781 = vmul.f32 %v769, %v764
      %v782 = vmul.f32 %v769, %v765
      %v783 = vmul.f32 %v769, %v766
      %v784 = vmul.f32 %v769, %v767
      %v785 = vmul.f32 %v769, %v768
      %v786 = vmul.f32 %v770, 8.0
      %v787 = vmul.f32 %v771, 8.0
      %v788 = vmul.f32 %v772, 8.0
      %v789 = vmul.f32 %v773, 8.0
      %v790 = vmul.f32 %v774, 8.0
      %v791 = vmul.f32 %v775, 8.0
      %v792 = vmul.f32 %v776, 8.0
      %v793 = vmul.f32 %v777, 8.0
      %v794 = vmul.f32 %v778, 8.0
      %v795 = vmul.f32 %v779, 8.0
      %v796 = vmul.f32 %v780, 8.0
      %v797 = vmul.f32 %v781, 8.0
      %v798 = vmul.f32 %v782, 8.0
      %v799 = vmul.f32 %v783, 8.0
      %v800 = vmul.f32 %v784, 8.0
      %v801 = vmul.f32 %v785, 8.0
      %v802 = vld [vmem:[%s4] sm:$0x1]
      %v803 = vmul.f32 %v470, %v770
      %v804 = vmul.f32 %v476, %v771
      %v805 = vmul.f32 %v482, %v772
      %v806 = vmul.f32 %v488, %v773
      %v807 = vmul.f32 %v494, %v774
      %v808 = vmul.f32 %v500, %v775
      %v809 = vmul.f32 %v506, %v776
      %v810 = vmul.f32 %v512, %v777
      %v811 = vmul.f32 %v518, %v778
      %v812 = vmul.f32 %v524, %v779
      %v813 = vmul.f32 %v530, %v780
      %v814 = vmul.f32 %v536, %v781
      %v815 = vmul.f32 %v542, %v782
      %v816 = vmul.f32 %v548, %v783
      %v817 = vmul.f32 %v554, %v784
      %v818 = vmul.f32 %v560, %v785
      %v819 = vsub.f32 %v802, %v803
      %v820 = vsub.f32 %v802, %v804
      %v821 = vsub.f32 %v802, %v805
      %v822 = vsub.f32 %v802, %v806
      %v823 = vsub.f32 %v802, %v807
      %v824 = vsub.f32 %v802, %v808
      %v825 = vsub.f32 %v802, %v809
      %v826 = vsub.f32 %v802, %v810
      %v827 = vsub.f32 %v802, %v811
      %v828 = vsub.f32 %v802, %v812
      %v829 = vsub.f32 %v802, %v813
      %v830 = vsub.f32 %v802, %v814
      %v831 = vsub.f32 %v802, %v815
      %v832 = vsub.f32 %v802, %v816
      %v833 = vsub.f32 %v802, %v817
      %v834 = vsub.f32 %v802, %v818
      %v835 = vlaneseq
      %v836 = vshrl.u32 %v835, 7
      %v837 = vsub.s32 0, %v836
      %v838 = vrot.slane %v786, %v837
      %v839 = vlaneseq
      %v840 = vshrl.u32 %v839, 7
      %v841 = vsub.s32 0, %v840
      %v842 = vrot.slane %v787, %v841
      %v843 = vlaneseq
      %v844 = vshrl.u32 %v843, 7
      %v845 = vsub.s32 0, %v844
      %v846 = vrot.slane %v788, %v845
      %v847 = vlaneseq
      %v848 = vshrl.u32 %v847, 7
      %v849 = vsub.s32 0, %v848
      %v850 = vrot.slane %v789, %v849
      %v851 = vlaneseq
      %v852 = vshrl.u32 %v851, 7
      %v853 = vsub.s32 0, %v852
      %v854 = vrot.slane %v790, %v853
      %v855 = vlaneseq
      %v856 = vshrl.u32 %v855, 7
      %v857 = vsub.s32 0, %v856
      %v858 = vrot.slane %v791, %v857
      %v859 = vlaneseq
      %v860 = vshrl.u32 %v859, 7
      %v861 = vsub.s32 0, %v860
      %v862 = vrot.slane %v792, %v861
      %v863 = vlaneseq
      %v864 = vshrl.u32 %v863, 7
      %v865 = vsub.s32 0, %v864
      %v866 = vrot.slane %v793, %v865
      %v867 = vlaneseq
      %v868 = vshrl.u32 %v867, 7
      %v869 = vsub.s32 0, %v868
      %v870 = vrot.slane %v794, %v869
      %v871 = vlaneseq
      %v872 = vshrl.u32 %v871, 7
      %v873 = vsub.s32 0, %v872
      %v874 = vrot.slane %v795, %v873
      %v875 = vlaneseq
      %v876 = vshrl.u32 %v875, 7
      %v877 = vsub.s32 0, %v876
      %v878 = vrot.slane %v796, %v877
      %v879 = vlaneseq
      %v880 = vshrl.u32 %v879, 7
      %v881 = vsub.s32 0, %v880
      %v882 = vrot.slane %v797, %v881
      %v883 = vlaneseq
      %v884 = vshrl.u32 %v883, 7
      %v885 = vsub.s32 0, %v884
      %v886 = vrot.slane %v798, %v885
      %v887 = vlaneseq
      %v888 = vshrl.u32 %v887, 7
      %v889 = vsub.s32 0, %v888
      %v890 = vrot.slane %v799, %v889
      %v891 = vlaneseq
      %v892 = vshrl.u32 %v891, 7
      %v893 = vsub.s32 0, %v892
      %v894 = vrot.slane %v800, %v893
      %v895 = vlaneseq
      %v896 = vshrl.u32 %v895, 7
      %v897 = vsub.s32 0, %v896
      %v898 = vrot.slane %v801, %v897
      %v899 = vmul.f32 %v387, %v838
      %v900 = vmul.f32 %v392, %v842
      %v901 = vmul.f32 %v397, %v846
      %v902 = vmul.f32 %v402, %v850
      %v903 = vmul.f32 %v407, %v854
      %v904 = vmul.f32 %v412, %v858
      %v905 = vmul.f32 %v417, %v862
      %v906 = vmul.f32 %v422, %v866
      %v907 = vmul.f32 %v427, %v870
      %v908 = vmul.f32 %v432, %v874
      %v909 = vmul.f32 %v437, %v878
      %v910 = vmul.f32 %v442, %v882
      %v911 = vmul.f32 %v447, %v886
      %v912 = vmul.f32 %v452, %v890
      %v913 = vmul.f32 %v457, %v894
      %v914 = vmul.f32 %v462, %v898
      %v915 = vlaneseq
      %v916 = vshrl.u32 %v915, 7
      %v917 = vsub.s32 0, %v916
      %v918 = vrot.slane %v819, %v917
      %v919 = vlaneseq
      %v920 = vshrl.u32 %v919, 7
      %v921 = vsub.s32 0, %v920
      %v922 = vrot.slane %v820, %v921
      %v923 = vlaneseq
      %v924 = vshrl.u32 %v923, 7
      %v925 = vsub.s32 0, %v924
      %v926 = vrot.slane %v821, %v925
      %v927 = vlaneseq
      %v928 = vshrl.u32 %v927, 7
      %v929 = vsub.s32 0, %v928
      %v930 = vrot.slane %v822, %v929
      %v931 = vlaneseq
      %v932 = vshrl.u32 %v931, 7
      %v933 = vsub.s32 0, %v932
      %v934 = vrot.slane %v823, %v933
      %v935 = vlaneseq
      %v936 = vshrl.u32 %v935, 7
      %v937 = vsub.s32 0, %v936
      %v938 = vrot.slane %v824, %v937
      %v939 = vlaneseq
      %v940 = vshrl.u32 %v939, 7
      %v941 = vsub.s32 0, %v940
      %v942 = vrot.slane %v825, %v941
      %v943 = vlaneseq
      %v944 = vshrl.u32 %v943, 7
      %v945 = vsub.s32 0, %v944
      %v946 = vrot.slane %v826, %v945
      %v947 = vlaneseq
      %v948 = vshrl.u32 %v947, 7
      %v949 = vsub.s32 0, %v948
      %v950 = vrot.slane %v827, %v949
      %v951 = vlaneseq
      %v952 = vshrl.u32 %v951, 7
      %v953 = vsub.s32 0, %v952
      %v954 = vrot.slane %v828, %v953
      %v955 = vlaneseq
      %v956 = vshrl.u32 %v955, 7
      %v957 = vsub.s32 0, %v956
      %v958 = vrot.slane %v829, %v957
      %v959 = vlaneseq
      %v960 = vshrl.u32 %v959, 7
      %v961 = vsub.s32 0, %v960
      %v962 = vrot.slane %v830, %v961
      %v963 = vlaneseq
      %v964 = vshrl.u32 %v963, 7
      %v965 = vsub.s32 0, %v964
      %v966 = vrot.slane %v831, %v965
      %v967 = vlaneseq
      %v968 = vshrl.u32 %v967, 7
      %v969 = vsub.s32 0, %v968
      %v970 = vrot.slane %v832, %v969
      %v971 = vlaneseq
      %v972 = vshrl.u32 %v971, 7
      %v973 = vsub.s32 0, %v972
      %v974 = vrot.slane %v833, %v973
      %v975 = vlaneseq
      %v976 = vshrl.u32 %v975, 7
      %v977 = vsub.s32 0, %v976
      %v978 = vrot.slane %v834, %v977
      %v979 = vadd.f32 %v899, %v918
      %v980 = vadd.f32 %v900, %v922
      %v981 = vadd.f32 %v901, %v926
      %v982 = vadd.f32 %v902, %v930
      %v983 = vadd.f32 %v903, %v934
      %v984 = vadd.f32 %v904, %v938
      %v985 = vadd.f32 %v905, %v942
      %v986 = vadd.f32 %v906, %v946
      %v987 = vadd.f32 %v907, %v950
      %v988 = vadd.f32 %v908, %v954
      %v989 = vadd.f32 %v909, %v958
      %v990 = vadd.f32 %v910, %v962
      %v991 = vadd.f32 %v911, %v966
      %v992 = vadd.f32 %v912, %v970
      %v993 = vadd.f32 %v913, %v974
      %v994 = vadd.f32 %v914, %v978
      %v995 = vmax.f32 %v979, 0.0
      %v996 = vmax.f32 %v980, 0.0
      %v997 = vmax.f32 %v981, 0.0
      %v998 = vmax.f32 %v982, 0.0
      %v999 = vmax.f32 %v983, 0.0
      %v1000 = vmax.f32 %v984, 0.0
      %v1001 = vmax.f32 %v985, 0.0
      %v1002 = vmax.f32 %v986, 0.0
      %v1003 = vmax.f32 %v987, 0.0
      %v1004 = vmax.f32 %v988, 0.0
      %v1005 = vmax.f32 %v989, 0.0
      %v1006 = vmax.f32 %v990, 0.0
      %v1007 = vmax.f32 %v991, 0.0
      %v1008 = vmax.f32 %v992, 0.0
      %v1009 = vmax.f32 %v993, 0.0
      %v1010 = vmax.f32 %v994, 0.0
      %v1011 = vld [vmem:[%s2] sm:$0xff]
      %v1012 = vld [vmem:[%s2 + $0x8] sm:$0xff]
      %v1013 = vld [vmem:[%s2 + $0x10] sm:$0xff]
      %v1014 = vld [vmem:[%s2 + $0x18] sm:$0xff]
      %v1015 = vld [vmem:[%s2 + $0x20] sm:$0xff]
      %v1016 = vld [vmem:[%s2 + $0x28] sm:$0xff]
      %v1017 = vld [vmem:[%s2 + $0x30] sm:$0xff]
      %v1018 = vld [vmem:[%s2 + $0x38] sm:$0xff]
      %v1019 = vld [vmem:[%s2 + $0x40] sm:$0xff]
      %v1020 = vld [vmem:[%s2 + $0x48] sm:$0xff]
      %v1021 = vld [vmem:[%s2 + $0x50] sm:$0xff]
      %v1022 = vld [vmem:[%s2 + $0x58] sm:$0xff]
      %v1023 = vld [vmem:[%s2 + $0x60] sm:$0xff]
      %v1024 = vld [vmem:[%s2 + $0x68] sm:$0xff]
      %v1025 = vld [vmem:[%s2 + $0x70] sm:$0xff]
      %v1026 = vld [vmem:[%s2 + $0x78] sm:$0xff]
      %1027 = vmatprep.subr.mxu0 0.0
      %1028 = vmatpush1.msra.mxu0 %v1026
      %1029 = vmatprep.subr.mxu0 0.0
      %1030 = vmatpush1.msra.mxu0 %v1025
      %1031 = vmatprep.subr.mxu0 0.0
      %1032 = vmatpush1.msra.mxu0 %v1024
      %1033 = vmatprep.subr.mxu0 0.0
      %1034 = vmatpush1.msra.mxu0 %v1023
      %1035 = vmatprep.subr.mxu0 0.0
      %1036 = vmatpush1.msra.mxu0 %v1022
      %1037 = vmatprep.subr.mxu0 0.0
      %1038 = vmatpush1.msra.mxu0 %v1021
      %1039 = vmatprep.subr.mxu0 0.0
      %1040 = vmatpush1.msra.mxu0 %v1020
      %1041 = vmatprep.subr.mxu0 0.0
      %1042 = vmatpush1.msra.mxu0 %v1019
      %1043 = vmatprep.subr.mxu0 0.0
      %1044 = vmatpush1.msra.mxu0 %v1018
      %1045 = vmatprep.subr.mxu0 0.0
      %1046 = vmatpush1.msra.mxu0 %v1017
      %1047 = vmatprep.subr.mxu0 0.0
      %1048 = vmatpush1.msra.mxu0 %v1016
      %1049 = vmatprep.subr.mxu0 0.0
      %1050 = vmatpush1.msra.mxu0 %v1015
      %1051 = vmatprep.subr.mxu0 0.0
      %1052 = vmatpush1.msra.mxu0 %v1014
      %1053 = vmatprep.subr.mxu0 0.0
      %1054 = vmatpush1.msra.mxu0 %v1013
      %1055 = vmatprep.subr.mxu0 0.0
      %1056 = vmatpush1.msra.mxu0 %v1012
      %1057 = vmatprep.subr.mxu0 0.0
      %1058 = vmatpush1.msra.mxu0 %v1011
      %1059 = vmatprep.subr.mxu0 0.0
      %1060 = vmatpush2.msra.mxu0 0.0
      %1061 = vmatprep.subr.mxu0 0.0
      %1062 = vmatpush2.msra.mxu0 0.0
      %1063 = vmatprep.subr.mxu0 0.0
      %1064 = vmatpush2.msra.mxu0 0.0
      %1065 = vmatprep.subr.mxu0 0.0
      %1066 = vmatpush2.msra.mxu0 0.0
      %1067 = vmatprep.subr.mxu0 0.0
      %1068 = vmatpush2.msra.mxu0 0.0
      %1069 = vmatprep.subr.mxu0 0.0
      %1070 = vmatpush2.msra.mxu0 0.0
      %1071 = vmatprep.subr.mxu0 0.0
      %1072 = vmatpush2.msra.mxu0 0.0
      %1073 = vmatprep.subr.mxu0 0.0
      %1074 = vmatpush2.msra.mxu0 0.0
      %1075 = vmatprep.subr.mxu0 0.0
      %1076 = vmatpush2.msra.mxu0 0.0
      %1077 = vmatprep.subr.mxu0 0.0
      %1078 = vmatpush2.msra.mxu0 0.0
      %1079 = vmatprep.subr.mxu0 0.0
      %1080 = vmatpush2.msra.mxu0 0.0
      %1081 = vmatprep.subr.mxu0 0.0
      %1082 = vmatpush2.msra.mxu0 0.0
      %1083 = vmatprep.subr.mxu0 0.0
      %1084 = vmatpush2.msra.mxu0 0.0
      %1085 = vmatprep.subr.mxu0 0.0
      %1086 = vmatpush2.msra.mxu0 0.0
      %1087 = vmatprep.subr.mxu0 0.0
      %1088 = vmatpush2.msra.mxu0 0.0
      %1089 = vmatprep.subr.mxu0 0.0
      %1090 = vmatpush2.msra.mxu0 0.0
      %1091 = vmatprep.mubr.f32.mxu0 0.0
      %1092 = vmatmul.mubr.f32.gmra.mxu0 %v995
      %v1093 = vpop.f32.mrf.mxu0
      %v1094 = vadd.f32 0.0, %v1093
      %v1095 = vpop.f32.mrf.mxu0
      %1096 = vmatprep.mubr.f32.mxu0 0.0
      %1097 = vmatmul.mubr.f32.gmra.mxu0 %v996
      %v1098 = vpop.f32.mrf.mxu0
      %v1099 = vadd.f32 0.0, %v1098
      %v1100 = vpop.f32.mrf.mxu0
      %1101 = vmatprep.mubr.f32.mxu0 0.0
      %1102 = vmatmul.mubr.f32.gmra.mxu0 %v997
      %v1103 = vpop.f32.mrf.mxu0
      %v1104 = vadd.f32 0.0, %v1103
      %v1105 = vpop.f32.mrf.mxu0
      %1106 = vmatprep.mubr.f32.mxu0 0.0
      %1107 = vmatmul.mubr.f32.gmra.mxu0 %v998
      %v1108 = vpop.f32.mrf.mxu0
      %v1109 = vadd.f32 0.0, %v1108
      %v1110 = vpop.f32.mrf.mxu0
      %1111 = vmatprep.mubr.f32.mxu0 0.0
      %1112 = vmatmul.mubr.f32.gmra.mxu0 %v999
      %v1113 = vpop.f32.mrf.mxu0
      %v1114 = vadd.f32 0.0, %v1113
      %v1115 = vpop.f32.mrf.mxu0
      %1116 = vmatprep.mubr.f32.mxu0 0.0
      %1117 = vmatmul.mubr.f32.gmra.mxu0 %v1000
      %v1118 = vpop.f32.mrf.mxu0
      %v1119 = vadd.f32 0.0, %v1118
      %v1120 = vpop.f32.mrf.mxu0
      %1121 = vmatprep.mubr.f32.mxu0 0.0
      %1122 = vmatmul.mubr.f32.gmra.mxu0 %v1001
      %v1123 = vpop.f32.mrf.mxu0
      %v1124 = vadd.f32 0.0, %v1123
      %v1125 = vpop.f32.mrf.mxu0
      %1126 = vmatprep.mubr.f32.mxu0 0.0
      %1127 = vmatmul.mubr.f32.gmra.mxu0 %v1002
      %v1128 = vpop.f32.mrf.mxu0
      %v1129 = vadd.f32 0.0, %v1128
      %v1130 = vpop.f32.mrf.mxu0
      %1131 = vmatprep.mubr.f32.mxu0 0.0
      %1132 = vmatmul.mubr.f32.gmra.mxu0 %v1003
      %v1133 = vpop.f32.mrf.mxu0
      %v1134 = vadd.f32 0.0, %v1133
      %v1135 = vpop.f32.mrf.mxu0
      %1136 = vmatprep.mubr.f32.mxu0 0.0
      %1137 = vmatmul.mubr.f32.gmra.mxu0 %v1004
      %v1138 = vpop.f32.mrf.mxu0
      %v1139 = vadd.f32 0.0, %v1138
      %v1140 = vpop.f32.mrf.mxu0
      %1141 = vmatprep.mubr.f32.mxu0 0.0
      %1142 = vmatmul.mubr.f32.gmra.mxu0 %v1005
      %v1143 = vpop.f32.mrf.mxu0
      %v1144 = vadd.f32 0.0, %v1143
      %v1145 = vpop.f32.mrf.mxu0
      %1146 = vmatprep.mubr.f32.mxu0 0.0
      %1147 = vmatmul.mubr.f32.gmra.mxu0 %v1006
      %v1148 = vpop.f32.mrf.mxu0
      %v1149 = vadd.f32 0.0, %v1148
      %v1150 = vpop.f32.mrf.mxu0
      %1151 = vmatprep.mubr.f32.mxu0 0.0
      %1152 = vmatmul.mubr.f32.gmra.mxu0 %v1007
      %v1153 = vpop.f32.mrf.mxu0
      %v1154 = vadd.f32 0.0, %v1153
      %v1155 = vpop.f32.mrf.mxu0
      %1156 = vmatprep.mubr.f32.mxu0 0.0
      %1157 = vmatmul.mubr.f32.gmra.mxu0 %v1008
      %v1158 = vpop.f32.mrf.mxu0
      %v1159 = vadd.f32 0.0, %v1158
      %v1160 = vpop.f32.mrf.mxu0
      %1161 = vmatprep.mubr.f32.mxu0 0.0
      %1162 = vmatmul.mubr.f32.gmra.mxu0 %v1009
      %v1163 = vpop.f32.mrf.mxu0
      %v1164 = vadd.f32 0.0, %v1163
      %v1165 = vpop.f32.mrf.mxu0
      %1166 = vmatprep.mubr.f32.mxu0 0.0
      %1167 = vmatmul.mubr.f32.gmra.mxu0 %v1010
      %v1168 = vpop.f32.mrf.mxu0
      %v1169 = vadd.f32 0.0, %v1168
      %v1170 = vpop.f32.mrf.mxu0
      %1171 = vdwg.mxu0
      %v1172 = vrot.slane %v1094, 4
      %v1173 = vadd.f32 %v1094, %v1172
      %v1174 = vrot.slane %v1173, 2
      %v1175 = vadd.f32 %v1173, %v1174
      %v1176 = vrot.slane %v1175, 1
      %v1177 = vadd.f32 %v1175, %v1176
      %v1178 = vrot.slane %v1099, 4
      %v1179 = vadd.f32 %v1099, %v1178
      %v1180 = vrot.slane %v1179, 2
      %v1181 = vadd.f32 %v1179, %v1180
      %v1182 = vrot.slane %v1181, 1
      %v1183 = vadd.f32 %v1181, %v1182
      %v1184 = vrot.slane %v1104, 4
      %v1185 = vadd.f32 %v1104, %v1184
      %v1186 = vrot.slane %v1185, 2
      %v1187 = vadd.f32 %v1185, %v1186
      %v1188 = vrot.slane %v1187, 1
      %v1189 = vadd.f32 %v1187, %v1188
      %v1190 = vrot.slane %v1109, 4
      %v1191 = vadd.f32 %v1109, %v1190
      %v1192 = vrot.slane %v1191, 2
      %v1193 = vadd.f32 %v1191, %v1192
      %v1194 = vrot.slane %v1193, 1
      %v1195 = vadd.f32 %v1193, %v1194
      %v1196 = vrot.slane %v1114, 4
      %v1197 = vadd.f32 %v1114, %v1196
      %v1198 = vrot.slane %v1197, 2
      %v1199 = vadd.f32 %v1197, %v1198
      %v1200 = vrot.slane %v1199, 1
      %v1201 = vadd.f32 %v1199, %v1200
      %v1202 = vrot.slane %v1119, 4
      %v1203 = vadd.f32 %v1119, %v1202
      %v1204 = vrot.slane %v1203, 2
      %v1205 = vadd.f32 %v1203, %v1204
      %v1206 = vrot.slane %v1205, 1
      %v1207 = vadd.f32 %v1205, %v1206
      %v1208 = vrot.slane %v1124, 4
      %v1209 = vadd.f32 %v1124, %v1208
      %v1210 = vrot.slane %v1209, 2
      %v1211 = vadd.f32 %v1209, %v1210
      %v1212 = vrot.slane %v1211, 1
      %v1213 = vadd.f32 %v1211, %v1212
      %v1214 = vrot.slane %v1129, 4
      %v1215 = vadd.f32 %v1129, %v1214
      %v1216 = vrot.slane %v1215, 2
      %v1217 = vadd.f32 %v1215, %v1216
      %v1218 = vrot.slane %v1217, 1
      %v1219 = vadd.f32 %v1217, %v1218
      %v1220 = vrot.slane %v1134, 4
      %v1221 = vadd.f32 %v1134, %v1220
      %v1222 = vrot.slane %v1221, 2
      %v1223 = vadd.f32 %v1221, %v1222
      %v1224 = vrot.slane %v1223, 1
      %v1225 = vadd.f32 %v1223, %v1224
      %v1226 = vrot.slane %v1139, 4
      %v1227 = vadd.f32 %v1139, %v1226
      %v1228 = vrot.slane %v1227, 2
      %v1229 = vadd.f32 %v1227, %v1228
      %v1230 = vrot.slane %v1229, 1
      %v1231 = vadd.f32 %v1229, %v1230
      %v1232 = vrot.slane %v1144, 4
      %v1233 = vadd.f32 %v1144, %v1232
      %v1234 = vrot.slane %v1233, 2
      %v1235 = vadd.f32 %v1233, %v1234
      %v1236 = vrot.slane %v1235, 1
      %v1237 = vadd.f32 %v1235, %v1236
      %v1238 = vrot.slane %v1149, 4
      %v1239 = vadd.f32 %v1149, %v1238
      %v1240 = vrot.slane %v1239, 2
      %v1241 = vadd.f32 %v1239, %v1240
      %v1242 = vrot.slane %v1241, 1
      %v1243 = vadd.f32 %v1241, %v1242
      %v1244 = vrot.slane %v1154, 4
      %v1245 = vadd.f32 %v1154, %v1244
      %v1246 = vrot.slane %v1245, 2
      %v1247 = vadd.f32 %v1245, %v1246
      %v1248 = vrot.slane %v1247, 1
      %v1249 = vadd.f32 %v1247, %v1248
      %v1250 = vrot.slane %v1159, 4
      %v1251 = vadd.f32 %v1159, %v1250
      %v1252 = vrot.slane %v1251, 2
      %v1253 = vadd.f32 %v1251, %v1252
      %v1254 = vrot.slane %v1253, 1
      %v1255 = vadd.f32 %v1253, %v1254
      %v1256 = vrot.slane %v1164, 4
      %v1257 = vadd.f32 %v1164, %v1256
      %v1258 = vrot.slane %v1257, 2
      %v1259 = vadd.f32 %v1257, %v1258
      %v1260 = vrot.slane %v1259, 1
      %v1261 = vadd.f32 %v1259, %v1260
      %v1262 = vrot.slane %v1169, 4
      %v1263 = vadd.f32 %v1169, %v1262
      %v1264 = vrot.slane %v1263, 2
      %v1265 = vadd.f32 %v1263, %v1264
      %v1266 = vrot.slane %v1265, 1
      %v1267 = vadd.f32 %v1265, %v1266
      %v1268 = vmul.f32 %v1094, %v1094
      %v1269 = vmul.f32 %v1099, %v1099
      %v1270 = vmul.f32 %v1104, %v1104
      %v1271 = vmul.f32 %v1109, %v1109
      %v1272 = vmul.f32 %v1114, %v1114
      %v1273 = vmul.f32 %v1119, %v1119
      %v1274 = vmul.f32 %v1124, %v1124
      %v1275 = vmul.f32 %v1129, %v1129
      %v1276 = vmul.f32 %v1134, %v1134
      %v1277 = vmul.f32 %v1139, %v1139
      %v1278 = vmul.f32 %v1144, %v1144
      %v1279 = vmul.f32 %v1149, %v1149
      %v1280 = vmul.f32 %v1154, %v1154
      %v1281 = vmul.f32 %v1159, %v1159
      %v1282 = vmul.f32 %v1164, %v1164
      %v1283 = vmul.f32 %v1169, %v1169
      %v1284 = vrot.slane %v1268, 4
      %v1285 = vadd.f32 %v1268, %v1284
      %v1286 = vrot.slane %v1285, 2
      %v1287 = vadd.f32 %v1285, %v1286
      %v1288 = vrot.slane %v1287, 1
      %v1289 = vadd.f32 %v1287, %v1288
      %v1290 = vrot.slane %v1269, 4
      %v1291 = vadd.f32 %v1269, %v1290
      %v1292 = vrot.slane %v1291, 2
      %v1293 = vadd.f32 %v1291, %v1292
      %v1294 = vrot.slane %v1293, 1
      %v1295 = vadd.f32 %v1293, %v1294
      %v1296 = vrot.slane %v1270, 4
      %v1297 = vadd.f32 %v1270, %v1296
      %v1298 = vrot.slane %v1297, 2
      %v1299 = vadd.f32 %v1297, %v1298
      %v1300 = vrot.slane %v1299, 1
      %v1301 = vadd.f32 %v1299, %v1300
      %v1302 = vrot.slane %v1271, 4
      %v1303 = vadd.f32 %v1271, %v1302
      %v1304 = vrot.slane %v1303, 2
      %v1305 = vadd.f32 %v1303, %v1304
      %v1306 = vrot.slane %v1305, 1
      %v1307 = vadd.f32 %v1305, %v1306
      %v1308 = vrot.slane %v1272, 4
      %v1309 = vadd.f32 %v1272, %v1308
      %v1310 = vrot.slane %v1309, 2
      %v1311 = vadd.f32 %v1309, %v1310
      %v1312 = vrot.slane %v1311, 1
      %v1313 = vadd.f32 %v1311, %v1312
      %v1314 = vrot.slane %v1273, 4
      %v1315 = vadd.f32 %v1273, %v1314
      %v1316 = vrot.slane %v1315, 2
      %v1317 = vadd.f32 %v1315, %v1316
      %v1318 = vrot.slane %v1317, 1
      %v1319 = vadd.f32 %v1317, %v1318
      %v1320 = vrot.slane %v1274, 4
      %v1321 = vadd.f32 %v1274, %v1320
      %v1322 = vrot.slane %v1321, 2
      %v1323 = vadd.f32 %v1321, %v1322
      %v1324 = vrot.slane %v1323, 1
      %v1325 = vadd.f32 %v1323, %v1324
      %v1326 = vrot.slane %v1275, 4
      %v1327 = vadd.f32 %v1275, %v1326
      %v1328 = vrot.slane %v1327, 2
      %v1329 = vadd.f32 %v1327, %v1328
      %v1330 = vrot.slane %v1329, 1
      %v1331 = vadd.f32 %v1329, %v1330
      %v1332 = vrot.slane %v1276, 4
      %v1333 = vadd.f32 %v1276, %v1332
      %v1334 = vrot.slane %v1333, 2
      %v1335 = vadd.f32 %v1333, %v1334
      %v1336 = vrot.slane %v1335, 1
      %v1337 = vadd.f32 %v1335, %v1336
      %v1338 = vrot.slane %v1277, 4
      %v1339 = vadd.f32 %v1277, %v1338
      %v1340 = vrot.slane %v1339, 2
      %v1341 = vadd.f32 %v1339, %v1340
      %v1342 = vrot.slane %v1341, 1
      %v1343 = vadd.f32 %v1341, %v1342
      %v1344 = vrot.slane %v1278, 4
      %v1345 = vadd.f32 %v1278, %v1344
      %v1346 = vrot.slane %v1345, 2
      %v1347 = vadd.f32 %v1345, %v1346
      %v1348 = vrot.slane %v1347, 1
      %v1349 = vadd.f32 %v1347, %v1348
      %v1350 = vrot.slane %v1279, 4
      %v1351 = vadd.f32 %v1279, %v1350
      %v1352 = vrot.slane %v1351, 2
      %v1353 = vadd.f32 %v1351, %v1352
      %v1354 = vrot.slane %v1353, 1
      %v1355 = vadd.f32 %v1353, %v1354
      %v1356 = vrot.slane %v1280, 4
      %v1357 = vadd.f32 %v1280, %v1356
      %v1358 = vrot.slane %v1357, 2
      %v1359 = vadd.f32 %v1357, %v1358
      %v1360 = vrot.slane %v1359, 1
      %v1361 = vadd.f32 %v1359, %v1360
      %v1362 = vrot.slane %v1281, 4
      %v1363 = vadd.f32 %v1281, %v1362
      %v1364 = vrot.slane %v1363, 2
      %v1365 = vadd.f32 %v1363, %v1364
      %v1366 = vrot.slane %v1365, 1
      %v1367 = vadd.f32 %v1365, %v1366
      %v1368 = vrot.slane %v1282, 4
      %v1369 = vadd.f32 %v1282, %v1368
      %v1370 = vrot.slane %v1369, 2
      %v1371 = vadd.f32 %v1369, %v1370
      %v1372 = vrot.slane %v1371, 1
      %v1373 = vadd.f32 %v1371, %v1372
      %v1374 = vrot.slane %v1283, 4
      %v1375 = vadd.f32 %v1283, %v1374
      %v1376 = vrot.slane %v1375, 2
      %v1377 = vadd.f32 %v1375, %v1376
      %v1378 = vrot.slane %v1377, 1
      %v1379 = vadd.f32 %v1377, %v1378
      %v1380 = vmul.f32 %v1289, 8.0
      %v1381 = vmul.f32 %v1295, 8.0
      %v1382 = vmul.f32 %v1301, 8.0
      %v1383 = vmul.f32 %v1307, 8.0
      %v1384 = vmul.f32 %v1313, 8.0
      %v1385 = vmul.f32 %v1319, 8.0
      %v1386 = vmul.f32 %v1325, 8.0
      %v1387 = vmul.f32 %v1331, 8.0
      %v1388 = vmul.f32 %v1337, 8.0
      %v1389 = vmul.f32 %v1343, 8.0
      %v1390 = vmul.f32 %v1349, 8.0
      %v1391 = vmul.f32 %v1355, 8.0
      %v1392 = vmul.f32 %v1361, 8.0
      %v1393 = vmul.f32 %v1367, 8.0
      %v1394 = vmul.f32 %v1373, 8.0
      %v1395 = vmul.f32 %v1379, 8.0
      %v1396 = vmul.f32 %v1177, %v1177
      %v1397 = vmul.f32 %v1183, %v1183
      %v1398 = vmul.f32 %v1189, %v1189
      %v1399 = vmul.f32 %v1195, %v1195
      %v1400 = vmul.f32 %v1201, %v1201
      %v1401 = vmul.f32 %v1207, %v1207
      %v1402 = vmul.f32 %v1213, %v1213
      %v1403 = vmul.f32 %v1219, %v1219
      %v1404 = vmul.f32 %v1225, %v1225
      %v1405 = vmul.f32 %v1231, %v1231
      %v1406 = vmul.f32 %v1237, %v1237
      %v1407 = vmul.f32 %v1243, %v1243
      %v1408 = vmul.f32 %v1249, %v1249
      %v1409 = vmul.f32 %v1255, %v1255
      %v1410 = vmul.f32 %v1261, %v1261
      %v1411 = vmul.f32 %v1267, %v1267
      %v1412 = vsub.f32 %v1380, %v1396
      %v1413 = vsub.f32 %v1381, %v1397
      %v1414 = vsub.f32 %v1382, %v1398
      %v1415 = vsub.f32 %v1383, %v1399
      %v1416 = vsub.f32 %v1384, %v1400
      %v1417 = vsub.f32 %v1385, %v1401
      %v1418 = vsub.f32 %v1386, %v1402
      %v1419 = vsub.f32 %v1387, %v1403
      %v1420 = vsub.f32 %v1388, %v1404
      %v1421 = vsub.f32 %v1389, %v1405
      %v1422 = vsub.f32 %v1390, %v1406
      %v1423 = vsub.f32 %v1391, %v1407
      %v1424 = vsub.f32 %v1392, %v1408
      %v1425 = vsub.f32 %v1393, %v1409
      %v1426 = vsub.f32 %v1394, %v1410
      %v1427 = vsub.f32 %v1395, %v1411
      %v1428 = vmax.f32 %v1412, 0.0
      %v1429 = vmax.f32 %v1413, 0.0
      %v1430 = vmax.f32 %v1414, 0.0
      %v1431 = vmax.f32 %v1415, 0.0
      %v1432 = vmax.f32 %v1416, 0.0
      %v1433 = vmax.f32 %v1417, 0.0
      %v1434 = vmax.f32 %v1418, 0.0
      %v1435 = vmax.f32 %v1419, 0.0
      %v1436 = vmax.f32 %v1420, 0.0
      %v1437 = vmax.f32 %v1421, 0.0
      %v1438 = vmax.f32 %v1422, 0.0
      %v1439 = vmax.f32 %v1423, 0.0
      %v1440 = vmax.f32 %v1424, 0.0
      %v1441 = vmax.f32 %v1425, 0.0
      %v1442 = vmax.f32 %v1426, 0.0
      %v1443 = vmax.f32 %v1427, 0.0
      %v1444 = vadd.f32 %v1428, 0.00064
      %v1445 = vadd.f32 %v1429, 0.00064
      %v1446 = vadd.f32 %v1430, 0.00064
      %v1447 = vadd.f32 %v1431, 0.00064
      %v1448 = vadd.f32 %v1432, 0.00064
      %v1449 = vadd.f32 %v1433, 0.00064
      %v1450 = vadd.f32 %v1434, 0.00064
      %v1451 = vadd.f32 %v1435, 0.00064
      %v1452 = vadd.f32 %v1436, 0.00064
      %v1453 = vadd.f32 %v1437, 0.00064
      %v1454 = vadd.f32 %v1438, 0.00064
      %v1455 = vadd.f32 %v1439, 0.00064
      %v1456 = vadd.f32 %v1440, 0.00064
      %v1457 = vadd.f32 %v1441, 0.00064
      %v1458 = vadd.f32 %v1442, 0.00064
      %v1459 = vadd.f32 %v1443, 0.00064
      %v1460 = vrsqrt.pop %v1444
      %v1461 = vrsqrt.pop %v1445
      %v1462 = vrsqrt.pop %v1446
      %v1463 = vrsqrt.pop %v1447
      %v1464 = vrsqrt.pop %v1448
      %v1465 = vrsqrt.pop %v1449
      %v1466 = vrsqrt.pop %v1450
      %v1467 = vrsqrt.pop %v1451
      %v1468 = vrsqrt.pop %v1452
      %v1469 = vrsqrt.pop %v1453
      %v1470 = vrsqrt.pop %v1454
      %v1471 = vrsqrt.pop %v1455
      %v1472 = vrsqrt.pop %v1456
      %v1473 = vrsqrt.pop %v1457
      %v1474 = vrsqrt.pop %v1458
      %v1475 = vrsqrt.pop %v1459
      %v1476 = vld [vmem:[%s3 + $0x1] sm:$0x1]
      %v1477 = vmul.f32 %v1476, %v1460
      %v1478 = vmul.f32 %v1476, %v1461
      %v1479 = vmul.f32 %v1476, %v1462
      %v1480 = vmul.f32 %v1476, %v1463
      %v1481 = vmul.f32 %v1476, %v1464
      %v1482 = vmul.f32 %v1476, %v1465
      %v1483 = vmul.f32 %v1476, %v1466
      %v1484 = vmul.f32 %v1476, %v1467
      %v1485 = vmul.f32 %v1476, %v1468
      %v1486 = vmul.f32 %v1476, %v1469
      %v1487 = vmul.f32 %v1476, %v1470
      %v1488 = vmul.f32 %v1476, %v1471
      %v1489 = vmul.f32 %v1476, %v1472
      %v1490 = vmul.f32 %v1476, %v1473
      %v1491 = vmul.f32 %v1476, %v1474
      %v1492 = vmul.f32 %v1476, %v1475
      %v1493 = vmul.f32 %v1477, 8.0
      %v1494 = vmul.f32 %v1478, 8.0
      %v1495 = vmul.f32 %v1479, 8.0
      %v1496 = vmul.f32 %v1480, 8.0
      %v1497 = vmul.f32 %v1481, 8.0
      %v1498 = vmul.f32 %v1482, 8.0
      %v1499 = vmul.f32 %v1483, 8.0
      %v1500 = vmul.f32 %v1484, 8.0
      %v1501 = vmul.f32 %v1485, 8.0
      %v1502 = vmul.f32 %v1486, 8.0
      %v1503 = vmul.f32 %v1487, 8.0
      %v1504 = vmul.f32 %v1488, 8.0
      %v1505 = vmul.f32 %v1489, 8.0
      %v1506 = vmul.f32 %v1490, 8.0
      %v1507 = vmul.f32 %v1491, 8.0
      %v1508 = vmul.f32 %v1492, 8.0
      %v1509 = vld [vmem:[%s4 + $0x1] sm:$0x1]
      %v1510 = vmul.f32 %v1177, %v1477
      %v1511 = vmul.f32 %v1183, %v1478
      %v1512 = vmul.f32 %v1189, %v1479
      %v1513 = vmul.f32 %v1195, %v1480
      %v1514 = vmul.f32 %v1201, %v1481
      %v1515 = vmul.f32 %v1207, %v1482
      %v1516 = vmul.f32 %v1213, %v1483
      %v1517 = vmul.f32 %v1219, %v1484
      %v1518 = vmul.f32 %v1225, %v1485
      %v1519 = vmul.f32 %v1231, %v1486
      %v1520 = vmul.f32 %v1237, %v1487
      %v1521 = vmul.f32 %v1243, %v1488
      %v1522 = vmul.f32 %v1249, %v1489
      %v1523 = vmul.f32 %v1255, %v1490
      %v1524 = vmul.f32 %v1261, %v1491
      %v1525 = vmul.f32 %v1267, %v1492
      %v1526 = vsub.f32 %v1509, %v1510
      %v1527 = vsub.f32 %v1509, %v1511
      %v1528 = vsub.f32 %v1509, %v1512
      %v1529 = vsub.f32 %v1509, %v1513
      %v1530 = vsub.f32 %v1509, %v1514
      %v1531 = vsub.f32 %v1509, %v1515
      %v1532 = vsub.f32 %v1509, %v1516
      %v1533 = vsub.f32 %v1509, %v1517
      %v1534 = vsub.f32 %v1509, %v1518
      %v1535 = vsub.f32 %v1509, %v1519
      %v1536 = vsub.f32 %v1509, %v1520
      %v1537 = vsub.f32 %v1509, %v1521
      %v1538 = vsub.f32 %v1509, %v1522
      %v1539 = vsub.f32 %v1509, %v1523
      %v1540 = vsub.f32 %v1509, %v1524
      %v1541 = vsub.f32 %v1509, %v1525
      %v1542 = vlaneseq
      %v1543 = vshrl.u32 %v1542, 7
      %v1544 = vsub.s32 0, %v1543
      %v1545 = vrot.slane %v1493, %v1544
      %v1546 = vlaneseq
      %v1547 = vshrl.u32 %v1546, 7
      %v1548 = vsub.s32 0, %v1547
      %v1549 = vrot.slane %v1494, %v1548
      %v1550 = vlaneseq
      %v1551 = vshrl.u32 %v1550, 7
      %v1552 = vsub.s32 0, %v1551
      %v1553 = vrot.slane %v1495, %v1552
      %v1554 = vlaneseq
      %v1555 = vshrl.u32 %v1554, 7
      %v1556 = vsub.s32 0, %v1555
      %v1557 = vrot.slane %v1496, %v1556
      %v1558 = vlaneseq
      %v1559 = vshrl.u32 %v1558, 7
      %v1560 = vsub.s32 0, %v1559
      %v1561 = vrot.slane %v1497, %v1560
      %v1562 = vlaneseq
      %v1563 = vshrl.u32 %v1562, 7
      %v1564 = vsub.s32 0, %v1563
      %v1565 = vrot.slane %v1498, %v1564
      %v1566 = vlaneseq
      %v1567 = vshrl.u32 %v1566, 7
      %v1568 = vsub.s32 0, %v1567
      %v1569 = vrot.slane %v1499, %v1568
      %v1570 = vlaneseq
      %v1571 = vshrl.u32 %v1570, 7
      %v1572 = vsub.s32 0, %v1571
      %v1573 = vrot.slane %v1500, %v1572
      %v1574 = vlaneseq
      %v1575 = vshrl.u32 %v1574, 7
      %v1576 = vsub.s32 0, %v1575
      %v1577 = vrot.slane %v1501, %v1576
      %v1578 = vlaneseq
      %v1579 = vshrl.u32 %v1578, 7
      %v1580 = vsub.s32 0, %v1579
      %v1581 = vrot.slane %v1502, %v1580
      %v1582 = vlaneseq
      %v1583 = vshrl.u32 %v1582, 7
      %v1584 = vsub.s32 0, %v1583
      %v1585 = vrot.slane %v1503, %v1584
      %v1586 = vlaneseq
      %v1587 = vshrl.u32 %v1586, 7
      %v1588 = vsub.s32 0, %v1587
      %v1589 = vrot.slane %v1504, %v1588
      %v1590 = vlaneseq
      %v1591 = vshrl.u32 %v1590, 7
      %v1592 = vsub.s32 0, %v1591
      %v1593 = vrot.slane %v1505, %v1592
      %v1594 = vlaneseq
      %v1595 = vshrl.u32 %v1594, 7
      %v1596 = vsub.s32 0, %v1595
      %v1597 = vrot.slane %v1506, %v1596
      %v1598 = vlaneseq
      %v1599 = vshrl.u32 %v1598, 7
      %v1600 = vsub.s32 0, %v1599
      %v1601 = vrot.slane %v1507, %v1600
      %v1602 = vlaneseq
      %v1603 = vshrl.u32 %v1602, 7
      %v1604 = vsub.s32 0, %v1603
      %v1605 = vrot.slane %v1508, %v1604
      %v1606 = vmul.f32 %v1094, %v1545
      %v1607 = vmul.f32 %v1099, %v1549
      %v1608 = vmul.f32 %v1104, %v1553
      %v1609 = vmul.f32 %v1109, %v1557
      %v1610 = vmul.f32 %v1114, %v1561
      %v1611 = vmul.f32 %v1119, %v1565
      %v1612 = vmul.f32 %v1124, %v1569
      %v1613 = vmul.f32 %v1129, %v1573
      %v1614 = vmul.f32 %v1134, %v1577
      %v1615 = vmul.f32 %v1139, %v1581
      %v1616 = vmul.f32 %v1144, %v1585
      %v1617 = vmul.f32 %v1149, %v1589
      %v1618 = vmul.f32 %v1154, %v1593
      %v1619 = vmul.f32 %v1159, %v1597
      %v1620 = vmul.f32 %v1164, %v1601
      %v1621 = vmul.f32 %v1169, %v1605
      %v1622 = vlaneseq
      %v1623 = vshrl.u32 %v1622, 7
      %v1624 = vsub.s32 0, %v1623
      %v1625 = vrot.slane %v1526, %v1624
      %v1626 = vlaneseq
      %v1627 = vshrl.u32 %v1626, 7
      %v1628 = vsub.s32 0, %v1627
      %v1629 = vrot.slane %v1527, %v1628
      %v1630 = vlaneseq
      %v1631 = vshrl.u32 %v1630, 7
      %v1632 = vsub.s32 0, %v1631
      %v1633 = vrot.slane %v1528, %v1632
      %v1634 = vlaneseq
      %v1635 = vshrl.u32 %v1634, 7
      %v1636 = vsub.s32 0, %v1635
      %v1637 = vrot.slane %v1529, %v1636
      %v1638 = vlaneseq
      %v1639 = vshrl.u32 %v1638, 7
      %v1640 = vsub.s32 0, %v1639
      %v1641 = vrot.slane %v1530, %v1640
      %v1642 = vlaneseq
      %v1643 = vshrl.u32 %v1642, 7
      %v1644 = vsub.s32 0, %v1643
      %v1645 = vrot.slane %v1531, %v1644
      %v1646 = vlaneseq
      %v1647 = vshrl.u32 %v1646, 7
      %v1648 = vsub.s32 0, %v1647
      %v1649 = vrot.slane %v1532, %v1648
      %v1650 = vlaneseq
      %v1651 = vshrl.u32 %v1650, 7
      %v1652 = vsub.s32 0, %v1651
      %v1653 = vrot.slane %v1533, %v1652
      %v1654 = vlaneseq
      %v1655 = vshrl.u32 %v1654, 7
      %v1656 = vsub.s32 0, %v1655
      %v1657 = vrot.slane %v1534, %v1656
      %v1658 = vlaneseq
      %v1659 = vshrl.u32 %v1658, 7
      %v1660 = vsub.s32 0, %v1659
      %v1661 = vrot.slane %v1535, %v1660
      %v1662 = vlaneseq
      %v1663 = vshrl.u32 %v1662, 7
      %v1664 = vsub.s32 0, %v1663
      %v1665 = vrot.slane %v1536, %v1664
      %v1666 = vlaneseq
      %v1667 = vshrl.u32 %v1666, 7
      %v1668 = vsub.s32 0, %v1667
      %v1669 = vrot.slane %v1537, %v1668
      %v1670 = vlaneseq
      %v1671 = vshrl.u32 %v1670, 7
      %v1672 = vsub.s32 0, %v1671
      %v1673 = vrot.slane %v1538, %v1672
      %v1674 = vlaneseq
      %v1675 = vshrl.u32 %v1674, 7
      %v1676 = vsub.s32 0, %v1675
      %v1677 = vrot.slane %v1539, %v1676
      %v1678 = vlaneseq
      %v1679 = vshrl.u32 %v1678, 7
      %v1680 = vsub.s32 0, %v1679
      %v1681 = vrot.slane %v1540, %v1680
      %v1682 = vlaneseq
      %v1683 = vshrl.u32 %v1682, 7
      %v1684 = vsub.s32 0, %v1683
      %v1685 = vrot.slane %v1541, %v1684
      %v1686 = vadd.f32 %v1606, %v1625
      %v1687 = vadd.f32 %v1607, %v1629
      %v1688 = vadd.f32 %v1608, %v1633
      %v1689 = vadd.f32 %v1609, %v1637
      %v1690 = vadd.f32 %v1610, %v1641
      %v1691 = vadd.f32 %v1611, %v1645
      %v1692 = vadd.f32 %v1612, %v1649
      %v1693 = vadd.f32 %v1613, %v1653
      %v1694 = vadd.f32 %v1614, %v1657
      %v1695 = vadd.f32 %v1615, %v1661
      %v1696 = vadd.f32 %v1616, %v1665
      %v1697 = vadd.f32 %v1617, %v1669
      %v1698 = vadd.f32 %v1618, %v1673
      %v1699 = vadd.f32 %v1619, %v1677
      %v1700 = vadd.f32 %v1620, %v1681
      %v1701 = vadd.f32 %v1621, %v1685
      %v1702 = vmax.f32 %v1686, 0.0
      %v1703 = vmax.f32 %v1687, 0.0
      %v1704 = vmax.f32 %v1688, 0.0
      %v1705 = vmax.f32 %v1689, 0.0
      %v1706 = vmax.f32 %v1690, 0.0
      %v1707 = vmax.f32 %v1691, 0.0
      %v1708 = vmax.f32 %v1692, 0.0
      %v1709 = vmax.f32 %v1693, 0.0
      %v1710 = vmax.f32 %v1694, 0.0
      %v1711 = vmax.f32 %v1695, 0.0
      %v1712 = vmax.f32 %v1696, 0.0
      %v1713 = vmax.f32 %v1697, 0.0
      %v1714 = vmax.f32 %v1698, 0.0
      %v1715 = vmax.f32 %v1699, 0.0
      %v1716 = vmax.f32 %v1700, 0.0
      %v1717 = vmax.f32 %v1701, 0.0
      %s1718 = scalar_lea.vmem %s2, 128
      %v1719 = vld [vmem:[%s1718] sm:$0xff]
      %v1720 = vld [vmem:[%s1718 + $0x8] sm:$0xff]
      %v1721 = vld [vmem:[%s1718 + $0x10] sm:$0xff]
      %v1722 = vld [vmem:[%s1718 + $0x18] sm:$0xff]
      %v1723 = vld [vmem:[%s1718 + $0x20] sm:$0xff]
      %v1724 = vld [vmem:[%s1718 + $0x28] sm:$0xff]
      %v1725 = vld [vmem:[%s1718 + $0x30] sm:$0xff]
      %v1726 = vld [vmem:[%s1718 + $0x38] sm:$0xff]
      %v1727 = vld [vmem:[%s1718 + $0x40] sm:$0xff]
      %v1728 = vld [vmem:[%s1718 + $0x48] sm:$0xff]
      %v1729 = vld [vmem:[%s1718 + $0x50] sm:$0xff]
      %v1730 = vld [vmem:[%s1718 + $0x58] sm:$0xff]
      %v1731 = vld [vmem:[%s1718 + $0x60] sm:$0xff]
      %v1732 = vld [vmem:[%s1718 + $0x68] sm:$0xff]
      %v1733 = vld [vmem:[%s1718 + $0x70] sm:$0xff]
      %v1734 = vld [vmem:[%s1718 + $0x78] sm:$0xff]
      %1735 = vmatprep.subr.mxu0 0.0
      %1736 = vmatpush1.msra.mxu0 %v1734
      %1737 = vmatprep.subr.mxu0 0.0
      %1738 = vmatpush1.msra.mxu0 %v1733
      %1739 = vmatprep.subr.mxu0 0.0
      %1740 = vmatpush1.msra.mxu0 %v1732
      %1741 = vmatprep.subr.mxu0 0.0
      %1742 = vmatpush1.msra.mxu0 %v1731
      %1743 = vmatprep.subr.mxu0 0.0
      %1744 = vmatpush1.msra.mxu0 %v1730
      %1745 = vmatprep.subr.mxu0 0.0
      %1746 = vmatpush1.msra.mxu0 %v1729
      %1747 = vmatprep.subr.mxu0 0.0
      %1748 = vmatpush1.msra.mxu0 %v1728
      %1749 = vmatprep.subr.mxu0 0.0
      %1750 = vmatpush1.msra.mxu0 %v1727
      %1751 = vmatprep.subr.mxu0 0.0
      %1752 = vmatpush1.msra.mxu0 %v1726
      %1753 = vmatprep.subr.mxu0 0.0
      %1754 = vmatpush1.msra.mxu0 %v1725
      %1755 = vmatprep.subr.mxu0 0.0
      %1756 = vmatpush1.msra.mxu0 %v1724
      %1757 = vmatprep.subr.mxu0 0.0
      %1758 = vmatpush1.msra.mxu0 %v1723
      %1759 = vmatprep.subr.mxu0 0.0
      %1760 = vmatpush1.msra.mxu0 %v1722
      %1761 = vmatprep.subr.mxu0 0.0
      %1762 = vmatpush1.msra.mxu0 %v1721
      %1763 = vmatprep.subr.mxu0 0.0
      %1764 = vmatpush1.msra.mxu0 %v1720
      %1765 = vmatprep.subr.mxu0 0.0
      %1766 = vmatpush1.msra.mxu0 %v1719
      %1767 = vmatprep.subr.mxu0 0.0
      %1768 = vmatpush2.msra.mxu0 0.0
      %1769 = vmatprep.subr.mxu0 0.0
      %1770 = vmatpush2.msra.mxu0 0.0
      %1771 = vmatprep.subr.mxu0 0.0
      %1772 = vmatpush2.msra.mxu0 0.0
      %1773 = vmatprep.subr.mxu0 0.0
      %1774 = vmatpush2.msra.mxu0 0.0
      %1775 = vmatprep.subr.mxu0 0.0
      %1776 = vmatpush2.msra.mxu0 0.0
      %1777 = vmatprep.subr.mxu0 0.0
      %1778 = vmatpush2.msra.mxu0 0.0
      %1779 = vmatprep.subr.mxu0 0.0
      %1780 = vmatpush2.msra.mxu0 0.0
      %1781 = vmatprep.subr.mxu0 0.0
      %1782 = vmatpush2.msra.mxu0 0.0
      %1783 = vmatprep.subr.mxu0 0.0
      %1784 = vmatpush2.msra.mxu0 0.0
      %1785 = vmatprep.subr.mxu0 0.0
      %1786 = vmatpush2.msra.mxu0 0.0
      %1787 = vmatprep.subr.mxu0 0.0
      %1788 = vmatpush2.msra.mxu0 0.0
      %1789 = vmatprep.subr.mxu0 0.0
      %1790 = vmatpush2.msra.mxu0 0.0
      %1791 = vmatprep.subr.mxu0 0.0
      %1792 = vmatpush2.msra.mxu0 0.0
      %1793 = vmatprep.subr.mxu0 0.0
      %1794 = vmatpush2.msra.mxu0 0.0
      %1795 = vmatprep.subr.mxu0 0.0
      %1796 = vmatpush2.msra.mxu0 0.0
      %1797 = vmatprep.subr.mxu0 0.0
      %1798 = vmatpush2.msra.mxu0 0.0
      %1799 = vmatprep.mubr.f32.mxu0 0.0
      %1800 = vmatmul.mubr.f32.gmra.mxu0 %v1702
      %v1801 = vpop.f32.mrf.mxu0
      %v1802 = vadd.f32 0.0, %v1801
      %v1803 = vpop.f32.mrf.mxu0
      %1804 = vmatprep.mubr.f32.mxu0 0.0
      %1805 = vmatmul.mubr.f32.gmra.mxu0 %v1703
      %v1806 = vpop.f32.mrf.mxu0
      %v1807 = vadd.f32 0.0, %v1806
      %v1808 = vpop.f32.mrf.mxu0
      %1809 = vmatprep.mubr.f32.mxu0 0.0
      %1810 = vmatmul.mubr.f32.gmra.mxu0 %v1704
      %v1811 = vpop.f32.mrf.mxu0
      %v1812 = vadd.f32 0.0, %v1811
      %v1813 = vpop.f32.mrf.mxu0
      %1814 = vmatprep.mubr.f32.mxu0 0.0
      %1815 = vmatmul.mubr.f32.gmra.mxu0 %v1705
      %v1816 = vpop.f32.mrf.mxu0
      %v1817 = vadd.f32 0.0, %v1816
      %v1818 = vpop.f32.mrf.mxu0
      %1819 = vmatprep.mubr.f32.mxu0 0.0
      %1820 = vmatmul.mubr.f32.gmra.mxu0 %v1706
      %v1821 = vpop.f32.mrf.mxu0
      %v1822 = vadd.f32 0.0, %v1821
      %v1823 = vpop.f32.mrf.mxu0
      %1824 = vmatprep.mubr.f32.mxu0 0.0
      %1825 = vmatmul.mubr.f32.gmra.mxu0 %v1707
      %v1826 = vpop.f32.mrf.mxu0
      %v1827 = vadd.f32 0.0, %v1826
      %v1828 = vpop.f32.mrf.mxu0
      %1829 = vmatprep.mubr.f32.mxu0 0.0
      %1830 = vmatmul.mubr.f32.gmra.mxu0 %v1708
      %v1831 = vpop.f32.mrf.mxu0
      %v1832 = vadd.f32 0.0, %v1831
      %v1833 = vpop.f32.mrf.mxu0
      %1834 = vmatprep.mubr.f32.mxu0 0.0
      %1835 = vmatmul.mubr.f32.gmra.mxu0 %v1709
      %v1836 = vpop.f32.mrf.mxu0
      %v1837 = vadd.f32 0.0, %v1836
      %v1838 = vpop.f32.mrf.mxu0
      %1839 = vmatprep.mubr.f32.mxu0 0.0
      %1840 = vmatmul.mubr.f32.gmra.mxu0 %v1710
      %v1841 = vpop.f32.mrf.mxu0
      %v1842 = vadd.f32 0.0, %v1841
      %v1843 = vpop.f32.mrf.mxu0
      %1844 = vmatprep.mubr.f32.mxu0 0.0
      %1845 = vmatmul.mubr.f32.gmra.mxu0 %v1711
      %v1846 = vpop.f32.mrf.mxu0
      %v1847 = vadd.f32 0.0, %v1846
      %v1848 = vpop.f32.mrf.mxu0
      %1849 = vmatprep.mubr.f32.mxu0 0.0
      %1850 = vmatmul.mubr.f32.gmra.mxu0 %v1712
      %v1851 = vpop.f32.mrf.mxu0
      %v1852 = vadd.f32 0.0, %v1851
      %v1853 = vpop.f32.mrf.mxu0
      %1854 = vmatprep.mubr.f32.mxu0 0.0
      %1855 = vmatmul.mubr.f32.gmra.mxu0 %v1713
      %v1856 = vpop.f32.mrf.mxu0
      %v1857 = vadd.f32 0.0, %v1856
      %v1858 = vpop.f32.mrf.mxu0
      %1859 = vmatprep.mubr.f32.mxu0 0.0
      %1860 = vmatmul.mubr.f32.gmra.mxu0 %v1714
      %v1861 = vpop.f32.mrf.mxu0
      %v1862 = vadd.f32 0.0, %v1861
      %v1863 = vpop.f32.mrf.mxu0
      %1864 = vmatprep.mubr.f32.mxu0 0.0
      %1865 = vmatmul.mubr.f32.gmra.mxu0 %v1715
      %v1866 = vpop.f32.mrf.mxu0
      %v1867 = vadd.f32 0.0, %v1866
      %v1868 = vpop.f32.mrf.mxu0
      %1869 = vmatprep.mubr.f32.mxu0 0.0
      %1870 = vmatmul.mubr.f32.gmra.mxu0 %v1716
      %v1871 = vpop.f32.mrf.mxu0
      %v1872 = vadd.f32 0.0, %v1871
      %v1873 = vpop.f32.mrf.mxu0
      %1874 = vmatprep.mubr.f32.mxu0 0.0
      %1875 = vmatmul.mubr.f32.gmra.mxu0 %v1717
      %v1876 = vpop.f32.mrf.mxu0
      %v1877 = vadd.f32 0.0, %v1876
      %v1878 = vpop.f32.mrf.mxu0
      %1879 = vdwg.mxu0
      %v1880 = vrot.slane %v1802, 4
      %v1881 = vadd.f32 %v1802, %v1880
      %v1882 = vrot.slane %v1881, 2
      %v1883 = vadd.f32 %v1881, %v1882
      %v1884 = vrot.slane %v1883, 1
      %v1885 = vadd.f32 %v1883, %v1884
      %v1886 = vrot.slane %v1807, 4
      %v1887 = vadd.f32 %v1807, %v1886
      %v1888 = vrot.slane %v1887, 2
      %v1889 = vadd.f32 %v1887, %v1888
      %v1890 = vrot.slane %v1889, 1
      %v1891 = vadd.f32 %v1889, %v1890
      %v1892 = vrot.slane %v1812, 4
      %v1893 = vadd.f32 %v1812, %v1892
      %v1894 = vrot.slane %v1893, 2
      %v1895 = vadd.f32 %v1893, %v1894
      %v1896 = vrot.slane %v1895, 1
      %v1897 = vadd.f32 %v1895, %v1896
      %v1898 = vrot.slane %v1817, 4
      %v1899 = vadd.f32 %v1817, %v1898
      %v1900 = vrot.slane %v1899, 2
      %v1901 = vadd.f32 %v1899, %v1900
      %v1902 = vrot.slane %v1901, 1
      %v1903 = vadd.f32 %v1901, %v1902
      %v1904 = vrot.slane %v1822, 4
      %v1905 = vadd.f32 %v1822, %v1904
      %v1906 = vrot.slane %v1905, 2
      %v1907 = vadd.f32 %v1905, %v1906
      %v1908 = vrot.slane %v1907, 1
      %v1909 = vadd.f32 %v1907, %v1908
      %v1910 = vrot.slane %v1827, 4
      %v1911 = vadd.f32 %v1827, %v1910
      %v1912 = vrot.slane %v1911, 2
      %v1913 = vadd.f32 %v1911, %v1912
      %v1914 = vrot.slane %v1913, 1
      %v1915 = vadd.f32 %v1913, %v1914
      %v1916 = vrot.slane %v1832, 4
      %v1917 = vadd.f32 %v1832, %v1916
      %v1918 = vrot.slane %v1917, 2
      %v1919 = vadd.f32 %v1917, %v1918
      %v1920 = vrot.slane %v1919, 1
      %v1921 = vadd.f32 %v1919, %v1920
      %v1922 = vrot.slane %v1837, 4
      %v1923 = vadd.f32 %v1837, %v1922
      %v1924 = vrot.slane %v1923, 2
      %v1925 = vadd.f32 %v1923, %v1924
      %v1926 = vrot.slane %v1925, 1
      %v1927 = vadd.f32 %v1925, %v1926
      %v1928 = vrot.slane %v1842, 4
      %v1929 = vadd.f32 %v1842, %v1928
      %v1930 = vrot.slane %v1929, 2
      %v1931 = vadd.f32 %v1929, %v1930
      %v1932 = vrot.slane %v1931, 1
      %v1933 = vadd.f32 %v1931, %v1932
      %v1934 = vrot.slane %v1847, 4
      %v1935 = vadd.f32 %v1847, %v1934
      %v1936 = vrot.slane %v1935, 2
      %v1937 = vadd.f32 %v1935, %v1936
      %v1938 = vrot.slane %v1937, 1
      %v1939 = vadd.f32 %v1937, %v1938
      %v1940 = vrot.slane %v1852, 4
      %v1941 = vadd.f32 %v1852, %v1940
      %v1942 = vrot.slane %v1941, 2
      %v1943 = vadd.f32 %v1941, %v1942
      %v1944 = vrot.slane %v1943, 1
      %v1945 = vadd.f32 %v1943, %v1944
      %v1946 = vrot.slane %v1857, 4
      %v1947 = vadd.f32 %v1857, %v1946
      %v1948 = vrot.slane %v1947, 2
      %v1949 = vadd.f32 %v1947, %v1948
      %v1950 = vrot.slane %v1949, 1
      %v1951 = vadd.f32 %v1949, %v1950
      %v1952 = vrot.slane %v1862, 4
      %v1953 = vadd.f32 %v1862, %v1952
      %v1954 = vrot.slane %v1953, 2
      %v1955 = vadd.f32 %v1953, %v1954
      %v1956 = vrot.slane %v1955, 1
      %v1957 = vadd.f32 %v1955, %v1956
      %v1958 = vrot.slane %v1867, 4
      %v1959 = vadd.f32 %v1867, %v1958
      %v1960 = vrot.slane %v1959, 2
      %v1961 = vadd.f32 %v1959, %v1960
      %v1962 = vrot.slane %v1961, 1
      %v1963 = vadd.f32 %v1961, %v1962
      %v1964 = vrot.slane %v1872, 4
      %v1965 = vadd.f32 %v1872, %v1964
      %v1966 = vrot.slane %v1965, 2
      %v1967 = vadd.f32 %v1965, %v1966
      %v1968 = vrot.slane %v1967, 1
      %v1969 = vadd.f32 %v1967, %v1968
      %v1970 = vrot.slane %v1877, 4
      %v1971 = vadd.f32 %v1877, %v1970
      %v1972 = vrot.slane %v1971, 2
      %v1973 = vadd.f32 %v1971, %v1972
      %v1974 = vrot.slane %v1973, 1
      %v1975 = vadd.f32 %v1973, %v1974
      %v1976 = vmul.f32 %v1802, %v1802
      %v1977 = vmul.f32 %v1807, %v1807
      %v1978 = vmul.f32 %v1812, %v1812
      %v1979 = vmul.f32 %v1817, %v1817
      %v1980 = vmul.f32 %v1822, %v1822
      %v1981 = vmul.f32 %v1827, %v1827
      %v1982 = vmul.f32 %v1832, %v1832
      %v1983 = vmul.f32 %v1837, %v1837
      %v1984 = vmul.f32 %v1842, %v1842
      %v1985 = vmul.f32 %v1847, %v1847
      %v1986 = vmul.f32 %v1852, %v1852
      %v1987 = vmul.f32 %v1857, %v1857
      %v1988 = vmul.f32 %v1862, %v1862
      %v1989 = vmul.f32 %v1867, %v1867
      %v1990 = vmul.f32 %v1872, %v1872
      %v1991 = vmul.f32 %v1877, %v1877
      %v1992 = vrot.slane %v1976, 4
      %v1993 = vadd.f32 %v1976, %v1992
      %v1994 = vrot.slane %v1993, 2
      %v1995 = vadd.f32 %v1993, %v1994
      %v1996 = vrot.slane %v1995, 1
      %v1997 = vadd.f32 %v1995, %v1996
      %v1998 = vrot.slane %v1977, 4
      %v1999 = vadd.f32 %v1977, %v1998
      %v2000 = vrot.slane %v1999, 2
      %v2001 = vadd.f32 %v1999, %v2000
      %v2002 = vrot.slane %v2001, 1
      %v2003 = vadd.f32 %v2001, %v2002
      %v2004 = vrot.slane %v1978, 4
      %v2005 = vadd.f32 %v1978, %v2004
      %v2006 = vrot.slane %v2005, 2
      %v2007 = vadd.f32 %v2005, %v2006
      %v2008 = vrot.slane %v2007, 1
      %v2009 = vadd.f32 %v2007, %v2008
      %v2010 = vrot.slane %v1979, 4
      %v2011 = vadd.f32 %v1979, %v2010
      %v2012 = vrot.slane %v2011, 2
      %v2013 = vadd.f32 %v2011, %v2012
      %v2014 = vrot.slane %v2013, 1
      %v2015 = vadd.f32 %v2013, %v2014
      %v2016 = vrot.slane %v1980, 4
      %v2017 = vadd.f32 %v1980, %v2016
      %v2018 = vrot.slane %v2017, 2
      %v2019 = vadd.f32 %v2017, %v2018
      %v2020 = vrot.slane %v2019, 1
      %v2021 = vadd.f32 %v2019, %v2020
      %v2022 = vrot.slane %v1981, 4
      %v2023 = vadd.f32 %v1981, %v2022
      %v2024 = vrot.slane %v2023, 2
      %v2025 = vadd.f32 %v2023, %v2024
      %v2026 = vrot.slane %v2025, 1
      %v2027 = vadd.f32 %v2025, %v2026
      %v2028 = vrot.slane %v1982, 4
      %v2029 = vadd.f32 %v1982, %v2028
      %v2030 = vrot.slane %v2029, 2
      %v2031 = vadd.f32 %v2029, %v2030
      %v2032 = vrot.slane %v2031, 1
      %v2033 = vadd.f32 %v2031, %v2032
      %v2034 = vrot.slane %v1983, 4
      %v2035 = vadd.f32 %v1983, %v2034
      %v2036 = vrot.slane %v2035, 2
      %v2037 = vadd.f32 %v2035, %v2036
      %v2038 = vrot.slane %v2037, 1
      %v2039 = vadd.f32 %v2037, %v2038
      %v2040 = vrot.slane %v1984, 4
      %v2041 = vadd.f32 %v1984, %v2040
      %v2042 = vrot.slane %v2041, 2
      %v2043 = vadd.f32 %v2041, %v2042
      %v2044 = vrot.slane %v2043, 1
      %v2045 = vadd.f32 %v2043, %v2044
      %v2046 = vrot.slane %v1985, 4
      %v2047 = vadd.f32 %v1985, %v2046
      %v2048 = vrot.slane %v2047, 2
      %v2049 = vadd.f32 %v2047, %v2048
      %v2050 = vrot.slane %v2049, 1
      %v2051 = vadd.f32 %v2049, %v2050
      %v2052 = vrot.slane %v1986, 4
      %v2053 = vadd.f32 %v1986, %v2052
      %v2054 = vrot.slane %v2053, 2
      %v2055 = vadd.f32 %v2053, %v2054
      %v2056 = vrot.slane %v2055, 1
      %v2057 = vadd.f32 %v2055, %v2056
      %v2058 = vrot.slane %v1987, 4
      %v2059 = vadd.f32 %v1987, %v2058
      %v2060 = vrot.slane %v2059, 2
      %v2061 = vadd.f32 %v2059, %v2060
      %v2062 = vrot.slane %v2061, 1
      %v2063 = vadd.f32 %v2061, %v2062
      %v2064 = vrot.slane %v1988, 4
      %v2065 = vadd.f32 %v1988, %v2064
      %v2066 = vrot.slane %v2065, 2
      %v2067 = vadd.f32 %v2065, %v2066
      %v2068 = vrot.slane %v2067, 1
      %v2069 = vadd.f32 %v2067, %v2068
      %v2070 = vrot.slane %v1989, 4
      %v2071 = vadd.f32 %v1989, %v2070
      %v2072 = vrot.slane %v2071, 2
      %v2073 = vadd.f32 %v2071, %v2072
      %v2074 = vrot.slane %v2073, 1
      %v2075 = vadd.f32 %v2073, %v2074
      %v2076 = vrot.slane %v1990, 4
      %v2077 = vadd.f32 %v1990, %v2076
      %v2078 = vrot.slane %v2077, 2
      %v2079 = vadd.f32 %v2077, %v2078
      %v2080 = vrot.slane %v2079, 1
      %v2081 = vadd.f32 %v2079, %v2080
      %v2082 = vrot.slane %v1991, 4
      %v2083 = vadd.f32 %v1991, %v2082
      %v2084 = vrot.slane %v2083, 2
      %v2085 = vadd.f32 %v2083, %v2084
      %v2086 = vrot.slane %v2085, 1
      %v2087 = vadd.f32 %v2085, %v2086
      %v2088 = vmul.f32 %v1997, 8.0
      %v2089 = vmul.f32 %v2003, 8.0
      %v2090 = vmul.f32 %v2009, 8.0
      %v2091 = vmul.f32 %v2015, 8.0
      %v2092 = vmul.f32 %v2021, 8.0
      %v2093 = vmul.f32 %v2027, 8.0
      %v2094 = vmul.f32 %v2033, 8.0
      %v2095 = vmul.f32 %v2039, 8.0
      %v2096 = vmul.f32 %v2045, 8.0
      %v2097 = vmul.f32 %v2051, 8.0
      %v2098 = vmul.f32 %v2057, 8.0
      %v2099 = vmul.f32 %v2063, 8.0
      %v2100 = vmul.f32 %v2069, 8.0
      %v2101 = vmul.f32 %v2075, 8.0
      %v2102 = vmul.f32 %v2081, 8.0
      %v2103 = vmul.f32 %v2087, 8.0
      %v2104 = vmul.f32 %v1885, %v1885
      %v2105 = vmul.f32 %v1891, %v1891
      %v2106 = vmul.f32 %v1897, %v1897
      %v2107 = vmul.f32 %v1903, %v1903
      %v2108 = vmul.f32 %v1909, %v1909
      %v2109 = vmul.f32 %v1915, %v1915
      %v2110 = vmul.f32 %v1921, %v1921
      %v2111 = vmul.f32 %v1927, %v1927
      %v2112 = vmul.f32 %v1933, %v1933
      %v2113 = vmul.f32 %v1939, %v1939
      %v2114 = vmul.f32 %v1945, %v1945
      %v2115 = vmul.f32 %v1951, %v1951
      %v2116 = vmul.f32 %v1957, %v1957
      %v2117 = vmul.f32 %v1963, %v1963
      %v2118 = vmul.f32 %v1969, %v1969
      %v2119 = vmul.f32 %v1975, %v1975
      %v2120 = vsub.f32 %v2088, %v2104
      %v2121 = vsub.f32 %v2089, %v2105
      %v2122 = vsub.f32 %v2090, %v2106
      %v2123 = vsub.f32 %v2091, %v2107
      %v2124 = vsub.f32 %v2092, %v2108
      %v2125 = vsub.f32 %v2093, %v2109
      %v2126 = vsub.f32 %v2094, %v2110
      %v2127 = vsub.f32 %v2095, %v2111
      %v2128 = vsub.f32 %v2096, %v2112
      %v2129 = vsub.f32 %v2097, %v2113
      %v2130 = vsub.f32 %v2098, %v2114
      %v2131 = vsub.f32 %v2099, %v2115
      %v2132 = vsub.f32 %v2100, %v2116
      %v2133 = vsub.f32 %v2101, %v2117
      %v2134 = vsub.f32 %v2102, %v2118
      %v2135 = vsub.f32 %v2103, %v2119
      %v2136 = vmax.f32 %v2120, 0.0
      %v2137 = vmax.f32 %v2121, 0.0
      %v2138 = vmax.f32 %v2122, 0.0
      %v2139 = vmax.f32 %v2123, 0.0
      %v2140 = vmax.f32 %v2124, 0.0
      %v2141 = vmax.f32 %v2125, 0.0
      %v2142 = vmax.f32 %v2126, 0.0
      %v2143 = vmax.f32 %v2127, 0.0
      %v2144 = vmax.f32 %v2128, 0.0
      %v2145 = vmax.f32 %v2129, 0.0
      %v2146 = vmax.f32 %v2130, 0.0
      %v2147 = vmax.f32 %v2131, 0.0
      %v2148 = vmax.f32 %v2132, 0.0
      %v2149 = vmax.f32 %v2133, 0.0
      %v2150 = vmax.f32 %v2134, 0.0
      %v2151 = vmax.f32 %v2135, 0.0
      %v2152 = vadd.f32 %v2136, 0.00064
      %v2153 = vadd.f32 %v2137, 0.00064
      %v2154 = vadd.f32 %v2138, 0.00064
      %v2155 = vadd.f32 %v2139, 0.00064
      %v2156 = vadd.f32 %v2140, 0.00064
      %v2157 = vadd.f32 %v2141, 0.00064
      %v2158 = vadd.f32 %v2142, 0.00064
      %v2159 = vadd.f32 %v2143, 0.00064
      %v2160 = vadd.f32 %v2144, 0.00064
      %v2161 = vadd.f32 %v2145, 0.00064
      %v2162 = vadd.f32 %v2146, 0.00064
      %v2163 = vadd.f32 %v2147, 0.00064
      %v2164 = vadd.f32 %v2148, 0.00064
      %v2165 = vadd.f32 %v2149, 0.00064
      %v2166 = vadd.f32 %v2150, 0.00064
      %v2167 = vadd.f32 %v2151, 0.00064
      %v2168 = vrsqrt.pop %v2152
      %v2169 = vrsqrt.pop %v2153
      %v2170 = vrsqrt.pop %v2154
      %v2171 = vrsqrt.pop %v2155
      %v2172 = vrsqrt.pop %v2156
      %v2173 = vrsqrt.pop %v2157
      %v2174 = vrsqrt.pop %v2158
      %v2175 = vrsqrt.pop %v2159
      %v2176 = vrsqrt.pop %v2160
      %v2177 = vrsqrt.pop %v2161
      %v2178 = vrsqrt.pop %v2162
      %v2179 = vrsqrt.pop %v2163
      %v2180 = vrsqrt.pop %v2164
      %v2181 = vrsqrt.pop %v2165
      %v2182 = vrsqrt.pop %v2166
      %v2183 = vrsqrt.pop %v2167
      %v2184 = vld [vmem:[%s3 + $0x2] sm:$0x1]
      %v2185 = vmul.f32 %v2184, %v2168
      %v2186 = vmul.f32 %v2184, %v2169
      %v2187 = vmul.f32 %v2184, %v2170
      %v2188 = vmul.f32 %v2184, %v2171
      %v2189 = vmul.f32 %v2184, %v2172
      %v2190 = vmul.f32 %v2184, %v2173
      %v2191 = vmul.f32 %v2184, %v2174
      %v2192 = vmul.f32 %v2184, %v2175
      %v2193 = vmul.f32 %v2184, %v2176
      %v2194 = vmul.f32 %v2184, %v2177
      %v2195 = vmul.f32 %v2184, %v2178
      %v2196 = vmul.f32 %v2184, %v2179
      %v2197 = vmul.f32 %v2184, %v2180
      %v2198 = vmul.f32 %v2184, %v2181
      %v2199 = vmul.f32 %v2184, %v2182
      %v2200 = vmul.f32 %v2184, %v2183
      %v2201 = vmul.f32 %v2185, 8.0
      %v2202 = vmul.f32 %v2186, 8.0
      %v2203 = vmul.f32 %v2187, 8.0
      %v2204 = vmul.f32 %v2188, 8.0
      %v2205 = vmul.f32 %v2189, 8.0
      %v2206 = vmul.f32 %v2190, 8.0
      %v2207 = vmul.f32 %v2191, 8.0
      %v2208 = vmul.f32 %v2192, 8.0
      %v2209 = vmul.f32 %v2193, 8.0
      %v2210 = vmul.f32 %v2194, 8.0
      %v2211 = vmul.f32 %v2195, 8.0
      %v2212 = vmul.f32 %v2196, 8.0
      %v2213 = vmul.f32 %v2197, 8.0
      %v2214 = vmul.f32 %v2198, 8.0
      %v2215 = vmul.f32 %v2199, 8.0
      %v2216 = vmul.f32 %v2200, 8.0
      %v2217 = vld [vmem:[%s4 + $0x2] sm:$0x1]
      %v2218 = vmul.f32 %v1885, %v2185
      %v2219 = vmul.f32 %v1891, %v2186
      %v2220 = vmul.f32 %v1897, %v2187
      %v2221 = vmul.f32 %v1903, %v2188
      %v2222 = vmul.f32 %v1909, %v2189
      %v2223 = vmul.f32 %v1915, %v2190
      %v2224 = vmul.f32 %v1921, %v2191
      %v2225 = vmul.f32 %v1927, %v2192
      %v2226 = vmul.f32 %v1933, %v2193
      %v2227 = vmul.f32 %v1939, %v2194
      %v2228 = vmul.f32 %v1945, %v2195
      %v2229 = vmul.f32 %v1951, %v2196
      %v2230 = vmul.f32 %v1957, %v2197
      %v2231 = vmul.f32 %v1963, %v2198
      %v2232 = vmul.f32 %v1969, %v2199
      %v2233 = vmul.f32 %v1975, %v2200
      %v2234 = vsub.f32 %v2217, %v2218
      %v2235 = vsub.f32 %v2217, %v2219
      %v2236 = vsub.f32 %v2217, %v2220
      %v2237 = vsub.f32 %v2217, %v2221
      %v2238 = vsub.f32 %v2217, %v2222
      %v2239 = vsub.f32 %v2217, %v2223
      %v2240 = vsub.f32 %v2217, %v2224
      %v2241 = vsub.f32 %v2217, %v2225
      %v2242 = vsub.f32 %v2217, %v2226
      %v2243 = vsub.f32 %v2217, %v2227
      %v2244 = vsub.f32 %v2217, %v2228
      %v2245 = vsub.f32 %v2217, %v2229
      %v2246 = vsub.f32 %v2217, %v2230
      %v2247 = vsub.f32 %v2217, %v2231
      %v2248 = vsub.f32 %v2217, %v2232
      %v2249 = vsub.f32 %v2217, %v2233
      %v2250 = vlaneseq
      %v2251 = vshrl.u32 %v2250, 7
      %v2252 = vsub.s32 0, %v2251
      %v2253 = vrot.slane %v2201, %v2252
      %v2254 = vlaneseq
      %v2255 = vshrl.u32 %v2254, 7
      %v2256 = vsub.s32 0, %v2255
      %v2257 = vrot.slane %v2202, %v2256
      %v2258 = vlaneseq
      %v2259 = vshrl.u32 %v2258, 7
      %v2260 = vsub.s32 0, %v2259
      %v2261 = vrot.slane %v2203, %v2260
      %v2262 = vlaneseq
      %v2263 = vshrl.u32 %v2262, 7
      %v2264 = vsub.s32 0, %v2263
      %v2265 = vrot.slane %v2204, %v2264
      %v2266 = vlaneseq
      %v2267 = vshrl.u32 %v2266, 7
      %v2268 = vsub.s32 0, %v2267
      %v2269 = vrot.slane %v2205, %v2268
      %v2270 = vlaneseq
      %v2271 = vshrl.u32 %v2270, 7
      %v2272 = vsub.s32 0, %v2271
      %v2273 = vrot.slane %v2206, %v2272
      %v2274 = vlaneseq
      %v2275 = vshrl.u32 %v2274, 7
      %v2276 = vsub.s32 0, %v2275
      %v2277 = vrot.slane %v2207, %v2276
      %v2278 = vlaneseq
      %v2279 = vshrl.u32 %v2278, 7
      %v2280 = vsub.s32 0, %v2279
      %v2281 = vrot.slane %v2208, %v2280
      %v2282 = vlaneseq
      %v2283 = vshrl.u32 %v2282, 7
      %v2284 = vsub.s32 0, %v2283
      %v2285 = vrot.slane %v2209, %v2284
      %v2286 = vlaneseq
      %v2287 = vshrl.u32 %v2286, 7
      %v2288 = vsub.s32 0, %v2287
      %v2289 = vrot.slane %v2210, %v2288
      %v2290 = vlaneseq
      %v2291 = vshrl.u32 %v2290, 7
      %v2292 = vsub.s32 0, %v2291
      %v2293 = vrot.slane %v2211, %v2292
      %v2294 = vlaneseq
      %v2295 = vshrl.u32 %v2294, 7
      %v2296 = vsub.s32 0, %v2295
      %v2297 = vrot.slane %v2212, %v2296
      %v2298 = vlaneseq
      %v2299 = vshrl.u32 %v2298, 7
      %v2300 = vsub.s32 0, %v2299
      %v2301 = vrot.slane %v2213, %v2300
      %v2302 = vlaneseq
      %v2303 = vshrl.u32 %v2302, 7
      %v2304 = vsub.s32 0, %v2303
      %v2305 = vrot.slane %v2214, %v2304
      %v2306 = vlaneseq
      %v2307 = vshrl.u32 %v2306, 7
      %v2308 = vsub.s32 0, %v2307
      %v2309 = vrot.slane %v2215, %v2308
      %v2310 = vlaneseq
      %v2311 = vshrl.u32 %v2310, 7
      %v2312 = vsub.s32 0, %v2311
      %v2313 = vrot.slane %v2216, %v2312
      %v2314 = vmul.f32 %v1802, %v2253
      %v2315 = vmul.f32 %v1807, %v2257
      %v2316 = vmul.f32 %v1812, %v2261
      %v2317 = vmul.f32 %v1817, %v2265
      %v2318 = vmul.f32 %v1822, %v2269
      %v2319 = vmul.f32 %v1827, %v2273
      %v2320 = vmul.f32 %v1832, %v2277
      %v2321 = vmul.f32 %v1837, %v2281
      %v2322 = vmul.f32 %v1842, %v2285
      %v2323 = vmul.f32 %v1847, %v2289
      %v2324 = vmul.f32 %v1852, %v2293
      %v2325 = vmul.f32 %v1857, %v2297
      %v2326 = vmul.f32 %v1862, %v2301
      %v2327 = vmul.f32 %v1867, %v2305
      %v2328 = vmul.f32 %v1872, %v2309
      %v2329 = vmul.f32 %v1877, %v2313
      %v2330 = vlaneseq
      %v2331 = vshrl.u32 %v2330, 7
      %v2332 = vsub.s32 0, %v2331
      %v2333 = vrot.slane %v2234, %v2332
      %v2334 = vlaneseq
      %v2335 = vshrl.u32 %v2334, 7
      %v2336 = vsub.s32 0, %v2335
      %v2337 = vrot.slane %v2235, %v2336
      %v2338 = vlaneseq
      %v2339 = vshrl.u32 %v2338, 7
      %v2340 = vsub.s32 0, %v2339
      %v2341 = vrot.slane %v2236, %v2340
      %v2342 = vlaneseq
      %v2343 = vshrl.u32 %v2342, 7
      %v2344 = vsub.s32 0, %v2343
      %v2345 = vrot.slane %v2237, %v2344
      %v2346 = vlaneseq
      %v2347 = vshrl.u32 %v2346, 7
      %v2348 = vsub.s32 0, %v2347
      %v2349 = vrot.slane %v2238, %v2348
      %v2350 = vlaneseq
      %v2351 = vshrl.u32 %v2350, 7
      %v2352 = vsub.s32 0, %v2351
      %v2353 = vrot.slane %v2239, %v2352
      %v2354 = vlaneseq
      %v2355 = vshrl.u32 %v2354, 7
      %v2356 = vsub.s32 0, %v2355
      %v2357 = vrot.slane %v2240, %v2356
      %v2358 = vlaneseq
      %v2359 = vshrl.u32 %v2358, 7
      %v2360 = vsub.s32 0, %v2359
      %v2361 = vrot.slane %v2241, %v2360
      %v2362 = vlaneseq
      %v2363 = vshrl.u32 %v2362, 7
      %v2364 = vsub.s32 0, %v2363
      %v2365 = vrot.slane %v2242, %v2364
      %v2366 = vlaneseq
      %v2367 = vshrl.u32 %v2366, 7
      %v2368 = vsub.s32 0, %v2367
      %v2369 = vrot.slane %v2243, %v2368
      %v2370 = vlaneseq
      %v2371 = vshrl.u32 %v2370, 7
      %v2372 = vsub.s32 0, %v2371
      %v2373 = vrot.slane %v2244, %v2372
      %v2374 = vlaneseq
      %v2375 = vshrl.u32 %v2374, 7
      %v2376 = vsub.s32 0, %v2375
      %v2377 = vrot.slane %v2245, %v2376
      %v2378 = vlaneseq
      %v2379 = vshrl.u32 %v2378, 7
      %v2380 = vsub.s32 0, %v2379
      %v2381 = vrot.slane %v2246, %v2380
      %v2382 = vlaneseq
      %v2383 = vshrl.u32 %v2382, 7
      %v2384 = vsub.s32 0, %v2383
      %v2385 = vrot.slane %v2247, %v2384
      %v2386 = vlaneseq
      %v2387 = vshrl.u32 %v2386, 7
      %v2388 = vsub.s32 0, %v2387
      %v2389 = vrot.slane %v2248, %v2388
      %v2390 = vlaneseq
      %v2391 = vshrl.u32 %v2390, 7
      %v2392 = vsub.s32 0, %v2391
      %v2393 = vrot.slane %v2249, %v2392
      %v2394 = vadd.f32 %v2314, %v2333
      %v2395 = vadd.f32 %v2315, %v2337
      %v2396 = vadd.f32 %v2316, %v2341
      %v2397 = vadd.f32 %v2317, %v2345
      %v2398 = vadd.f32 %v2318, %v2349
      %v2399 = vadd.f32 %v2319, %v2353
      %v2400 = vadd.f32 %v2320, %v2357
      %v2401 = vadd.f32 %v2321, %v2361
      %v2402 = vadd.f32 %v2322, %v2365
      %v2403 = vadd.f32 %v2323, %v2369
      %v2404 = vadd.f32 %v2324, %v2373
      %v2405 = vadd.f32 %v2325, %v2377
      %v2406 = vadd.f32 %v2326, %v2381
      %v2407 = vadd.f32 %v2327, %v2385
      %v2408 = vadd.f32 %v2328, %v2389
      %v2409 = vadd.f32 %v2329, %v2393
      %v2410 = vmax.f32 %v2394, 0.0
      %v2411 = vmax.f32 %v2395, 0.0
      %v2412 = vmax.f32 %v2396, 0.0
      %v2413 = vmax.f32 %v2397, 0.0
      %v2414 = vmax.f32 %v2398, 0.0
      %v2415 = vmax.f32 %v2399, 0.0
      %v2416 = vmax.f32 %v2400, 0.0
      %v2417 = vmax.f32 %v2401, 0.0
      %v2418 = vmax.f32 %v2402, 0.0
      %v2419 = vmax.f32 %v2403, 0.0
      %v2420 = vmax.f32 %v2404, 0.0
      %v2421 = vmax.f32 %v2405, 0.0
      %v2422 = vmax.f32 %v2406, 0.0
      %v2423 = vmax.f32 %v2407, 0.0
      %v2424 = vmax.f32 %v2408, 0.0
      %v2425 = vmax.f32 %v2409, 0.0
      %s2426 = scalar_lea.vmem %s2, 256
      %v2427 = vld [vmem:[%s2426] sm:$0xff]
      %v2428 = vld [vmem:[%s2426 + $0x8] sm:$0xff]
      %v2429 = vld [vmem:[%s2426 + $0x10] sm:$0xff]
      %v2430 = vld [vmem:[%s2426 + $0x18] sm:$0xff]
      %v2431 = vld [vmem:[%s2426 + $0x20] sm:$0xff]
      %v2432 = vld [vmem:[%s2426 + $0x28] sm:$0xff]
      %v2433 = vld [vmem:[%s2426 + $0x30] sm:$0xff]
      %v2434 = vld [vmem:[%s2426 + $0x38] sm:$0xff]
      %v2435 = vld [vmem:[%s2426 + $0x40] sm:$0xff]
      %v2436 = vld [vmem:[%s2426 + $0x48] sm:$0xff]
      %v2437 = vld [vmem:[%s2426 + $0x50] sm:$0xff]
      %v2438 = vld [vmem:[%s2426 + $0x58] sm:$0xff]
      %v2439 = vld [vmem:[%s2426 + $0x60] sm:$0xff]
      %v2440 = vld [vmem:[%s2426 + $0x68] sm:$0xff]
      %v2441 = vld [vmem:[%s2426 + $0x70] sm:$0xff]
      %v2442 = vld [vmem:[%s2426 + $0x78] sm:$0xff]
      %2443 = vmatprep.subr.mxu0 0.0
      %2444 = vmatpush1.msra.mxu0 %v2442
      %2445 = vmatprep.subr.mxu0 0.0
      %2446 = vmatpush1.msra.mxu0 %v2441
      %2447 = vmatprep.subr.mxu0 0.0
      %2448 = vmatpush1.msra.mxu0 %v2440
      %2449 = vmatprep.subr.mxu0 0.0
      %2450 = vmatpush1.msra.mxu0 %v2439
      %2451 = vmatprep.subr.mxu0 0.0
      %2452 = vmatpush1.msra.mxu0 %v2438
      %2453 = vmatprep.subr.mxu0 0.0
      %2454 = vmatpush1.msra.mxu0 %v2437
      %2455 = vmatprep.subr.mxu0 0.0
      %2456 = vmatpush1.msra.mxu0 %v2436
      %2457 = vmatprep.subr.mxu0 0.0
      %2458 = vmatpush1.msra.mxu0 %v2435
      %2459 = vmatprep.subr.mxu0 0.0
      %2460 = vmatpush1.msra.mxu0 %v2434
      %2461 = vmatprep.subr.mxu0 0.0
      %2462 = vmatpush1.msra.mxu0 %v2433
      %2463 = vmatprep.subr.mxu0 0.0
      %2464 = vmatpush1.msra.mxu0 %v2432
      %2465 = vmatprep.subr.mxu0 0.0
      %2466 = vmatpush1.msra.mxu0 %v2431
      %2467 = vmatprep.subr.mxu0 0.0
      %2468 = vmatpush1.msra.mxu0 %v2430
      %2469 = vmatprep.subr.mxu0 0.0
      %2470 = vmatpush1.msra.mxu0 %v2429
      %2471 = vmatprep.subr.mxu0 0.0
      %2472 = vmatpush1.msra.mxu0 %v2428
      %2473 = vmatprep.subr.mxu0 0.0
      %2474 = vmatpush1.msra.mxu0 %v2427
      %2475 = vmatprep.subr.mxu0 0.0
      %2476 = vmatpush2.msra.mxu0 0.0
      %2477 = vmatprep.subr.mxu0 0.0
      %2478 = vmatpush2.msra.mxu0 0.0
      %2479 = vmatprep.subr.mxu0 0.0
      %2480 = vmatpush2.msra.mxu0 0.0
      %2481 = vmatprep.subr.mxu0 0.0
      %2482 = vmatpush2.msra.mxu0 0.0
      %2483 = vmatprep.subr.mxu0 0.0
      %2484 = vmatpush2.msra.mxu0 0.0
      %2485 = vmatprep.subr.mxu0 0.0
      %2486 = vmatpush2.msra.mxu0 0.0
      %2487 = vmatprep.subr.mxu0 0.0
      %2488 = vmatpush2.msra.mxu0 0.0
      %2489 = vmatprep.subr.mxu0 0.0
      %2490 = vmatpush2.msra.mxu0 0.0
      %2491 = vmatprep.subr.mxu0 0.0
      %2492 = vmatpush2.msra.mxu0 0.0
      %2493 = vmatprep.subr.mxu0 0.0
      %2494 = vmatpush2.msra.mxu0 0.0
      %2495 = vmatprep.subr.mxu0 0.0
      %2496 = vmatpush2.msra.mxu0 0.0
      %2497 = vmatprep.subr.mxu0 0.0
      %2498 = vmatpush2.msra.mxu0 0.0
      %2499 = vmatprep.subr.mxu0 0.0
      %2500 = vmatpush2.msra.mxu0 0.0
      %2501 = vmatprep.subr.mxu0 0.0
      %2502 = vmatpush2.msra.mxu0 0.0
      %2503 = vmatprep.subr.mxu0 0.0
      %2504 = vmatpush2.msra.mxu0 0.0
      %2505 = vmatprep.subr.mxu0 0.0
      %2506 = vmatpush2.msra.mxu0 0.0
      %2507 = vmatprep.mubr.f32.mxu0 0.0
      %2508 = vmatmul.mubr.f32.gmra.mxu0 %v2410
      %v2509 = vpop.f32.mrf.mxu0
      %v2510 = vadd.f32 0.0, %v2509
      %v2511 = vpop.f32.mrf.mxu0
      %2512 = vmatprep.mubr.f32.mxu0 0.0
      %2513 = vmatmul.mubr.f32.gmra.mxu0 %v2411
      %v2514 = vpop.f32.mrf.mxu0
      %v2515 = vadd.f32 0.0, %v2514
      %v2516 = vpop.f32.mrf.mxu0
      %2517 = vmatprep.mubr.f32.mxu0 0.0
      %2518 = vmatmul.mubr.f32.gmra.mxu0 %v2412
      %v2519 = vpop.f32.mrf.mxu0
      %v2520 = vadd.f32 0.0, %v2519
      %v2521 = vpop.f32.mrf.mxu0
      %2522 = vmatprep.mubr.f32.mxu0 0.0
      %2523 = vmatmul.mubr.f32.gmra.mxu0 %v2413
      %v2524 = vpop.f32.mrf.mxu0
      %v2525 = vadd.f32 0.0, %v2524
      %v2526 = vpop.f32.mrf.mxu0
      %2527 = vmatprep.mubr.f32.mxu0 0.0
      %2528 = vmatmul.mubr.f32.gmra.mxu0 %v2414
      %v2529 = vpop.f32.mrf.mxu0
      %v2530 = vadd.f32 0.0, %v2529
      %v2531 = vpop.f32.mrf.mxu0
      %2532 = vmatprep.mubr.f32.mxu0 0.0
      %2533 = vmatmul.mubr.f32.gmra.mxu0 %v2415
      %v2534 = vpop.f32.mrf.mxu0
      %v2535 = vadd.f32 0.0, %v2534
      %v2536 = vpop.f32.mrf.mxu0
      %2537 = vmatprep.mubr.f32.mxu0 0.0
      %2538 = vmatmul.mubr.f32.gmra.mxu0 %v2416
      %v2539 = vpop.f32.mrf.mxu0
      %v2540 = vadd.f32 0.0, %v2539
      %v2541 = vpop.f32.mrf.mxu0
      %2542 = vmatprep.mubr.f32.mxu0 0.0
      %2543 = vmatmul.mubr.f32.gmra.mxu0 %v2417
      %v2544 = vpop.f32.mrf.mxu0
      %v2545 = vadd.f32 0.0, %v2544
      %v2546 = vpop.f32.mrf.mxu0
      %2547 = vmatprep.mubr.f32.mxu0 0.0
      %2548 = vmatmul.mubr.f32.gmra.mxu0 %v2418
      %v2549 = vpop.f32.mrf.mxu0
      %v2550 = vadd.f32 0.0, %v2549
      %v2551 = vpop.f32.mrf.mxu0
      %2552 = vmatprep.mubr.f32.mxu0 0.0
      %2553 = vmatmul.mubr.f32.gmra.mxu0 %v2419
      %v2554 = vpop.f32.mrf.mxu0
      %v2555 = vadd.f32 0.0, %v2554
      %v2556 = vpop.f32.mrf.mxu0
      %2557 = vmatprep.mubr.f32.mxu0 0.0
      %2558 = vmatmul.mubr.f32.gmra.mxu0 %v2420
      %v2559 = vpop.f32.mrf.mxu0
      %v2560 = vadd.f32 0.0, %v2559
      %v2561 = vpop.f32.mrf.mxu0
      %2562 = vmatprep.mubr.f32.mxu0 0.0
      %2563 = vmatmul.mubr.f32.gmra.mxu0 %v2421
      %v2564 = vpop.f32.mrf.mxu0
      %v2565 = vadd.f32 0.0, %v2564
      %v2566 = vpop.f32.mrf.mxu0
      %2567 = vmatprep.mubr.f32.mxu0 0.0
      %2568 = vmatmul.mubr.f32.gmra.mxu0 %v2422
      %v2569 = vpop.f32.mrf.mxu0
      %v2570 = vadd.f32 0.0, %v2569
      %v2571 = vpop.f32.mrf.mxu0
      %2572 = vmatprep.mubr.f32.mxu0 0.0
      %2573 = vmatmul.mubr.f32.gmra.mxu0 %v2423
      %v2574 = vpop.f32.mrf.mxu0
      %v2575 = vadd.f32 0.0, %v2574
      %v2576 = vpop.f32.mrf.mxu0
      %2577 = vmatprep.mubr.f32.mxu0 0.0
      %2578 = vmatmul.mubr.f32.gmra.mxu0 %v2424
      %v2579 = vpop.f32.mrf.mxu0
      %v2580 = vadd.f32 0.0, %v2579
      %v2581 = vpop.f32.mrf.mxu0
      %2582 = vmatprep.mubr.f32.mxu0 0.0
      %2583 = vmatmul.mubr.f32.gmra.mxu0 %v2425
      %v2584 = vpop.f32.mrf.mxu0
      %v2585 = vadd.f32 0.0, %v2584
      %v2586 = vpop.f32.mrf.mxu0
      %2587 = vdwg.mxu0
      %v2588 = vrot.slane %v2510, 4
      %v2589 = vadd.f32 %v2510, %v2588
      %v2590 = vrot.slane %v2589, 2
      %v2591 = vadd.f32 %v2589, %v2590
      %v2592 = vrot.slane %v2591, 1
      %v2593 = vadd.f32 %v2591, %v2592
      %v2594 = vrot.slane %v2515, 4
      %v2595 = vadd.f32 %v2515, %v2594
      %v2596 = vrot.slane %v2595, 2
      %v2597 = vadd.f32 %v2595, %v2596
      %v2598 = vrot.slane %v2597, 1
      %v2599 = vadd.f32 %v2597, %v2598
      %v2600 = vrot.slane %v2520, 4
      %v2601 = vadd.f32 %v2520, %v2600
      %v2602 = vrot.slane %v2601, 2
      %v2603 = vadd.f32 %v2601, %v2602
      %v2604 = vrot.slane %v2603, 1
      %v2605 = vadd.f32 %v2603, %v2604
      %v2606 = vrot.slane %v2525, 4
      %v2607 = vadd.f32 %v2525, %v2606
      %v2608 = vrot.slane %v2607, 2
      %v2609 = vadd.f32 %v2607, %v2608
      %v2610 = vrot.slane %v2609, 1
      %v2611 = vadd.f32 %v2609, %v2610
      %v2612 = vrot.slane %v2530, 4
      %v2613 = vadd.f32 %v2530, %v2612
      %v2614 = vrot.slane %v2613, 2
      %v2615 = vadd.f32 %v2613, %v2614
      %v2616 = vrot.slane %v2615, 1
      %v2617 = vadd.f32 %v2615, %v2616
      %v2618 = vrot.slane %v2535, 4
      %v2619 = vadd.f32 %v2535, %v2618
      %v2620 = vrot.slane %v2619, 2
      %v2621 = vadd.f32 %v2619, %v2620
      %v2622 = vrot.slane %v2621, 1
      %v2623 = vadd.f32 %v2621, %v2622
      %v2624 = vrot.slane %v2540, 4
      %v2625 = vadd.f32 %v2540, %v2624
      %v2626 = vrot.slane %v2625, 2
      %v2627 = vadd.f32 %v2625, %v2626
      %v2628 = vrot.slane %v2627, 1
      %v2629 = vadd.f32 %v2627, %v2628
      %v2630 = vrot.slane %v2545, 4
      %v2631 = vadd.f32 %v2545, %v2630
      %v2632 = vrot.slane %v2631, 2
      %v2633 = vadd.f32 %v2631, %v2632
      %v2634 = vrot.slane %v2633, 1
      %v2635 = vadd.f32 %v2633, %v2634
      %v2636 = vrot.slane %v2550, 4
      %v2637 = vadd.f32 %v2550, %v2636
      %v2638 = vrot.slane %v2637, 2
      %v2639 = vadd.f32 %v2637, %v2638
      %v2640 = vrot.slane %v2639, 1
      %v2641 = vadd.f32 %v2639, %v2640
      %v2642 = vrot.slane %v2555, 4
      %v2643 = vadd.f32 %v2555, %v2642
      %v2644 = vrot.slane %v2643, 2
      %v2645 = vadd.f32 %v2643, %v2644
      %v2646 = vrot.slane %v2645, 1
      %v2647 = vadd.f32 %v2645, %v2646
      %v2648 = vrot.slane %v2560, 4
      %v2649 = vadd.f32 %v2560, %v2648
      %v2650 = vrot.slane %v2649, 2
      %v2651 = vadd.f32 %v2649, %v2650
      %v2652 = vrot.slane %v2651, 1
      %v2653 = vadd.f32 %v2651, %v2652
      %v2654 = vrot.slane %v2565, 4
      %v2655 = vadd.f32 %v2565, %v2654
      %v2656 = vrot.slane %v2655, 2
      %v2657 = vadd.f32 %v2655, %v2656
      %v2658 = vrot.slane %v2657, 1
      %v2659 = vadd.f32 %v2657, %v2658
      %v2660 = vrot.slane %v2570, 4
      %v2661 = vadd.f32 %v2570, %v2660
      %v2662 = vrot.slane %v2661, 2
      %v2663 = vadd.f32 %v2661, %v2662
      %v2664 = vrot.slane %v2663, 1
      %v2665 = vadd.f32 %v2663, %v2664
      %v2666 = vrot.slane %v2575, 4
      %v2667 = vadd.f32 %v2575, %v2666
      %v2668 = vrot.slane %v2667, 2
      %v2669 = vadd.f32 %v2667, %v2668
      %v2670 = vrot.slane %v2669, 1
      %v2671 = vadd.f32 %v2669, %v2670
      %v2672 = vrot.slane %v2580, 4
      %v2673 = vadd.f32 %v2580, %v2672
      %v2674 = vrot.slane %v2673, 2
      %v2675 = vadd.f32 %v2673, %v2674
      %v2676 = vrot.slane %v2675, 1
      %v2677 = vadd.f32 %v2675, %v2676
      %v2678 = vrot.slane %v2585, 4
      %v2679 = vadd.f32 %v2585, %v2678
      %v2680 = vrot.slane %v2679, 2
      %v2681 = vadd.f32 %v2679, %v2680
      %v2682 = vrot.slane %v2681, 1
      %v2683 = vadd.f32 %v2681, %v2682
      %v2684 = vmul.f32 %v2510, %v2510
      %v2685 = vmul.f32 %v2515, %v2515
      %v2686 = vmul.f32 %v2520, %v2520
      %v2687 = vmul.f32 %v2525, %v2525
      %v2688 = vmul.f32 %v2530, %v2530
      %v2689 = vmul.f32 %v2535, %v2535
      %v2690 = vmul.f32 %v2540, %v2540
      %v2691 = vmul.f32 %v2545, %v2545
      %v2692 = vmul.f32 %v2550, %v2550
      %v2693 = vmul.f32 %v2555, %v2555
      %v2694 = vmul.f32 %v2560, %v2560
      %v2695 = vmul.f32 %v2565, %v2565
      %v2696 = vmul.f32 %v2570, %v2570
      %v2697 = vmul.f32 %v2575, %v2575
      %v2698 = vmul.f32 %v2580, %v2580
      %v2699 = vmul.f32 %v2585, %v2585
      %v2700 = vrot.slane %v2684, 4
      %v2701 = vadd.f32 %v2684, %v2700
      %v2702 = vrot.slane %v2701, 2
      %v2703 = vadd.f32 %v2701, %v2702
      %v2704 = vrot.slane %v2703, 1
      %v2705 = vadd.f32 %v2703, %v2704
      %v2706 = vrot.slane %v2685, 4
      %v2707 = vadd.f32 %v2685, %v2706
      %v2708 = vrot.slane %v2707, 2
      %v2709 = vadd.f32 %v2707, %v2708
      %v2710 = vrot.slane %v2709, 1
      %v2711 = vadd.f32 %v2709, %v2710
      %v2712 = vrot.slane %v2686, 4
      %v2713 = vadd.f32 %v2686, %v2712
      %v2714 = vrot.slane %v2713, 2
      %v2715 = vadd.f32 %v2713, %v2714
      %v2716 = vrot.slane %v2715, 1
      %v2717 = vadd.f32 %v2715, %v2716
      %v2718 = vrot.slane %v2687, 4
      %v2719 = vadd.f32 %v2687, %v2718
      %v2720 = vrot.slane %v2719, 2
      %v2721 = vadd.f32 %v2719, %v2720
      %v2722 = vrot.slane %v2721, 1
      %v2723 = vadd.f32 %v2721, %v2722
      %v2724 = vrot.slane %v2688, 4
      %v2725 = vadd.f32 %v2688, %v2724
      %v2726 = vrot.slane %v2725, 2
      %v2727 = vadd.f32 %v2725, %v2726
      %v2728 = vrot.slane %v2727, 1
      %v2729 = vadd.f32 %v2727, %v2728
      %v2730 = vrot.slane %v2689, 4
      %v2731 = vadd.f32 %v2689, %v2730
      %v2732 = vrot.slane %v2731, 2
      %v2733 = vadd.f32 %v2731, %v2732
      %v2734 = vrot.slane %v2733, 1
      %v2735 = vadd.f32 %v2733, %v2734
      %v2736 = vrot.slane %v2690, 4
      %v2737 = vadd.f32 %v2690, %v2736
      %v2738 = vrot.slane %v2737, 2
      %v2739 = vadd.f32 %v2737, %v2738
      %v2740 = vrot.slane %v2739, 1
      %v2741 = vadd.f32 %v2739, %v2740
      %v2742 = vrot.slane %v2691, 4
      %v2743 = vadd.f32 %v2691, %v2742
      %v2744 = vrot.slane %v2743, 2
      %v2745 = vadd.f32 %v2743, %v2744
      %v2746 = vrot.slane %v2745, 1
      %v2747 = vadd.f32 %v2745, %v2746
      %v2748 = vrot.slane %v2692, 4
      %v2749 = vadd.f32 %v2692, %v2748
      %v2750 = vrot.slane %v2749, 2
      %v2751 = vadd.f32 %v2749, %v2750
      %v2752 = vrot.slane %v2751, 1
      %v2753 = vadd.f32 %v2751, %v2752
      %v2754 = vrot.slane %v2693, 4
      %v2755 = vadd.f32 %v2693, %v2754
      %v2756 = vrot.slane %v2755, 2
      %v2757 = vadd.f32 %v2755, %v2756
      %v2758 = vrot.slane %v2757, 1
      %v2759 = vadd.f32 %v2757, %v2758
      %v2760 = vrot.slane %v2694, 4
      %v2761 = vadd.f32 %v2694, %v2760
      %v2762 = vrot.slane %v2761, 2
      %v2763 = vadd.f32 %v2761, %v2762
      %v2764 = vrot.slane %v2763, 1
      %v2765 = vadd.f32 %v2763, %v2764
      %v2766 = vrot.slane %v2695, 4
      %v2767 = vadd.f32 %v2695, %v2766
      %v2768 = vrot.slane %v2767, 2
      %v2769 = vadd.f32 %v2767, %v2768
      %v2770 = vrot.slane %v2769, 1
      %v2771 = vadd.f32 %v2769, %v2770
      %v2772 = vrot.slane %v2696, 4
      %v2773 = vadd.f32 %v2696, %v2772
      %v2774 = vrot.slane %v2773, 2
      %v2775 = vadd.f32 %v2773, %v2774
      %v2776 = vrot.slane %v2775, 1
      %v2777 = vadd.f32 %v2775, %v2776
      %v2778 = vrot.slane %v2697, 4
      %v2779 = vadd.f32 %v2697, %v2778
      %v2780 = vrot.slane %v2779, 2
      %v2781 = vadd.f32 %v2779, %v2780
      %v2782 = vrot.slane %v2781, 1
      %v2783 = vadd.f32 %v2781, %v2782
      %v2784 = vrot.slane %v2698, 4
      %v2785 = vadd.f32 %v2698, %v2784
      %v2786 = vrot.slane %v2785, 2
      %v2787 = vadd.f32 %v2785, %v2786
      %v2788 = vrot.slane %v2787, 1
      %v2789 = vadd.f32 %v2787, %v2788
      %v2790 = vrot.slane %v2699, 4
      %v2791 = vadd.f32 %v2699, %v2790
      %v2792 = vrot.slane %v2791, 2
      %v2793 = vadd.f32 %v2791, %v2792
      %v2794 = vrot.slane %v2793, 1
      %v2795 = vadd.f32 %v2793, %v2794
      %v2796 = vmul.f32 %v2705, 8.0
      %v2797 = vmul.f32 %v2711, 8.0
      %v2798 = vmul.f32 %v2717, 8.0
      %v2799 = vmul.f32 %v2723, 8.0
      %v2800 = vmul.f32 %v2729, 8.0
      %v2801 = vmul.f32 %v2735, 8.0
      %v2802 = vmul.f32 %v2741, 8.0
      %v2803 = vmul.f32 %v2747, 8.0
      %v2804 = vmul.f32 %v2753, 8.0
      %v2805 = vmul.f32 %v2759, 8.0
      %v2806 = vmul.f32 %v2765, 8.0
      %v2807 = vmul.f32 %v2771, 8.0
      %v2808 = vmul.f32 %v2777, 8.0
      %v2809 = vmul.f32 %v2783, 8.0
      %v2810 = vmul.f32 %v2789, 8.0
      %v2811 = vmul.f32 %v2795, 8.0
      %v2812 = vmul.f32 %v2593, %v2593
      %v2813 = vmul.f32 %v2599, %v2599
      %v2814 = vmul.f32 %v2605, %v2605
      %v2815 = vmul.f32 %v2611, %v2611
      %v2816 = vmul.f32 %v2617, %v2617
      %v2817 = vmul.f32 %v2623, %v2623
      %v2818 = vmul.f32 %v2629, %v2629
      %v2819 = vmul.f32 %v2635, %v2635
      %v2820 = vmul.f32 %v2641, %v2641
      %v2821 = vmul.f32 %v2647, %v2647
      %v2822 = vmul.f32 %v2653, %v2653
      %v2823 = vmul.f32 %v2659, %v2659
      %v2824 = vmul.f32 %v2665, %v2665
      %v2825 = vmul.f32 %v2671, %v2671
      %v2826 = vmul.f32 %v2677, %v2677
      %v2827 = vmul.f32 %v2683, %v2683
      %v2828 = vsub.f32 %v2796, %v2812
      %v2829 = vsub.f32 %v2797, %v2813
      %v2830 = vsub.f32 %v2798, %v2814
      %v2831 = vsub.f32 %v2799, %v2815
      %v2832 = vsub.f32 %v2800, %v2816
      %v2833 = vsub.f32 %v2801, %v2817
      %v2834 = vsub.f32 %v2802, %v2818
      %v2835 = vsub.f32 %v2803, %v2819
      %v2836 = vsub.f32 %v2804, %v2820
      %v2837 = vsub.f32 %v2805, %v2821
      %v2838 = vsub.f32 %v2806, %v2822
      %v2839 = vsub.f32 %v2807, %v2823
      %v2840 = vsub.f32 %v2808, %v2824
      %v2841 = vsub.f32 %v2809, %v2825
      %v2842 = vsub.f32 %v2810, %v2826
      %v2843 = vsub.f32 %v2811, %v2827
      %v2844 = vmax.f32 %v2828, 0.0
      %v2845 = vmax.f32 %v2829, 0.0
      %v2846 = vmax.f32 %v2830, 0.0
      %v2847 = vmax.f32 %v2831, 0.0
      %v2848 = vmax.f32 %v2832, 0.0
      %v2849 = vmax.f32 %v2833, 0.0
      %v2850 = vmax.f32 %v2834, 0.0
      %v2851 = vmax.f32 %v2835, 0.0
      %v2852 = vmax.f32 %v2836, 0.0
      %v2853 = vmax.f32 %v2837, 0.0
      %v2854 = vmax.f32 %v2838, 0.0
      %v2855 = vmax.f32 %v2839, 0.0
      %v2856 = vmax.f32 %v2840, 0.0
      %v2857 = vmax.f32 %v2841, 0.0
      %v2858 = vmax.f32 %v2842, 0.0
      %v2859 = vmax.f32 %v2843, 0.0
      %v2860 = vadd.f32 %v2844, 0.00064
      %v2861 = vadd.f32 %v2845, 0.00064
      %v2862 = vadd.f32 %v2846, 0.00064
      %v2863 = vadd.f32 %v2847, 0.00064
      %v2864 = vadd.f32 %v2848, 0.00064
      %v2865 = vadd.f32 %v2849, 0.00064
      %v2866 = vadd.f32 %v2850, 0.00064
      %v2867 = vadd.f32 %v2851, 0.00064
      %v2868 = vadd.f32 %v2852, 0.00064
      %v2869 = vadd.f32 %v2853, 0.00064
      %v2870 = vadd.f32 %v2854, 0.00064
      %v2871 = vadd.f32 %v2855, 0.00064
      %v2872 = vadd.f32 %v2856, 0.00064
      %v2873 = vadd.f32 %v2857, 0.00064
      %v2874 = vadd.f32 %v2858, 0.00064
      %v2875 = vadd.f32 %v2859, 0.00064
      %v2876 = vrsqrt.pop %v2860
      %v2877 = vrsqrt.pop %v2861
      %v2878 = vrsqrt.pop %v2862
      %v2879 = vrsqrt.pop %v2863
      %v2880 = vrsqrt.pop %v2864
      %v2881 = vrsqrt.pop %v2865
      %v2882 = vrsqrt.pop %v2866
      %v2883 = vrsqrt.pop %v2867
      %v2884 = vrsqrt.pop %v2868
      %v2885 = vrsqrt.pop %v2869
      %v2886 = vrsqrt.pop %v2870
      %v2887 = vrsqrt.pop %v2871
      %v2888 = vrsqrt.pop %v2872
      %v2889 = vrsqrt.pop %v2873
      %v2890 = vrsqrt.pop %v2874
      %v2891 = vrsqrt.pop %v2875
      %v2892 = vld [vmem:[%s3 + $0x3] sm:$0x1]
      %v2893 = vmul.f32 %v2892, %v2876
      %v2894 = vmul.f32 %v2892, %v2877
      %v2895 = vmul.f32 %v2892, %v2878
      %v2896 = vmul.f32 %v2892, %v2879
      %v2897 = vmul.f32 %v2892, %v2880
      %v2898 = vmul.f32 %v2892, %v2881
      %v2899 = vmul.f32 %v2892, %v2882
      %v2900 = vmul.f32 %v2892, %v2883
      %v2901 = vmul.f32 %v2892, %v2884
      %v2902 = vmul.f32 %v2892, %v2885
      %v2903 = vmul.f32 %v2892, %v2886
      %v2904 = vmul.f32 %v2892, %v2887
      %v2905 = vmul.f32 %v2892, %v2888
      %v2906 = vmul.f32 %v2892, %v2889
      %v2907 = vmul.f32 %v2892, %v2890
      %v2908 = vmul.f32 %v2892, %v2891
      %v2909 = vmul.f32 %v2893, 8.0
      %v2910 = vmul.f32 %v2894, 8.0
      %v2911 = vmul.f32 %v2895, 8.0
      %v2912 = vmul.f32 %v2896, 8.0
      %v2913 = vmul.f32 %v2897, 8.0
      %v2914 = vmul.f32 %v2898, 8.0
      %v2915 = vmul.f32 %v2899, 8.0
      %v2916 = vmul.f32 %v2900, 8.0
      %v2917 = vmul.f32 %v2901, 8.0
      %v2918 = vmul.f32 %v2902, 8.0
      %v2919 = vmul.f32 %v2903, 8.0
      %v2920 = vmul.f32 %v2904, 8.0
      %v2921 = vmul.f32 %v2905, 8.0
      %v2922 = vmul.f32 %v2906, 8.0
      %v2923 = vmul.f32 %v2907, 8.0
      %v2924 = vmul.f32 %v2908, 8.0
      %v2925 = vld [vmem:[%s4 + $0x3] sm:$0x1]
      %v2926 = vmul.f32 %v2593, %v2893
      %v2927 = vmul.f32 %v2599, %v2894
      %v2928 = vmul.f32 %v2605, %v2895
      %v2929 = vmul.f32 %v2611, %v2896
      %v2930 = vmul.f32 %v2617, %v2897
      %v2931 = vmul.f32 %v2623, %v2898
      %v2932 = vmul.f32 %v2629, %v2899
      %v2933 = vmul.f32 %v2635, %v2900
      %v2934 = vmul.f32 %v2641, %v2901
      %v2935 = vmul.f32 %v2647, %v2902
      %v2936 = vmul.f32 %v2653, %v2903
      %v2937 = vmul.f32 %v2659, %v2904
      %v2938 = vmul.f32 %v2665, %v2905
      %v2939 = vmul.f32 %v2671, %v2906
      %v2940 = vmul.f32 %v2677, %v2907
      %v2941 = vmul.f32 %v2683, %v2908
      %v2942 = vsub.f32 %v2925, %v2926
      %v2943 = vsub.f32 %v2925, %v2927
      %v2944 = vsub.f32 %v2925, %v2928
      %v2945 = vsub.f32 %v2925, %v2929
      %v2946 = vsub.f32 %v2925, %v2930
      %v2947 = vsub.f32 %v2925, %v2931
      %v2948 = vsub.f32 %v2925, %v2932
      %v2949 = vsub.f32 %v2925, %v2933
      %v2950 = vsub.f32 %v2925, %v2934
      %v2951 = vsub.f32 %v2925, %v2935
      %v2952 = vsub.f32 %v2925, %v2936
      %v2953 = vsub.f32 %v2925, %v2937
      %v2954 = vsub.f32 %v2925, %v2938
      %v2955 = vsub.f32 %v2925, %v2939
      %v2956 = vsub.f32 %v2925, %v2940
      %v2957 = vsub.f32 %v2925, %v2941
      %v2958 = vlaneseq
      %v2959 = vshrl.u32 %v2958, 7
      %v2960 = vsub.s32 0, %v2959
      %v2961 = vrot.slane %v2909, %v2960
      %v2962 = vlaneseq
      %v2963 = vshrl.u32 %v2962, 7
      %v2964 = vsub.s32 0, %v2963
      %v2965 = vrot.slane %v2910, %v2964
      %v2966 = vlaneseq
      %v2967 = vshrl.u32 %v2966, 7
      %v2968 = vsub.s32 0, %v2967
      %v2969 = vrot.slane %v2911, %v2968
      %v2970 = vlaneseq
      %v2971 = vshrl.u32 %v2970, 7
      %v2972 = vsub.s32 0, %v2971
      %v2973 = vrot.slane %v2912, %v2972
      %v2974 = vlaneseq
      %v2975 = vshrl.u32 %v2974, 7
      %v2976 = vsub.s32 0, %v2975
      %v2977 = vrot.slane %v2913, %v2976
      %v2978 = vlaneseq
      %v2979 = vshrl.u32 %v2978, 7
      %v2980 = vsub.s32 0, %v2979
      %v2981 = vrot.slane %v2914, %v2980
      %v2982 = vlaneseq
      %v2983 = vshrl.u32 %v2982, 7
      %v2984 = vsub.s32 0, %v2983
      %v2985 = vrot.slane %v2915, %v2984
      %v2986 = vlaneseq
      %v2987 = vshrl.u32 %v2986, 7
      %v2988 = vsub.s32 0, %v2987
      %v2989 = vrot.slane %v2916, %v2988
      %v2990 = vlaneseq
      %v2991 = vshrl.u32 %v2990, 7
      %v2992 = vsub.s32 0, %v2991
      %v2993 = vrot.slane %v2917, %v2992
      %v2994 = vlaneseq
      %v2995 = vshrl.u32 %v2994, 7
      %v2996 = vsub.s32 0, %v2995
      %v2997 = vrot.slane %v2918, %v2996
      %v2998 = vlaneseq
      %v2999 = vshrl.u32 %v2998, 7
      %v3000 = vsub.s32 0, %v2999
      %v3001 = vrot.slane %v2919, %v3000
      %v3002 = vlaneseq
      %v3003 = vshrl.u32 %v3002, 7
      %v3004 = vsub.s32 0, %v3003
      %v3005 = vrot.slane %v2920, %v3004
      %v3006 = vlaneseq
      %v3007 = vshrl.u32 %v3006, 7
      %v3008 = vsub.s32 0, %v3007
      %v3009 = vrot.slane %v2921, %v3008
      %v3010 = vlaneseq
      %v3011 = vshrl.u32 %v3010, 7
      %v3012 = vsub.s32 0, %v3011
      %v3013 = vrot.slane %v2922, %v3012
      %v3014 = vlaneseq
      %v3015 = vshrl.u32 %v3014, 7
      %v3016 = vsub.s32 0, %v3015
      %v3017 = vrot.slane %v2923, %v3016
      %v3018 = vlaneseq
      %v3019 = vshrl.u32 %v3018, 7
      %v3020 = vsub.s32 0, %v3019
      %v3021 = vrot.slane %v2924, %v3020
      %v3022 = vmul.f32 %v2510, %v2961
      %v3023 = vmul.f32 %v2515, %v2965
      %v3024 = vmul.f32 %v2520, %v2969
      %v3025 = vmul.f32 %v2525, %v2973
      %v3026 = vmul.f32 %v2530, %v2977
      %v3027 = vmul.f32 %v2535, %v2981
      %v3028 = vmul.f32 %v2540, %v2985
      %v3029 = vmul.f32 %v2545, %v2989
      %v3030 = vmul.f32 %v2550, %v2993
      %v3031 = vmul.f32 %v2555, %v2997
      %v3032 = vmul.f32 %v2560, %v3001
      %v3033 = vmul.f32 %v2565, %v3005
      %v3034 = vmul.f32 %v2570, %v3009
      %v3035 = vmul.f32 %v2575, %v3013
      %v3036 = vmul.f32 %v2580, %v3017
      %v3037 = vmul.f32 %v2585, %v3021
      %v3038 = vlaneseq
      %v3039 = vshrl.u32 %v3038, 7
      %v3040 = vsub.s32 0, %v3039
      %v3041 = vrot.slane %v2942, %v3040
      %v3042 = vlaneseq
      %v3043 = vshrl.u32 %v3042, 7
      %v3044 = vsub.s32 0, %v3043
      %v3045 = vrot.slane %v2943, %v3044
      %v3046 = vlaneseq
      %v3047 = vshrl.u32 %v3046, 7
      %v3048 = vsub.s32 0, %v3047
      %v3049 = vrot.slane %v2944, %v3048
      %v3050 = vlaneseq
      %v3051 = vshrl.u32 %v3050, 7
      %v3052 = vsub.s32 0, %v3051
      %v3053 = vrot.slane %v2945, %v3052
      %v3054 = vlaneseq
      %v3055 = vshrl.u32 %v3054, 7
      %v3056 = vsub.s32 0, %v3055
      %v3057 = vrot.slane %v2946, %v3056
      %v3058 = vlaneseq
      %v3059 = vshrl.u32 %v3058, 7
      %v3060 = vsub.s32 0, %v3059
      %v3061 = vrot.slane %v2947, %v3060
      %v3062 = vlaneseq
      %v3063 = vshrl.u32 %v3062, 7
      %v3064 = vsub.s32 0, %v3063
      %v3065 = vrot.slane %v2948, %v3064
      %v3066 = vlaneseq
      %v3067 = vshrl.u32 %v3066, 7
      %v3068 = vsub.s32 0, %v3067
      %v3069 = vrot.slane %v2949, %v3068
      %v3070 = vlaneseq
      %v3071 = vshrl.u32 %v3070, 7
      %v3072 = vsub.s32 0, %v3071
      %v3073 = vrot.slane %v2950, %v3072
      %v3074 = vlaneseq
      %v3075 = vshrl.u32 %v3074, 7
      %v3076 = vsub.s32 0, %v3075
      %v3077 = vrot.slane %v2951, %v3076
      %v3078 = vlaneseq
      %v3079 = vshrl.u32 %v3078, 7
      %v3080 = vsub.s32 0, %v3079
      %v3081 = vrot.slane %v2952, %v3080
      %v3082 = vlaneseq
      %v3083 = vshrl.u32 %v3082, 7
      %v3084 = vsub.s32 0, %v3083
      %v3085 = vrot.slane %v2953, %v3084
      %v3086 = vlaneseq
      %v3087 = vshrl.u32 %v3086, 7
      %v3088 = vsub.s32 0, %v3087
      %v3089 = vrot.slane %v2954, %v3088
      %v3090 = vlaneseq
      %v3091 = vshrl.u32 %v3090, 7
      %v3092 = vsub.s32 0, %v3091
      %v3093 = vrot.slane %v2955, %v3092
      %v3094 = vlaneseq
      %v3095 = vshrl.u32 %v3094, 7
      %v3096 = vsub.s32 0, %v3095
      %v3097 = vrot.slane %v2956, %v3096
      %v3098 = vlaneseq
      %v3099 = vshrl.u32 %v3098, 7
      %v3100 = vsub.s32 0, %v3099
      %v3101 = vrot.slane %v2957, %v3100
      %v3102 = vadd.f32 %v3022, %v3041
      %v3103 = vadd.f32 %v3023, %v3045
      %v3104 = vadd.f32 %v3024, %v3049
      %v3105 = vadd.f32 %v3025, %v3053
      %v3106 = vadd.f32 %v3026, %v3057
      %v3107 = vadd.f32 %v3027, %v3061
      %v3108 = vadd.f32 %v3028, %v3065
      %v3109 = vadd.f32 %v3029, %v3069
      %v3110 = vadd.f32 %v3030, %v3073
      %v3111 = vadd.f32 %v3031, %v3077
      %v3112 = vadd.f32 %v3032, %v3081
      %v3113 = vadd.f32 %v3033, %v3085
      %v3114 = vadd.f32 %v3034, %v3089
      %v3115 = vadd.f32 %v3035, %v3093
      %v3116 = vadd.f32 %v3036, %v3097
      %v3117 = vadd.f32 %v3037, %v3101
      %v3118 = vmax.f32 %v3102, 0.0
      %v3119 = vmax.f32 %v3103, 0.0
      %v3120 = vmax.f32 %v3104, 0.0
      %v3121 = vmax.f32 %v3105, 0.0
      %v3122 = vmax.f32 %v3106, 0.0
      %v3123 = vmax.f32 %v3107, 0.0
      %v3124 = vmax.f32 %v3108, 0.0
      %v3125 = vmax.f32 %v3109, 0.0
      %v3126 = vmax.f32 %v3110, 0.0
      %v3127 = vmax.f32 %v3111, 0.0
      %v3128 = vmax.f32 %v3112, 0.0
      %v3129 = vmax.f32 %v3113, 0.0
      %v3130 = vmax.f32 %v3114, 0.0
      %v3131 = vmax.f32 %v3115, 0.0
      %v3132 = vmax.f32 %v3116, 0.0
      %v3133 = vmax.f32 %v3117, 0.0
      %s3134 = scalar_lea.vmem %s2, 384
      %v3135 = vld [vmem:[%s3134] sm:$0xff]
      %v3136 = vld [vmem:[%s3134 + $0x8] sm:$0xff]
      %v3137 = vld [vmem:[%s3134 + $0x10] sm:$0xff]
      %v3138 = vld [vmem:[%s3134 + $0x18] sm:$0xff]
      %v3139 = vld [vmem:[%s3134 + $0x20] sm:$0xff]
      %v3140 = vld [vmem:[%s3134 + $0x28] sm:$0xff]
      %v3141 = vld [vmem:[%s3134 + $0x30] sm:$0xff]
      %v3142 = vld [vmem:[%s3134 + $0x38] sm:$0xff]
      %v3143 = vld [vmem:[%s3134 + $0x40] sm:$0xff]
      %v3144 = vld [vmem:[%s3134 + $0x48] sm:$0xff]
      %v3145 = vld [vmem:[%s3134 + $0x50] sm:$0xff]
      %v3146 = vld [vmem:[%s3134 + $0x58] sm:$0xff]
      %v3147 = vld [vmem:[%s3134 + $0x60] sm:$0xff]
      %v3148 = vld [vmem:[%s3134 + $0x68] sm:$0xff]
      %v3149 = vld [vmem:[%s3134 + $0x70] sm:$0xff]
      %v3150 = vld [vmem:[%s3134 + $0x78] sm:$0xff]
      %3151 = vmatprep.subr.mxu0 0.0
      %3152 = vmatpush1.msra.mxu0 %v3150
      %3153 = vmatprep.subr.mxu0 0.0
      %3154 = vmatpush1.msra.mxu0 %v3149
      %3155 = vmatprep.subr.mxu0 0.0
      %3156 = vmatpush1.msra.mxu0 %v3148
      %3157 = vmatprep.subr.mxu0 0.0
      %3158 = vmatpush1.msra.mxu0 %v3147
      %3159 = vmatprep.subr.mxu0 0.0
      %3160 = vmatpush1.msra.mxu0 %v3146
      %3161 = vmatprep.subr.mxu0 0.0
      %3162 = vmatpush1.msra.mxu0 %v3145
      %3163 = vmatprep.subr.mxu0 0.0
      %3164 = vmatpush1.msra.mxu0 %v3144
      %3165 = vmatprep.subr.mxu0 0.0
      %3166 = vmatpush1.msra.mxu0 %v3143
      %3167 = vmatprep.subr.mxu0 0.0
      %3168 = vmatpush1.msra.mxu0 %v3142
      %3169 = vmatprep.subr.mxu0 0.0
      %3170 = vmatpush1.msra.mxu0 %v3141
      %3171 = vmatprep.subr.mxu0 0.0
      %3172 = vmatpush1.msra.mxu0 %v3140
      %3173 = vmatprep.subr.mxu0 0.0
      %3174 = vmatpush1.msra.mxu0 %v3139
      %3175 = vmatprep.subr.mxu0 0.0
      %3176 = vmatpush1.msra.mxu0 %v3138
      %3177 = vmatprep.subr.mxu0 0.0
      %3178 = vmatpush1.msra.mxu0 %v3137
      %3179 = vmatprep.subr.mxu0 0.0
      %3180 = vmatpush1.msra.mxu0 %v3136
      %3181 = vmatprep.subr.mxu0 0.0
      %3182 = vmatpush1.msra.mxu0 %v3135
      %3183 = vmatprep.subr.mxu0 0.0
      %3184 = vmatpush2.msra.mxu0 0.0
      %3185 = vmatprep.subr.mxu0 0.0
      %3186 = vmatpush2.msra.mxu0 0.0
      %3187 = vmatprep.subr.mxu0 0.0
      %3188 = vmatpush2.msra.mxu0 0.0
      %3189 = vmatprep.subr.mxu0 0.0
      %3190 = vmatpush2.msra.mxu0 0.0
      %3191 = vmatprep.subr.mxu0 0.0
      %3192 = vmatpush2.msra.mxu0 0.0
      %3193 = vmatprep.subr.mxu0 0.0
      %3194 = vmatpush2.msra.mxu0 0.0
      %3195 = vmatprep.subr.mxu0 0.0
      %3196 = vmatpush2.msra.mxu0 0.0
      %3197 = vmatprep.subr.mxu0 0.0
      %3198 = vmatpush2.msra.mxu0 0.0
      %3199 = vmatprep.subr.mxu0 0.0
      %3200 = vmatpush2.msra.mxu0 0.0
      %3201 = vmatprep.subr.mxu0 0.0
      %3202 = vmatpush2.msra.mxu0 0.0
      %3203 = vmatprep.subr.mxu0 0.0
      %3204 = vmatpush2.msra.mxu0 0.0
      %3205 = vmatprep.subr.mxu0 0.0
      %3206 = vmatpush2.msra.mxu0 0.0
      %3207 = vmatprep.subr.mxu0 0.0
      %3208 = vmatpush2.msra.mxu0 0.0
      %3209 = vmatprep.subr.mxu0 0.0
      %3210 = vmatpush2.msra.mxu0 0.0
      %3211 = vmatprep.subr.mxu0 0.0
      %3212 = vmatpush2.msra.mxu0 0.0
      %3213 = vmatprep.subr.mxu0 0.0
      %3214 = vmatpush2.msra.mxu0 0.0
      %3215 = vmatprep.mubr.f32.mxu0 0.0
      %3216 = vmatmul.mubr.f32.gmra.mxu0 %v3118
      %v3217 = vpop.f32.mrf.mxu0
      %v3218 = vadd.f32 0.0, %v3217
      %v3219 = vpop.f32.mrf.mxu0
      %3220 = vmatprep.mubr.f32.mxu0 0.0
      %3221 = vmatmul.mubr.f32.gmra.mxu0 %v3119
      %v3222 = vpop.f32.mrf.mxu0
      %v3223 = vadd.f32 0.0, %v3222
      %v3224 = vpop.f32.mrf.mxu0
      %3225 = vmatprep.mubr.f32.mxu0 0.0
      %3226 = vmatmul.mubr.f32.gmra.mxu0 %v3120
      %v3227 = vpop.f32.mrf.mxu0
      %v3228 = vadd.f32 0.0, %v3227
      %v3229 = vpop.f32.mrf.mxu0
      %3230 = vmatprep.mubr.f32.mxu0 0.0
      %3231 = vmatmul.mubr.f32.gmra.mxu0 %v3121
      %v3232 = vpop.f32.mrf.mxu0
      %v3233 = vadd.f32 0.0, %v3232
      %v3234 = vpop.f32.mrf.mxu0
      %3235 = vmatprep.mubr.f32.mxu0 0.0
      %3236 = vmatmul.mubr.f32.gmra.mxu0 %v3122
      %v3237 = vpop.f32.mrf.mxu0
      %v3238 = vadd.f32 0.0, %v3237
      %v3239 = vpop.f32.mrf.mxu0
      %3240 = vmatprep.mubr.f32.mxu0 0.0
      %3241 = vmatmul.mubr.f32.gmra.mxu0 %v3123
      %v3242 = vpop.f32.mrf.mxu0
      %v3243 = vadd.f32 0.0, %v3242
      %v3244 = vpop.f32.mrf.mxu0
      %3245 = vmatprep.mubr.f32.mxu0 0.0
      %3246 = vmatmul.mubr.f32.gmra.mxu0 %v3124
      %v3247 = vpop.f32.mrf.mxu0
      %v3248 = vadd.f32 0.0, %v3247
      %v3249 = vpop.f32.mrf.mxu0
      %3250 = vmatprep.mubr.f32.mxu0 0.0
      %3251 = vmatmul.mubr.f32.gmra.mxu0 %v3125
      %v3252 = vpop.f32.mrf.mxu0
      %v3253 = vadd.f32 0.0, %v3252
      %v3254 = vpop.f32.mrf.mxu0
      %3255 = vmatprep.mubr.f32.mxu0 0.0
      %3256 = vmatmul.mubr.f32.gmra.mxu0 %v3126
      %v3257 = vpop.f32.mrf.mxu0
      %v3258 = vadd.f32 0.0, %v3257
      %v3259 = vpop.f32.mrf.mxu0
      %3260 = vmatprep.mubr.f32.mxu0 0.0
      %3261 = vmatmul.mubr.f32.gmra.mxu0 %v3127
      %v3262 = vpop.f32.mrf.mxu0
      %v3263 = vadd.f32 0.0, %v3262
      %v3264 = vpop.f32.mrf.mxu0
      %3265 = vmatprep.mubr.f32.mxu0 0.0
      %3266 = vmatmul.mubr.f32.gmra.mxu0 %v3128
      %v3267 = vpop.f32.mrf.mxu0
      %v3268 = vadd.f32 0.0, %v3267
      %v3269 = vpop.f32.mrf.mxu0
      %3270 = vmatprep.mubr.f32.mxu0 0.0
      %3271 = vmatmul.mubr.f32.gmra.mxu0 %v3129
      %v3272 = vpop.f32.mrf.mxu0
      %v3273 = vadd.f32 0.0, %v3272
      %v3274 = vpop.f32.mrf.mxu0
      %3275 = vmatprep.mubr.f32.mxu0 0.0
      %3276 = vmatmul.mubr.f32.gmra.mxu0 %v3130
      %v3277 = vpop.f32.mrf.mxu0
      %v3278 = vadd.f32 0.0, %v3277
      %v3279 = vpop.f32.mrf.mxu0
      %3280 = vmatprep.mubr.f32.mxu0 0.0
      %3281 = vmatmul.mubr.f32.gmra.mxu0 %v3131
      %v3282 = vpop.f32.mrf.mxu0
      %v3283 = vadd.f32 0.0, %v3282
      %v3284 = vpop.f32.mrf.mxu0
      %3285 = vmatprep.mubr.f32.mxu0 0.0
      %3286 = vmatmul.mubr.f32.gmra.mxu0 %v3132
      %v3287 = vpop.f32.mrf.mxu0
      %v3288 = vadd.f32 0.0, %v3287
      %v3289 = vpop.f32.mrf.mxu0
      %3290 = vmatprep.mubr.f32.mxu0 0.0
      %3291 = vmatmul.mubr.f32.gmra.mxu0 %v3133
      %v3292 = vpop.f32.mrf.mxu0
      %v3293 = vadd.f32 0.0, %v3292
      %v3294 = vpop.f32.mrf.mxu0
      %3295 = vdwg.mxu0
      %v3296 = vrot.slane %v3218, 4
      %v3297 = vadd.f32 %v3218, %v3296
      %v3298 = vrot.slane %v3297, 2
      %v3299 = vadd.f32 %v3297, %v3298
      %v3300 = vrot.slane %v3299, 1
      %v3301 = vadd.f32 %v3299, %v3300
      %v3302 = vrot.slane %v3223, 4
      %v3303 = vadd.f32 %v3223, %v3302
      %v3304 = vrot.slane %v3303, 2
      %v3305 = vadd.f32 %v3303, %v3304
      %v3306 = vrot.slane %v3305, 1
      %v3307 = vadd.f32 %v3305, %v3306
      %v3308 = vrot.slane %v3228, 4
      %v3309 = vadd.f32 %v3228, %v3308
      %v3310 = vrot.slane %v3309, 2
      %v3311 = vadd.f32 %v3309, %v3310
      %v3312 = vrot.slane %v3311, 1
      %v3313 = vadd.f32 %v3311, %v3312
      %v3314 = vrot.slane %v3233, 4
      %v3315 = vadd.f32 %v3233, %v3314
      %v3316 = vrot.slane %v3315, 2
      %v3317 = vadd.f32 %v3315, %v3316
      %v3318 = vrot.slane %v3317, 1
      %v3319 = vadd.f32 %v3317, %v3318
      %v3320 = vrot.slane %v3238, 4
      %v3321 = vadd.f32 %v3238, %v3320
      %v3322 = vrot.slane %v3321, 2
      %v3323 = vadd.f32 %v3321, %v3322
      %v3324 = vrot.slane %v3323, 1
      %v3325 = vadd.f32 %v3323, %v3324
      %v3326 = vrot.slane %v3243, 4
      %v3327 = vadd.f32 %v3243, %v3326
      %v3328 = vrot.slane %v3327, 2
      %v3329 = vadd.f32 %v3327, %v3328
      %v3330 = vrot.slane %v3329, 1
      %v3331 = vadd.f32 %v3329, %v3330
      %v3332 = vrot.slane %v3248, 4
      %v3333 = vadd.f32 %v3248, %v3332
      %v3334 = vrot.slane %v3333, 2
      %v3335 = vadd.f32 %v3333, %v3334
      %v3336 = vrot.slane %v3335, 1
      %v3337 = vadd.f32 %v3335, %v3336
      %v3338 = vrot.slane %v3253, 4
      %v3339 = vadd.f32 %v3253, %v3338
      %v3340 = vrot.slane %v3339, 2
      %v3341 = vadd.f32 %v3339, %v3340
      %v3342 = vrot.slane %v3341, 1
      %v3343 = vadd.f32 %v3341, %v3342
      %v3344 = vrot.slane %v3258, 4
      %v3345 = vadd.f32 %v3258, %v3344
      %v3346 = vrot.slane %v3345, 2
      %v3347 = vadd.f32 %v3345, %v3346
      %v3348 = vrot.slane %v3347, 1
      %v3349 = vadd.f32 %v3347, %v3348
      %v3350 = vrot.slane %v3263, 4
      %v3351 = vadd.f32 %v3263, %v3350
      %v3352 = vrot.slane %v3351, 2
      %v3353 = vadd.f32 %v3351, %v3352
      %v3354 = vrot.slane %v3353, 1
      %v3355 = vadd.f32 %v3353, %v3354
      %v3356 = vrot.slane %v3268, 4
      %v3357 = vadd.f32 %v3268, %v3356
      %v3358 = vrot.slane %v3357, 2
      %v3359 = vadd.f32 %v3357, %v3358
      %v3360 = vrot.slane %v3359, 1
      %v3361 = vadd.f32 %v3359, %v3360
      %v3362 = vrot.slane %v3273, 4
      %v3363 = vadd.f32 %v3273, %v3362
      %v3364 = vrot.slane %v3363, 2
      %v3365 = vadd.f32 %v3363, %v3364
      %v3366 = vrot.slane %v3365, 1
      %v3367 = vadd.f32 %v3365, %v3366
      %v3368 = vrot.slane %v3278, 4
      %v3369 = vadd.f32 %v3278, %v3368
      %v3370 = vrot.slane %v3369, 2
      %v3371 = vadd.f32 %v3369, %v3370
      %v3372 = vrot.slane %v3371, 1
      %v3373 = vadd.f32 %v3371, %v3372
      %v3374 = vrot.slane %v3283, 4
      %v3375 = vadd.f32 %v3283, %v3374
      %v3376 = vrot.slane %v3375, 2
      %v3377 = vadd.f32 %v3375, %v3376
      %v3378 = vrot.slane %v3377, 1
      %v3379 = vadd.f32 %v3377, %v3378
      %v3380 = vrot.slane %v3288, 4
      %v3381 = vadd.f32 %v3288, %v3380
      %v3382 = vrot.slane %v3381, 2
      %v3383 = vadd.f32 %v3381, %v3382
      %v3384 = vrot.slane %v3383, 1
      %v3385 = vadd.f32 %v3383, %v3384
      %v3386 = vrot.slane %v3293, 4
      %v3387 = vadd.f32 %v3293, %v3386
      %v3388 = vrot.slane %v3387, 2
      %v3389 = vadd.f32 %v3387, %v3388
      %v3390 = vrot.slane %v3389, 1
      %v3391 = vadd.f32 %v3389, %v3390
      %v3392 = vmul.f32 %v3218, %v3218
      %v3393 = vmul.f32 %v3223, %v3223
      %v3394 = vmul.f32 %v3228, %v3228
      %v3395 = vmul.f32 %v3233, %v3233
      %v3396 = vmul.f32 %v3238, %v3238
      %v3397 = vmul.f32 %v3243, %v3243
      %v3398 = vmul.f32 %v3248, %v3248
      %v3399 = vmul.f32 %v3253, %v3253
      %v3400 = vmul.f32 %v3258, %v3258
      %v3401 = vmul.f32 %v3263, %v3263
      %v3402 = vmul.f32 %v3268, %v3268
      %v3403 = vmul.f32 %v3273, %v3273
      %v3404 = vmul.f32 %v3278, %v3278
      %v3405 = vmul.f32 %v3283, %v3283
      %v3406 = vmul.f32 %v3288, %v3288
      %v3407 = vmul.f32 %v3293, %v3293
      %v3408 = vrot.slane %v3392, 4
      %v3409 = vadd.f32 %v3392, %v3408
      %v3410 = vrot.slane %v3409, 2
      %v3411 = vadd.f32 %v3409, %v3410
      %v3412 = vrot.slane %v3411, 1
      %v3413 = vadd.f32 %v3411, %v3412
      %v3414 = vrot.slane %v3393, 4
      %v3415 = vadd.f32 %v3393, %v3414
      %v3416 = vrot.slane %v3415, 2
      %v3417 = vadd.f32 %v3415, %v3416
      %v3418 = vrot.slane %v3417, 1
      %v3419 = vadd.f32 %v3417, %v3418
      %v3420 = vrot.slane %v3394, 4
      %v3421 = vadd.f32 %v3394, %v3420
      %v3422 = vrot.slane %v3421, 2
      %v3423 = vadd.f32 %v3421, %v3422
      %v3424 = vrot.slane %v3423, 1
      %v3425 = vadd.f32 %v3423, %v3424
      %v3426 = vrot.slane %v3395, 4
      %v3427 = vadd.f32 %v3395, %v3426
      %v3428 = vrot.slane %v3427, 2
      %v3429 = vadd.f32 %v3427, %v3428
      %v3430 = vrot.slane %v3429, 1
      %v3431 = vadd.f32 %v3429, %v3430
      %v3432 = vrot.slane %v3396, 4
      %v3433 = vadd.f32 %v3396, %v3432
      %v3434 = vrot.slane %v3433, 2
      %v3435 = vadd.f32 %v3433, %v3434
      %v3436 = vrot.slane %v3435, 1
      %v3437 = vadd.f32 %v3435, %v3436
      %v3438 = vrot.slane %v3397, 4
      %v3439 = vadd.f32 %v3397, %v3438
      %v3440 = vrot.slane %v3439, 2
      %v3441 = vadd.f32 %v3439, %v3440
      %v3442 = vrot.slane %v3441, 1
      %v3443 = vadd.f32 %v3441, %v3442
      %v3444 = vrot.slane %v3398, 4
      %v3445 = vadd.f32 %v3398, %v3444
      %v3446 = vrot.slane %v3445, 2
      %v3447 = vadd.f32 %v3445, %v3446
      %v3448 = vrot.slane %v3447, 1
      %v3449 = vadd.f32 %v3447, %v3448
      %v3450 = vrot.slane %v3399, 4
      %v3451 = vadd.f32 %v3399, %v3450
      %v3452 = vrot.slane %v3451, 2
      %v3453 = vadd.f32 %v3451, %v3452
      %v3454 = vrot.slane %v3453, 1
      %v3455 = vadd.f32 %v3453, %v3454
      %v3456 = vrot.slane %v3400, 4
      %v3457 = vadd.f32 %v3400, %v3456
      %v3458 = vrot.slane %v3457, 2
      %v3459 = vadd.f32 %v3457, %v3458
      %v3460 = vrot.slane %v3459, 1
      %v3461 = vadd.f32 %v3459, %v3460
      %v3462 = vrot.slane %v3401, 4
      %v3463 = vadd.f32 %v3401, %v3462
      %v3464 = vrot.slane %v3463, 2
      %v3465 = vadd.f32 %v3463, %v3464
      %v3466 = vrot.slane %v3465, 1
      %v3467 = vadd.f32 %v3465, %v3466
      %v3468 = vrot.slane %v3402, 4
      %v3469 = vadd.f32 %v3402, %v3468
      %v3470 = vrot.slane %v3469, 2
      %v3471 = vadd.f32 %v3469, %v3470
      %v3472 = vrot.slane %v3471, 1
      %v3473 = vadd.f32 %v3471, %v3472
      %v3474 = vrot.slane %v3403, 4
      %v3475 = vadd.f32 %v3403, %v3474
      %v3476 = vrot.slane %v3475, 2
      %v3477 = vadd.f32 %v3475, %v3476
      %v3478 = vrot.slane %v3477, 1
      %v3479 = vadd.f32 %v3477, %v3478
      %v3480 = vrot.slane %v3404, 4
      %v3481 = vadd.f32 %v3404, %v3480
      %v3482 = vrot.slane %v3481, 2
      %v3483 = vadd.f32 %v3481, %v3482
      %v3484 = vrot.slane %v3483, 1
      %v3485 = vadd.f32 %v3483, %v3484
      %v3486 = vrot.slane %v3405, 4
      %v3487 = vadd.f32 %v3405, %v3486
      %v3488 = vrot.slane %v3487, 2
      %v3489 = vadd.f32 %v3487, %v3488
      %v3490 = vrot.slane %v3489, 1
      %v3491 = vadd.f32 %v3489, %v3490
      %v3492 = vrot.slane %v3406, 4
      %v3493 = vadd.f32 %v3406, %v3492
      %v3494 = vrot.slane %v3493, 2
      %v3495 = vadd.f32 %v3493, %v3494
      %v3496 = vrot.slane %v3495, 1
      %v3497 = vadd.f32 %v3495, %v3496
      %v3498 = vrot.slane %v3407, 4
      %v3499 = vadd.f32 %v3407, %v3498
      %v3500 = vrot.slane %v3499, 2
      %v3501 = vadd.f32 %v3499, %v3500
      %v3502 = vrot.slane %v3501, 1
      %v3503 = vadd.f32 %v3501, %v3502
      %v3504 = vmul.f32 %v3413, 8.0
      %v3505 = vmul.f32 %v3419, 8.0
      %v3506 = vmul.f32 %v3425, 8.0
      %v3507 = vmul.f32 %v3431, 8.0
      %v3508 = vmul.f32 %v3437, 8.0
      %v3509 = vmul.f32 %v3443, 8.0
      %v3510 = vmul.f32 %v3449, 8.0
      %v3511 = vmul.f32 %v3455, 8.0
      %v3512 = vmul.f32 %v3461, 8.0
      %v3513 = vmul.f32 %v3467, 8.0
      %v3514 = vmul.f32 %v3473, 8.0
      %v3515 = vmul.f32 %v3479, 8.0
      %v3516 = vmul.f32 %v3485, 8.0
      %v3517 = vmul.f32 %v3491, 8.0
      %v3518 = vmul.f32 %v3497, 8.0
      %v3519 = vmul.f32 %v3503, 8.0
      %v3520 = vmul.f32 %v3301, %v3301
      %v3521 = vmul.f32 %v3307, %v3307
      %v3522 = vmul.f32 %v3313, %v3313
      %v3523 = vmul.f32 %v3319, %v3319
      %v3524 = vmul.f32 %v3325, %v3325
      %v3525 = vmul.f32 %v3331, %v3331
      %v3526 = vmul.f32 %v3337, %v3337
      %v3527 = vmul.f32 %v3343, %v3343
      %v3528 = vmul.f32 %v3349, %v3349
      %v3529 = vmul.f32 %v3355, %v3355
      %v3530 = vmul.f32 %v3361, %v3361
      %v3531 = vmul.f32 %v3367, %v3367
      %v3532 = vmul.f32 %v3373, %v3373
      %v3533 = vmul.f32 %v3379, %v3379
      %v3534 = vmul.f32 %v3385, %v3385
      %v3535 = vmul.f32 %v3391, %v3391
      %v3536 = vsub.f32 %v3504, %v3520
      %v3537 = vsub.f32 %v3505, %v3521
      %v3538 = vsub.f32 %v3506, %v3522
      %v3539 = vsub.f32 %v3507, %v3523
      %v3540 = vsub.f32 %v3508, %v3524
      %v3541 = vsub.f32 %v3509, %v3525
      %v3542 = vsub.f32 %v3510, %v3526
      %v3543 = vsub.f32 %v3511, %v3527
      %v3544 = vsub.f32 %v3512, %v3528
      %v3545 = vsub.f32 %v3513, %v3529
      %v3546 = vsub.f32 %v3514, %v3530
      %v3547 = vsub.f32 %v3515, %v3531
      %v3548 = vsub.f32 %v3516, %v3532
      %v3549 = vsub.f32 %v3517, %v3533
      %v3550 = vsub.f32 %v3518, %v3534
      %v3551 = vsub.f32 %v3519, %v3535
      %v3552 = vmax.f32 %v3536, 0.0
      %v3553 = vmax.f32 %v3537, 0.0
      %v3554 = vmax.f32 %v3538, 0.0
      %v3555 = vmax.f32 %v3539, 0.0
      %v3556 = vmax.f32 %v3540, 0.0
      %v3557 = vmax.f32 %v3541, 0.0
      %v3558 = vmax.f32 %v3542, 0.0
      %v3559 = vmax.f32 %v3543, 0.0
      %v3560 = vmax.f32 %v3544, 0.0
      %v3561 = vmax.f32 %v3545, 0.0
      %v3562 = vmax.f32 %v3546, 0.0
      %v3563 = vmax.f32 %v3547, 0.0
      %v3564 = vmax.f32 %v3548, 0.0
      %v3565 = vmax.f32 %v3549, 0.0
      %v3566 = vmax.f32 %v3550, 0.0
      %v3567 = vmax.f32 %v3551, 0.0
      %v3568 = vadd.f32 %v3552, 0.00064
      %v3569 = vadd.f32 %v3553, 0.00064
      %v3570 = vadd.f32 %v3554, 0.00064
      %v3571 = vadd.f32 %v3555, 0.00064
      %v3572 = vadd.f32 %v3556, 0.00064
      %v3573 = vadd.f32 %v3557, 0.00064
      %v3574 = vadd.f32 %v3558, 0.00064
      %v3575 = vadd.f32 %v3559, 0.00064
      %v3576 = vadd.f32 %v3560, 0.00064
      %v3577 = vadd.f32 %v3561, 0.00064
      %v3578 = vadd.f32 %v3562, 0.00064
      %v3579 = vadd.f32 %v3563, 0.00064
      %v3580 = vadd.f32 %v3564, 0.00064
      %v3581 = vadd.f32 %v3565, 0.00064
      %v3582 = vadd.f32 %v3566, 0.00064
      %v3583 = vadd.f32 %v3567, 0.00064
      %v3584 = vrsqrt.pop %v3568
      %v3585 = vrsqrt.pop %v3569
      %v3586 = vrsqrt.pop %v3570
      %v3587 = vrsqrt.pop %v3571
      %v3588 = vrsqrt.pop %v3572
      %v3589 = vrsqrt.pop %v3573
      %v3590 = vrsqrt.pop %v3574
      %v3591 = vrsqrt.pop %v3575
      %v3592 = vrsqrt.pop %v3576
      %v3593 = vrsqrt.pop %v3577
      %v3594 = vrsqrt.pop %v3578
      %v3595 = vrsqrt.pop %v3579
      %v3596 = vrsqrt.pop %v3580
      %v3597 = vrsqrt.pop %v3581
      %v3598 = vrsqrt.pop %v3582
      %v3599 = vrsqrt.pop %v3583
      %v3600 = vld [vmem:[%s3 + $0x4] sm:$0x1]
      %v3601 = vmul.f32 %v3600, %v3584
      %v3602 = vmul.f32 %v3600, %v3585
      %v3603 = vmul.f32 %v3600, %v3586
      %v3604 = vmul.f32 %v3600, %v3587
      %v3605 = vmul.f32 %v3600, %v3588
      %v3606 = vmul.f32 %v3600, %v3589
      %v3607 = vmul.f32 %v3600, %v3590
      %v3608 = vmul.f32 %v3600, %v3591
      %v3609 = vmul.f32 %v3600, %v3592
      %v3610 = vmul.f32 %v3600, %v3593
      %v3611 = vmul.f32 %v3600, %v3594
      %v3612 = vmul.f32 %v3600, %v3595
      %v3613 = vmul.f32 %v3600, %v3596
      %v3614 = vmul.f32 %v3600, %v3597
      %v3615 = vmul.f32 %v3600, %v3598
      %v3616 = vmul.f32 %v3600, %v3599
      %v3617 = vmul.f32 %v3601, 8.0
      %v3618 = vmul.f32 %v3602, 8.0
      %v3619 = vmul.f32 %v3603, 8.0
      %v3620 = vmul.f32 %v3604, 8.0
      %v3621 = vmul.f32 %v3605, 8.0
      %v3622 = vmul.f32 %v3606, 8.0
      %v3623 = vmul.f32 %v3607, 8.0
      %v3624 = vmul.f32 %v3608, 8.0
      %v3625 = vmul.f32 %v3609, 8.0
      %v3626 = vmul.f32 %v3610, 8.0
      %v3627 = vmul.f32 %v3611, 8.0
      %v3628 = vmul.f32 %v3612, 8.0
      %v3629 = vmul.f32 %v3613, 8.0
      %v3630 = vmul.f32 %v3614, 8.0
      %v3631 = vmul.f32 %v3615, 8.0
      %v3632 = vmul.f32 %v3616, 8.0
      %v3633 = vld [vmem:[%s4 + $0x4] sm:$0x1]
      %v3634 = vmul.f32 %v3301, %v3601
      %v3635 = vmul.f32 %v3307, %v3602
      %v3636 = vmul.f32 %v3313, %v3603
      %v3637 = vmul.f32 %v3319, %v3604
      %v3638 = vmul.f32 %v3325, %v3605
      %v3639 = vmul.f32 %v3331, %v3606
      %v3640 = vmul.f32 %v3337, %v3607
      %v3641 = vmul.f32 %v3343, %v3608
      %v3642 = vmul.f32 %v3349, %v3609
      %v3643 = vmul.f32 %v3355, %v3610
      %v3644 = vmul.f32 %v3361, %v3611
      %v3645 = vmul.f32 %v3367, %v3612
      %v3646 = vmul.f32 %v3373, %v3613
      %v3647 = vmul.f32 %v3379, %v3614
      %v3648 = vmul.f32 %v3385, %v3615
      %v3649 = vmul.f32 %v3391, %v3616
      %v3650 = vsub.f32 %v3633, %v3634
      %v3651 = vsub.f32 %v3633, %v3635
      %v3652 = vsub.f32 %v3633, %v3636
      %v3653 = vsub.f32 %v3633, %v3637
      %v3654 = vsub.f32 %v3633, %v3638
      %v3655 = vsub.f32 %v3633, %v3639
      %v3656 = vsub.f32 %v3633, %v3640
      %v3657 = vsub.f32 %v3633, %v3641
      %v3658 = vsub.f32 %v3633, %v3642
      %v3659 = vsub.f32 %v3633, %v3643
      %v3660 = vsub.f32 %v3633, %v3644
      %v3661 = vsub.f32 %v3633, %v3645
      %v3662 = vsub.f32 %v3633, %v3646
      %v3663 = vsub.f32 %v3633, %v3647
      %v3664 = vsub.f32 %v3633, %v3648
      %v3665 = vsub.f32 %v3633, %v3649
      %v3666 = vlaneseq
      %v3667 = vshrl.u32 %v3666, 7
      %v3668 = vsub.s32 0, %v3667
      %v3669 = vrot.slane %v3617, %v3668
      %v3670 = vlaneseq
      %v3671 = vshrl.u32 %v3670, 7
      %v3672 = vsub.s32 0, %v3671
      %v3673 = vrot.slane %v3618, %v3672
      %v3674 = vlaneseq
      %v3675 = vshrl.u32 %v3674, 7
      %v3676 = vsub.s32 0, %v3675
      %v3677 = vrot.slane %v3619, %v3676
      %v3678 = vlaneseq
      %v3679 = vshrl.u32 %v3678, 7
      %v3680 = vsub.s32 0, %v3679
      %v3681 = vrot.slane %v3620, %v3680
      %v3682 = vlaneseq
      %v3683 = vshrl.u32 %v3682, 7
      %v3684 = vsub.s32 0, %v3683
      %v3685 = vrot.slane %v3621, %v3684
      %v3686 = vlaneseq
      %v3687 = vshrl.u32 %v3686, 7
      %v3688 = vsub.s32 0, %v3687
      %v3689 = vrot.slane %v3622, %v3688
      %v3690 = vlaneseq
      %v3691 = vshrl.u32 %v3690, 7
      %v3692 = vsub.s32 0, %v3691
      %v3693 = vrot.slane %v3623, %v3692
      %v3694 = vlaneseq
      %v3695 = vshrl.u32 %v3694, 7
      %v3696 = vsub.s32 0, %v3695
      %v3697 = vrot.slane %v3624, %v3696
      %v3698 = vlaneseq
      %v3699 = vshrl.u32 %v3698, 7
      %v3700 = vsub.s32 0, %v3699
      %v3701 = vrot.slane %v3625, %v3700
      %v3702 = vlaneseq
      %v3703 = vshrl.u32 %v3702, 7
      %v3704 = vsub.s32 0, %v3703
      %v3705 = vrot.slane %v3626, %v3704
      %v3706 = vlaneseq
      %v3707 = vshrl.u32 %v3706, 7
      %v3708 = vsub.s32 0, %v3707
      %v3709 = vrot.slane %v3627, %v3708
      %v3710 = vlaneseq
      %v3711 = vshrl.u32 %v3710, 7
      %v3712 = vsub.s32 0, %v3711
      %v3713 = vrot.slane %v3628, %v3712
      %v3714 = vlaneseq
      %v3715 = vshrl.u32 %v3714, 7
      %v3716 = vsub.s32 0, %v3715
      %v3717 = vrot.slane %v3629, %v3716
      %v3718 = vlaneseq
      %v3719 = vshrl.u32 %v3718, 7
      %v3720 = vsub.s32 0, %v3719
      %v3721 = vrot.slane %v3630, %v3720
      %v3722 = vlaneseq
      %v3723 = vshrl.u32 %v3722, 7
      %v3724 = vsub.s32 0, %v3723
      %v3725 = vrot.slane %v3631, %v3724
      %v3726 = vlaneseq
      %v3727 = vshrl.u32 %v3726, 7
      %v3728 = vsub.s32 0, %v3727
      %v3729 = vrot.slane %v3632, %v3728
      %v3730 = vmul.f32 %v3218, %v3669
      %v3731 = vmul.f32 %v3223, %v3673
      %v3732 = vmul.f32 %v3228, %v3677
      %v3733 = vmul.f32 %v3233, %v3681
      %v3734 = vmul.f32 %v3238, %v3685
      %v3735 = vmul.f32 %v3243, %v3689
      %v3736 = vmul.f32 %v3248, %v3693
      %v3737 = vmul.f32 %v3253, %v3697
      %v3738 = vmul.f32 %v3258, %v3701
      %v3739 = vmul.f32 %v3263, %v3705
      %v3740 = vmul.f32 %v3268, %v3709
      %v3741 = vmul.f32 %v3273, %v3713
      %v3742 = vmul.f32 %v3278, %v3717
      %v3743 = vmul.f32 %v3283, %v3721
      %v3744 = vmul.f32 %v3288, %v3725
      %v3745 = vmul.f32 %v3293, %v3729
      %v3746 = vlaneseq
      %v3747 = vshrl.u32 %v3746, 7
      %v3748 = vsub.s32 0, %v3747
      %v3749 = vrot.slane %v3650, %v3748
      %v3750 = vlaneseq
      %v3751 = vshrl.u32 %v3750, 7
      %v3752 = vsub.s32 0, %v3751
      %v3753 = vrot.slane %v3651, %v3752
      %v3754 = vlaneseq
      %v3755 = vshrl.u32 %v3754, 7
      %v3756 = vsub.s32 0, %v3755
      %v3757 = vrot.slane %v3652, %v3756
      %v3758 = vlaneseq
      %v3759 = vshrl.u32 %v3758, 7
      %v3760 = vsub.s32 0, %v3759
      %v3761 = vrot.slane %v3653, %v3760
      %v3762 = vlaneseq
      %v3763 = vshrl.u32 %v3762, 7
      %v3764 = vsub.s32 0, %v3763
      %v3765 = vrot.slane %v3654, %v3764
      %v3766 = vlaneseq
      %v3767 = vshrl.u32 %v3766, 7
      %v3768 = vsub.s32 0, %v3767
      %v3769 = vrot.slane %v3655, %v3768
      %v3770 = vlaneseq
      %v3771 = vshrl.u32 %v3770, 7
      %v3772 = vsub.s32 0, %v3771
      %v3773 = vrot.slane %v3656, %v3772
      %v3774 = vlaneseq
      %v3775 = vshrl.u32 %v3774, 7
      %v3776 = vsub.s32 0, %v3775
      %v3777 = vrot.slane %v3657, %v3776
      %v3778 = vlaneseq
      %v3779 = vshrl.u32 %v3778, 7
      %v3780 = vsub.s32 0, %v3779
      %v3781 = vrot.slane %v3658, %v3780
      %v3782 = vlaneseq
      %v3783 = vshrl.u32 %v3782, 7
      %v3784 = vsub.s32 0, %v3783
      %v3785 = vrot.slane %v3659, %v3784
      %v3786 = vlaneseq
      %v3787 = vshrl.u32 %v3786, 7
      %v3788 = vsub.s32 0, %v3787
      %v3789 = vrot.slane %v3660, %v3788
      %v3790 = vlaneseq
      %v3791 = vshrl.u32 %v3790, 7
      %v3792 = vsub.s32 0, %v3791
      %v3793 = vrot.slane %v3661, %v3792
      %v3794 = vlaneseq
      %v3795 = vshrl.u32 %v3794, 7
      %v3796 = vsub.s32 0, %v3795
      %v3797 = vrot.slane %v3662, %v3796
      %v3798 = vlaneseq
      %v3799 = vshrl.u32 %v3798, 7
      %v3800 = vsub.s32 0, %v3799
      %v3801 = vrot.slane %v3663, %v3800
      %v3802 = vlaneseq
      %v3803 = vshrl.u32 %v3802, 7
      %v3804 = vsub.s32 0, %v3803
      %v3805 = vrot.slane %v3664, %v3804
      %v3806 = vlaneseq
      %v3807 = vshrl.u32 %v3806, 7
      %v3808 = vsub.s32 0, %v3807
      %v3809 = vrot.slane %v3665, %v3808
      %v3810 = vadd.f32 %v3730, %v3749
      %v3811 = vadd.f32 %v3731, %v3753
      %v3812 = vadd.f32 %v3732, %v3757
      %v3813 = vadd.f32 %v3733, %v3761
      %v3814 = vadd.f32 %v3734, %v3765
      %v3815 = vadd.f32 %v3735, %v3769
      %v3816 = vadd.f32 %v3736, %v3773
      %v3817 = vadd.f32 %v3737, %v3777
      %v3818 = vadd.f32 %v3738, %v3781
      %v3819 = vadd.f32 %v3739, %v3785
      %v3820 = vadd.f32 %v3740, %v3789
      %v3821 = vadd.f32 %v3741, %v3793
      %v3822 = vadd.f32 %v3742, %v3797
      %v3823 = vadd.f32 %v3743, %v3801
      %v3824 = vadd.f32 %v3744, %v3805
      %v3825 = vadd.f32 %v3745, %v3809
      %v3826 = vmax.f32 %v3810, 0.0
      %v3827 = vmax.f32 %v3811, 0.0
      %v3828 = vmax.f32 %v3812, 0.0
      %v3829 = vmax.f32 %v3813, 0.0
      %v3830 = vmax.f32 %v3814, 0.0
      %v3831 = vmax.f32 %v3815, 0.0
      %v3832 = vmax.f32 %v3816, 0.0
      %v3833 = vmax.f32 %v3817, 0.0
      %v3834 = vmax.f32 %v3818, 0.0
      %v3835 = vmax.f32 %v3819, 0.0
      %v3836 = vmax.f32 %v3820, 0.0
      %v3837 = vmax.f32 %v3821, 0.0
      %v3838 = vmax.f32 %v3822, 0.0
      %v3839 = vmax.f32 %v3823, 0.0
      %v3840 = vmax.f32 %v3824, 0.0
      %v3841 = vmax.f32 %v3825, 0.0
      %s3842 = scalar_lea.vmem %s2, 512
      %v3843 = vld [vmem:[%s3842] sm:$0xff]
      %v3844 = vld [vmem:[%s3842 + $0x8] sm:$0xff]
      %v3845 = vld [vmem:[%s3842 + $0x10] sm:$0xff]
      %v3846 = vld [vmem:[%s3842 + $0x18] sm:$0xff]
      %v3847 = vld [vmem:[%s3842 + $0x20] sm:$0xff]
      %v3848 = vld [vmem:[%s3842 + $0x28] sm:$0xff]
      %v3849 = vld [vmem:[%s3842 + $0x30] sm:$0xff]
      %v3850 = vld [vmem:[%s3842 + $0x38] sm:$0xff]
      %v3851 = vld [vmem:[%s3842 + $0x40] sm:$0xff]
      %v3852 = vld [vmem:[%s3842 + $0x48] sm:$0xff]
      %v3853 = vld [vmem:[%s3842 + $0x50] sm:$0xff]
      %v3854 = vld [vmem:[%s3842 + $0x58] sm:$0xff]
      %v3855 = vld [vmem:[%s3842 + $0x60] sm:$0xff]
      %v3856 = vld [vmem:[%s3842 + $0x68] sm:$0xff]
      %v3857 = vld [vmem:[%s3842 + $0x70] sm:$0xff]
      %v3858 = vld [vmem:[%s3842 + $0x78] sm:$0xff]
      %3859 = vmatprep.subr.mxu0 0.0
      %3860 = vmatpush1.msra.mxu0 %v3858
      %3861 = vmatprep.subr.mxu0 0.0
      %3862 = vmatpush1.msra.mxu0 %v3857
      %3863 = vmatprep.subr.mxu0 0.0
      %3864 = vmatpush1.msra.mxu0 %v3856
      %3865 = vmatprep.subr.mxu0 0.0
      %3866 = vmatpush1.msra.mxu0 %v3855
      %3867 = vmatprep.subr.mxu0 0.0
      %3868 = vmatpush1.msra.mxu0 %v3854
      %3869 = vmatprep.subr.mxu0 0.0
      %3870 = vmatpush1.msra.mxu0 %v3853
      %3871 = vmatprep.subr.mxu0 0.0
      %3872 = vmatpush1.msra.mxu0 %v3852
      %3873 = vmatprep.subr.mxu0 0.0
      %3874 = vmatpush1.msra.mxu0 %v3851
      %3875 = vmatprep.subr.mxu0 0.0
      %3876 = vmatpush1.msra.mxu0 %v3850
      %3877 = vmatprep.subr.mxu0 0.0
      %3878 = vmatpush1.msra.mxu0 %v3849
      %3879 = vmatprep.subr.mxu0 0.0
      %3880 = vmatpush1.msra.mxu0 %v3848
      %3881 = vmatprep.subr.mxu0 0.0
      %3882 = vmatpush1.msra.mxu0 %v3847
      %3883 = vmatprep.subr.mxu0 0.0
      %3884 = vmatpush1.msra.mxu0 %v3846
      %3885 = vmatprep.subr.mxu0 0.0
      %3886 = vmatpush1.msra.mxu0 %v3845
      %3887 = vmatprep.subr.mxu0 0.0
      %3888 = vmatpush1.msra.mxu0 %v3844
      %3889 = vmatprep.subr.mxu0 0.0
      %3890 = vmatpush1.msra.mxu0 %v3843
      %3891 = vmatprep.subr.mxu0 0.0
      %3892 = vmatpush2.msra.mxu0 0.0
      %3893 = vmatprep.subr.mxu0 0.0
      %3894 = vmatpush2.msra.mxu0 0.0
      %3895 = vmatprep.subr.mxu0 0.0
      %3896 = vmatpush2.msra.mxu0 0.0
      %3897 = vmatprep.subr.mxu0 0.0
      %3898 = vmatpush2.msra.mxu0 0.0
      %3899 = vmatprep.subr.mxu0 0.0
      %3900 = vmatpush2.msra.mxu0 0.0
      %3901 = vmatprep.subr.mxu0 0.0
      %3902 = vmatpush2.msra.mxu0 0.0
      %3903 = vmatprep.subr.mxu0 0.0
      %3904 = vmatpush2.msra.mxu0 0.0
      %3905 = vmatprep.subr.mxu0 0.0
      %3906 = vmatpush2.msra.mxu0 0.0
      %3907 = vmatprep.subr.mxu0 0.0
      %3908 = vmatpush2.msra.mxu0 0.0
      %3909 = vmatprep.subr.mxu0 0.0
      %3910 = vmatpush2.msra.mxu0 0.0
      %3911 = vmatprep.subr.mxu0 0.0
      %3912 = vmatpush2.msra.mxu0 0.0
      %3913 = vmatprep.subr.mxu0 0.0
      %3914 = vmatpush2.msra.mxu0 0.0
      %3915 = vmatprep.subr.mxu0 0.0
      %3916 = vmatpush2.msra.mxu0 0.0
      %3917 = vmatprep.subr.mxu0 0.0
      %3918 = vmatpush2.msra.mxu0 0.0
      %3919 = vmatprep.subr.mxu0 0.0
      %3920 = vmatpush2.msra.mxu0 0.0
      %3921 = vmatprep.subr.mxu0 0.0
      %3922 = vmatpush2.msra.mxu0 0.0
      %3923 = vmatprep.mubr.f32.mxu0 0.0
      %3924 = vmatmul.mubr.f32.gmra.mxu0 %v3826
      %v3925 = vpop.f32.mrf.mxu0
      %v3926 = vadd.f32 0.0, %v3925
      %v3927 = vpop.f32.mrf.mxu0
      %3928 = vmatprep.mubr.f32.mxu0 0.0
      %3929 = vmatmul.mubr.f32.gmra.mxu0 %v3827
      %v3930 = vpop.f32.mrf.mxu0
      %v3931 = vadd.f32 0.0, %v3930
      %v3932 = vpop.f32.mrf.mxu0
      %3933 = vmatprep.mubr.f32.mxu0 0.0
      %3934 = vmatmul.mubr.f32.gmra.mxu0 %v3828
      %v3935 = vpop.f32.mrf.mxu0
      %v3936 = vadd.f32 0.0, %v3935
      %v3937 = vpop.f32.mrf.mxu0
      %3938 = vmatprep.mubr.f32.mxu0 0.0
      %3939 = vmatmul.mubr.f32.gmra.mxu0 %v3829
      %v3940 = vpop.f32.mrf.mxu0
      %v3941 = vadd.f32 0.0, %v3940
      %v3942 = vpop.f32.mrf.mxu0
      %3943 = vmatprep.mubr.f32.mxu0 0.0
      %3944 = vmatmul.mubr.f32.gmra.mxu0 %v3830
      %v3945 = vpop.f32.mrf.mxu0
      %v3946 = vadd.f32 0.0, %v3945
      %v3947 = vpop.f32.mrf.mxu0
      %3948 = vmatprep.mubr.f32.mxu0 0.0
      %3949 = vmatmul.mubr.f32.gmra.mxu0 %v3831
      %v3950 = vpop.f32.mrf.mxu0
      %v3951 = vadd.f32 0.0, %v3950
      %v3952 = vpop.f32.mrf.mxu0
      %3953 = vmatprep.mubr.f32.mxu0 0.0
      %3954 = vmatmul.mubr.f32.gmra.mxu0 %v3832
      %v3955 = vpop.f32.mrf.mxu0
      %v3956 = vadd.f32 0.0, %v3955
      %v3957 = vpop.f32.mrf.mxu0
      %3958 = vmatprep.mubr.f32.mxu0 0.0
      %3959 = vmatmul.mubr.f32.gmra.mxu0 %v3833
      %v3960 = vpop.f32.mrf.mxu0
      %v3961 = vadd.f32 0.0, %v3960
      %v3962 = vpop.f32.mrf.mxu0
      %3963 = vmatprep.mubr.f32.mxu0 0.0
      %3964 = vmatmul.mubr.f32.gmra.mxu0 %v3834
      %v3965 = vpop.f32.mrf.mxu0
      %v3966 = vadd.f32 0.0, %v3965
      %v3967 = vpop.f32.mrf.mxu0
      %3968 = vmatprep.mubr.f32.mxu0 0.0
      %3969 = vmatmul.mubr.f32.gmra.mxu0 %v3835
      %v3970 = vpop.f32.mrf.mxu0
      %v3971 = vadd.f32 0.0, %v3970
      %v3972 = vpop.f32.mrf.mxu0
      %3973 = vmatprep.mubr.f32.mxu0 0.0
      %3974 = vmatmul.mubr.f32.gmra.mxu0 %v3836
      %v3975 = vpop.f32.mrf.mxu0
      %v3976 = vadd.f32 0.0, %v3975
      %v3977 = vpop.f32.mrf.mxu0
      %3978 = vmatprep.mubr.f32.mxu0 0.0
      %3979 = vmatmul.mubr.f32.gmra.mxu0 %v3837
      %v3980 = vpop.f32.mrf.mxu0
      %v3981 = vadd.f32 0.0, %v3980
      %v3982 = vpop.f32.mrf.mxu0
      %3983 = vmatprep.mubr.f32.mxu0 0.0
      %3984 = vmatmul.mubr.f32.gmra.mxu0 %v3838
      %v3985 = vpop.f32.mrf.mxu0
      %v3986 = vadd.f32 0.0, %v3985
      %v3987 = vpop.f32.mrf.mxu0
      %3988 = vmatprep.mubr.f32.mxu0 0.0
      %3989 = vmatmul.mubr.f32.gmra.mxu0 %v3839
      %v3990 = vpop.f32.mrf.mxu0
      %v3991 = vadd.f32 0.0, %v3990
      %v3992 = vpop.f32.mrf.mxu0
      %3993 = vmatprep.mubr.f32.mxu0 0.0
      %3994 = vmatmul.mubr.f32.gmra.mxu0 %v3840
      %v3995 = vpop.f32.mrf.mxu0
      %v3996 = vadd.f32 0.0, %v3995
      %v3997 = vpop.f32.mrf.mxu0
      %3998 = vmatprep.mubr.f32.mxu0 0.0
      %3999 = vmatmul.mubr.f32.gmra.mxu0 %v3841
      %v4000 = vpop.f32.mrf.mxu0
      %v4001 = vadd.f32 0.0, %v4000
      %v4002 = vpop.f32.mrf.mxu0
      %4003 = vdwg.mxu0
      %v4004 = vrot.slane %v3926, 4
      %v4005 = vadd.f32 %v3926, %v4004
      %v4006 = vrot.slane %v4005, 2
      %v4007 = vadd.f32 %v4005, %v4006
      %v4008 = vrot.slane %v4007, 1
      %v4009 = vadd.f32 %v4007, %v4008
      %v4010 = vrot.slane %v3931, 4
      %v4011 = vadd.f32 %v3931, %v4010
      %v4012 = vrot.slane %v4011, 2
      %v4013 = vadd.f32 %v4011, %v4012
      %v4014 = vrot.slane %v4013, 1
      %v4015 = vadd.f32 %v4013, %v4014
      %v4016 = vrot.slane %v3936, 4
      %v4017 = vadd.f32 %v3936, %v4016
      %v4018 = vrot.slane %v4017, 2
      %v4019 = vadd.f32 %v4017, %v4018
      %v4020 = vrot.slane %v4019, 1
      %v4021 = vadd.f32 %v4019, %v4020
      %v4022 = vrot.slane %v3941, 4
      %v4023 = vadd.f32 %v3941, %v4022
      %v4024 = vrot.slane %v4023, 2
      %v4025 = vadd.f32 %v4023, %v4024
      %v4026 = vrot.slane %v4025, 1
      %v4027 = vadd.f32 %v4025, %v4026
      %v4028 = vrot.slane %v3946, 4
      %v4029 = vadd.f32 %v3946, %v4028
      %v4030 = vrot.slane %v4029, 2
      %v4031 = vadd.f32 %v4029, %v4030
      %v4032 = vrot.slane %v4031, 1
      %v4033 = vadd.f32 %v4031, %v4032
      %v4034 = vrot.slane %v3951, 4
      %v4035 = vadd.f32 %v3951, %v4034
      %v4036 = vrot.slane %v4035, 2
      %v4037 = vadd.f32 %v4035, %v4036
      %v4038 = vrot.slane %v4037, 1
      %v4039 = vadd.f32 %v4037, %v4038
      %v4040 = vrot.slane %v3956, 4
      %v4041 = vadd.f32 %v3956, %v4040
      %v4042 = vrot.slane %v4041, 2
      %v4043 = vadd.f32 %v4041, %v4042
      %v4044 = vrot.slane %v4043, 1
      %v4045 = vadd.f32 %v4043, %v4044
      %v4046 = vrot.slane %v3961, 4
      %v4047 = vadd.f32 %v3961, %v4046
      %v4048 = vrot.slane %v4047, 2
      %v4049 = vadd.f32 %v4047, %v4048
      %v4050 = vrot.slane %v4049, 1
      %v4051 = vadd.f32 %v4049, %v4050
      %v4052 = vrot.slane %v3966, 4
      %v4053 = vadd.f32 %v3966, %v4052
      %v4054 = vrot.slane %v4053, 2
      %v4055 = vadd.f32 %v4053, %v4054
      %v4056 = vrot.slane %v4055, 1
      %v4057 = vadd.f32 %v4055, %v4056
      %v4058 = vrot.slane %v3971, 4
      %v4059 = vadd.f32 %v3971, %v4058
      %v4060 = vrot.slane %v4059, 2
      %v4061 = vadd.f32 %v4059, %v4060
      %v4062 = vrot.slane %v4061, 1
      %v4063 = vadd.f32 %v4061, %v4062
      %v4064 = vrot.slane %v3976, 4
      %v4065 = vadd.f32 %v3976, %v4064
      %v4066 = vrot.slane %v4065, 2
      %v4067 = vadd.f32 %v4065, %v4066
      %v4068 = vrot.slane %v4067, 1
      %v4069 = vadd.f32 %v4067, %v4068
      %v4070 = vrot.slane %v3981, 4
      %v4071 = vadd.f32 %v3981, %v4070
      %v4072 = vrot.slane %v4071, 2
      %v4073 = vadd.f32 %v4071, %v4072
      %v4074 = vrot.slane %v4073, 1
      %v4075 = vadd.f32 %v4073, %v4074
      %v4076 = vrot.slane %v3986, 4
      %v4077 = vadd.f32 %v3986, %v4076
      %v4078 = vrot.slane %v4077, 2
      %v4079 = vadd.f32 %v4077, %v4078
      %v4080 = vrot.slane %v4079, 1
      %v4081 = vadd.f32 %v4079, %v4080
      %v4082 = vrot.slane %v3991, 4
      %v4083 = vadd.f32 %v3991, %v4082
      %v4084 = vrot.slane %v4083, 2
      %v4085 = vadd.f32 %v4083, %v4084
      %v4086 = vrot.slane %v4085, 1
      %v4087 = vadd.f32 %v4085, %v4086
      %v4088 = vrot.slane %v3996, 4
      %v4089 = vadd.f32 %v3996, %v4088
      %v4090 = vrot.slane %v4089, 2
      %v4091 = vadd.f32 %v4089, %v4090
      %v4092 = vrot.slane %v4091, 1
      %v4093 = vadd.f32 %v4091, %v4092
      %v4094 = vrot.slane %v4001, 4
      %v4095 = vadd.f32 %v4001, %v4094
      %v4096 = vrot.slane %v4095, 2
      %v4097 = vadd.f32 %v4095, %v4096
      %v4098 = vrot.slane %v4097, 1
      %v4099 = vadd.f32 %v4097, %v4098
      %v4100 = vmul.f32 %v3926, %v3926
      %v4101 = vmul.f32 %v3931, %v3931
      %v4102 = vmul.f32 %v3936, %v3936
      %v4103 = vmul.f32 %v3941, %v3941
      %v4104 = vmul.f32 %v3946, %v3946
      %v4105 = vmul.f32 %v3951, %v3951
      %v4106 = vmul.f32 %v3956, %v3956
      %v4107 = vmul.f32 %v3961, %v3961
      %v4108 = vmul.f32 %v3966, %v3966
      %v4109 = vmul.f32 %v3971, %v3971
      %v4110 = vmul.f32 %v3976, %v3976
      %v4111 = vmul.f32 %v3981, %v3981
      %v4112 = vmul.f32 %v3986, %v3986
      %v4113 = vmul.f32 %v3991, %v3991
      %v4114 = vmul.f32 %v3996, %v3996
      %v4115 = vmul.f32 %v4001, %v4001
      %v4116 = vrot.slane %v4100, 4
      %v4117 = vadd.f32 %v4100, %v4116
      %v4118 = vrot.slane %v4117, 2
      %v4119 = vadd.f32 %v4117, %v4118
      %v4120 = vrot.slane %v4119, 1
      %v4121 = vadd.f32 %v4119, %v4120
      %v4122 = vrot.slane %v4101, 4
      %v4123 = vadd.f32 %v4101, %v4122
      %v4124 = vrot.slane %v4123, 2
      %v4125 = vadd.f32 %v4123, %v4124
      %v4126 = vrot.slane %v4125, 1
      %v4127 = vadd.f32 %v4125, %v4126
      %v4128 = vrot.slane %v4102, 4
      %v4129 = vadd.f32 %v4102, %v4128
      %v4130 = vrot.slane %v4129, 2
      %v4131 = vadd.f32 %v4129, %v4130
      %v4132 = vrot.slane %v4131, 1
      %v4133 = vadd.f32 %v4131, %v4132
      %v4134 = vrot.slane %v4103, 4
      %v4135 = vadd.f32 %v4103, %v4134
      %v4136 = vrot.slane %v4135, 2
      %v4137 = vadd.f32 %v4135, %v4136
      %v4138 = vrot.slane %v4137, 1
      %v4139 = vadd.f32 %v4137, %v4138
      %v4140 = vrot.slane %v4104, 4
      %v4141 = vadd.f32 %v4104, %v4140
      %v4142 = vrot.slane %v4141, 2
      %v4143 = vadd.f32 %v4141, %v4142
      %v4144 = vrot.slane %v4143, 1
      %v4145 = vadd.f32 %v4143, %v4144
      %v4146 = vrot.slane %v4105, 4
      %v4147 = vadd.f32 %v4105, %v4146
      %v4148 = vrot.slane %v4147, 2
      %v4149 = vadd.f32 %v4147, %v4148
      %v4150 = vrot.slane %v4149, 1
      %v4151 = vadd.f32 %v4149, %v4150
      %v4152 = vrot.slane %v4106, 4
      %v4153 = vadd.f32 %v4106, %v4152
      %v4154 = vrot.slane %v4153, 2
      %v4155 = vadd.f32 %v4153, %v4154
      %v4156 = vrot.slane %v4155, 1
      %v4157 = vadd.f32 %v4155, %v4156
      %v4158 = vrot.slane %v4107, 4
      %v4159 = vadd.f32 %v4107, %v4158
      %v4160 = vrot.slane %v4159, 2
      %v4161 = vadd.f32 %v4159, %v4160
      %v4162 = vrot.slane %v4161, 1
      %v4163 = vadd.f32 %v4161, %v4162
      %v4164 = vrot.slane %v4108, 4
      %v4165 = vadd.f32 %v4108, %v4164
      %v4166 = vrot.slane %v4165, 2
      %v4167 = vadd.f32 %v4165, %v4166
      %v4168 = vrot.slane %v4167, 1
      %v4169 = vadd.f32 %v4167, %v4168
      %v4170 = vrot.slane %v4109, 4
      %v4171 = vadd.f32 %v4109, %v4170
      %v4172 = vrot.slane %v4171, 2
      %v4173 = vadd.f32 %v4171, %v4172
      %v4174 = vrot.slane %v4173, 1
      %v4175 = vadd.f32 %v4173, %v4174
      %v4176 = vrot.slane %v4110, 4
      %v4177 = vadd.f32 %v4110, %v4176
      %v4178 = vrot.slane %v4177, 2
      %v4179 = vadd.f32 %v4177, %v4178
      %v4180 = vrot.slane %v4179, 1
      %v4181 = vadd.f32 %v4179, %v4180
      %v4182 = vrot.slane %v4111, 4
      %v4183 = vadd.f32 %v4111, %v4182
      %v4184 = vrot.slane %v4183, 2
      %v4185 = vadd.f32 %v4183, %v4184
      %v4186 = vrot.slane %v4185, 1
      %v4187 = vadd.f32 %v4185, %v4186
      %v4188 = vrot.slane %v4112, 4
      %v4189 = vadd.f32 %v4112, %v4188
      %v4190 = vrot.slane %v4189, 2
      %v4191 = vadd.f32 %v4189, %v4190
      %v4192 = vrot.slane %v4191, 1
      %v4193 = vadd.f32 %v4191, %v4192
      %v4194 = vrot.slane %v4113, 4
      %v4195 = vadd.f32 %v4113, %v4194
      %v4196 = vrot.slane %v4195, 2
      %v4197 = vadd.f32 %v4195, %v4196
      %v4198 = vrot.slane %v4197, 1
      %v4199 = vadd.f32 %v4197, %v4198
      %v4200 = vrot.slane %v4114, 4
      %v4201 = vadd.f32 %v4114, %v4200
      %v4202 = vrot.slane %v4201, 2
      %v4203 = vadd.f32 %v4201, %v4202
      %v4204 = vrot.slane %v4203, 1
      %v4205 = vadd.f32 %v4203, %v4204
      %v4206 = vrot.slane %v4115, 4
      %v4207 = vadd.f32 %v4115, %v4206
      %v4208 = vrot.slane %v4207, 2
      %v4209 = vadd.f32 %v4207, %v4208
      %v4210 = vrot.slane %v4209, 1
      %v4211 = vadd.f32 %v4209, %v4210
      %v4212 = vmul.f32 %v4121, 8.0
      %v4213 = vmul.f32 %v4127, 8.0
      %v4214 = vmul.f32 %v4133, 8.0
      %v4215 = vmul.f32 %v4139, 8.0
      %v4216 = vmul.f32 %v4145, 8.0
      %v4217 = vmul.f32 %v4151, 8.0
      %v4218 = vmul.f32 %v4157, 8.0
      %v4219 = vmul.f32 %v4163, 8.0
      %v4220 = vmul.f32 %v4169, 8.0
      %v4221 = vmul.f32 %v4175, 8.0
      %v4222 = vmul.f32 %v4181, 8.0
      %v4223 = vmul.f32 %v4187, 8.0
      %v4224 = vmul.f32 %v4193, 8.0
      %v4225 = vmul.f32 %v4199, 8.0
      %v4226 = vmul.f32 %v4205, 8.0
      %v4227 = vmul.f32 %v4211, 8.0
      %v4228 = vmul.f32 %v4009, %v4009
      %v4229 = vmul.f32 %v4015, %v4015
      %v4230 = vmul.f32 %v4021, %v4021
      %v4231 = vmul.f32 %v4027, %v4027
      %v4232 = vmul.f32 %v4033, %v4033
      %v4233 = vmul.f32 %v4039, %v4039
      %v4234 = vmul.f32 %v4045, %v4045
      %v4235 = vmul.f32 %v4051, %v4051
      %v4236 = vmul.f32 %v4057, %v4057
      %v4237 = vmul.f32 %v4063, %v4063
      %v4238 = vmul.f32 %v4069, %v4069
      %v4239 = vmul.f32 %v4075, %v4075
      %v4240 = vmul.f32 %v4081, %v4081
      %v4241 = vmul.f32 %v4087, %v4087
      %v4242 = vmul.f32 %v4093, %v4093
      %v4243 = vmul.f32 %v4099, %v4099
      %v4244 = vsub.f32 %v4212, %v4228
      %v4245 = vsub.f32 %v4213, %v4229
      %v4246 = vsub.f32 %v4214, %v4230
      %v4247 = vsub.f32 %v4215, %v4231
      %v4248 = vsub.f32 %v4216, %v4232
      %v4249 = vsub.f32 %v4217, %v4233
      %v4250 = vsub.f32 %v4218, %v4234
      %v4251 = vsub.f32 %v4219, %v4235
      %v4252 = vsub.f32 %v4220, %v4236
      %v4253 = vsub.f32 %v4221, %v4237
      %v4254 = vsub.f32 %v4222, %v4238
      %v4255 = vsub.f32 %v4223, %v4239
      %v4256 = vsub.f32 %v4224, %v4240
      %v4257 = vsub.f32 %v4225, %v4241
      %v4258 = vsub.f32 %v4226, %v4242
      %v4259 = vsub.f32 %v4227, %v4243
      %v4260 = vmax.f32 %v4244, 0.0
      %v4261 = vmax.f32 %v4245, 0.0
      %v4262 = vmax.f32 %v4246, 0.0
      %v4263 = vmax.f32 %v4247, 0.0
      %v4264 = vmax.f32 %v4248, 0.0
      %v4265 = vmax.f32 %v4249, 0.0
      %v4266 = vmax.f32 %v4250, 0.0
      %v4267 = vmax.f32 %v4251, 0.0
      %v4268 = vmax.f32 %v4252, 0.0
      %v4269 = vmax.f32 %v4253, 0.0
      %v4270 = vmax.f32 %v4254, 0.0
      %v4271 = vmax.f32 %v4255, 0.0
      %v4272 = vmax.f32 %v4256, 0.0
      %v4273 = vmax.f32 %v4257, 0.0
      %v4274 = vmax.f32 %v4258, 0.0
      %v4275 = vmax.f32 %v4259, 0.0
      %v4276 = vadd.f32 %v4260, 0.00064
      %v4277 = vadd.f32 %v4261, 0.00064
      %v4278 = vadd.f32 %v4262, 0.00064
      %v4279 = vadd.f32 %v4263, 0.00064
      %v4280 = vadd.f32 %v4264, 0.00064
      %v4281 = vadd.f32 %v4265, 0.00064
      %v4282 = vadd.f32 %v4266, 0.00064
      %v4283 = vadd.f32 %v4267, 0.00064
      %v4284 = vadd.f32 %v4268, 0.00064
      %v4285 = vadd.f32 %v4269, 0.00064
      %v4286 = vadd.f32 %v4270, 0.00064
      %v4287 = vadd.f32 %v4271, 0.00064
      %v4288 = vadd.f32 %v4272, 0.00064
      %v4289 = vadd.f32 %v4273, 0.00064
      %v4290 = vadd.f32 %v4274, 0.00064
      %v4291 = vadd.f32 %v4275, 0.00064
      %v4292 = vrsqrt.pop %v4276
      %v4293 = vrsqrt.pop %v4277
      %v4294 = vrsqrt.pop %v4278
      %v4295 = vrsqrt.pop %v4279
      %v4296 = vrsqrt.pop %v4280
      %v4297 = vrsqrt.pop %v4281
      %v4298 = vrsqrt.pop %v4282
      %v4299 = vrsqrt.pop %v4283
      %v4300 = vrsqrt.pop %v4284
      %v4301 = vrsqrt.pop %v4285
      %v4302 = vrsqrt.pop %v4286
      %v4303 = vrsqrt.pop %v4287
      %v4304 = vrsqrt.pop %v4288
      %v4305 = vrsqrt.pop %v4289
      %v4306 = vrsqrt.pop %v4290
      %v4307 = vrsqrt.pop %v4291
      %v4308 = vld [vmem:[%s3 + $0x5] sm:$0x1]
      %v4309 = vmul.f32 %v4308, %v4292
      %v4310 = vmul.f32 %v4308, %v4293
      %v4311 = vmul.f32 %v4308, %v4294
      %v4312 = vmul.f32 %v4308, %v4295
      %v4313 = vmul.f32 %v4308, %v4296
      %v4314 = vmul.f32 %v4308, %v4297
      %v4315 = vmul.f32 %v4308, %v4298
      %v4316 = vmul.f32 %v4308, %v4299
      %v4317 = vmul.f32 %v4308, %v4300
      %v4318 = vmul.f32 %v4308, %v4301
      %v4319 = vmul.f32 %v4308, %v4302
      %v4320 = vmul.f32 %v4308, %v4303
      %v4321 = vmul.f32 %v4308, %v4304
      %v4322 = vmul.f32 %v4308, %v4305
      %v4323 = vmul.f32 %v4308, %v4306
      %v4324 = vmul.f32 %v4308, %v4307
      %v4325 = vmul.f32 %v4309, 8.0
      %v4326 = vmul.f32 %v4310, 8.0
      %v4327 = vmul.f32 %v4311, 8.0
      %v4328 = vmul.f32 %v4312, 8.0
      %v4329 = vmul.f32 %v4313, 8.0
      %v4330 = vmul.f32 %v4314, 8.0
      %v4331 = vmul.f32 %v4315, 8.0
      %v4332 = vmul.f32 %v4316, 8.0
      %v4333 = vmul.f32 %v4317, 8.0
      %v4334 = vmul.f32 %v4318, 8.0
      %v4335 = vmul.f32 %v4319, 8.0
      %v4336 = vmul.f32 %v4320, 8.0
      %v4337 = vmul.f32 %v4321, 8.0
      %v4338 = vmul.f32 %v4322, 8.0
      %v4339 = vmul.f32 %v4323, 8.0
      %v4340 = vmul.f32 %v4324, 8.0
      %v4341 = vld [vmem:[%s4 + $0x5] sm:$0x1]
      %v4342 = vmul.f32 %v4009, %v4309
      %v4343 = vmul.f32 %v4015, %v4310
      %v4344 = vmul.f32 %v4021, %v4311
      %v4345 = vmul.f32 %v4027, %v4312
      %v4346 = vmul.f32 %v4033, %v4313
      %v4347 = vmul.f32 %v4039, %v4314
      %v4348 = vmul.f32 %v4045, %v4315
      %v4349 = vmul.f32 %v4051, %v4316
      %v4350 = vmul.f32 %v4057, %v4317
      %v4351 = vmul.f32 %v4063, %v4318
      %v4352 = vmul.f32 %v4069, %v4319
      %v4353 = vmul.f32 %v4075, %v4320
      %v4354 = vmul.f32 %v4081, %v4321
      %v4355 = vmul.f32 %v4087, %v4322
      %v4356 = vmul.f32 %v4093, %v4323
      %v4357 = vmul.f32 %v4099, %v4324
      %v4358 = vsub.f32 %v4341, %v4342
      %v4359 = vsub.f32 %v4341, %v4343
      %v4360 = vsub.f32 %v4341, %v4344
      %v4361 = vsub.f32 %v4341, %v4345
      %v4362 = vsub.f32 %v4341, %v4346
      %v4363 = vsub.f32 %v4341, %v4347
      %v4364 = vsub.f32 %v4341, %v4348
      %v4365 = vsub.f32 %v4341, %v4349
      %v4366 = vsub.f32 %v4341, %v4350
      %v4367 = vsub.f32 %v4341, %v4351
      %v4368 = vsub.f32 %v4341, %v4352
      %v4369 = vsub.f32 %v4341, %v4353
      %v4370 = vsub.f32 %v4341, %v4354
      %v4371 = vsub.f32 %v4341, %v4355
      %v4372 = vsub.f32 %v4341, %v4356
      %v4373 = vsub.f32 %v4341, %v4357
      %v4374 = vlaneseq
      %v4375 = vshrl.u32 %v4374, 7
      %v4376 = vsub.s32 0, %v4375
      %v4377 = vrot.slane %v4325, %v4376
      %v4378 = vlaneseq
      %v4379 = vshrl.u32 %v4378, 7
      %v4380 = vsub.s32 0, %v4379
      %v4381 = vrot.slane %v4326, %v4380
      %v4382 = vlaneseq
      %v4383 = vshrl.u32 %v4382, 7
      %v4384 = vsub.s32 0, %v4383
      %v4385 = vrot.slane %v4327, %v4384
      %v4386 = vlaneseq
      %v4387 = vshrl.u32 %v4386, 7
      %v4388 = vsub.s32 0, %v4387
      %v4389 = vrot.slane %v4328, %v4388
      %v4390 = vlaneseq
      %v4391 = vshrl.u32 %v4390, 7
      %v4392 = vsub.s32 0, %v4391
      %v4393 = vrot.slane %v4329, %v4392
      %v4394 = vlaneseq
      %v4395 = vshrl.u32 %v4394, 7
      %v4396 = vsub.s32 0, %v4395
      %v4397 = vrot.slane %v4330, %v4396
      %v4398 = vlaneseq
      %v4399 = vshrl.u32 %v4398, 7
      %v4400 = vsub.s32 0, %v4399
      %v4401 = vrot.slane %v4331, %v4400
      %v4402 = vlaneseq
      %v4403 = vshrl.u32 %v4402, 7
      %v4404 = vsub.s32 0, %v4403
      %v4405 = vrot.slane %v4332, %v4404
      %v4406 = vlaneseq
      %v4407 = vshrl.u32 %v4406, 7
      %v4408 = vsub.s32 0, %v4407
      %v4409 = vrot.slane %v4333, %v4408
      %v4410 = vlaneseq
      %v4411 = vshrl.u32 %v4410, 7
      %v4412 = vsub.s32 0, %v4411
      %v4413 = vrot.slane %v4334, %v4412
      %v4414 = vlaneseq
      %v4415 = vshrl.u32 %v4414, 7
      %v4416 = vsub.s32 0, %v4415
      %v4417 = vrot.slane %v4335, %v4416
      %v4418 = vlaneseq
      %v4419 = vshrl.u32 %v4418, 7
      %v4420 = vsub.s32 0, %v4419
      %v4421 = vrot.slane %v4336, %v4420
      %v4422 = vlaneseq
      %v4423 = vshrl.u32 %v4422, 7
      %v4424 = vsub.s32 0, %v4423
      %v4425 = vrot.slane %v4337, %v4424
      %v4426 = vlaneseq
      %v4427 = vshrl.u32 %v4426, 7
      %v4428 = vsub.s32 0, %v4427
      %v4429 = vrot.slane %v4338, %v4428
      %v4430 = vlaneseq
      %v4431 = vshrl.u32 %v4430, 7
      %v4432 = vsub.s32 0, %v4431
      %v4433 = vrot.slane %v4339, %v4432
      %v4434 = vlaneseq
      %v4435 = vshrl.u32 %v4434, 7
      %v4436 = vsub.s32 0, %v4435
      %v4437 = vrot.slane %v4340, %v4436
      %v4438 = vmul.f32 %v3926, %v4377
      %v4439 = vmul.f32 %v3931, %v4381
      %v4440 = vmul.f32 %v3936, %v4385
      %v4441 = vmul.f32 %v3941, %v4389
      %v4442 = vmul.f32 %v3946, %v4393
      %v4443 = vmul.f32 %v3951, %v4397
      %v4444 = vmul.f32 %v3956, %v4401
      %v4445 = vmul.f32 %v3961, %v4405
      %v4446 = vmul.f32 %v3966, %v4409
      %v4447 = vmul.f32 %v3971, %v4413
      %v4448 = vmul.f32 %v3976, %v4417
      %v4449 = vmul.f32 %v3981, %v4421
      %v4450 = vmul.f32 %v3986, %v4425
      %v4451 = vmul.f32 %v3991, %v4429
      %v4452 = vmul.f32 %v3996, %v4433
      %v4453 = vmul.f32 %v4001, %v4437
      %v4454 = vlaneseq
      %v4455 = vshrl.u32 %v4454, 7
      %v4456 = vsub.s32 0, %v4455
      %v4457 = vrot.slane %v4358, %v4456
      %v4458 = vlaneseq
      %v4459 = vshrl.u32 %v4458, 7
      %v4460 = vsub.s32 0, %v4459
      %v4461 = vrot.slane %v4359, %v4460
      %v4462 = vlaneseq
      %v4463 = vshrl.u32 %v4462, 7
      %v4464 = vsub.s32 0, %v4463
      %v4465 = vrot.slane %v4360, %v4464
      %v4466 = vlaneseq
      %v4467 = vshrl.u32 %v4466, 7
      %v4468 = vsub.s32 0, %v4467
      %v4469 = vrot.slane %v4361, %v4468
      %v4470 = vlaneseq
      %v4471 = vshrl.u32 %v4470, 7
      %v4472 = vsub.s32 0, %v4471
      %v4473 = vrot.slane %v4362, %v4472
      %v4474 = vlaneseq
      %v4475 = vshrl.u32 %v4474, 7
      %v4476 = vsub.s32 0, %v4475
      %v4477 = vrot.slane %v4363, %v4476
      %v4478 = vlaneseq
      %v4479 = vshrl.u32 %v4478, 7
      %v4480 = vsub.s32 0, %v4479
      %v4481 = vrot.slane %v4364, %v4480
      %v4482 = vlaneseq
      %v4483 = vshrl.u32 %v4482, 7
      %v4484 = vsub.s32 0, %v4483
      %v4485 = vrot.slane %v4365, %v4484
      %v4486 = vlaneseq
      %v4487 = vshrl.u32 %v4486, 7
      %v4488 = vsub.s32 0, %v4487
      %v4489 = vrot.slane %v4366, %v4488
      %v4490 = vlaneseq
      %v4491 = vshrl.u32 %v4490, 7
      %v4492 = vsub.s32 0, %v4491
      %v4493 = vrot.slane %v4367, %v4492
      %v4494 = vlaneseq
      %v4495 = vshrl.u32 %v4494, 7
      %v4496 = vsub.s32 0, %v4495
      %v4497 = vrot.slane %v4368, %v4496
      %v4498 = vlaneseq
      %v4499 = vshrl.u32 %v4498, 7
      %v4500 = vsub.s32 0, %v4499
      %v4501 = vrot.slane %v4369, %v4500
      %v4502 = vlaneseq
      %v4503 = vshrl.u32 %v4502, 7
      %v4504 = vsub.s32 0, %v4503
      %v4505 = vrot.slane %v4370, %v4504
      %v4506 = vlaneseq
      %v4507 = vshrl.u32 %v4506, 7
      %v4508 = vsub.s32 0, %v4507
      %v4509 = vrot.slane %v4371, %v4508
      %v4510 = vlaneseq
      %v4511 = vshrl.u32 %v4510, 7
      %v4512 = vsub.s32 0, %v4511
      %v4513 = vrot.slane %v4372, %v4512
      %v4514 = vlaneseq
      %v4515 = vshrl.u32 %v4514, 7
      %v4516 = vsub.s32 0, %v4515
      %v4517 = vrot.slane %v4373, %v4516
      %v4518 = vadd.f32 %v4438, %v4457
      %v4519 = vadd.f32 %v4439, %v4461
      %v4520 = vadd.f32 %v4440, %v4465
      %v4521 = vadd.f32 %v4441, %v4469
      %v4522 = vadd.f32 %v4442, %v4473
      %v4523 = vadd.f32 %v4443, %v4477
      %v4524 = vadd.f32 %v4444, %v4481
      %v4525 = vadd.f32 %v4445, %v4485
      %v4526 = vadd.f32 %v4446, %v4489
      %v4527 = vadd.f32 %v4447, %v4493
      %v4528 = vadd.f32 %v4448, %v4497
      %v4529 = vadd.f32 %v4449, %v4501
      %v4530 = vadd.f32 %v4450, %v4505
      %v4531 = vadd.f32 %v4451, %v4509
      %v4532 = vadd.f32 %v4452, %v4513
      %v4533 = vadd.f32 %v4453, %v4517
      %v4534 = vmax.f32 %v4518, 0.0
      %v4535 = vmax.f32 %v4519, 0.0
      %v4536 = vmax.f32 %v4520, 0.0
      %v4537 = vmax.f32 %v4521, 0.0
      %v4538 = vmax.f32 %v4522, 0.0
      %v4539 = vmax.f32 %v4523, 0.0
      %v4540 = vmax.f32 %v4524, 0.0
      %v4541 = vmax.f32 %v4525, 0.0
      %v4542 = vmax.f32 %v4526, 0.0
      %v4543 = vmax.f32 %v4527, 0.0
      %v4544 = vmax.f32 %v4528, 0.0
      %v4545 = vmax.f32 %v4529, 0.0
      %v4546 = vmax.f32 %v4530, 0.0
      %v4547 = vmax.f32 %v4531, 0.0
      %v4548 = vmax.f32 %v4532, 0.0
      %v4549 = vmax.f32 %v4533, 0.0
      %s4550 = scalar_lea.vmem %s2, 640
      %v4551 = vld [vmem:[%s4550] sm:$0xff]
      %v4552 = vld [vmem:[%s4550 + $0x8] sm:$0xff]
      %v4553 = vld [vmem:[%s4550 + $0x10] sm:$0xff]
      %v4554 = vld [vmem:[%s4550 + $0x18] sm:$0xff]
      %v4555 = vld [vmem:[%s4550 + $0x20] sm:$0xff]
      %v4556 = vld [vmem:[%s4550 + $0x28] sm:$0xff]
      %v4557 = vld [vmem:[%s4550 + $0x30] sm:$0xff]
      %v4558 = vld [vmem:[%s4550 + $0x38] sm:$0xff]
      %v4559 = vld [vmem:[%s4550 + $0x40] sm:$0xff]
      %v4560 = vld [vmem:[%s4550 + $0x48] sm:$0xff]
      %v4561 = vld [vmem:[%s4550 + $0x50] sm:$0xff]
      %v4562 = vld [vmem:[%s4550 + $0x58] sm:$0xff]
      %v4563 = vld [vmem:[%s4550 + $0x60] sm:$0xff]
      %v4564 = vld [vmem:[%s4550 + $0x68] sm:$0xff]
      %v4565 = vld [vmem:[%s4550 + $0x70] sm:$0xff]
      %v4566 = vld [vmem:[%s4550 + $0x78] sm:$0xff]
      %4567 = vmatprep.subr.mxu0 0.0
      %4568 = vmatpush1.msra.mxu0 %v4566
      %4569 = vmatprep.subr.mxu0 0.0
      %4570 = vmatpush1.msra.mxu0 %v4565
      %4571 = vmatprep.subr.mxu0 0.0
      %4572 = vmatpush1.msra.mxu0 %v4564
      %4573 = vmatprep.subr.mxu0 0.0
      %4574 = vmatpush1.msra.mxu0 %v4563
      %4575 = vmatprep.subr.mxu0 0.0
      %4576 = vmatpush1.msra.mxu0 %v4562
      %4577 = vmatprep.subr.mxu0 0.0
      %4578 = vmatpush1.msra.mxu0 %v4561
      %4579 = vmatprep.subr.mxu0 0.0
      %4580 = vmatpush1.msra.mxu0 %v4560
      %4581 = vmatprep.subr.mxu0 0.0
      %4582 = vmatpush1.msra.mxu0 %v4559
      %4583 = vmatprep.subr.mxu0 0.0
      %4584 = vmatpush1.msra.mxu0 %v4558
      %4585 = vmatprep.subr.mxu0 0.0
      %4586 = vmatpush1.msra.mxu0 %v4557
      %4587 = vmatprep.subr.mxu0 0.0
      %4588 = vmatpush1.msra.mxu0 %v4556
      %4589 = vmatprep.subr.mxu0 0.0
      %4590 = vmatpush1.msra.mxu0 %v4555
      %4591 = vmatprep.subr.mxu0 0.0
      %4592 = vmatpush1.msra.mxu0 %v4554
      %4593 = vmatprep.subr.mxu0 0.0
      %4594 = vmatpush1.msra.mxu0 %v4553
      %4595 = vmatprep.subr.mxu0 0.0
      %4596 = vmatpush1.msra.mxu0 %v4552
      %4597 = vmatprep.subr.mxu0 0.0
      %4598 = vmatpush1.msra.mxu0 %v4551
      %4599 = vmatprep.subr.mxu0 0.0
      %4600 = vmatpush2.msra.mxu0 0.0
      %4601 = vmatprep.subr.mxu0 0.0
      %4602 = vmatpush2.msra.mxu0 0.0
      %4603 = vmatprep.subr.mxu0 0.0
      %4604 = vmatpush2.msra.mxu0 0.0
      %4605 = vmatprep.subr.mxu0 0.0
      %4606 = vmatpush2.msra.mxu0 0.0
      %4607 = vmatprep.subr.mxu0 0.0
      %4608 = vmatpush2.msra.mxu0 0.0
      %4609 = vmatprep.subr.mxu0 0.0
      %4610 = vmatpush2.msra.mxu0 0.0
      %4611 = vmatprep.subr.mxu0 0.0
      %4612 = vmatpush2.msra.mxu0 0.0
      %4613 = vmatprep.subr.mxu0 0.0
      %4614 = vmatpush2.msra.mxu0 0.0
      %4615 = vmatprep.subr.mxu0 0.0
      %4616 = vmatpush2.msra.mxu0 0.0
      %4617 = vmatprep.subr.mxu0 0.0
      %4618 = vmatpush2.msra.mxu0 0.0
      %4619 = vmatprep.subr.mxu0 0.0
      %4620 = vmatpush2.msra.mxu0 0.0
      %4621 = vmatprep.subr.mxu0 0.0
      %4622 = vmatpush2.msra.mxu0 0.0
      %4623 = vmatprep.subr.mxu0 0.0
      %4624 = vmatpush2.msra.mxu0 0.0
      %4625 = vmatprep.subr.mxu0 0.0
      %4626 = vmatpush2.msra.mxu0 0.0
      %4627 = vmatprep.subr.mxu0 0.0
      %4628 = vmatpush2.msra.mxu0 0.0
      %4629 = vmatprep.subr.mxu0 0.0
      %4630 = vmatpush2.msra.mxu0 0.0
      %4631 = vmatprep.mubr.f32.mxu0 0.0
      %4632 = vmatmul.mubr.f32.gmra.mxu0 %v4534
      %v4633 = vpop.f32.mrf.mxu0
      %v4634 = vadd.f32 0.0, %v4633
      %v4635 = vpop.f32.mrf.mxu0
      %4636 = vmatprep.mubr.f32.mxu0 0.0
      %4637 = vmatmul.mubr.f32.gmra.mxu0 %v4535
      %v4638 = vpop.f32.mrf.mxu0
      %v4639 = vadd.f32 0.0, %v4638
      %v4640 = vpop.f32.mrf.mxu0
      %4641 = vmatprep.mubr.f32.mxu0 0.0
      %4642 = vmatmul.mubr.f32.gmra.mxu0 %v4536
      %v4643 = vpop.f32.mrf.mxu0
      %v4644 = vadd.f32 0.0, %v4643
      %v4645 = vpop.f32.mrf.mxu0
      %4646 = vmatprep.mubr.f32.mxu0 0.0
      %4647 = vmatmul.mubr.f32.gmra.mxu0 %v4537
      %v4648 = vpop.f32.mrf.mxu0
      %v4649 = vadd.f32 0.0, %v4648
      %v4650 = vpop.f32.mrf.mxu0
      %4651 = vmatprep.mubr.f32.mxu0 0.0
      %4652 = vmatmul.mubr.f32.gmra.mxu0 %v4538
      %v4653 = vpop.f32.mrf.mxu0
      %v4654 = vadd.f32 0.0, %v4653
      %v4655 = vpop.f32.mrf.mxu0
      %4656 = vmatprep.mubr.f32.mxu0 0.0
      %4657 = vmatmul.mubr.f32.gmra.mxu0 %v4539
      %v4658 = vpop.f32.mrf.mxu0
      %v4659 = vadd.f32 0.0, %v4658
      %v4660 = vpop.f32.mrf.mxu0
      %4661 = vmatprep.mubr.f32.mxu0 0.0
      %4662 = vmatmul.mubr.f32.gmra.mxu0 %v4540
      %v4663 = vpop.f32.mrf.mxu0
      %v4664 = vadd.f32 0.0, %v4663
      %v4665 = vpop.f32.mrf.mxu0
      %4666 = vmatprep.mubr.f32.mxu0 0.0
      %4667 = vmatmul.mubr.f32.gmra.mxu0 %v4541
      %v4668 = vpop.f32.mrf.mxu0
      %v4669 = vadd.f32 0.0, %v4668
      %v4670 = vpop.f32.mrf.mxu0
      %4671 = vmatprep.mubr.f32.mxu0 0.0
      %4672 = vmatmul.mubr.f32.gmra.mxu0 %v4542
      %v4673 = vpop.f32.mrf.mxu0
      %v4674 = vadd.f32 0.0, %v4673
      %v4675 = vpop.f32.mrf.mxu0
      %4676 = vmatprep.mubr.f32.mxu0 0.0
      %4677 = vmatmul.mubr.f32.gmra.mxu0 %v4543
      %v4678 = vpop.f32.mrf.mxu0
      %v4679 = vadd.f32 0.0, %v4678
      %v4680 = vpop.f32.mrf.mxu0
      %4681 = vmatprep.mubr.f32.mxu0 0.0
      %4682 = vmatmul.mubr.f32.gmra.mxu0 %v4544
      %v4683 = vpop.f32.mrf.mxu0
      %v4684 = vadd.f32 0.0, %v4683
      %v4685 = vpop.f32.mrf.mxu0
      %4686 = vmatprep.mubr.f32.mxu0 0.0
      %4687 = vmatmul.mubr.f32.gmra.mxu0 %v4545
      %v4688 = vpop.f32.mrf.mxu0
      %v4689 = vadd.f32 0.0, %v4688
      %v4690 = vpop.f32.mrf.mxu0
      %4691 = vmatprep.mubr.f32.mxu0 0.0
      %4692 = vmatmul.mubr.f32.gmra.mxu0 %v4546
      %v4693 = vpop.f32.mrf.mxu0
      %v4694 = vadd.f32 0.0, %v4693
      %v4695 = vpop.f32.mrf.mxu0
      %4696 = vmatprep.mubr.f32.mxu0 0.0
      %4697 = vmatmul.mubr.f32.gmra.mxu0 %v4547
      %v4698 = vpop.f32.mrf.mxu0
      %v4699 = vadd.f32 0.0, %v4698
      %v4700 = vpop.f32.mrf.mxu0
      %4701 = vmatprep.mubr.f32.mxu0 0.0
      %4702 = vmatmul.mubr.f32.gmra.mxu0 %v4548
      %v4703 = vpop.f32.mrf.mxu0
      %v4704 = vadd.f32 0.0, %v4703
      %v4705 = vpop.f32.mrf.mxu0
      %4706 = vmatprep.mubr.f32.mxu0 0.0
      %4707 = vmatmul.mubr.f32.gmra.mxu0 %v4549
      %v4708 = vpop.f32.mrf.mxu0
      %v4709 = vadd.f32 0.0, %v4708
      %v4710 = vpop.f32.mrf.mxu0
      %4711 = vdwg.mxu0
      %v4712 = vrot.slane %v4634, 4
      %v4713 = vadd.f32 %v4634, %v4712
      %v4714 = vrot.slane %v4713, 2
      %v4715 = vadd.f32 %v4713, %v4714
      %v4716 = vrot.slane %v4715, 1
      %v4717 = vadd.f32 %v4715, %v4716
      %v4718 = vrot.slane %v4639, 4
      %v4719 = vadd.f32 %v4639, %v4718
      %v4720 = vrot.slane %v4719, 2
      %v4721 = vadd.f32 %v4719, %v4720
      %v4722 = vrot.slane %v4721, 1
      %v4723 = vadd.f32 %v4721, %v4722
      %v4724 = vrot.slane %v4644, 4
      %v4725 = vadd.f32 %v4644, %v4724
      %v4726 = vrot.slane %v4725, 2
      %v4727 = vadd.f32 %v4725, %v4726
      %v4728 = vrot.slane %v4727, 1
      %v4729 = vadd.f32 %v4727, %v4728
      %v4730 = vrot.slane %v4649, 4
      %v4731 = vadd.f32 %v4649, %v4730
      %v4732 = vrot.slane %v4731, 2
      %v4733 = vadd.f32 %v4731, %v4732
      %v4734 = vrot.slane %v4733, 1
      %v4735 = vadd.f32 %v4733, %v4734
      %v4736 = vrot.slane %v4654, 4
      %v4737 = vadd.f32 %v4654, %v4736
      %v4738 = vrot.slane %v4737, 2
      %v4739 = vadd.f32 %v4737, %v4738
      %v4740 = vrot.slane %v4739, 1
      %v4741 = vadd.f32 %v4739, %v4740
      %v4742 = vrot.slane %v4659, 4
      %v4743 = vadd.f32 %v4659, %v4742
      %v4744 = vrot.slane %v4743, 2
      %v4745 = vadd.f32 %v4743, %v4744
      %v4746 = vrot.slane %v4745, 1
      %v4747 = vadd.f32 %v4745, %v4746
      %v4748 = vrot.slane %v4664, 4
      %v4749 = vadd.f32 %v4664, %v4748
      %v4750 = vrot.slane %v4749, 2
      %v4751 = vadd.f32 %v4749, %v4750
      %v4752 = vrot.slane %v4751, 1
      %v4753 = vadd.f32 %v4751, %v4752
      %v4754 = vrot.slane %v4669, 4
      %v4755 = vadd.f32 %v4669, %v4754
      %v4756 = vrot.slane %v4755, 2
      %v4757 = vadd.f32 %v4755, %v4756
      %v4758 = vrot.slane %v4757, 1
      %v4759 = vadd.f32 %v4757, %v4758
      %v4760 = vrot.slane %v4674, 4
      %v4761 = vadd.f32 %v4674, %v4760
      %v4762 = vrot.slane %v4761, 2
      %v4763 = vadd.f32 %v4761, %v4762
      %v4764 = vrot.slane %v4763, 1
      %v4765 = vadd.f32 %v4763, %v4764
      %v4766 = vrot.slane %v4679, 4
      %v4767 = vadd.f32 %v4679, %v4766
      %v4768 = vrot.slane %v4767, 2
      %v4769 = vadd.f32 %v4767, %v4768
      %v4770 = vrot.slane %v4769, 1
      %v4771 = vadd.f32 %v4769, %v4770
      %v4772 = vrot.slane %v4684, 4
      %v4773 = vadd.f32 %v4684, %v4772
      %v4774 = vrot.slane %v4773, 2
      %v4775 = vadd.f32 %v4773, %v4774
      %v4776 = vrot.slane %v4775, 1
      %v4777 = vadd.f32 %v4775, %v4776
      %v4778 = vrot.slane %v4689, 4
      %v4779 = vadd.f32 %v4689, %v4778
      %v4780 = vrot.slane %v4779, 2
      %v4781 = vadd.f32 %v4779, %v4780
      %v4782 = vrot.slane %v4781, 1
      %v4783 = vadd.f32 %v4781, %v4782
      %v4784 = vrot.slane %v4694, 4
      %v4785 = vadd.f32 %v4694, %v4784
      %v4786 = vrot.slane %v4785, 2
      %v4787 = vadd.f32 %v4785, %v4786
      %v4788 = vrot.slane %v4787, 1
      %v4789 = vadd.f32 %v4787, %v4788
      %v4790 = vrot.slane %v4699, 4
      %v4791 = vadd.f32 %v4699, %v4790
      %v4792 = vrot.slane %v4791, 2
      %v4793 = vadd.f32 %v4791, %v4792
      %v4794 = vrot.slane %v4793, 1
      %v4795 = vadd.f32 %v4793, %v4794
      %v4796 = vrot.slane %v4704, 4
      %v4797 = vadd.f32 %v4704, %v4796
      %v4798 = vrot.slane %v4797, 2
      %v4799 = vadd.f32 %v4797, %v4798
      %v4800 = vrot.slane %v4799, 1
      %v4801 = vadd.f32 %v4799, %v4800
      %v4802 = vrot.slane %v4709, 4
      %v4803 = vadd.f32 %v4709, %v4802
      %v4804 = vrot.slane %v4803, 2
      %v4805 = vadd.f32 %v4803, %v4804
      %v4806 = vrot.slane %v4805, 1
      %v4807 = vadd.f32 %v4805, %v4806
      %v4808 = vmul.f32 %v4634, %v4634
      %v4809 = vmul.f32 %v4639, %v4639
      %v4810 = vmul.f32 %v4644, %v4644
      %v4811 = vmul.f32 %v4649, %v4649
      %v4812 = vmul.f32 %v4654, %v4654
      %v4813 = vmul.f32 %v4659, %v4659
      %v4814 = vmul.f32 %v4664, %v4664
      %v4815 = vmul.f32 %v4669, %v4669
      %v4816 = vmul.f32 %v4674, %v4674
      %v4817 = vmul.f32 %v4679, %v4679
      %v4818 = vmul.f32 %v4684, %v4684
      %v4819 = vmul.f32 %v4689, %v4689
      %v4820 = vmul.f32 %v4694, %v4694
      %v4821 = vmul.f32 %v4699, %v4699
      %v4822 = vmul.f32 %v4704, %v4704
      %v4823 = vmul.f32 %v4709, %v4709
      %v4824 = vrot.slane %v4808, 4
      %v4825 = vadd.f32 %v4808, %v4824
      %v4826 = vrot.slane %v4825, 2
      %v4827 = vadd.f32 %v4825, %v4826
      %v4828 = vrot.slane %v4827, 1
      %v4829 = vadd.f32 %v4827, %v4828
      %v4830 = vrot.slane %v4809, 4
      %v4831 = vadd.f32 %v4809, %v4830
      %v4832 = vrot.slane %v4831, 2
      %v4833 = vadd.f32 %v4831, %v4832
      %v4834 = vrot.slane %v4833, 1
      %v4835 = vadd.f32 %v4833, %v4834
      %v4836 = vrot.slane %v4810, 4
      %v4837 = vadd.f32 %v4810, %v4836
      %v4838 = vrot.slane %v4837, 2
      %v4839 = vadd.f32 %v4837, %v4838
      %v4840 = vrot.slane %v4839, 1
      %v4841 = vadd.f32 %v4839, %v4840
      %v4842 = vrot.slane %v4811, 4
      %v4843 = vadd.f32 %v4811, %v4842
      %v4844 = vrot.slane %v4843, 2
      %v4845 = vadd.f32 %v4843, %v4844
      %v4846 = vrot.slane %v4845, 1
      %v4847 = vadd.f32 %v4845, %v4846
      %v4848 = vrot.slane %v4812, 4
      %v4849 = vadd.f32 %v4812, %v4848
      %v4850 = vrot.slane %v4849, 2
      %v4851 = vadd.f32 %v4849, %v4850
      %v4852 = vrot.slane %v4851, 1
      %v4853 = vadd.f32 %v4851, %v4852
      %v4854 = vrot.slane %v4813, 4
      %v4855 = vadd.f32 %v4813, %v4854
      %v4856 = vrot.slane %v4855, 2
      %v4857 = vadd.f32 %v4855, %v4856
      %v4858 = vrot.slane %v4857, 1
      %v4859 = vadd.f32 %v4857, %v4858
      %v4860 = vrot.slane %v4814, 4
      %v4861 = vadd.f32 %v4814, %v4860
      %v4862 = vrot.slane %v4861, 2
      %v4863 = vadd.f32 %v4861, %v4862
      %v4864 = vrot.slane %v4863, 1
      %v4865 = vadd.f32 %v4863, %v4864
      %v4866 = vrot.slane %v4815, 4
      %v4867 = vadd.f32 %v4815, %v4866
      %v4868 = vrot.slane %v4867, 2
      %v4869 = vadd.f32 %v4867, %v4868
      %v4870 = vrot.slane %v4869, 1
      %v4871 = vadd.f32 %v4869, %v4870
      %v4872 = vrot.slane %v4816, 4
      %v4873 = vadd.f32 %v4816, %v4872
      %v4874 = vrot.slane %v4873, 2
      %v4875 = vadd.f32 %v4873, %v4874
      %v4876 = vrot.slane %v4875, 1
      %v4877 = vadd.f32 %v4875, %v4876
      %v4878 = vrot.slane %v4817, 4
      %v4879 = vadd.f32 %v4817, %v4878
      %v4880 = vrot.slane %v4879, 2
      %v4881 = vadd.f32 %v4879, %v4880
      %v4882 = vrot.slane %v4881, 1
      %v4883 = vadd.f32 %v4881, %v4882
      %v4884 = vrot.slane %v4818, 4
      %v4885 = vadd.f32 %v4818, %v4884
      %v4886 = vrot.slane %v4885, 2
      %v4887 = vadd.f32 %v4885, %v4886
      %v4888 = vrot.slane %v4887, 1
      %v4889 = vadd.f32 %v4887, %v4888
      %v4890 = vrot.slane %v4819, 4
      %v4891 = vadd.f32 %v4819, %v4890
      %v4892 = vrot.slane %v4891, 2
      %v4893 = vadd.f32 %v4891, %v4892
      %v4894 = vrot.slane %v4893, 1
      %v4895 = vadd.f32 %v4893, %v4894
      %v4896 = vrot.slane %v4820, 4
      %v4897 = vadd.f32 %v4820, %v4896
      %v4898 = vrot.slane %v4897, 2
      %v4899 = vadd.f32 %v4897, %v4898
      %v4900 = vrot.slane %v4899, 1
      %v4901 = vadd.f32 %v4899, %v4900
      %v4902 = vrot.slane %v4821, 4
      %v4903 = vadd.f32 %v4821, %v4902
      %v4904 = vrot.slane %v4903, 2
      %v4905 = vadd.f32 %v4903, %v4904
      %v4906 = vrot.slane %v4905, 1
      %v4907 = vadd.f32 %v4905, %v4906
      %v4908 = vrot.slane %v4822, 4
      %v4909 = vadd.f32 %v4822, %v4908
      %v4910 = vrot.slane %v4909, 2
      %v4911 = vadd.f32 %v4909, %v4910
      %v4912 = vrot.slane %v4911, 1
      %v4913 = vadd.f32 %v4911, %v4912
      %v4914 = vrot.slane %v4823, 4
      %v4915 = vadd.f32 %v4823, %v4914
      %v4916 = vrot.slane %v4915, 2
      %v4917 = vadd.f32 %v4915, %v4916
      %v4918 = vrot.slane %v4917, 1
      %v4919 = vadd.f32 %v4917, %v4918
      %v4920 = vmul.f32 %v4829, 8.0
      %v4921 = vmul.f32 %v4835, 8.0
      %v4922 = vmul.f32 %v4841, 8.0
      %v4923 = vmul.f32 %v4847, 8.0
      %v4924 = vmul.f32 %v4853, 8.0
      %v4925 = vmul.f32 %v4859, 8.0
      %v4926 = vmul.f32 %v4865, 8.0
      %v4927 = vmul.f32 %v4871, 8.0
      %v4928 = vmul.f32 %v4877, 8.0
      %v4929 = vmul.f32 %v4883, 8.0
      %v4930 = vmul.f32 %v4889, 8.0
      %v4931 = vmul.f32 %v4895, 8.0
      %v4932 = vmul.f32 %v4901, 8.0
      %v4933 = vmul.f32 %v4907, 8.0
      %v4934 = vmul.f32 %v4913, 8.0
      %v4935 = vmul.f32 %v4919, 8.0
      %v4936 = vmul.f32 %v4717, %v4717
      %v4937 = vmul.f32 %v4723, %v4723
      %v4938 = vmul.f32 %v4729, %v4729
      %v4939 = vmul.f32 %v4735, %v4735
      %v4940 = vmul.f32 %v4741, %v4741
      %v4941 = vmul.f32 %v4747, %v4747
      %v4942 = vmul.f32 %v4753, %v4753
      %v4943 = vmul.f32 %v4759, %v4759
      %v4944 = vmul.f32 %v4765, %v4765
      %v4945 = vmul.f32 %v4771, %v4771
      %v4946 = vmul.f32 %v4777, %v4777
      %v4947 = vmul.f32 %v4783, %v4783
      %v4948 = vmul.f32 %v4789, %v4789
      %v4949 = vmul.f32 %v4795, %v4795
      %v4950 = vmul.f32 %v4801, %v4801
      %v4951 = vmul.f32 %v4807, %v4807
      %v4952 = vsub.f32 %v4920, %v4936
      %v4953 = vsub.f32 %v4921, %v4937
      %v4954 = vsub.f32 %v4922, %v4938
      %v4955 = vsub.f32 %v4923, %v4939
      %v4956 = vsub.f32 %v4924, %v4940
      %v4957 = vsub.f32 %v4925, %v4941
      %v4958 = vsub.f32 %v4926, %v4942
      %v4959 = vsub.f32 %v4927, %v4943
      %v4960 = vsub.f32 %v4928, %v4944
      %v4961 = vsub.f32 %v4929, %v4945
      %v4962 = vsub.f32 %v4930, %v4946
      %v4963 = vsub.f32 %v4931, %v4947
      %v4964 = vsub.f32 %v4932, %v4948
      %v4965 = vsub.f32 %v4933, %v4949
      %v4966 = vsub.f32 %v4934, %v4950
      %v4967 = vsub.f32 %v4935, %v4951
      %v4968 = vmax.f32 %v4952, 0.0
      %v4969 = vmax.f32 %v4953, 0.0
      %v4970 = vmax.f32 %v4954, 0.0
      %v4971 = vmax.f32 %v4955, 0.0
      %v4972 = vmax.f32 %v4956, 0.0
      %v4973 = vmax.f32 %v4957, 0.0
      %v4974 = vmax.f32 %v4958, 0.0
      %v4975 = vmax.f32 %v4959, 0.0
      %v4976 = vmax.f32 %v4960, 0.0
      %v4977 = vmax.f32 %v4961, 0.0
      %v4978 = vmax.f32 %v4962, 0.0
      %v4979 = vmax.f32 %v4963, 0.0
      %v4980 = vmax.f32 %v4964, 0.0
      %v4981 = vmax.f32 %v4965, 0.0
      %v4982 = vmax.f32 %v4966, 0.0
      %v4983 = vmax.f32 %v4967, 0.0
      %v4984 = vadd.f32 %v4968, 0.00064
      %v4985 = vadd.f32 %v4969, 0.00064
      %v4986 = vadd.f32 %v4970, 0.00064
      %v4987 = vadd.f32 %v4971, 0.00064
      %v4988 = vadd.f32 %v4972, 0.00064
      %v4989 = vadd.f32 %v4973, 0.00064
      %v4990 = vadd.f32 %v4974, 0.00064
      %v4991 = vadd.f32 %v4975, 0.00064
      %v4992 = vadd.f32 %v4976, 0.00064
      %v4993 = vadd.f32 %v4977, 0.00064
      %v4994 = vadd.f32 %v4978, 0.00064
      %v4995 = vadd.f32 %v4979, 0.00064
      %v4996 = vadd.f32 %v4980, 0.00064
      %v4997 = vadd.f32 %v4981, 0.00064
      %v4998 = vadd.f32 %v4982, 0.00064
      %v4999 = vadd.f32 %v4983, 0.00064
      %v5000 = vrsqrt.pop %v4984
      %v5001 = vrsqrt.pop %v4985
      %v5002 = vrsqrt.pop %v4986
      %v5003 = vrsqrt.pop %v4987
      %v5004 = vrsqrt.pop %v4988
      %v5005 = vrsqrt.pop %v4989
      %v5006 = vrsqrt.pop %v4990
      %v5007 = vrsqrt.pop %v4991
      %v5008 = vrsqrt.pop %v4992
      %v5009 = vrsqrt.pop %v4993
      %v5010 = vrsqrt.pop %v4994
      %v5011 = vrsqrt.pop %v4995
      %v5012 = vrsqrt.pop %v4996
      %v5013 = vrsqrt.pop %v4997
      %v5014 = vrsqrt.pop %v4998
      %v5015 = vrsqrt.pop %v4999
      %v5016 = vld [vmem:[%s3 + $0x6] sm:$0x1]
      %v5017 = vmul.f32 %v5016, %v5000
      %v5018 = vmul.f32 %v5016, %v5001
      %v5019 = vmul.f32 %v5016, %v5002
      %v5020 = vmul.f32 %v5016, %v5003
      %v5021 = vmul.f32 %v5016, %v5004
      %v5022 = vmul.f32 %v5016, %v5005
      %v5023 = vmul.f32 %v5016, %v5006
      %v5024 = vmul.f32 %v5016, %v5007
      %v5025 = vmul.f32 %v5016, %v5008
      %v5026 = vmul.f32 %v5016, %v5009
      %v5027 = vmul.f32 %v5016, %v5010
      %v5028 = vmul.f32 %v5016, %v5011
      %v5029 = vmul.f32 %v5016, %v5012
      %v5030 = vmul.f32 %v5016, %v5013
      %v5031 = vmul.f32 %v5016, %v5014
      %v5032 = vmul.f32 %v5016, %v5015
      %v5033 = vmul.f32 %v5017, 8.0
      %v5034 = vmul.f32 %v5018, 8.0
      %v5035 = vmul.f32 %v5019, 8.0
      %v5036 = vmul.f32 %v5020, 8.0
      %v5037 = vmul.f32 %v5021, 8.0
      %v5038 = vmul.f32 %v5022, 8.0
      %v5039 = vmul.f32 %v5023, 8.0
      %v5040 = vmul.f32 %v5024, 8.0
      %v5041 = vmul.f32 %v5025, 8.0
      %v5042 = vmul.f32 %v5026, 8.0
      %v5043 = vmul.f32 %v5027, 8.0
      %v5044 = vmul.f32 %v5028, 8.0
      %v5045 = vmul.f32 %v5029, 8.0
      %v5046 = vmul.f32 %v5030, 8.0
      %v5047 = vmul.f32 %v5031, 8.0
      %v5048 = vmul.f32 %v5032, 8.0
      %v5049 = vld [vmem:[%s4 + $0x6] sm:$0x1]
      %v5050 = vmul.f32 %v4717, %v5017
      %v5051 = vmul.f32 %v4723, %v5018
      %v5052 = vmul.f32 %v4729, %v5019
      %v5053 = vmul.f32 %v4735, %v5020
      %v5054 = vmul.f32 %v4741, %v5021
      %v5055 = vmul.f32 %v4747, %v5022
      %v5056 = vmul.f32 %v4753, %v5023
      %v5057 = vmul.f32 %v4759, %v5024
      %v5058 = vmul.f32 %v4765, %v5025
      %v5059 = vmul.f32 %v4771, %v5026
      %v5060 = vmul.f32 %v4777, %v5027
      %v5061 = vmul.f32 %v4783, %v5028
      %v5062 = vmul.f32 %v4789, %v5029
      %v5063 = vmul.f32 %v4795, %v5030
      %v5064 = vmul.f32 %v4801, %v5031
      %v5065 = vmul.f32 %v4807, %v5032
      %v5066 = vsub.f32 %v5049, %v5050
      %v5067 = vsub.f32 %v5049, %v5051
      %v5068 = vsub.f32 %v5049, %v5052
      %v5069 = vsub.f32 %v5049, %v5053
      %v5070 = vsub.f32 %v5049, %v5054
      %v5071 = vsub.f32 %v5049, %v5055
      %v5072 = vsub.f32 %v5049, %v5056
      %v5073 = vsub.f32 %v5049, %v5057
      %v5074 = vsub.f32 %v5049, %v5058
      %v5075 = vsub.f32 %v5049, %v5059
      %v5076 = vsub.f32 %v5049, %v5060
      %v5077 = vsub.f32 %v5049, %v5061
      %v5078 = vsub.f32 %v5049, %v5062
      %v5079 = vsub.f32 %v5049, %v5063
      %v5080 = vsub.f32 %v5049, %v5064
      %v5081 = vsub.f32 %v5049, %v5065
      %v5082 = vlaneseq
      %v5083 = vshrl.u32 %v5082, 7
      %v5084 = vsub.s32 0, %v5083
      %v5085 = vrot.slane %v5033, %v5084
      %v5086 = vlaneseq
      %v5087 = vshrl.u32 %v5086, 7
      %v5088 = vsub.s32 0, %v5087
      %v5089 = vrot.slane %v5034, %v5088
      %v5090 = vlaneseq
      %v5091 = vshrl.u32 %v5090, 7
      %v5092 = vsub.s32 0, %v5091
      %v5093 = vrot.slane %v5035, %v5092
      %v5094 = vlaneseq
      %v5095 = vshrl.u32 %v5094, 7
      %v5096 = vsub.s32 0, %v5095
      %v5097 = vrot.slane %v5036, %v5096
      %v5098 = vlaneseq
      %v5099 = vshrl.u32 %v5098, 7
      %v5100 = vsub.s32 0, %v5099
      %v5101 = vrot.slane %v5037, %v5100
      %v5102 = vlaneseq
      %v5103 = vshrl.u32 %v5102, 7
      %v5104 = vsub.s32 0, %v5103
      %v5105 = vrot.slane %v5038, %v5104
      %v5106 = vlaneseq
      %v5107 = vshrl.u32 %v5106, 7
      %v5108 = vsub.s32 0, %v5107
      %v5109 = vrot.slane %v5039, %v5108
      %v5110 = vlaneseq
      %v5111 = vshrl.u32 %v5110, 7
      %v5112 = vsub.s32 0, %v5111
      %v5113 = vrot.slane %v5040, %v5112
      %v5114 = vlaneseq
      %v5115 = vshrl.u32 %v5114, 7
      %v5116 = vsub.s32 0, %v5115
      %v5117 = vrot.slane %v5041, %v5116
      %v5118 = vlaneseq
      %v5119 = vshrl.u32 %v5118, 7
      %v5120 = vsub.s32 0, %v5119
      %v5121 = vrot.slane %v5042, %v5120
      %v5122 = vlaneseq
      %v5123 = vshrl.u32 %v5122, 7
      %v5124 = vsub.s32 0, %v5123
      %v5125 = vrot.slane %v5043, %v5124
      %v5126 = vlaneseq
      %v5127 = vshrl.u32 %v5126, 7
      %v5128 = vsub.s32 0, %v5127
      %v5129 = vrot.slane %v5044, %v5128
      %v5130 = vlaneseq
      %v5131 = vshrl.u32 %v5130, 7
      %v5132 = vsub.s32 0, %v5131
      %v5133 = vrot.slane %v5045, %v5132
      %v5134 = vlaneseq
      %v5135 = vshrl.u32 %v5134, 7
      %v5136 = vsub.s32 0, %v5135
      %v5137 = vrot.slane %v5046, %v5136
      %v5138 = vlaneseq
      %v5139 = vshrl.u32 %v5138, 7
      %v5140 = vsub.s32 0, %v5139
      %v5141 = vrot.slane %v5047, %v5140
      %v5142 = vlaneseq
      %v5143 = vshrl.u32 %v5142, 7
      %v5144 = vsub.s32 0, %v5143
      %v5145 = vrot.slane %v5048, %v5144
      %v5146 = vmul.f32 %v4634, %v5085
      %v5147 = vmul.f32 %v4639, %v5089
      %v5148 = vmul.f32 %v4644, %v5093
      %v5149 = vmul.f32 %v4649, %v5097
      %v5150 = vmul.f32 %v4654, %v5101
      %v5151 = vmul.f32 %v4659, %v5105
      %v5152 = vmul.f32 %v4664, %v5109
      %v5153 = vmul.f32 %v4669, %v5113
      %v5154 = vmul.f32 %v4674, %v5117
      %v5155 = vmul.f32 %v4679, %v5121
      %v5156 = vmul.f32 %v4684, %v5125
      %v5157 = vmul.f32 %v4689, %v5129
      %v5158 = vmul.f32 %v4694, %v5133
      %v5159 = vmul.f32 %v4699, %v5137
      %v5160 = vmul.f32 %v4704, %v5141
      %v5161 = vmul.f32 %v4709, %v5145
      %v5162 = vlaneseq
      %v5163 = vshrl.u32 %v5162, 7
      %v5164 = vsub.s32 0, %v5163
      %v5165 = vrot.slane %v5066, %v5164
      %v5166 = vlaneseq
      %v5167 = vshrl.u32 %v5166, 7
      %v5168 = vsub.s32 0, %v5167
      %v5169 = vrot.slane %v5067, %v5168
      %v5170 = vlaneseq
      %v5171 = vshrl.u32 %v5170, 7
      %v5172 = vsub.s32 0, %v5171
      %v5173 = vrot.slane %v5068, %v5172
      %v5174 = vlaneseq
      %v5175 = vshrl.u32 %v5174, 7
      %v5176 = vsub.s32 0, %v5175
      %v5177 = vrot.slane %v5069, %v5176
      %v5178 = vlaneseq
      %v5179 = vshrl.u32 %v5178, 7
      %v5180 = vsub.s32 0, %v5179
      %v5181 = vrot.slane %v5070, %v5180
      %v5182 = vlaneseq
      %v5183 = vshrl.u32 %v5182, 7
      %v5184 = vsub.s32 0, %v5183
      %v5185 = vrot.slane %v5071, %v5184
      %v5186 = vlaneseq
      %v5187 = vshrl.u32 %v5186, 7
      %v5188 = vsub.s32 0, %v5187
      %v5189 = vrot.slane %v5072, %v5188
      %v5190 = vlaneseq
      %v5191 = vshrl.u32 %v5190, 7
      %v5192 = vsub.s32 0, %v5191
      %v5193 = vrot.slane %v5073, %v5192
      %v5194 = vlaneseq
      %v5195 = vshrl.u32 %v5194, 7
      %v5196 = vsub.s32 0, %v5195
      %v5197 = vrot.slane %v5074, %v5196
      %v5198 = vlaneseq
      %v5199 = vshrl.u32 %v5198, 7
      %v5200 = vsub.s32 0, %v5199
      %v5201 = vrot.slane %v5075, %v5200
      %v5202 = vlaneseq
      %v5203 = vshrl.u32 %v5202, 7
      %v5204 = vsub.s32 0, %v5203
      %v5205 = vrot.slane %v5076, %v5204
      %v5206 = vlaneseq
      %v5207 = vshrl.u32 %v5206, 7
      %v5208 = vsub.s32 0, %v5207
      %v5209 = vrot.slane %v5077, %v5208
      %v5210 = vlaneseq
      %v5211 = vshrl.u32 %v5210, 7
      %v5212 = vsub.s32 0, %v5211
      %v5213 = vrot.slane %v5078, %v5212
      %v5214 = vlaneseq
      %v5215 = vshrl.u32 %v5214, 7
      %v5216 = vsub.s32 0, %v5215
      %v5217 = vrot.slane %v5079, %v5216
      %v5218 = vlaneseq
      %v5219 = vshrl.u32 %v5218, 7
      %v5220 = vsub.s32 0, %v5219
      %v5221 = vrot.slane %v5080, %v5220
      %v5222 = vlaneseq
      %v5223 = vshrl.u32 %v5222, 7
      %v5224 = vsub.s32 0, %v5223
      %v5225 = vrot.slane %v5081, %v5224
      %v5226 = vadd.f32 %v5146, %v5165
      %v5227 = vadd.f32 %v5147, %v5169
      %v5228 = vadd.f32 %v5148, %v5173
      %v5229 = vadd.f32 %v5149, %v5177
      %v5230 = vadd.f32 %v5150, %v5181
      %v5231 = vadd.f32 %v5151, %v5185
      %v5232 = vadd.f32 %v5152, %v5189
      %v5233 = vadd.f32 %v5153, %v5193
      %v5234 = vadd.f32 %v5154, %v5197
      %v5235 = vadd.f32 %v5155, %v5201
      %v5236 = vadd.f32 %v5156, %v5205
      %v5237 = vadd.f32 %v5157, %v5209
      %v5238 = vadd.f32 %v5158, %v5213
      %v5239 = vadd.f32 %v5159, %v5217
      %v5240 = vadd.f32 %v5160, %v5221
      %v5241 = vadd.f32 %v5161, %v5225
      %v5242 = vmax.f32 %v5226, 0.0
      %v5243 = vmax.f32 %v5227, 0.0
      %v5244 = vmax.f32 %v5228, 0.0
      %v5245 = vmax.f32 %v5229, 0.0
      %v5246 = vmax.f32 %v5230, 0.0
      %v5247 = vmax.f32 %v5231, 0.0
      %v5248 = vmax.f32 %v5232, 0.0
      %v5249 = vmax.f32 %v5233, 0.0
      %v5250 = vmax.f32 %v5234, 0.0
      %v5251 = vmax.f32 %v5235, 0.0
      %v5252 = vmax.f32 %v5236, 0.0
      %v5253 = vmax.f32 %v5237, 0.0
      %v5254 = vmax.f32 %v5238, 0.0
      %v5255 = vmax.f32 %v5239, 0.0
      %v5256 = vmax.f32 %v5240, 0.0
      %v5257 = vmax.f32 %v5241, 0.0
      %s5258 = scalar_lea.vmem %s2, 768
      %v5259 = vld [vmem:[%s5258] sm:$0xff]
      %v5260 = vld [vmem:[%s5258 + $0x8] sm:$0xff]
      %v5261 = vld [vmem:[%s5258 + $0x10] sm:$0xff]
      %v5262 = vld [vmem:[%s5258 + $0x18] sm:$0xff]
      %v5263 = vld [vmem:[%s5258 + $0x20] sm:$0xff]
      %v5264 = vld [vmem:[%s5258 + $0x28] sm:$0xff]
      %v5265 = vld [vmem:[%s5258 + $0x30] sm:$0xff]
      %v5266 = vld [vmem:[%s5258 + $0x38] sm:$0xff]
      %v5267 = vld [vmem:[%s5258 + $0x40] sm:$0xff]
      %v5268 = vld [vmem:[%s5258 + $0x48] sm:$0xff]
      %v5269 = vld [vmem:[%s5258 + $0x50] sm:$0xff]
      %v5270 = vld [vmem:[%s5258 + $0x58] sm:$0xff]
      %v5271 = vld [vmem:[%s5258 + $0x60] sm:$0xff]
      %v5272 = vld [vmem:[%s5258 + $0x68] sm:$0xff]
      %v5273 = vld [vmem:[%s5258 + $0x70] sm:$0xff]
      %v5274 = vld [vmem:[%s5258 + $0x78] sm:$0xff]
      %5275 = vmatprep.subr.mxu0 0.0
      %5276 = vmatpush1.msra.mxu0 %v5274
      %5277 = vmatprep.subr.mxu0 0.0
      %5278 = vmatpush1.msra.mxu0 %v5273
      %5279 = vmatprep.subr.mxu0 0.0
      %5280 = vmatpush1.msra.mxu0 %v5272
      %5281 = vmatprep.subr.mxu0 0.0
      %5282 = vmatpush1.msra.mxu0 %v5271
      %5283 = vmatprep.subr.mxu0 0.0
      %5284 = vmatpush1.msra.mxu0 %v5270
      %5285 = vmatprep.subr.mxu0 0.0
      %5286 = vmatpush1.msra.mxu0 %v5269
      %5287 = vmatprep.subr.mxu0 0.0
      %5288 = vmatpush1.msra.mxu0 %v5268
      %5289 = vmatprep.subr.mxu0 0.0
      %5290 = vmatpush1.msra.mxu0 %v5267
      %5291 = vmatprep.subr.mxu0 0.0
      %5292 = vmatpush1.msra.mxu0 %v5266
      %5293 = vmatprep.subr.mxu0 0.0
      %5294 = vmatpush1.msra.mxu0 %v5265
      %5295 = vmatprep.subr.mxu0 0.0
      %5296 = vmatpush1.msra.mxu0 %v5264
      %5297 = vmatprep.subr.mxu0 0.0
      %5298 = vmatpush1.msra.mxu0 %v5263
      %5299 = vmatprep.subr.mxu0 0.0
      %5300 = vmatpush1.msra.mxu0 %v5262
      %5301 = vmatprep.subr.mxu0 0.0
      %5302 = vmatpush1.msra.mxu0 %v5261
      %5303 = vmatprep.subr.mxu0 0.0
      %5304 = vmatpush1.msra.mxu0 %v5260
      %5305 = vmatprep.subr.mxu0 0.0
      %5306 = vmatpush1.msra.mxu0 %v5259
      %5307 = vmatprep.subr.mxu0 0.0
      %5308 = vmatpush2.msra.mxu0 0.0
      %5309 = vmatprep.subr.mxu0 0.0
      %5310 = vmatpush2.msra.mxu0 0.0
      %5311 = vmatprep.subr.mxu0 0.0
      %5312 = vmatpush2.msra.mxu0 0.0
      %5313 = vmatprep.subr.mxu0 0.0
      %5314 = vmatpush2.msra.mxu0 0.0
      %5315 = vmatprep.subr.mxu0 0.0
      %5316 = vmatpush2.msra.mxu0 0.0
      %5317 = vmatprep.subr.mxu0 0.0
      %5318 = vmatpush2.msra.mxu0 0.0
      %5319 = vmatprep.subr.mxu0 0.0
      %5320 = vmatpush2.msra.mxu0 0.0
      %5321 = vmatprep.subr.mxu0 0.0
      %5322 = vmatpush2.msra.mxu0 0.0
      %5323 = vmatprep.subr.mxu0 0.0
      %5324 = vmatpush2.msra.mxu0 0.0
      %5325 = vmatprep.subr.mxu0 0.0
      %5326 = vmatpush2.msra.mxu0 0.0
      %5327 = vmatprep.subr.mxu0 0.0
      %5328 = vmatpush2.msra.mxu0 0.0
      %5329 = vmatprep.subr.mxu0 0.0
      %5330 = vmatpush2.msra.mxu0 0.0
      %5331 = vmatprep.subr.mxu0 0.0
      %5332 = vmatpush2.msra.mxu0 0.0
      %5333 = vmatprep.subr.mxu0 0.0
      %5334 = vmatpush2.msra.mxu0 0.0
      %5335 = vmatprep.subr.mxu0 0.0
      %5336 = vmatpush2.msra.mxu0 0.0
      %5337 = vmatprep.subr.mxu0 0.0
      %5338 = vmatpush2.msra.mxu0 0.0
      %5339 = vmatprep.mubr.f32.mxu0 0.0
      %5340 = vmatmul.mubr.f32.gmra.mxu0 %v5242
      %v5341 = vpop.f32.mrf.mxu0
      %v5342 = vadd.f32 0.0, %v5341
      %v5343 = vpop.f32.mrf.mxu0
      %5344 = vmatprep.mubr.f32.mxu0 0.0
      %5345 = vmatmul.mubr.f32.gmra.mxu0 %v5243
      %v5346 = vpop.f32.mrf.mxu0
      %v5347 = vadd.f32 0.0, %v5346
      %v5348 = vpop.f32.mrf.mxu0
      %5349 = vmatprep.mubr.f32.mxu0 0.0
      %5350 = vmatmul.mubr.f32.gmra.mxu0 %v5244
      %v5351 = vpop.f32.mrf.mxu0
      %v5352 = vadd.f32 0.0, %v5351
      %v5353 = vpop.f32.mrf.mxu0
      %5354 = vmatprep.mubr.f32.mxu0 0.0
      %5355 = vmatmul.mubr.f32.gmra.mxu0 %v5245
      %v5356 = vpop.f32.mrf.mxu0
      %v5357 = vadd.f32 0.0, %v5356
      %v5358 = vpop.f32.mrf.mxu0
      %5359 = vmatprep.mubr.f32.mxu0 0.0
      %5360 = vmatmul.mubr.f32.gmra.mxu0 %v5246
      %v5361 = vpop.f32.mrf.mxu0
      %v5362 = vadd.f32 0.0, %v5361
      %v5363 = vpop.f32.mrf.mxu0
      %5364 = vmatprep.mubr.f32.mxu0 0.0
      %5365 = vmatmul.mubr.f32.gmra.mxu0 %v5247
      %v5366 = vpop.f32.mrf.mxu0
      %v5367 = vadd.f32 0.0, %v5366
      %v5368 = vpop.f32.mrf.mxu0
      %5369 = vmatprep.mubr.f32.mxu0 0.0
      %5370 = vmatmul.mubr.f32.gmra.mxu0 %v5248
      %v5371 = vpop.f32.mrf.mxu0
      %v5372 = vadd.f32 0.0, %v5371
      %v5373 = vpop.f32.mrf.mxu0
      %5374 = vmatprep.mubr.f32.mxu0 0.0
      %5375 = vmatmul.mubr.f32.gmra.mxu0 %v5249
      %v5376 = vpop.f32.mrf.mxu0
      %v5377 = vadd.f32 0.0, %v5376
      %v5378 = vpop.f32.mrf.mxu0
      %5379 = vmatprep.mubr.f32.mxu0 0.0
      %5380 = vmatmul.mubr.f32.gmra.mxu0 %v5250
      %v5381 = vpop.f32.mrf.mxu0
      %v5382 = vadd.f32 0.0, %v5381
      %v5383 = vpop.f32.mrf.mxu0
      %5384 = vmatprep.mubr.f32.mxu0 0.0
      %5385 = vmatmul.mubr.f32.gmra.mxu0 %v5251
      %v5386 = vpop.f32.mrf.mxu0
      %v5387 = vadd.f32 0.0, %v5386
      %v5388 = vpop.f32.mrf.mxu0
      %5389 = vmatprep.mubr.f32.mxu0 0.0
      %5390 = vmatmul.mubr.f32.gmra.mxu0 %v5252
      %v5391 = vpop.f32.mrf.mxu0
      %v5392 = vadd.f32 0.0, %v5391
      %v5393 = vpop.f32.mrf.mxu0
      %5394 = vmatprep.mubr.f32.mxu0 0.0
      %5395 = vmatmul.mubr.f32.gmra.mxu0 %v5253
      %v5396 = vpop.f32.mrf.mxu0
      %v5397 = vadd.f32 0.0, %v5396
      %v5398 = vpop.f32.mrf.mxu0
      %5399 = vmatprep.mubr.f32.mxu0 0.0
      %5400 = vmatmul.mubr.f32.gmra.mxu0 %v5254
      %v5401 = vpop.f32.mrf.mxu0
      %v5402 = vadd.f32 0.0, %v5401
      %v5403 = vpop.f32.mrf.mxu0
      %5404 = vmatprep.mubr.f32.mxu0 0.0
      %5405 = vmatmul.mubr.f32.gmra.mxu0 %v5255
      %v5406 = vpop.f32.mrf.mxu0
      %v5407 = vadd.f32 0.0, %v5406
      %v5408 = vpop.f32.mrf.mxu0
      %5409 = vmatprep.mubr.f32.mxu0 0.0
      %5410 = vmatmul.mubr.f32.gmra.mxu0 %v5256
      %v5411 = vpop.f32.mrf.mxu0
      %v5412 = vadd.f32 0.0, %v5411
      %v5413 = vpop.f32.mrf.mxu0
      %5414 = vmatprep.mubr.f32.mxu0 0.0
      %5415 = vmatmul.mubr.f32.gmra.mxu0 %v5257
      %v5416 = vpop.f32.mrf.mxu0
      %v5417 = vadd.f32 0.0, %v5416
      %v5418 = vpop.f32.mrf.mxu0
      %5419 = vdwg.mxu0
      %v5420 = vrot.slane %v5342, 4
      %v5421 = vadd.f32 %v5342, %v5420
      %v5422 = vrot.slane %v5421, 2
      %v5423 = vadd.f32 %v5421, %v5422
      %v5424 = vrot.slane %v5423, 1
      %v5425 = vadd.f32 %v5423, %v5424
      %v5426 = vrot.slane %v5347, 4
      %v5427 = vadd.f32 %v5347, %v5426
      %v5428 = vrot.slane %v5427, 2
      %v5429 = vadd.f32 %v5427, %v5428
      %v5430 = vrot.slane %v5429, 1
      %v5431 = vadd.f32 %v5429, %v5430
      %v5432 = vrot.slane %v5352, 4
      %v5433 = vadd.f32 %v5352, %v5432
      %v5434 = vrot.slane %v5433, 2
      %v5435 = vadd.f32 %v5433, %v5434
      %v5436 = vrot.slane %v5435, 1
      %v5437 = vadd.f32 %v5435, %v5436
      %v5438 = vrot.slane %v5357, 4
      %v5439 = vadd.f32 %v5357, %v5438
      %v5440 = vrot.slane %v5439, 2
      %v5441 = vadd.f32 %v5439, %v5440
      %v5442 = vrot.slane %v5441, 1
      %v5443 = vadd.f32 %v5441, %v5442
      %v5444 = vrot.slane %v5362, 4
      %v5445 = vadd.f32 %v5362, %v5444
      %v5446 = vrot.slane %v5445, 2
      %v5447 = vadd.f32 %v5445, %v5446
      %v5448 = vrot.slane %v5447, 1
      %v5449 = vadd.f32 %v5447, %v5448
      %v5450 = vrot.slane %v5367, 4
      %v5451 = vadd.f32 %v5367, %v5450
      %v5452 = vrot.slane %v5451, 2
      %v5453 = vadd.f32 %v5451, %v5452
      %v5454 = vrot.slane %v5453, 1
      %v5455 = vadd.f32 %v5453, %v5454
      %v5456 = vrot.slane %v5372, 4
      %v5457 = vadd.f32 %v5372, %v5456
      %v5458 = vrot.slane %v5457, 2
      %v5459 = vadd.f32 %v5457, %v5458
      %v5460 = vrot.slane %v5459, 1
      %v5461 = vadd.f32 %v5459, %v5460
      %v5462 = vrot.slane %v5377, 4
      %v5463 = vadd.f32 %v5377, %v5462
      %v5464 = vrot.slane %v5463, 2
      %v5465 = vadd.f32 %v5463, %v5464
      %v5466 = vrot.slane %v5465, 1
      %v5467 = vadd.f32 %v5465, %v5466
      %v5468 = vrot.slane %v5382, 4
      %v5469 = vadd.f32 %v5382, %v5468
      %v5470 = vrot.slane %v5469, 2
      %v5471 = vadd.f32 %v5469, %v5470
      %v5472 = vrot.slane %v5471, 1
      %v5473 = vadd.f32 %v5471, %v5472
      %v5474 = vrot.slane %v5387, 4
      %v5475 = vadd.f32 %v5387, %v5474
      %v5476 = vrot.slane %v5475, 2
      %v5477 = vadd.f32 %v5475, %v5476
      %v5478 = vrot.slane %v5477, 1
      %v5479 = vadd.f32 %v5477, %v5478
      %v5480 = vrot.slane %v5392, 4
      %v5481 = vadd.f32 %v5392, %v5480
      %v5482 = vrot.slane %v5481, 2
      %v5483 = vadd.f32 %v5481, %v5482
      %v5484 = vrot.slane %v5483, 1
      %v5485 = vadd.f32 %v5483, %v5484
      %v5486 = vrot.slane %v5397, 4
      %v5487 = vadd.f32 %v5397, %v5486
      %v5488 = vrot.slane %v5487, 2
      %v5489 = vadd.f32 %v5487, %v5488
      %v5490 = vrot.slane %v5489, 1
      %v5491 = vadd.f32 %v5489, %v5490
      %v5492 = vrot.slane %v5402, 4
      %v5493 = vadd.f32 %v5402, %v5492
      %v5494 = vrot.slane %v5493, 2
      %v5495 = vadd.f32 %v5493, %v5494
      %v5496 = vrot.slane %v5495, 1
      %v5497 = vadd.f32 %v5495, %v5496
      %v5498 = vrot.slane %v5407, 4
      %v5499 = vadd.f32 %v5407, %v5498
      %v5500 = vrot.slane %v5499, 2
      %v5501 = vadd.f32 %v5499, %v5500
      %v5502 = vrot.slane %v5501, 1
      %v5503 = vadd.f32 %v5501, %v5502
      %v5504 = vrot.slane %v5412, 4
      %v5505 = vadd.f32 %v5412, %v5504
      %v5506 = vrot.slane %v5505, 2
      %v5507 = vadd.f32 %v5505, %v5506
      %v5508 = vrot.slane %v5507, 1
      %v5509 = vadd.f32 %v5507, %v5508
      %v5510 = vrot.slane %v5417, 4
      %v5511 = vadd.f32 %v5417, %v5510
      %v5512 = vrot.slane %v5511, 2
      %v5513 = vadd.f32 %v5511, %v5512
      %v5514 = vrot.slane %v5513, 1
      %v5515 = vadd.f32 %v5513, %v5514
      %v5516 = vmul.f32 %v5342, %v5342
      %v5517 = vmul.f32 %v5347, %v5347
      %v5518 = vmul.f32 %v5352, %v5352
      %v5519 = vmul.f32 %v5357, %v5357
      %v5520 = vmul.f32 %v5362, %v5362
      %v5521 = vmul.f32 %v5367, %v5367
      %v5522 = vmul.f32 %v5372, %v5372
      %v5523 = vmul.f32 %v5377, %v5377
      %v5524 = vmul.f32 %v5382, %v5382
      %v5525 = vmul.f32 %v5387, %v5387
      %v5526 = vmul.f32 %v5392, %v5392
      %v5527 = vmul.f32 %v5397, %v5397
      %v5528 = vmul.f32 %v5402, %v5402
      %v5529 = vmul.f32 %v5407, %v5407
      %v5530 = vmul.f32 %v5412, %v5412
      %v5531 = vmul.f32 %v5417, %v5417
      %v5532 = vrot.slane %v5516, 4
      %v5533 = vadd.f32 %v5516, %v5532
      %v5534 = vrot.slane %v5533, 2
      %v5535 = vadd.f32 %v5533, %v5534
      %v5536 = vrot.slane %v5535, 1
      %v5537 = vadd.f32 %v5535, %v5536
      %v5538 = vrot.slane %v5517, 4
      %v5539 = vadd.f32 %v5517, %v5538
      %v5540 = vrot.slane %v5539, 2
      %v5541 = vadd.f32 %v5539, %v5540
      %v5542 = vrot.slane %v5541, 1
      %v5543 = vadd.f32 %v5541, %v5542
      %v5544 = vrot.slane %v5518, 4
      %v5545 = vadd.f32 %v5518, %v5544
      %v5546 = vrot.slane %v5545, 2
      %v5547 = vadd.f32 %v5545, %v5546
      %v5548 = vrot.slane %v5547, 1
      %v5549 = vadd.f32 %v5547, %v5548
      %v5550 = vrot.slane %v5519, 4
      %v5551 = vadd.f32 %v5519, %v5550
      %v5552 = vrot.slane %v5551, 2
      %v5553 = vadd.f32 %v5551, %v5552
      %v5554 = vrot.slane %v5553, 1
      %v5555 = vadd.f32 %v5553, %v5554
      %v5556 = vrot.slane %v5520, 4
      %v5557 = vadd.f32 %v5520, %v5556
      %v5558 = vrot.slane %v5557, 2
      %v5559 = vadd.f32 %v5557, %v5558
      %v5560 = vrot.slane %v5559, 1
      %v5561 = vadd.f32 %v5559, %v5560
      %v5562 = vrot.slane %v5521, 4
      %v5563 = vadd.f32 %v5521, %v5562
      %v5564 = vrot.slane %v5563, 2
      %v5565 = vadd.f32 %v5563, %v5564
      %v5566 = vrot.slane %v5565, 1
      %v5567 = vadd.f32 %v5565, %v5566
      %v5568 = vrot.slane %v5522, 4
      %v5569 = vadd.f32 %v5522, %v5568
      %v5570 = vrot.slane %v5569, 2
      %v5571 = vadd.f32 %v5569, %v5570
      %v5572 = vrot.slane %v5571, 1
      %v5573 = vadd.f32 %v5571, %v5572
      %v5574 = vrot.slane %v5523, 4
      %v5575 = vadd.f32 %v5523, %v5574
      %v5576 = vrot.slane %v5575, 2
      %v5577 = vadd.f32 %v5575, %v5576
      %v5578 = vrot.slane %v5577, 1
      %v5579 = vadd.f32 %v5577, %v5578
      %v5580 = vrot.slane %v5524, 4
      %v5581 = vadd.f32 %v5524, %v5580
      %v5582 = vrot.slane %v5581, 2
      %v5583 = vadd.f32 %v5581, %v5582
      %v5584 = vrot.slane %v5583, 1
      %v5585 = vadd.f32 %v5583, %v5584
      %v5586 = vrot.slane %v5525, 4
      %v5587 = vadd.f32 %v5525, %v5586
      %v5588 = vrot.slane %v5587, 2
      %v5589 = vadd.f32 %v5587, %v5588
      %v5590 = vrot.slane %v5589, 1
      %v5591 = vadd.f32 %v5589, %v5590
      %v5592 = vrot.slane %v5526, 4
      %v5593 = vadd.f32 %v5526, %v5592
      %v5594 = vrot.slane %v5593, 2
      %v5595 = vadd.f32 %v5593, %v5594
      %v5596 = vrot.slane %v5595, 1
      %v5597 = vadd.f32 %v5595, %v5596
      %v5598 = vrot.slane %v5527, 4
      %v5599 = vadd.f32 %v5527, %v5598
      %v5600 = vrot.slane %v5599, 2
      %v5601 = vadd.f32 %v5599, %v5600
      %v5602 = vrot.slane %v5601, 1
      %v5603 = vadd.f32 %v5601, %v5602
      %v5604 = vrot.slane %v5528, 4
      %v5605 = vadd.f32 %v5528, %v5604
      %v5606 = vrot.slane %v5605, 2
      %v5607 = vadd.f32 %v5605, %v5606
      %v5608 = vrot.slane %v5607, 1
      %v5609 = vadd.f32 %v5607, %v5608
      %v5610 = vrot.slane %v5529, 4
      %v5611 = vadd.f32 %v5529, %v5610
      %v5612 = vrot.slane %v5611, 2
      %v5613 = vadd.f32 %v5611, %v5612
      %v5614 = vrot.slane %v5613, 1
      %v5615 = vadd.f32 %v5613, %v5614
      %v5616 = vrot.slane %v5530, 4
      %v5617 = vadd.f32 %v5530, %v5616
      %v5618 = vrot.slane %v5617, 2
      %v5619 = vadd.f32 %v5617, %v5618
      %v5620 = vrot.slane %v5619, 1
      %v5621 = vadd.f32 %v5619, %v5620
      %v5622 = vrot.slane %v5531, 4
      %v5623 = vadd.f32 %v5531, %v5622
      %v5624 = vrot.slane %v5623, 2
      %v5625 = vadd.f32 %v5623, %v5624
      %v5626 = vrot.slane %v5625, 1
      %v5627 = vadd.f32 %v5625, %v5626
      %v5628 = vmul.f32 %v5537, 8.0
      %v5629 = vmul.f32 %v5543, 8.0
      %v5630 = vmul.f32 %v5549, 8.0
      %v5631 = vmul.f32 %v5555, 8.0
      %v5632 = vmul.f32 %v5561, 8.0
      %v5633 = vmul.f32 %v5567, 8.0
      %v5634 = vmul.f32 %v5573, 8.0
      %v5635 = vmul.f32 %v5579, 8.0
      %v5636 = vmul.f32 %v5585, 8.0
      %v5637 = vmul.f32 %v5591, 8.0
      %v5638 = vmul.f32 %v5597, 8.0
      %v5639 = vmul.f32 %v5603, 8.0
      %v5640 = vmul.f32 %v5609, 8.0
      %v5641 = vmul.f32 %v5615, 8.0
      %v5642 = vmul.f32 %v5621, 8.0
      %v5643 = vmul.f32 %v5627, 8.0
      %v5644 = vmul.f32 %v5425, %v5425
      %v5645 = vmul.f32 %v5431, %v5431
      %v5646 = vmul.f32 %v5437, %v5437
      %v5647 = vmul.f32 %v5443, %v5443
      %v5648 = vmul.f32 %v5449, %v5449
      %v5649 = vmul.f32 %v5455, %v5455
      %v5650 = vmul.f32 %v5461, %v5461
      %v5651 = vmul.f32 %v5467, %v5467
      %v5652 = vmul.f32 %v5473, %v5473
      %v5653 = vmul.f32 %v5479, %v5479
      %v5654 = vmul.f32 %v5485, %v5485
      %v5655 = vmul.f32 %v5491, %v5491
      %v5656 = vmul.f32 %v5497, %v5497
      %v5657 = vmul.f32 %v5503, %v5503
      %v5658 = vmul.f32 %v5509, %v5509
      %v5659 = vmul.f32 %v5515, %v5515
      %v5660 = vsub.f32 %v5628, %v5644
      %v5661 = vsub.f32 %v5629, %v5645
      %v5662 = vsub.f32 %v5630, %v5646
      %v5663 = vsub.f32 %v5631, %v5647
      %v5664 = vsub.f32 %v5632, %v5648
      %v5665 = vsub.f32 %v5633, %v5649
      %v5666 = vsub.f32 %v5634, %v5650
      %v5667 = vsub.f32 %v5635, %v5651
      %v5668 = vsub.f32 %v5636, %v5652
      %v5669 = vsub.f32 %v5637, %v5653
      %v5670 = vsub.f32 %v5638, %v5654
      %v5671 = vsub.f32 %v5639, %v5655
      %v5672 = vsub.f32 %v5640, %v5656
      %v5673 = vsub.f32 %v5641, %v5657
      %v5674 = vsub.f32 %v5642, %v5658
      %v5675 = vsub.f32 %v5643, %v5659
      %v5676 = vmax.f32 %v5660, 0.0
      %v5677 = vmax.f32 %v5661, 0.0
      %v5678 = vmax.f32 %v5662, 0.0
      %v5679 = vmax.f32 %v5663, 0.0
      %v5680 = vmax.f32 %v5664, 0.0
      %v5681 = vmax.f32 %v5665, 0.0
      %v5682 = vmax.f32 %v5666, 0.0
      %v5683 = vmax.f32 %v5667, 0.0
      %v5684 = vmax.f32 %v5668, 0.0
      %v5685 = vmax.f32 %v5669, 0.0
      %v5686 = vmax.f32 %v5670, 0.0
      %v5687 = vmax.f32 %v5671, 0.0
      %v5688 = vmax.f32 %v5672, 0.0
      %v5689 = vmax.f32 %v5673, 0.0
      %v5690 = vmax.f32 %v5674, 0.0
      %v5691 = vmax.f32 %v5675, 0.0
      %v5692 = vadd.f32 %v5676, 0.00064
      %v5693 = vadd.f32 %v5677, 0.00064
      %v5694 = vadd.f32 %v5678, 0.00064
      %v5695 = vadd.f32 %v5679, 0.00064
      %v5696 = vadd.f32 %v5680, 0.00064
      %v5697 = vadd.f32 %v5681, 0.00064
      %v5698 = vadd.f32 %v5682, 0.00064
      %v5699 = vadd.f32 %v5683, 0.00064
      %v5700 = vadd.f32 %v5684, 0.00064
      %v5701 = vadd.f32 %v5685, 0.00064
      %v5702 = vadd.f32 %v5686, 0.00064
      %v5703 = vadd.f32 %v5687, 0.00064
      %v5704 = vadd.f32 %v5688, 0.00064
      %v5705 = vadd.f32 %v5689, 0.00064
      %v5706 = vadd.f32 %v5690, 0.00064
      %v5707 = vadd.f32 %v5691, 0.00064
      %v5708 = vrsqrt.pop %v5692
      %v5709 = vrsqrt.pop %v5693
      %v5710 = vrsqrt.pop %v5694
      %v5711 = vrsqrt.pop %v5695
      %v5712 = vrsqrt.pop %v5696
      %v5713 = vrsqrt.pop %v5697
      %v5714 = vrsqrt.pop %v5698
      %v5715 = vrsqrt.pop %v5699
      %v5716 = vrsqrt.pop %v5700
      %v5717 = vrsqrt.pop %v5701
      %v5718 = vrsqrt.pop %v5702
      %v5719 = vrsqrt.pop %v5703
      %v5720 = vrsqrt.pop %v5704
      %v5721 = vrsqrt.pop %v5705
      %v5722 = vrsqrt.pop %v5706
      %v5723 = vrsqrt.pop %v5707
      %v5724 = vld [vmem:[%s3 + $0x7] sm:$0x1]
      %v5725 = vmul.f32 %v5724, %v5708
      %v5726 = vmul.f32 %v5724, %v5709
      %v5727 = vmul.f32 %v5724, %v5710
      %v5728 = vmul.f32 %v5724, %v5711
      %v5729 = vmul.f32 %v5724, %v5712
      %v5730 = vmul.f32 %v5724, %v5713
      %v5731 = vmul.f32 %v5724, %v5714
      %v5732 = vmul.f32 %v5724, %v5715
      %v5733 = vmul.f32 %v5724, %v5716
      %v5734 = vmul.f32 %v5724, %v5717
      %v5735 = vmul.f32 %v5724, %v5718
      %v5736 = vmul.f32 %v5724, %v5719
      %v5737 = vmul.f32 %v5724, %v5720
      %v5738 = vmul.f32 %v5724, %v5721
      %v5739 = vmul.f32 %v5724, %v5722
      %v5740 = vmul.f32 %v5724, %v5723
      %v5741 = vmul.f32 %v5725, 8.0
      %v5742 = vmul.f32 %v5726, 8.0
      %v5743 = vmul.f32 %v5727, 8.0
      %v5744 = vmul.f32 %v5728, 8.0
      %v5745 = vmul.f32 %v5729, 8.0
      %v5746 = vmul.f32 %v5730, 8.0
      %v5747 = vmul.f32 %v5731, 8.0
      %v5748 = vmul.f32 %v5732, 8.0
      %v5749 = vmul.f32 %v5733, 8.0
      %v5750 = vmul.f32 %v5734, 8.0
      %v5751 = vmul.f32 %v5735, 8.0
      %v5752 = vmul.f32 %v5736, 8.0
      %v5753 = vmul.f32 %v5737, 8.0
      %v5754 = vmul.f32 %v5738, 8.0
      %v5755 = vmul.f32 %v5739, 8.0
      %v5756 = vmul.f32 %v5740, 8.0
      %v5757 = vld [vmem:[%s4 + $0x7] sm:$0x1]
      %v5758 = vmul.f32 %v5425, %v5725
      %v5759 = vmul.f32 %v5431, %v5726
      %v5760 = vmul.f32 %v5437, %v5727
      %v5761 = vmul.f32 %v5443, %v5728
      %v5762 = vmul.f32 %v5449, %v5729
      %v5763 = vmul.f32 %v5455, %v5730
      %v5764 = vmul.f32 %v5461, %v5731
      %v5765 = vmul.f32 %v5467, %v5732
      %v5766 = vmul.f32 %v5473, %v5733
      %v5767 = vmul.f32 %v5479, %v5734
      %v5768 = vmul.f32 %v5485, %v5735
      %v5769 = vmul.f32 %v5491, %v5736
      %v5770 = vmul.f32 %v5497, %v5737
      %v5771 = vmul.f32 %v5503, %v5738
      %v5772 = vmul.f32 %v5509, %v5739
      %v5773 = vmul.f32 %v5515, %v5740
      %v5774 = vsub.f32 %v5757, %v5758
      %v5775 = vsub.f32 %v5757, %v5759
      %v5776 = vsub.f32 %v5757, %v5760
      %v5777 = vsub.f32 %v5757, %v5761
      %v5778 = vsub.f32 %v5757, %v5762
      %v5779 = vsub.f32 %v5757, %v5763
      %v5780 = vsub.f32 %v5757, %v5764
      %v5781 = vsub.f32 %v5757, %v5765
      %v5782 = vsub.f32 %v5757, %v5766
      %v5783 = vsub.f32 %v5757, %v5767
      %v5784 = vsub.f32 %v5757, %v5768
      %v5785 = vsub.f32 %v5757, %v5769
      %v5786 = vsub.f32 %v5757, %v5770
      %v5787 = vsub.f32 %v5757, %v5771
      %v5788 = vsub.f32 %v5757, %v5772
      %v5789 = vsub.f32 %v5757, %v5773
      %v5790 = vlaneseq
      %v5791 = vshrl.u32 %v5790, 7
      %v5792 = vsub.s32 0, %v5791
      %v5793 = vrot.slane %v5741, %v5792
      %v5794 = vlaneseq
      %v5795 = vshrl.u32 %v5794, 7
      %v5796 = vsub.s32 0, %v5795
      %v5797 = vrot.slane %v5742, %v5796
      %v5798 = vlaneseq
      %v5799 = vshrl.u32 %v5798, 7
      %v5800 = vsub.s32 0, %v5799
      %v5801 = vrot.slane %v5743, %v5800
      %v5802 = vlaneseq
      %v5803 = vshrl.u32 %v5802, 7
      %v5804 = vsub.s32 0, %v5803
      %v5805 = vrot.slane %v5744, %v5804
      %v5806 = vlaneseq
      %v5807 = vshrl.u32 %v5806, 7
      %v5808 = vsub.s32 0, %v5807
      %v5809 = vrot.slane %v5745, %v5808
      %v5810 = vlaneseq
      %v5811 = vshrl.u32 %v5810, 7
      %v5812 = vsub.s32 0, %v5811
      %v5813 = vrot.slane %v5746, %v5812
      %v5814 = vlaneseq
      %v5815 = vshrl.u32 %v5814, 7
      %v5816 = vsub.s32 0, %v5815
      %v5817 = vrot.slane %v5747, %v5816
      %v5818 = vlaneseq
      %v5819 = vshrl.u32 %v5818, 7
      %v5820 = vsub.s32 0, %v5819
      %v5821 = vrot.slane %v5748, %v5820
      %v5822 = vlaneseq
      %v5823 = vshrl.u32 %v5822, 7
      %v5824 = vsub.s32 0, %v5823
      %v5825 = vrot.slane %v5749, %v5824
      %v5826 = vlaneseq
      %v5827 = vshrl.u32 %v5826, 7
      %v5828 = vsub.s32 0, %v5827
      %v5829 = vrot.slane %v5750, %v5828
      %v5830 = vlaneseq
      %v5831 = vshrl.u32 %v5830, 7
      %v5832 = vsub.s32 0, %v5831
      %v5833 = vrot.slane %v5751, %v5832
      %v5834 = vlaneseq
      %v5835 = vshrl.u32 %v5834, 7
      %v5836 = vsub.s32 0, %v5835
      %v5837 = vrot.slane %v5752, %v5836
      %v5838 = vlaneseq
      %v5839 = vshrl.u32 %v5838, 7
      %v5840 = vsub.s32 0, %v5839
      %v5841 = vrot.slane %v5753, %v5840
      %v5842 = vlaneseq
      %v5843 = vshrl.u32 %v5842, 7
      %v5844 = vsub.s32 0, %v5843
      %v5845 = vrot.slane %v5754, %v5844
      %v5846 = vlaneseq
      %v5847 = vshrl.u32 %v5846, 7
      %v5848 = vsub.s32 0, %v5847
      %v5849 = vrot.slane %v5755, %v5848
      %v5850 = vlaneseq
      %v5851 = vshrl.u32 %v5850, 7
      %v5852 = vsub.s32 0, %v5851
      %v5853 = vrot.slane %v5756, %v5852
      %v5854 = vmul.f32 %v5342, %v5793
      %v5855 = vmul.f32 %v5347, %v5797
      %v5856 = vmul.f32 %v5352, %v5801
      %v5857 = vmul.f32 %v5357, %v5805
      %v5858 = vmul.f32 %v5362, %v5809
      %v5859 = vmul.f32 %v5367, %v5813
      %v5860 = vmul.f32 %v5372, %v5817
      %v5861 = vmul.f32 %v5377, %v5821
      %v5862 = vmul.f32 %v5382, %v5825
      %v5863 = vmul.f32 %v5387, %v5829
      %v5864 = vmul.f32 %v5392, %v5833
      %v5865 = vmul.f32 %v5397, %v5837
      %v5866 = vmul.f32 %v5402, %v5841
      %v5867 = vmul.f32 %v5407, %v5845
      %v5868 = vmul.f32 %v5412, %v5849
      %v5869 = vmul.f32 %v5417, %v5853
      %v5870 = vlaneseq
      %v5871 = vshrl.u32 %v5870, 7
      %v5872 = vsub.s32 0, %v5871
      %v5873 = vrot.slane %v5774, %v5872
      %v5874 = vlaneseq
      %v5875 = vshrl.u32 %v5874, 7
      %v5876 = vsub.s32 0, %v5875
      %v5877 = vrot.slane %v5775, %v5876
      %v5878 = vlaneseq
      %v5879 = vshrl.u32 %v5878, 7
      %v5880 = vsub.s32 0, %v5879
      %v5881 = vrot.slane %v5776, %v5880
      %v5882 = vlaneseq
      %v5883 = vshrl.u32 %v5882, 7
      %v5884 = vsub.s32 0, %v5883
      %v5885 = vrot.slane %v5777, %v5884
      %v5886 = vlaneseq
      %v5887 = vshrl.u32 %v5886, 7
      %v5888 = vsub.s32 0, %v5887
      %v5889 = vrot.slane %v5778, %v5888
      %v5890 = vlaneseq
      %v5891 = vshrl.u32 %v5890, 7
      %v5892 = vsub.s32 0, %v5891
      %v5893 = vrot.slane %v5779, %v5892
      %v5894 = vlaneseq
      %v5895 = vshrl.u32 %v5894, 7
      %v5896 = vsub.s32 0, %v5895
      %v5897 = vrot.slane %v5780, %v5896
      %v5898 = vlaneseq
      %v5899 = vshrl.u32 %v5898, 7
      %v5900 = vsub.s32 0, %v5899
      %v5901 = vrot.slane %v5781, %v5900
      %v5902 = vlaneseq
      %v5903 = vshrl.u32 %v5902, 7
      %v5904 = vsub.s32 0, %v5903
      %v5905 = vrot.slane %v5782, %v5904
      %v5906 = vlaneseq
      %v5907 = vshrl.u32 %v5906, 7
      %v5908 = vsub.s32 0, %v5907
      %v5909 = vrot.slane %v5783, %v5908
      %v5910 = vlaneseq
      %v5911 = vshrl.u32 %v5910, 7
      %v5912 = vsub.s32 0, %v5911
      %v5913 = vrot.slane %v5784, %v5912
      %v5914 = vlaneseq
      %v5915 = vshrl.u32 %v5914, 7
      %v5916 = vsub.s32 0, %v5915
      %v5917 = vrot.slane %v5785, %v5916
      %v5918 = vlaneseq
      %v5919 = vshrl.u32 %v5918, 7
      %v5920 = vsub.s32 0, %v5919
      %v5921 = vrot.slane %v5786, %v5920
      %v5922 = vlaneseq
      %v5923 = vshrl.u32 %v5922, 7
      %v5924 = vsub.s32 0, %v5923
      %v5925 = vrot.slane %v5787, %v5924
      %v5926 = vlaneseq
      %v5927 = vshrl.u32 %v5926, 7
      %v5928 = vsub.s32 0, %v5927
      %v5929 = vrot.slane %v5788, %v5928
      %v5930 = vlaneseq
      %v5931 = vshrl.u32 %v5930, 7
      %v5932 = vsub.s32 0, %v5931
      %v5933 = vrot.slane %v5789, %v5932
      %v5934 = vadd.f32 %v5854, %v5873
      %v5935 = vadd.f32 %v5855, %v5877
      %v5936 = vadd.f32 %v5856, %v5881
      %v5937 = vadd.f32 %v5857, %v5885
      %v5938 = vadd.f32 %v5858, %v5889
      %v5939 = vadd.f32 %v5859, %v5893
      %v5940 = vadd.f32 %v5860, %v5897
      %v5941 = vadd.f32 %v5861, %v5901
      %v5942 = vadd.f32 %v5862, %v5905
      %v5943 = vadd.f32 %v5863, %v5909
      %v5944 = vadd.f32 %v5864, %v5913
      %v5945 = vadd.f32 %v5865, %v5917
      %v5946 = vadd.f32 %v5866, %v5921
      %v5947 = vadd.f32 %v5867, %v5925
      %v5948 = vadd.f32 %v5868, %v5929
      %v5949 = vadd.f32 %v5869, %v5933
      %v5950 = vmax.f32 %v5934, 0.0
      %v5951 = vmax.f32 %v5935, 0.0
      %v5952 = vmax.f32 %v5936, 0.0
      %v5953 = vmax.f32 %v5937, 0.0
      %v5954 = vmax.f32 %v5938, 0.0
      %v5955 = vmax.f32 %v5939, 0.0
      %v5956 = vmax.f32 %v5940, 0.0
      %v5957 = vmax.f32 %v5941, 0.0
      %v5958 = vmax.f32 %v5942, 0.0
      %v5959 = vmax.f32 %v5943, 0.0
      %v5960 = vmax.f32 %v5944, 0.0
      %v5961 = vmax.f32 %v5945, 0.0
      %v5962 = vmax.f32 %v5946, 0.0
      %v5963 = vmax.f32 %v5947, 0.0
      %v5964 = vmax.f32 %v5948, 0.0
      %v5965 = vmax.f32 %v5949, 0.0
      %s5966 = scalar_lea.vmem %s2, 896
      %v5967 = vld [vmem:[%s5966] sm:$0xff]
      %v5968 = vld [vmem:[%s5966 + $0x8] sm:$0xff]
      %v5969 = vld [vmem:[%s5966 + $0x10] sm:$0xff]
      %v5970 = vld [vmem:[%s5966 + $0x18] sm:$0xff]
      %v5971 = vld [vmem:[%s5966 + $0x20] sm:$0xff]
      %v5972 = vld [vmem:[%s5966 + $0x28] sm:$0xff]
      %v5973 = vld [vmem:[%s5966 + $0x30] sm:$0xff]
      %v5974 = vld [vmem:[%s5966 + $0x38] sm:$0xff]
      %v5975 = vld [vmem:[%s5966 + $0x40] sm:$0xff]
      %v5976 = vld [vmem:[%s5966 + $0x48] sm:$0xff]
      %v5977 = vld [vmem:[%s5966 + $0x50] sm:$0xff]
      %v5978 = vld [vmem:[%s5966 + $0x58] sm:$0xff]
      %v5979 = vld [vmem:[%s5966 + $0x60] sm:$0xff]
      %v5980 = vld [vmem:[%s5966 + $0x68] sm:$0xff]
      %v5981 = vld [vmem:[%s5966 + $0x70] sm:$0xff]
      %v5982 = vld [vmem:[%s5966 + $0x78] sm:$0xff]
      %5983 = vmatprep.subr.mxu0 0.0
      %5984 = vmatpush1.msra.mxu0 %v5982
      %5985 = vmatprep.subr.mxu0 0.0
      %5986 = vmatpush1.msra.mxu0 %v5981
      %5987 = vmatprep.subr.mxu0 0.0
      %5988 = vmatpush1.msra.mxu0 %v5980
      %5989 = vmatprep.subr.mxu0 0.0
      %5990 = vmatpush1.msra.mxu0 %v5979
      %5991 = vmatprep.subr.mxu0 0.0
      %5992 = vmatpush1.msra.mxu0 %v5978
      %5993 = vmatprep.subr.mxu0 0.0
      %5994 = vmatpush1.msra.mxu0 %v5977
      %5995 = vmatprep.subr.mxu0 0.0
      %5996 = vmatpush1.msra.mxu0 %v5976
      %5997 = vmatprep.subr.mxu0 0.0
      %5998 = vmatpush1.msra.mxu0 %v5975
      %5999 = vmatprep.subr.mxu0 0.0
      %6000 = vmatpush1.msra.mxu0 %v5974
      %6001 = vmatprep.subr.mxu0 0.0
      %6002 = vmatpush1.msra.mxu0 %v5973
      %6003 = vmatprep.subr.mxu0 0.0
      %6004 = vmatpush1.msra.mxu0 %v5972
      %6005 = vmatprep.subr.mxu0 0.0
      %6006 = vmatpush1.msra.mxu0 %v5971
      %6007 = vmatprep.subr.mxu0 0.0
      %6008 = vmatpush1.msra.mxu0 %v5970
      %6009 = vmatprep.subr.mxu0 0.0
      %6010 = vmatpush1.msra.mxu0 %v5969
      %6011 = vmatprep.subr.mxu0 0.0
      %6012 = vmatpush1.msra.mxu0 %v5968
      %6013 = vmatprep.subr.mxu0 0.0
      %6014 = vmatpush1.msra.mxu0 %v5967
      %6015 = vmatprep.subr.mxu0 0.0
      %6016 = vmatpush2.msra.mxu0 0.0
      %6017 = vmatprep.subr.mxu0 0.0
      %6018 = vmatpush2.msra.mxu0 0.0
      %6019 = vmatprep.subr.mxu0 0.0
      %6020 = vmatpush2.msra.mxu0 0.0
      %6021 = vmatprep.subr.mxu0 0.0
      %6022 = vmatpush2.msra.mxu0 0.0
      %6023 = vmatprep.subr.mxu0 0.0
      %6024 = vmatpush2.msra.mxu0 0.0
      %6025 = vmatprep.subr.mxu0 0.0
      %6026 = vmatpush2.msra.mxu0 0.0
      %6027 = vmatprep.subr.mxu0 0.0
      %6028 = vmatpush2.msra.mxu0 0.0
      %6029 = vmatprep.subr.mxu0 0.0
      %6030 = vmatpush2.msra.mxu0 0.0
      %6031 = vmatprep.subr.mxu0 0.0
      %6032 = vmatpush2.msra.mxu0 0.0
      %6033 = vmatprep.subr.mxu0 0.0
      %6034 = vmatpush2.msra.mxu0 0.0
      %6035 = vmatprep.subr.mxu0 0.0
      %6036 = vmatpush2.msra.mxu0 0.0
      %6037 = vmatprep.subr.mxu0 0.0
      %6038 = vmatpush2.msra.mxu0 0.0
      %6039 = vmatprep.subr.mxu0 0.0
      %6040 = vmatpush2.msra.mxu0 0.0
      %6041 = vmatprep.subr.mxu0 0.0
      %6042 = vmatpush2.msra.mxu0 0.0
      %6043 = vmatprep.subr.mxu0 0.0
      %6044 = vmatpush2.msra.mxu0 0.0
      %6045 = vmatprep.subr.mxu0 0.0
      %6046 = vmatpush2.msra.mxu0 0.0
      %6047 = vmatprep.mubr.f32.mxu0 0.0
      %6048 = vmatmul.mubr.f32.gmra.mxu0 %v5950
      %v6049 = vpop.f32.mrf.mxu0
      %v6050 = vadd.f32 0.0, %v6049
      %v6051 = vpop.f32.mrf.mxu0
      %6052 = vmatprep.mubr.f32.mxu0 0.0
      %6053 = vmatmul.mubr.f32.gmra.mxu0 %v5951
      %v6054 = vpop.f32.mrf.mxu0
      %v6055 = vadd.f32 0.0, %v6054
      %v6056 = vpop.f32.mrf.mxu0
      %6057 = vmatprep.mubr.f32.mxu0 0.0
      %6058 = vmatmul.mubr.f32.gmra.mxu0 %v5952
      %v6059 = vpop.f32.mrf.mxu0
      %v6060 = vadd.f32 0.0, %v6059
      %v6061 = vpop.f32.mrf.mxu0
      %6062 = vmatprep.mubr.f32.mxu0 0.0
      %6063 = vmatmul.mubr.f32.gmra.mxu0 %v5953
      %v6064 = vpop.f32.mrf.mxu0
      %v6065 = vadd.f32 0.0, %v6064
      %v6066 = vpop.f32.mrf.mxu0
      %6067 = vmatprep.mubr.f32.mxu0 0.0
      %6068 = vmatmul.mubr.f32.gmra.mxu0 %v5954
      %v6069 = vpop.f32.mrf.mxu0
      %v6070 = vadd.f32 0.0, %v6069
      %v6071 = vpop.f32.mrf.mxu0
      %6072 = vmatprep.mubr.f32.mxu0 0.0
      %6073 = vmatmul.mubr.f32.gmra.mxu0 %v5955
      %v6074 = vpop.f32.mrf.mxu0
      %v6075 = vadd.f32 0.0, %v6074
      %v6076 = vpop.f32.mrf.mxu0
      %6077 = vmatprep.mubr.f32.mxu0 0.0
      %6078 = vmatmul.mubr.f32.gmra.mxu0 %v5956
      %v6079 = vpop.f32.mrf.mxu0
      %v6080 = vadd.f32 0.0, %v6079
      %v6081 = vpop.f32.mrf.mxu0
      %6082 = vmatprep.mubr.f32.mxu0 0.0
      %6083 = vmatmul.mubr.f32.gmra.mxu0 %v5957
      %v6084 = vpop.f32.mrf.mxu0
      %v6085 = vadd.f32 0.0, %v6084
      %v6086 = vpop.f32.mrf.mxu0
      %6087 = vmatprep.mubr.f32.mxu0 0.0
      %6088 = vmatmul.mubr.f32.gmra.mxu0 %v5958
      %v6089 = vpop.f32.mrf.mxu0
      %v6090 = vadd.f32 0.0, %v6089
      %v6091 = vpop.f32.mrf.mxu0
      %6092 = vmatprep.mubr.f32.mxu0 0.0
      %6093 = vmatmul.mubr.f32.gmra.mxu0 %v5959
      %v6094 = vpop.f32.mrf.mxu0
      %v6095 = vadd.f32 0.0, %v6094
      %v6096 = vpop.f32.mrf.mxu0
      %6097 = vmatprep.mubr.f32.mxu0 0.0
      %6098 = vmatmul.mubr.f32.gmra.mxu0 %v5960
      %v6099 = vpop.f32.mrf.mxu0
      %v6100 = vadd.f32 0.0, %v6099
      %v6101 = vpop.f32.mrf.mxu0
      %6102 = vmatprep.mubr.f32.mxu0 0.0
      %6103 = vmatmul.mubr.f32.gmra.mxu0 %v5961
      %v6104 = vpop.f32.mrf.mxu0
      %v6105 = vadd.f32 0.0, %v6104
      %v6106 = vpop.f32.mrf.mxu0
      %6107 = vmatprep.mubr.f32.mxu0 0.0
      %6108 = vmatmul.mubr.f32.gmra.mxu0 %v5962
      %v6109 = vpop.f32.mrf.mxu0
      %v6110 = vadd.f32 0.0, %v6109
      %v6111 = vpop.f32.mrf.mxu0
      %6112 = vmatprep.mubr.f32.mxu0 0.0
      %6113 = vmatmul.mubr.f32.gmra.mxu0 %v5963
      %v6114 = vpop.f32.mrf.mxu0
      %v6115 = vadd.f32 0.0, %v6114
      %v6116 = vpop.f32.mrf.mxu0
      %6117 = vmatprep.mubr.f32.mxu0 0.0
      %6118 = vmatmul.mubr.f32.gmra.mxu0 %v5964
      %v6119 = vpop.f32.mrf.mxu0
      %v6120 = vadd.f32 0.0, %v6119
      %v6121 = vpop.f32.mrf.mxu0
      %6122 = vmatprep.mubr.f32.mxu0 0.0
      %6123 = vmatmul.mubr.f32.gmra.mxu0 %v5965
      %v6124 = vpop.f32.mrf.mxu0
      %v6125 = vadd.f32 0.0, %v6124
      %v6126 = vpop.f32.mrf.mxu0
      %6127 = vdwg.mxu0
      %v6128 = vrot.slane %v6050, 4
      %v6129 = vadd.f32 %v6050, %v6128
      %v6130 = vrot.slane %v6129, 2
      %v6131 = vadd.f32 %v6129, %v6130
      %v6132 = vrot.slane %v6131, 1
      %v6133 = vadd.f32 %v6131, %v6132
      %v6134 = vrot.slane %v6055, 4
      %v6135 = vadd.f32 %v6055, %v6134
      %v6136 = vrot.slane %v6135, 2
      %v6137 = vadd.f32 %v6135, %v6136
      %v6138 = vrot.slane %v6137, 1
      %v6139 = vadd.f32 %v6137, %v6138
      %v6140 = vrot.slane %v6060, 4
      %v6141 = vadd.f32 %v6060, %v6140
      %v6142 = vrot.slane %v6141, 2
      %v6143 = vadd.f32 %v6141, %v6142
      %v6144 = vrot.slane %v6143, 1
      %v6145 = vadd.f32 %v6143, %v6144
      %v6146 = vrot.slane %v6065, 4
      %v6147 = vadd.f32 %v6065, %v6146
      %v6148 = vrot.slane %v6147, 2
      %v6149 = vadd.f32 %v6147, %v6148
      %v6150 = vrot.slane %v6149, 1
      %v6151 = vadd.f32 %v6149, %v6150
      %v6152 = vrot.slane %v6070, 4
      %v6153 = vadd.f32 %v6070, %v6152
      %v6154 = vrot.slane %v6153, 2
      %v6155 = vadd.f32 %v6153, %v6154
      %v6156 = vrot.slane %v6155, 1
      %v6157 = vadd.f32 %v6155, %v6156
      %v6158 = vrot.slane %v6075, 4
      %v6159 = vadd.f32 %v6075, %v6158
      %v6160 = vrot.slane %v6159, 2
      %v6161 = vadd.f32 %v6159, %v6160
      %v6162 = vrot.slane %v6161, 1
      %v6163 = vadd.f32 %v6161, %v6162
      %v6164 = vrot.slane %v6080, 4
      %v6165 = vadd.f32 %v6080, %v6164
      %v6166 = vrot.slane %v6165, 2
      %v6167 = vadd.f32 %v6165, %v6166
      %v6168 = vrot.slane %v6167, 1
      %v6169 = vadd.f32 %v6167, %v6168
      %v6170 = vrot.slane %v6085, 4
      %v6171 = vadd.f32 %v6085, %v6170
      %v6172 = vrot.slane %v6171, 2
      %v6173 = vadd.f32 %v6171, %v6172
      %v6174 = vrot.slane %v6173, 1
      %v6175 = vadd.f32 %v6173, %v6174
      %v6176 = vrot.slane %v6090, 4
      %v6177 = vadd.f32 %v6090, %v6176
      %v6178 = vrot.slane %v6177, 2
      %v6179 = vadd.f32 %v6177, %v6178
      %v6180 = vrot.slane %v6179, 1
      %v6181 = vadd.f32 %v6179, %v6180
      %v6182 = vrot.slane %v6095, 4
      %v6183 = vadd.f32 %v6095, %v6182
      %v6184 = vrot.slane %v6183, 2
      %v6185 = vadd.f32 %v6183, %v6184
      %v6186 = vrot.slane %v6185, 1
      %v6187 = vadd.f32 %v6185, %v6186
      %v6188 = vrot.slane %v6100, 4
      %v6189 = vadd.f32 %v6100, %v6188
      %v6190 = vrot.slane %v6189, 2
      %v6191 = vadd.f32 %v6189, %v6190
      %v6192 = vrot.slane %v6191, 1
      %v6193 = vadd.f32 %v6191, %v6192
      %v6194 = vrot.slane %v6105, 4
      %v6195 = vadd.f32 %v6105, %v6194
      %v6196 = vrot.slane %v6195, 2
      %v6197 = vadd.f32 %v6195, %v6196
      %v6198 = vrot.slane %v6197, 1
      %v6199 = vadd.f32 %v6197, %v6198
      %v6200 = vrot.slane %v6110, 4
      %v6201 = vadd.f32 %v6110, %v6200
      %v6202 = vrot.slane %v6201, 2
      %v6203 = vadd.f32 %v6201, %v6202
      %v6204 = vrot.slane %v6203, 1
      %v6205 = vadd.f32 %v6203, %v6204
      %v6206 = vrot.slane %v6115, 4
      %v6207 = vadd.f32 %v6115, %v6206
      %v6208 = vrot.slane %v6207, 2
      %v6209 = vadd.f32 %v6207, %v6208
      %v6210 = vrot.slane %v6209, 1
      %v6211 = vadd.f32 %v6209, %v6210
      %v6212 = vrot.slane %v6120, 4
      %v6213 = vadd.f32 %v6120, %v6212
      %v6214 = vrot.slane %v6213, 2
      %v6215 = vadd.f32 %v6213, %v6214
      %v6216 = vrot.slane %v6215, 1
      %v6217 = vadd.f32 %v6215, %v6216
      %v6218 = vrot.slane %v6125, 4
      %v6219 = vadd.f32 %v6125, %v6218
      %v6220 = vrot.slane %v6219, 2
      %v6221 = vadd.f32 %v6219, %v6220
      %v6222 = vrot.slane %v6221, 1
      %v6223 = vadd.f32 %v6221, %v6222
      %v6224 = vmul.f32 %v6050, %v6050
      %v6225 = vmul.f32 %v6055, %v6055
      %v6226 = vmul.f32 %v6060, %v6060
      %v6227 = vmul.f32 %v6065, %v6065
      %v6228 = vmul.f32 %v6070, %v6070
      %v6229 = vmul.f32 %v6075, %v6075
      %v6230 = vmul.f32 %v6080, %v6080
      %v6231 = vmul.f32 %v6085, %v6085
      %v6232 = vmul.f32 %v6090, %v6090
      %v6233 = vmul.f32 %v6095, %v6095
      %v6234 = vmul.f32 %v6100, %v6100
      %v6235 = vmul.f32 %v6105, %v6105
      %v6236 = vmul.f32 %v6110, %v6110
      %v6237 = vmul.f32 %v6115, %v6115
      %v6238 = vmul.f32 %v6120, %v6120
      %v6239 = vmul.f32 %v6125, %v6125
      %v6240 = vrot.slane %v6224, 4
      %v6241 = vadd.f32 %v6224, %v6240
      %v6242 = vrot.slane %v6241, 2
      %v6243 = vadd.f32 %v6241, %v6242
      %v6244 = vrot.slane %v6243, 1
      %v6245 = vadd.f32 %v6243, %v6244
      %v6246 = vrot.slane %v6225, 4
      %v6247 = vadd.f32 %v6225, %v6246
      %v6248 = vrot.slane %v6247, 2
      %v6249 = vadd.f32 %v6247, %v6248
      %v6250 = vrot.slane %v6249, 1
      %v6251 = vadd.f32 %v6249, %v6250
      %v6252 = vrot.slane %v6226, 4
      %v6253 = vadd.f32 %v6226, %v6252
      %v6254 = vrot.slane %v6253, 2
      %v6255 = vadd.f32 %v6253, %v6254
      %v6256 = vrot.slane %v6255, 1
      %v6257 = vadd.f32 %v6255, %v6256
      %v6258 = vrot.slane %v6227, 4
      %v6259 = vadd.f32 %v6227, %v6258
      %v6260 = vrot.slane %v6259, 2
      %v6261 = vadd.f32 %v6259, %v6260
      %v6262 = vrot.slane %v6261, 1
      %v6263 = vadd.f32 %v6261, %v6262
      %v6264 = vrot.slane %v6228, 4
      %v6265 = vadd.f32 %v6228, %v6264
      %v6266 = vrot.slane %v6265, 2
      %v6267 = vadd.f32 %v6265, %v6266
      %v6268 = vrot.slane %v6267, 1
      %v6269 = vadd.f32 %v6267, %v6268
      %v6270 = vrot.slane %v6229, 4
      %v6271 = vadd.f32 %v6229, %v6270
      %v6272 = vrot.slane %v6271, 2
      %v6273 = vadd.f32 %v6271, %v6272
      %v6274 = vrot.slane %v6273, 1
      %v6275 = vadd.f32 %v6273, %v6274
      %v6276 = vrot.slane %v6230, 4
      %v6277 = vadd.f32 %v6230, %v6276
      %v6278 = vrot.slane %v6277, 2
      %v6279 = vadd.f32 %v6277, %v6278
      %v6280 = vrot.slane %v6279, 1
      %v6281 = vadd.f32 %v6279, %v6280
      %v6282 = vrot.slane %v6231, 4
      %v6283 = vadd.f32 %v6231, %v6282
      %v6284 = vrot.slane %v6283, 2
      %v6285 = vadd.f32 %v6283, %v6284
      %v6286 = vrot.slane %v6285, 1
      %v6287 = vadd.f32 %v6285, %v6286
      %v6288 = vrot.slane %v6232, 4
      %v6289 = vadd.f32 %v6232, %v6288
      %v6290 = vrot.slane %v6289, 2
      %v6291 = vadd.f32 %v6289, %v6290
      %v6292 = vrot.slane %v6291, 1
      %v6293 = vadd.f32 %v6291, %v6292
      %v6294 = vrot.slane %v6233, 4
      %v6295 = vadd.f32 %v6233, %v6294
      %v6296 = vrot.slane %v6295, 2
      %v6297 = vadd.f32 %v6295, %v6296
      %v6298 = vrot.slane %v6297, 1
      %v6299 = vadd.f32 %v6297, %v6298
      %v6300 = vrot.slane %v6234, 4
      %v6301 = vadd.f32 %v6234, %v6300
      %v6302 = vrot.slane %v6301, 2
      %v6303 = vadd.f32 %v6301, %v6302
      %v6304 = vrot.slane %v6303, 1
      %v6305 = vadd.f32 %v6303, %v6304
      %v6306 = vrot.slane %v6235, 4
      %v6307 = vadd.f32 %v6235, %v6306
      %v6308 = vrot.slane %v6307, 2
      %v6309 = vadd.f32 %v6307, %v6308
      %v6310 = vrot.slane %v6309, 1
      %v6311 = vadd.f32 %v6309, %v6310
      %v6312 = vrot.slane %v6236, 4
      %v6313 = vadd.f32 %v6236, %v6312
      %v6314 = vrot.slane %v6313, 2
      %v6315 = vadd.f32 %v6313, %v6314
      %v6316 = vrot.slane %v6315, 1
      %v6317 = vadd.f32 %v6315, %v6316
      %v6318 = vrot.slane %v6237, 4
      %v6319 = vadd.f32 %v6237, %v6318
      %v6320 = vrot.slane %v6319, 2
      %v6321 = vadd.f32 %v6319, %v6320
      %v6322 = vrot.slane %v6321, 1
      %v6323 = vadd.f32 %v6321, %v6322
      %v6324 = vrot.slane %v6238, 4
      %v6325 = vadd.f32 %v6238, %v6324
      %v6326 = vrot.slane %v6325, 2
      %v6327 = vadd.f32 %v6325, %v6326
      %v6328 = vrot.slane %v6327, 1
      %v6329 = vadd.f32 %v6327, %v6328
      %v6330 = vrot.slane %v6239, 4
      %v6331 = vadd.f32 %v6239, %v6330
      %v6332 = vrot.slane %v6331, 2
      %v6333 = vadd.f32 %v6331, %v6332
      %v6334 = vrot.slane %v6333, 1
      %v6335 = vadd.f32 %v6333, %v6334
      %v6336 = vmul.f32 %v6245, 8.0
      %v6337 = vmul.f32 %v6251, 8.0
      %v6338 = vmul.f32 %v6257, 8.0
      %v6339 = vmul.f32 %v6263, 8.0
      %v6340 = vmul.f32 %v6269, 8.0
      %v6341 = vmul.f32 %v6275, 8.0
      %v6342 = vmul.f32 %v6281, 8.0
      %v6343 = vmul.f32 %v6287, 8.0
      %v6344 = vmul.f32 %v6293, 8.0
      %v6345 = vmul.f32 %v6299, 8.0
      %v6346 = vmul.f32 %v6305, 8.0
      %v6347 = vmul.f32 %v6311, 8.0
      %v6348 = vmul.f32 %v6317, 8.0
      %v6349 = vmul.f32 %v6323, 8.0
      %v6350 = vmul.f32 %v6329, 8.0
      %v6351 = vmul.f32 %v6335, 8.0
      %v6352 = vmul.f32 %v6133, %v6133
      %v6353 = vmul.f32 %v6139, %v6139
      %v6354 = vmul.f32 %v6145, %v6145
      %v6355 = vmul.f32 %v6151, %v6151
      %v6356 = vmul.f32 %v6157, %v6157
      %v6357 = vmul.f32 %v6163, %v6163
      %v6358 = vmul.f32 %v6169, %v6169
      %v6359 = vmul.f32 %v6175, %v6175
      %v6360 = vmul.f32 %v6181, %v6181
      %v6361 = vmul.f32 %v6187, %v6187
      %v6362 = vmul.f32 %v6193, %v6193
      %v6363 = vmul.f32 %v6199, %v6199
      %v6364 = vmul.f32 %v6205, %v6205
      %v6365 = vmul.f32 %v6211, %v6211
      %v6366 = vmul.f32 %v6217, %v6217
      %v6367 = vmul.f32 %v6223, %v6223
      %v6368 = vsub.f32 %v6336, %v6352
      %v6369 = vsub.f32 %v6337, %v6353
      %v6370 = vsub.f32 %v6338, %v6354
      %v6371 = vsub.f32 %v6339, %v6355
      %v6372 = vsub.f32 %v6340, %v6356
      %v6373 = vsub.f32 %v6341, %v6357
      %v6374 = vsub.f32 %v6342, %v6358
      %v6375 = vsub.f32 %v6343, %v6359
      %v6376 = vsub.f32 %v6344, %v6360
      %v6377 = vsub.f32 %v6345, %v6361
      %v6378 = vsub.f32 %v6346, %v6362
      %v6379 = vsub.f32 %v6347, %v6363
      %v6380 = vsub.f32 %v6348, %v6364
      %v6381 = vsub.f32 %v6349, %v6365
      %v6382 = vsub.f32 %v6350, %v6366
      %v6383 = vsub.f32 %v6351, %v6367
      %v6384 = vmax.f32 %v6368, 0.0
      %v6385 = vmax.f32 %v6369, 0.0
      %v6386 = vmax.f32 %v6370, 0.0
      %v6387 = vmax.f32 %v6371, 0.0
      %v6388 = vmax.f32 %v6372, 0.0
      %v6389 = vmax.f32 %v6373, 0.0
      %v6390 = vmax.f32 %v6374, 0.0
      %v6391 = vmax.f32 %v6375, 0.0
      %v6392 = vmax.f32 %v6376, 0.0
      %v6393 = vmax.f32 %v6377, 0.0
      %v6394 = vmax.f32 %v6378, 0.0
      %v6395 = vmax.f32 %v6379, 0.0
      %v6396 = vmax.f32 %v6380, 0.0
      %v6397 = vmax.f32 %v6381, 0.0
      %v6398 = vmax.f32 %v6382, 0.0
      %v6399 = vmax.f32 %v6383, 0.0
      %v6400 = vadd.f32 %v6384, 0.00064
      %v6401 = vadd.f32 %v6385, 0.00064
      %v6402 = vadd.f32 %v6386, 0.00064
      %v6403 = vadd.f32 %v6387, 0.00064
      %v6404 = vadd.f32 %v6388, 0.00064
      %v6405 = vadd.f32 %v6389, 0.00064
      %v6406 = vadd.f32 %v6390, 0.00064
      %v6407 = vadd.f32 %v6391, 0.00064
      %v6408 = vadd.f32 %v6392, 0.00064
      %v6409 = vadd.f32 %v6393, 0.00064
      %v6410 = vadd.f32 %v6394, 0.00064
      %v6411 = vadd.f32 %v6395, 0.00064
      %v6412 = vadd.f32 %v6396, 0.00064
      %v6413 = vadd.f32 %v6397, 0.00064
      %v6414 = vadd.f32 %v6398, 0.00064
      %v6415 = vadd.f32 %v6399, 0.00064
      %v6416 = vrsqrt.pop %v6400
      %v6417 = vrsqrt.pop %v6401
      %v6418 = vrsqrt.pop %v6402
      %v6419 = vrsqrt.pop %v6403
      %v6420 = vrsqrt.pop %v6404
      %v6421 = vrsqrt.pop %v6405
      %v6422 = vrsqrt.pop %v6406
      %v6423 = vrsqrt.pop %v6407
      %v6424 = vrsqrt.pop %v6408
      %v6425 = vrsqrt.pop %v6409
      %v6426 = vrsqrt.pop %v6410
      %v6427 = vrsqrt.pop %v6411
      %v6428 = vrsqrt.pop %v6412
      %v6429 = vrsqrt.pop %v6413
      %v6430 = vrsqrt.pop %v6414
      %v6431 = vrsqrt.pop %v6415
      %v6432 = vld [vmem:[%s3 + $0x8] sm:$0x1]
      %v6433 = vmul.f32 %v6432, %v6416
      %v6434 = vmul.f32 %v6432, %v6417
      %v6435 = vmul.f32 %v6432, %v6418
      %v6436 = vmul.f32 %v6432, %v6419
      %v6437 = vmul.f32 %v6432, %v6420
      %v6438 = vmul.f32 %v6432, %v6421
      %v6439 = vmul.f32 %v6432, %v6422
      %v6440 = vmul.f32 %v6432, %v6423
      %v6441 = vmul.f32 %v6432, %v6424
      %v6442 = vmul.f32 %v6432, %v6425
      %v6443 = vmul.f32 %v6432, %v6426
      %v6444 = vmul.f32 %v6432, %v6427
      %v6445 = vmul.f32 %v6432, %v6428
      %v6446 = vmul.f32 %v6432, %v6429
      %v6447 = vmul.f32 %v6432, %v6430
      %v6448 = vmul.f32 %v6432, %v6431
      %v6449 = vmul.f32 %v6433, 8.0
      %v6450 = vmul.f32 %v6434, 8.0
      %v6451 = vmul.f32 %v6435, 8.0
      %v6452 = vmul.f32 %v6436, 8.0
      %v6453 = vmul.f32 %v6437, 8.0
      %v6454 = vmul.f32 %v6438, 8.0
      %v6455 = vmul.f32 %v6439, 8.0
      %v6456 = vmul.f32 %v6440, 8.0
      %v6457 = vmul.f32 %v6441, 8.0
      %v6458 = vmul.f32 %v6442, 8.0
      %v6459 = vmul.f32 %v6443, 8.0
      %v6460 = vmul.f32 %v6444, 8.0
      %v6461 = vmul.f32 %v6445, 8.0
      %v6462 = vmul.f32 %v6446, 8.0
      %v6463 = vmul.f32 %v6447, 8.0
      %v6464 = vmul.f32 %v6448, 8.0
      %v6465 = vld [vmem:[%s4 + $0x8] sm:$0x1]
      %v6466 = vmul.f32 %v6133, %v6433
      %v6467 = vmul.f32 %v6139, %v6434
      %v6468 = vmul.f32 %v6145, %v6435
      %v6469 = vmul.f32 %v6151, %v6436
      %v6470 = vmul.f32 %v6157, %v6437
      %v6471 = vmul.f32 %v6163, %v6438
      %v6472 = vmul.f32 %v6169, %v6439
      %v6473 = vmul.f32 %v6175, %v6440
      %v6474 = vmul.f32 %v6181, %v6441
      %v6475 = vmul.f32 %v6187, %v6442
      %v6476 = vmul.f32 %v6193, %v6443
      %v6477 = vmul.f32 %v6199, %v6444
      %v6478 = vmul.f32 %v6205, %v6445
      %v6479 = vmul.f32 %v6211, %v6446
      %v6480 = vmul.f32 %v6217, %v6447
      %v6481 = vmul.f32 %v6223, %v6448
      %v6482 = vsub.f32 %v6465, %v6466
      %v6483 = vsub.f32 %v6465, %v6467
      %v6484 = vsub.f32 %v6465, %v6468
      %v6485 = vsub.f32 %v6465, %v6469
      %v6486 = vsub.f32 %v6465, %v6470
      %v6487 = vsub.f32 %v6465, %v6471
      %v6488 = vsub.f32 %v6465, %v6472
      %v6489 = vsub.f32 %v6465, %v6473
      %v6490 = vsub.f32 %v6465, %v6474
      %v6491 = vsub.f32 %v6465, %v6475
      %v6492 = vsub.f32 %v6465, %v6476
      %v6493 = vsub.f32 %v6465, %v6477
      %v6494 = vsub.f32 %v6465, %v6478
      %v6495 = vsub.f32 %v6465, %v6479
      %v6496 = vsub.f32 %v6465, %v6480
      %v6497 = vsub.f32 %v6465, %v6481
      %v6498 = vlaneseq
      %v6499 = vshrl.u32 %v6498, 7
      %v6500 = vsub.s32 0, %v6499
      %v6501 = vrot.slane %v6449, %v6500
      %v6502 = vlaneseq
      %v6503 = vshrl.u32 %v6502, 7
      %v6504 = vsub.s32 0, %v6503
      %v6505 = vrot.slane %v6450, %v6504
      %v6506 = vlaneseq
      %v6507 = vshrl.u32 %v6506, 7
      %v6508 = vsub.s32 0, %v6507
      %v6509 = vrot.slane %v6451, %v6508
      %v6510 = vlaneseq
      %v6511 = vshrl.u32 %v6510, 7
      %v6512 = vsub.s32 0, %v6511
      %v6513 = vrot.slane %v6452, %v6512
      %v6514 = vlaneseq
      %v6515 = vshrl.u32 %v6514, 7
      %v6516 = vsub.s32 0, %v6515
      %v6517 = vrot.slane %v6453, %v6516
      %v6518 = vlaneseq
      %v6519 = vshrl.u32 %v6518, 7
      %v6520 = vsub.s32 0, %v6519
      %v6521 = vrot.slane %v6454, %v6520
      %v6522 = vlaneseq
      %v6523 = vshrl.u32 %v6522, 7
      %v6524 = vsub.s32 0, %v6523
      %v6525 = vrot.slane %v6455, %v6524
      %v6526 = vlaneseq
      %v6527 = vshrl.u32 %v6526, 7
      %v6528 = vsub.s32 0, %v6527
      %v6529 = vrot.slane %v6456, %v6528
      %v6530 = vlaneseq
      %v6531 = vshrl.u32 %v6530, 7
      %v6532 = vsub.s32 0, %v6531
      %v6533 = vrot.slane %v6457, %v6532
      %v6534 = vlaneseq
      %v6535 = vshrl.u32 %v6534, 7
      %v6536 = vsub.s32 0, %v6535
      %v6537 = vrot.slane %v6458, %v6536
      %v6538 = vlaneseq
      %v6539 = vshrl.u32 %v6538, 7
      %v6540 = vsub.s32 0, %v6539
      %v6541 = vrot.slane %v6459, %v6540
      %v6542 = vlaneseq
      %v6543 = vshrl.u32 %v6542, 7
      %v6544 = vsub.s32 0, %v6543
      %v6545 = vrot.slane %v6460, %v6544
      %v6546 = vlaneseq
      %v6547 = vshrl.u32 %v6546, 7
      %v6548 = vsub.s32 0, %v6547
      %v6549 = vrot.slane %v6461, %v6548
      %v6550 = vlaneseq
      %v6551 = vshrl.u32 %v6550, 7
      %v6552 = vsub.s32 0, %v6551
      %v6553 = vrot.slane %v6462, %v6552
      %v6554 = vlaneseq
      %v6555 = vshrl.u32 %v6554, 7
      %v6556 = vsub.s32 0, %v6555
      %v6557 = vrot.slane %v6463, %v6556
      %v6558 = vlaneseq
      %v6559 = vshrl.u32 %v6558, 7
      %v6560 = vsub.s32 0, %v6559
      %v6561 = vrot.slane %v6464, %v6560
      %v6562 = vmul.f32 %v6050, %v6501
      %v6563 = vmul.f32 %v6055, %v6505
      %v6564 = vmul.f32 %v6060, %v6509
      %v6565 = vmul.f32 %v6065, %v6513
      %v6566 = vmul.f32 %v6070, %v6517
      %v6567 = vmul.f32 %v6075, %v6521
      %v6568 = vmul.f32 %v6080, %v6525
      %v6569 = vmul.f32 %v6085, %v6529
      %v6570 = vmul.f32 %v6090, %v6533
      %v6571 = vmul.f32 %v6095, %v6537
      %v6572 = vmul.f32 %v6100, %v6541
      %v6573 = vmul.f32 %v6105, %v6545
      %v6574 = vmul.f32 %v6110, %v6549
      %v6575 = vmul.f32 %v6115, %v6553
      %v6576 = vmul.f32 %v6120, %v6557
      %v6577 = vmul.f32 %v6125, %v6561
      %v6578 = vlaneseq
      %v6579 = vshrl.u32 %v6578, 7
      %v6580 = vsub.s32 0, %v6579
      %v6581 = vrot.slane %v6482, %v6580
      %v6582 = vlaneseq
      %v6583 = vshrl.u32 %v6582, 7
      %v6584 = vsub.s32 0, %v6583
      %v6585 = vrot.slane %v6483, %v6584
      %v6586 = vlaneseq
      %v6587 = vshrl.u32 %v6586, 7
      %v6588 = vsub.s32 0, %v6587
      %v6589 = vrot.slane %v6484, %v6588
      %v6590 = vlaneseq
      %v6591 = vshrl.u32 %v6590, 7
      %v6592 = vsub.s32 0, %v6591
      %v6593 = vrot.slane %v6485, %v6592
      %v6594 = vlaneseq
      %v6595 = vshrl.u32 %v6594, 7
      %v6596 = vsub.s32 0, %v6595
      %v6597 = vrot.slane %v6486, %v6596
      %v6598 = vlaneseq
      %v6599 = vshrl.u32 %v6598, 7
      %v6600 = vsub.s32 0, %v6599
      %v6601 = vrot.slane %v6487, %v6600
      %v6602 = vlaneseq
      %v6603 = vshrl.u32 %v6602, 7
      %v6604 = vsub.s32 0, %v6603
      %v6605 = vrot.slane %v6488, %v6604
      %v6606 = vlaneseq
      %v6607 = vshrl.u32 %v6606, 7
      %v6608 = vsub.s32 0, %v6607
      %v6609 = vrot.slane %v6489, %v6608
      %v6610 = vlaneseq
      %v6611 = vshrl.u32 %v6610, 7
      %v6612 = vsub.s32 0, %v6611
      %v6613 = vrot.slane %v6490, %v6612
      %v6614 = vlaneseq
      %v6615 = vshrl.u32 %v6614, 7
      %v6616 = vsub.s32 0, %v6615
      %v6617 = vrot.slane %v6491, %v6616
      %v6618 = vlaneseq
      %v6619 = vshrl.u32 %v6618, 7
      %v6620 = vsub.s32 0, %v6619
      %v6621 = vrot.slane %v6492, %v6620
      %v6622 = vlaneseq
      %v6623 = vshrl.u32 %v6622, 7
      %v6624 = vsub.s32 0, %v6623
      %v6625 = vrot.slane %v6493, %v6624
      %v6626 = vlaneseq
      %v6627 = vshrl.u32 %v6626, 7
      %v6628 = vsub.s32 0, %v6627
      %v6629 = vrot.slane %v6494, %v6628
      %v6630 = vlaneseq
      %v6631 = vshrl.u32 %v6630, 7
      %v6632 = vsub.s32 0, %v6631
      %v6633 = vrot.slane %v6495, %v6632
      %v6634 = vlaneseq
      %v6635 = vshrl.u32 %v6634, 7
      %v6636 = vsub.s32 0, %v6635
      %v6637 = vrot.slane %v6496, %v6636
      %v6638 = vlaneseq
      %v6639 = vshrl.u32 %v6638, 7
      %v6640 = vsub.s32 0, %v6639
      %v6641 = vrot.slane %v6497, %v6640
      %v6642 = vadd.f32 %v6562, %v6581
      %v6643 = vadd.f32 %v6563, %v6585
      %v6644 = vadd.f32 %v6564, %v6589
      %v6645 = vadd.f32 %v6565, %v6593
      %v6646 = vadd.f32 %v6566, %v6597
      %v6647 = vadd.f32 %v6567, %v6601
      %v6648 = vadd.f32 %v6568, %v6605
      %v6649 = vadd.f32 %v6569, %v6609
      %v6650 = vadd.f32 %v6570, %v6613
      %v6651 = vadd.f32 %v6571, %v6617
      %v6652 = vadd.f32 %v6572, %v6621
      %v6653 = vadd.f32 %v6573, %v6625
      %v6654 = vadd.f32 %v6574, %v6629
      %v6655 = vadd.f32 %v6575, %v6633
      %v6656 = vadd.f32 %v6576, %v6637
      %v6657 = vadd.f32 %v6577, %v6641
      %v6658 = vmax.f32 %v6642, 0.0
      %v6659 = vmax.f32 %v6643, 0.0
      %v6660 = vmax.f32 %v6644, 0.0
      %v6661 = vmax.f32 %v6645, 0.0
      %v6662 = vmax.f32 %v6646, 0.0
      %v6663 = vmax.f32 %v6647, 0.0
      %v6664 = vmax.f32 %v6648, 0.0
      %v6665 = vmax.f32 %v6649, 0.0
      %v6666 = vmax.f32 %v6650, 0.0
      %v6667 = vmax.f32 %v6651, 0.0
      %v6668 = vmax.f32 %v6652, 0.0
      %v6669 = vmax.f32 %v6653, 0.0
      %v6670 = vmax.f32 %v6654, 0.0
      %v6671 = vmax.f32 %v6655, 0.0
      %v6672 = vmax.f32 %v6656, 0.0
      %v6673 = vmax.f32 %v6657, 0.0
      %s6674 = scalar_lea.vmem %s2, 1024
      %v6675 = vld [vmem:[%s6674] sm:$0xff]
      %v6676 = vld [vmem:[%s6674 + $0x8] sm:$0xff]
      %v6677 = vld [vmem:[%s6674 + $0x10] sm:$0xff]
      %v6678 = vld [vmem:[%s6674 + $0x18] sm:$0xff]
      %v6679 = vld [vmem:[%s6674 + $0x20] sm:$0xff]
      %v6680 = vld [vmem:[%s6674 + $0x28] sm:$0xff]
      %v6681 = vld [vmem:[%s6674 + $0x30] sm:$0xff]
      %v6682 = vld [vmem:[%s6674 + $0x38] sm:$0xff]
      %v6683 = vld [vmem:[%s6674 + $0x40] sm:$0xff]
      %v6684 = vld [vmem:[%s6674 + $0x48] sm:$0xff]
      %v6685 = vld [vmem:[%s6674 + $0x50] sm:$0xff]
      %v6686 = vld [vmem:[%s6674 + $0x58] sm:$0xff]
      %v6687 = vld [vmem:[%s6674 + $0x60] sm:$0xff]
      %v6688 = vld [vmem:[%s6674 + $0x68] sm:$0xff]
      %v6689 = vld [vmem:[%s6674 + $0x70] sm:$0xff]
      %v6690 = vld [vmem:[%s6674 + $0x78] sm:$0xff]
      %6691 = vmatprep.subr.mxu0 0.0
      %6692 = vmatpush1.msra.mxu0 %v6690
      %6693 = vmatprep.subr.mxu0 0.0
      %6694 = vmatpush1.msra.mxu0 %v6689
      %6695 = vmatprep.subr.mxu0 0.0
      %6696 = vmatpush1.msra.mxu0 %v6688
      %6697 = vmatprep.subr.mxu0 0.0
      %6698 = vmatpush1.msra.mxu0 %v6687
      %6699 = vmatprep.subr.mxu0 0.0
      %6700 = vmatpush1.msra.mxu0 %v6686
      %6701 = vmatprep.subr.mxu0 0.0
      %6702 = vmatpush1.msra.mxu0 %v6685
      %6703 = vmatprep.subr.mxu0 0.0
      %6704 = vmatpush1.msra.mxu0 %v6684
      %6705 = vmatprep.subr.mxu0 0.0
      %6706 = vmatpush1.msra.mxu0 %v6683
      %6707 = vmatprep.subr.mxu0 0.0
      %6708 = vmatpush1.msra.mxu0 %v6682
      %6709 = vmatprep.subr.mxu0 0.0
      %6710 = vmatpush1.msra.mxu0 %v6681
      %6711 = vmatprep.subr.mxu0 0.0
      %6712 = vmatpush1.msra.mxu0 %v6680
      %6713 = vmatprep.subr.mxu0 0.0
      %6714 = vmatpush1.msra.mxu0 %v6679
      %6715 = vmatprep.subr.mxu0 0.0
      %6716 = vmatpush1.msra.mxu0 %v6678
      %6717 = vmatprep.subr.mxu0 0.0
      %6718 = vmatpush1.msra.mxu0 %v6677
      %6719 = vmatprep.subr.mxu0 0.0
      %6720 = vmatpush1.msra.mxu0 %v6676
      %6721 = vmatprep.subr.mxu0 0.0
      %6722 = vmatpush1.msra.mxu0 %v6675
      %6723 = vmatprep.subr.mxu0 0.0
      %6724 = vmatpush2.msra.mxu0 0.0
      %6725 = vmatprep.subr.mxu0 0.0
      %6726 = vmatpush2.msra.mxu0 0.0
      %6727 = vmatprep.subr.mxu0 0.0
      %6728 = vmatpush2.msra.mxu0 0.0
      %6729 = vmatprep.subr.mxu0 0.0
      %6730 = vmatpush2.msra.mxu0 0.0
      %6731 = vmatprep.subr.mxu0 0.0
      %6732 = vmatpush2.msra.mxu0 0.0
      %6733 = vmatprep.subr.mxu0 0.0
      %6734 = vmatpush2.msra.mxu0 0.0
      %6735 = vmatprep.subr.mxu0 0.0
      %6736 = vmatpush2.msra.mxu0 0.0
      %6737 = vmatprep.subr.mxu0 0.0
      %6738 = vmatpush2.msra.mxu0 0.0
      %6739 = vmatprep.subr.mxu0 0.0
      %6740 = vmatpush2.msra.mxu0 0.0
      %6741 = vmatprep.subr.mxu0 0.0
      %6742 = vmatpush2.msra.mxu0 0.0
      %6743 = vmatprep.subr.mxu0 0.0
      %6744 = vmatpush2.msra.mxu0 0.0
      %6745 = vmatprep.subr.mxu0 0.0
      %6746 = vmatpush2.msra.mxu0 0.0
      %6747 = vmatprep.subr.mxu0 0.0
      %6748 = vmatpush2.msra.mxu0 0.0
      %6749 = vmatprep.subr.mxu0 0.0
      %6750 = vmatpush2.msra.mxu0 0.0
      %6751 = vmatprep.subr.mxu0 0.0
      %6752 = vmatpush2.msra.mxu0 0.0
      %6753 = vmatprep.subr.mxu0 0.0
      %6754 = vmatpush2.msra.mxu0 0.0
      %6755 = vmatprep.mubr.f32.mxu0 0.0
      %6756 = vmatmul.mubr.f32.gmra.mxu0 %v6658
      %v6757 = vpop.f32.mrf.mxu0
      %v6758 = vadd.f32 0.0, %v6757
      %v6759 = vpop.f32.mrf.mxu0
      %6760 = vmatprep.mubr.f32.mxu0 0.0
      %6761 = vmatmul.mubr.f32.gmra.mxu0 %v6659
      %v6762 = vpop.f32.mrf.mxu0
      %v6763 = vadd.f32 0.0, %v6762
      %v6764 = vpop.f32.mrf.mxu0
      %6765 = vmatprep.mubr.f32.mxu0 0.0
      %6766 = vmatmul.mubr.f32.gmra.mxu0 %v6660
      %v6767 = vpop.f32.mrf.mxu0
      %v6768 = vadd.f32 0.0, %v6767
      %v6769 = vpop.f32.mrf.mxu0
      %6770 = vmatprep.mubr.f32.mxu0 0.0
      %6771 = vmatmul.mubr.f32.gmra.mxu0 %v6661
      %v6772 = vpop.f32.mrf.mxu0
      %v6773 = vadd.f32 0.0, %v6772
      %v6774 = vpop.f32.mrf.mxu0
      %6775 = vmatprep.mubr.f32.mxu0 0.0
      %6776 = vmatmul.mubr.f32.gmra.mxu0 %v6662
      %v6777 = vpop.f32.mrf.mxu0
      %v6778 = vadd.f32 0.0, %v6777
      %v6779 = vpop.f32.mrf.mxu0
      %6780 = vmatprep.mubr.f32.mxu0 0.0
      %6781 = vmatmul.mubr.f32.gmra.mxu0 %v6663
      %v6782 = vpop.f32.mrf.mxu0
      %v6783 = vadd.f32 0.0, %v6782
      %v6784 = vpop.f32.mrf.mxu0
      %6785 = vmatprep.mubr.f32.mxu0 0.0
      %6786 = vmatmul.mubr.f32.gmra.mxu0 %v6664
      %v6787 = vpop.f32.mrf.mxu0
      %v6788 = vadd.f32 0.0, %v6787
      %v6789 = vpop.f32.mrf.mxu0
      %6790 = vmatprep.mubr.f32.mxu0 0.0
      %6791 = vmatmul.mubr.f32.gmra.mxu0 %v6665
      %v6792 = vpop.f32.mrf.mxu0
      %v6793 = vadd.f32 0.0, %v6792
      %v6794 = vpop.f32.mrf.mxu0
      %6795 = vmatprep.mubr.f32.mxu0 0.0
      %6796 = vmatmul.mubr.f32.gmra.mxu0 %v6666
      %v6797 = vpop.f32.mrf.mxu0
      %v6798 = vadd.f32 0.0, %v6797
      %v6799 = vpop.f32.mrf.mxu0
      %6800 = vmatprep.mubr.f32.mxu0 0.0
      %6801 = vmatmul.mubr.f32.gmra.mxu0 %v6667
      %v6802 = vpop.f32.mrf.mxu0
      %v6803 = vadd.f32 0.0, %v6802
      %v6804 = vpop.f32.mrf.mxu0
      %6805 = vmatprep.mubr.f32.mxu0 0.0
      %6806 = vmatmul.mubr.f32.gmra.mxu0 %v6668
      %v6807 = vpop.f32.mrf.mxu0
      %v6808 = vadd.f32 0.0, %v6807
      %v6809 = vpop.f32.mrf.mxu0
      %6810 = vmatprep.mubr.f32.mxu0 0.0
      %6811 = vmatmul.mubr.f32.gmra.mxu0 %v6669
      %v6812 = vpop.f32.mrf.mxu0
      %v6813 = vadd.f32 0.0, %v6812
      %v6814 = vpop.f32.mrf.mxu0
      %6815 = vmatprep.mubr.f32.mxu0 0.0
      %6816 = vmatmul.mubr.f32.gmra.mxu0 %v6670
      %v6817 = vpop.f32.mrf.mxu0
      %v6818 = vadd.f32 0.0, %v6817
      %v6819 = vpop.f32.mrf.mxu0
      %6820 = vmatprep.mubr.f32.mxu0 0.0
      %6821 = vmatmul.mubr.f32.gmra.mxu0 %v6671
      %v6822 = vpop.f32.mrf.mxu0
      %v6823 = vadd.f32 0.0, %v6822
      %v6824 = vpop.f32.mrf.mxu0
      %6825 = vmatprep.mubr.f32.mxu0 0.0
      %6826 = vmatmul.mubr.f32.gmra.mxu0 %v6672
      %v6827 = vpop.f32.mrf.mxu0
      %v6828 = vadd.f32 0.0, %v6827
      %v6829 = vpop.f32.mrf.mxu0
      %6830 = vmatprep.mubr.f32.mxu0 0.0
      %6831 = vmatmul.mubr.f32.gmra.mxu0 %v6673
      %v6832 = vpop.f32.mrf.mxu0
      %v6833 = vadd.f32 0.0, %v6832
      %v6834 = vpop.f32.mrf.mxu0
      %6835 = vdwg.mxu0
      %v6836 = vrot.slane %v6758, 4
      %v6837 = vadd.f32 %v6758, %v6836
      %v6838 = vrot.slane %v6837, 2
      %v6839 = vadd.f32 %v6837, %v6838
      %v6840 = vrot.slane %v6839, 1
      %v6841 = vadd.f32 %v6839, %v6840
      %v6842 = vrot.slane %v6763, 4
      %v6843 = vadd.f32 %v6763, %v6842
      %v6844 = vrot.slane %v6843, 2
      %v6845 = vadd.f32 %v6843, %v6844
      %v6846 = vrot.slane %v6845, 1
      %v6847 = vadd.f32 %v6845, %v6846
      %v6848 = vrot.slane %v6768, 4
      %v6849 = vadd.f32 %v6768, %v6848
      %v6850 = vrot.slane %v6849, 2
      %v6851 = vadd.f32 %v6849, %v6850
      %v6852 = vrot.slane %v6851, 1
      %v6853 = vadd.f32 %v6851, %v6852
      %v6854 = vrot.slane %v6773, 4
      %v6855 = vadd.f32 %v6773, %v6854
      %v6856 = vrot.slane %v6855, 2
      %v6857 = vadd.f32 %v6855, %v6856
      %v6858 = vrot.slane %v6857, 1
      %v6859 = vadd.f32 %v6857, %v6858
      %v6860 = vrot.slane %v6778, 4
      %v6861 = vadd.f32 %v6778, %v6860
      %v6862 = vrot.slane %v6861, 2
      %v6863 = vadd.f32 %v6861, %v6862
      %v6864 = vrot.slane %v6863, 1
      %v6865 = vadd.f32 %v6863, %v6864
      %v6866 = vrot.slane %v6783, 4
      %v6867 = vadd.f32 %v6783, %v6866
      %v6868 = vrot.slane %v6867, 2
      %v6869 = vadd.f32 %v6867, %v6868
      %v6870 = vrot.slane %v6869, 1
      %v6871 = vadd.f32 %v6869, %v6870
      %v6872 = vrot.slane %v6788, 4
      %v6873 = vadd.f32 %v6788, %v6872
      %v6874 = vrot.slane %v6873, 2
      %v6875 = vadd.f32 %v6873, %v6874
      %v6876 = vrot.slane %v6875, 1
      %v6877 = vadd.f32 %v6875, %v6876
      %v6878 = vrot.slane %v6793, 4
      %v6879 = vadd.f32 %v6793, %v6878
      %v6880 = vrot.slane %v6879, 2
      %v6881 = vadd.f32 %v6879, %v6880
      %v6882 = vrot.slane %v6881, 1
      %v6883 = vadd.f32 %v6881, %v6882
      %v6884 = vrot.slane %v6798, 4
      %v6885 = vadd.f32 %v6798, %v6884
      %v6886 = vrot.slane %v6885, 2
      %v6887 = vadd.f32 %v6885, %v6886
      %v6888 = vrot.slane %v6887, 1
      %v6889 = vadd.f32 %v6887, %v6888
      %v6890 = vrot.slane %v6803, 4
      %v6891 = vadd.f32 %v6803, %v6890
      %v6892 = vrot.slane %v6891, 2
      %v6893 = vadd.f32 %v6891, %v6892
      %v6894 = vrot.slane %v6893, 1
      %v6895 = vadd.f32 %v6893, %v6894
      %v6896 = vrot.slane %v6808, 4
      %v6897 = vadd.f32 %v6808, %v6896
      %v6898 = vrot.slane %v6897, 2
      %v6899 = vadd.f32 %v6897, %v6898
      %v6900 = vrot.slane %v6899, 1
      %v6901 = vadd.f32 %v6899, %v6900
      %v6902 = vrot.slane %v6813, 4
      %v6903 = vadd.f32 %v6813, %v6902
      %v6904 = vrot.slane %v6903, 2
      %v6905 = vadd.f32 %v6903, %v6904
      %v6906 = vrot.slane %v6905, 1
      %v6907 = vadd.f32 %v6905, %v6906
      %v6908 = vrot.slane %v6818, 4
      %v6909 = vadd.f32 %v6818, %v6908
      %v6910 = vrot.slane %v6909, 2
      %v6911 = vadd.f32 %v6909, %v6910
      %v6912 = vrot.slane %v6911, 1
      %v6913 = vadd.f32 %v6911, %v6912
      %v6914 = vrot.slane %v6823, 4
      %v6915 = vadd.f32 %v6823, %v6914
      %v6916 = vrot.slane %v6915, 2
      %v6917 = vadd.f32 %v6915, %v6916
      %v6918 = vrot.slane %v6917, 1
      %v6919 = vadd.f32 %v6917, %v6918
      %v6920 = vrot.slane %v6828, 4
      %v6921 = vadd.f32 %v6828, %v6920
      %v6922 = vrot.slane %v6921, 2
      %v6923 = vadd.f32 %v6921, %v6922
      %v6924 = vrot.slane %v6923, 1
      %v6925 = vadd.f32 %v6923, %v6924
      %v6926 = vrot.slane %v6833, 4
      %v6927 = vadd.f32 %v6833, %v6926
      %v6928 = vrot.slane %v6927, 2
      %v6929 = vadd.f32 %v6927, %v6928
      %v6930 = vrot.slane %v6929, 1
      %v6931 = vadd.f32 %v6929, %v6930
      %v6932 = vmul.f32 %v6758, %v6758
      %v6933 = vmul.f32 %v6763, %v6763
      %v6934 = vmul.f32 %v6768, %v6768
      %v6935 = vmul.f32 %v6773, %v6773
      %v6936 = vmul.f32 %v6778, %v6778
      %v6937 = vmul.f32 %v6783, %v6783
      %v6938 = vmul.f32 %v6788, %v6788
      %v6939 = vmul.f32 %v6793, %v6793
      %v6940 = vmul.f32 %v6798, %v6798
      %v6941 = vmul.f32 %v6803, %v6803
      %v6942 = vmul.f32 %v6808, %v6808
      %v6943 = vmul.f32 %v6813, %v6813
      %v6944 = vmul.f32 %v6818, %v6818
      %v6945 = vmul.f32 %v6823, %v6823
      %v6946 = vmul.f32 %v6828, %v6828
      %v6947 = vmul.f32 %v6833, %v6833
      %v6948 = vrot.slane %v6932, 4
      %v6949 = vadd.f32 %v6932, %v6948
      %v6950 = vrot.slane %v6949, 2
      %v6951 = vadd.f32 %v6949, %v6950
      %v6952 = vrot.slane %v6951, 1
      %v6953 = vadd.f32 %v6951, %v6952
      %v6954 = vrot.slane %v6933, 4
      %v6955 = vadd.f32 %v6933, %v6954
      %v6956 = vrot.slane %v6955, 2
      %v6957 = vadd.f32 %v6955, %v6956
      %v6958 = vrot.slane %v6957, 1
      %v6959 = vadd.f32 %v6957, %v6958
      %v6960 = vrot.slane %v6934, 4
      %v6961 = vadd.f32 %v6934, %v6960
      %v6962 = vrot.slane %v6961, 2
      %v6963 = vadd.f32 %v6961, %v6962
      %v6964 = vrot.slane %v6963, 1
      %v6965 = vadd.f32 %v6963, %v6964
      %v6966 = vrot.slane %v6935, 4
      %v6967 = vadd.f32 %v6935, %v6966
      %v6968 = vrot.slane %v6967, 2
      %v6969 = vadd.f32 %v6967, %v6968
      %v6970 = vrot.slane %v6969, 1
      %v6971 = vadd.f32 %v6969, %v6970
      %v6972 = vrot.slane %v6936, 4
      %v6973 = vadd.f32 %v6936, %v6972
      %v6974 = vrot.slane %v6973, 2
      %v6975 = vadd.f32 %v6973, %v6974
      %v6976 = vrot.slane %v6975, 1
      %v6977 = vadd.f32 %v6975, %v6976
      %v6978 = vrot.slane %v6937, 4
      %v6979 = vadd.f32 %v6937, %v6978
      %v6980 = vrot.slane %v6979, 2
      %v6981 = vadd.f32 %v6979, %v6980
      %v6982 = vrot.slane %v6981, 1
      %v6983 = vadd.f32 %v6981, %v6982
      %v6984 = vrot.slane %v6938, 4
      %v6985 = vadd.f32 %v6938, %v6984
      %v6986 = vrot.slane %v6985, 2
      %v6987 = vadd.f32 %v6985, %v6986
      %v6988 = vrot.slane %v6987, 1
      %v6989 = vadd.f32 %v6987, %v6988
      %v6990 = vrot.slane %v6939, 4
      %v6991 = vadd.f32 %v6939, %v6990
      %v6992 = vrot.slane %v6991, 2
      %v6993 = vadd.f32 %v6991, %v6992
      %v6994 = vrot.slane %v6993, 1
      %v6995 = vadd.f32 %v6993, %v6994
      %v6996 = vrot.slane %v6940, 4
      %v6997 = vadd.f32 %v6940, %v6996
      %v6998 = vrot.slane %v6997, 2
      %v6999 = vadd.f32 %v6997, %v6998
      %v7000 = vrot.slane %v6999, 1
      %v7001 = vadd.f32 %v6999, %v7000
      %v7002 = vrot.slane %v6941, 4
      %v7003 = vadd.f32 %v6941, %v7002
      %v7004 = vrot.slane %v7003, 2
      %v7005 = vadd.f32 %v7003, %v7004
      %v7006 = vrot.slane %v7005, 1
      %v7007 = vadd.f32 %v7005, %v7006
      %v7008 = vrot.slane %v6942, 4
      %v7009 = vadd.f32 %v6942, %v7008
      %v7010 = vrot.slane %v7009, 2
      %v7011 = vadd.f32 %v7009, %v7010
      %v7012 = vrot.slane %v7011, 1
      %v7013 = vadd.f32 %v7011, %v7012
      %v7014 = vrot.slane %v6943, 4
      %v7015 = vadd.f32 %v6943, %v7014
      %v7016 = vrot.slane %v7015, 2
      %v7017 = vadd.f32 %v7015, %v7016
      %v7018 = vrot.slane %v7017, 1
      %v7019 = vadd.f32 %v7017, %v7018
      %v7020 = vrot.slane %v6944, 4
      %v7021 = vadd.f32 %v6944, %v7020
      %v7022 = vrot.slane %v7021, 2
      %v7023 = vadd.f32 %v7021, %v7022
      %v7024 = vrot.slane %v7023, 1
      %v7025 = vadd.f32 %v7023, %v7024
      %v7026 = vrot.slane %v6945, 4
      %v7027 = vadd.f32 %v6945, %v7026
      %v7028 = vrot.slane %v7027, 2
      %v7029 = vadd.f32 %v7027, %v7028
      %v7030 = vrot.slane %v7029, 1
      %v7031 = vadd.f32 %v7029, %v7030
      %v7032 = vrot.slane %v6946, 4
      %v7033 = vadd.f32 %v6946, %v7032
      %v7034 = vrot.slane %v7033, 2
      %v7035 = vadd.f32 %v7033, %v7034
      %v7036 = vrot.slane %v7035, 1
      %v7037 = vadd.f32 %v7035, %v7036
      %v7038 = vrot.slane %v6947, 4
      %v7039 = vadd.f32 %v6947, %v7038
      %v7040 = vrot.slane %v7039, 2
      %v7041 = vadd.f32 %v7039, %v7040
      %v7042 = vrot.slane %v7041, 1
      %v7043 = vadd.f32 %v7041, %v7042
      %v7044 = vmul.f32 %v6953, 8.0
      %v7045 = vmul.f32 %v6959, 8.0
      %v7046 = vmul.f32 %v6965, 8.0
      %v7047 = vmul.f32 %v6971, 8.0
      %v7048 = vmul.f32 %v6977, 8.0
      %v7049 = vmul.f32 %v6983, 8.0
      %v7050 = vmul.f32 %v6989, 8.0
      %v7051 = vmul.f32 %v6995, 8.0
      %v7052 = vmul.f32 %v7001, 8.0
      %v7053 = vmul.f32 %v7007, 8.0
      %v7054 = vmul.f32 %v7013, 8.0
      %v7055 = vmul.f32 %v7019, 8.0
      %v7056 = vmul.f32 %v7025, 8.0
      %v7057 = vmul.f32 %v7031, 8.0
      %v7058 = vmul.f32 %v7037, 8.0
      %v7059 = vmul.f32 %v7043, 8.0
      %v7060 = vmul.f32 %v6841, %v6841
      %v7061 = vmul.f32 %v6847, %v6847
      %v7062 = vmul.f32 %v6853, %v6853
      %v7063 = vmul.f32 %v6859, %v6859
      %v7064 = vmul.f32 %v6865, %v6865
      %v7065 = vmul.f32 %v6871, %v6871
      %v7066 = vmul.f32 %v6877, %v6877
      %v7067 = vmul.f32 %v6883, %v6883
      %v7068 = vmul.f32 %v6889, %v6889
      %v7069 = vmul.f32 %v6895, %v6895
      %v7070 = vmul.f32 %v6901, %v6901
      %v7071 = vmul.f32 %v6907, %v6907
      %v7072 = vmul.f32 %v6913, %v6913
      %v7073 = vmul.f32 %v6919, %v6919
      %v7074 = vmul.f32 %v6925, %v6925
      %v7075 = vmul.f32 %v6931, %v6931
      %v7076 = vsub.f32 %v7044, %v7060
      %v7077 = vsub.f32 %v7045, %v7061
      %v7078 = vsub.f32 %v7046, %v7062
      %v7079 = vsub.f32 %v7047, %v7063
      %v7080 = vsub.f32 %v7048, %v7064
      %v7081 = vsub.f32 %v7049, %v7065
      %v7082 = vsub.f32 %v7050, %v7066
      %v7083 = vsub.f32 %v7051, %v7067
      %v7084 = vsub.f32 %v7052, %v7068
      %v7085 = vsub.f32 %v7053, %v7069
      %v7086 = vsub.f32 %v7054, %v7070
      %v7087 = vsub.f32 %v7055, %v7071
      %v7088 = vsub.f32 %v7056, %v7072
      %v7089 = vsub.f32 %v7057, %v7073
      %v7090 = vsub.f32 %v7058, %v7074
      %v7091 = vsub.f32 %v7059, %v7075
      %v7092 = vmax.f32 %v7076, 0.0
      %v7093 = vmax.f32 %v7077, 0.0
      %v7094 = vmax.f32 %v7078, 0.0
      %v7095 = vmax.f32 %v7079, 0.0
      %v7096 = vmax.f32 %v7080, 0.0
      %v7097 = vmax.f32 %v7081, 0.0
      %v7098 = vmax.f32 %v7082, 0.0
      %v7099 = vmax.f32 %v7083, 0.0
      %v7100 = vmax.f32 %v7084, 0.0
      %v7101 = vmax.f32 %v7085, 0.0
      %v7102 = vmax.f32 %v7086, 0.0
      %v7103 = vmax.f32 %v7087, 0.0
      %v7104 = vmax.f32 %v7088, 0.0
      %v7105 = vmax.f32 %v7089, 0.0
      %v7106 = vmax.f32 %v7090, 0.0
      %v7107 = vmax.f32 %v7091, 0.0
      %v7108 = vadd.f32 %v7092, 0.00064
      %v7109 = vadd.f32 %v7093, 0.00064
      %v7110 = vadd.f32 %v7094, 0.00064
      %v7111 = vadd.f32 %v7095, 0.00064
      %v7112 = vadd.f32 %v7096, 0.00064
      %v7113 = vadd.f32 %v7097, 0.00064
      %v7114 = vadd.f32 %v7098, 0.00064
      %v7115 = vadd.f32 %v7099, 0.00064
      %v7116 = vadd.f32 %v7100, 0.00064
      %v7117 = vadd.f32 %v7101, 0.00064
      %v7118 = vadd.f32 %v7102, 0.00064
      %v7119 = vadd.f32 %v7103, 0.00064
      %v7120 = vadd.f32 %v7104, 0.00064
      %v7121 = vadd.f32 %v7105, 0.00064
      %v7122 = vadd.f32 %v7106, 0.00064
      %v7123 = vadd.f32 %v7107, 0.00064
      %v7124 = vrsqrt.pop %v7108
      %v7125 = vrsqrt.pop %v7109
      %v7126 = vrsqrt.pop %v7110
      %v7127 = vrsqrt.pop %v7111
      %v7128 = vrsqrt.pop %v7112
      %v7129 = vrsqrt.pop %v7113
      %v7130 = vrsqrt.pop %v7114
      %v7131 = vrsqrt.pop %v7115
      %v7132 = vrsqrt.pop %v7116
      %v7133 = vrsqrt.pop %v7117
      %v7134 = vrsqrt.pop %v7118
      %v7135 = vrsqrt.pop %v7119
      %v7136 = vrsqrt.pop %v7120
      %v7137 = vrsqrt.pop %v7121
      %v7138 = vrsqrt.pop %v7122
      %v7139 = vrsqrt.pop %v7123
      %v7140 = vld [vmem:[%s3 + $0x9] sm:$0x1]
      %v7141 = vmul.f32 %v7140, %v7124
      %v7142 = vmul.f32 %v7140, %v7125
      %v7143 = vmul.f32 %v7140, %v7126
      %v7144 = vmul.f32 %v7140, %v7127
      %v7145 = vmul.f32 %v7140, %v7128
      %v7146 = vmul.f32 %v7140, %v7129
      %v7147 = vmul.f32 %v7140, %v7130
      %v7148 = vmul.f32 %v7140, %v7131
      %v7149 = vmul.f32 %v7140, %v7132
      %v7150 = vmul.f32 %v7140, %v7133
      %v7151 = vmul.f32 %v7140, %v7134
      %v7152 = vmul.f32 %v7140, %v7135
      %v7153 = vmul.f32 %v7140, %v7136
      %v7154 = vmul.f32 %v7140, %v7137
      %v7155 = vmul.f32 %v7140, %v7138
      %v7156 = vmul.f32 %v7140, %v7139
      %v7157 = vmul.f32 %v7141, 8.0
      %v7158 = vmul.f32 %v7142, 8.0
      %v7159 = vmul.f32 %v7143, 8.0
      %v7160 = vmul.f32 %v7144, 8.0
      %v7161 = vmul.f32 %v7145, 8.0
      %v7162 = vmul.f32 %v7146, 8.0
      %v7163 = vmul.f32 %v7147, 8.0
      %v7164 = vmul.f32 %v7148, 8.0
      %v7165 = vmul.f32 %v7149, 8.0
      %v7166 = vmul.f32 %v7150, 8.0
      %v7167 = vmul.f32 %v7151, 8.0
      %v7168 = vmul.f32 %v7152, 8.0
      %v7169 = vmul.f32 %v7153, 8.0
      %v7170 = vmul.f32 %v7154, 8.0
      %v7171 = vmul.f32 %v7155, 8.0
      %v7172 = vmul.f32 %v7156, 8.0
      %v7173 = vld [vmem:[%s4 + $0x9] sm:$0x1]
      %v7174 = vmul.f32 %v6841, %v7141
      %v7175 = vmul.f32 %v6847, %v7142
      %v7176 = vmul.f32 %v6853, %v7143
      %v7177 = vmul.f32 %v6859, %v7144
      %v7178 = vmul.f32 %v6865, %v7145
      %v7179 = vmul.f32 %v6871, %v7146
      %v7180 = vmul.f32 %v6877, %v7147
      %v7181 = vmul.f32 %v6883, %v7148
      %v7182 = vmul.f32 %v6889, %v7149
      %v7183 = vmul.f32 %v6895, %v7150
      %v7184 = vmul.f32 %v6901, %v7151
      %v7185 = vmul.f32 %v6907, %v7152
      %v7186 = vmul.f32 %v6913, %v7153
      %v7187 = vmul.f32 %v6919, %v7154
      %v7188 = vmul.f32 %v6925, %v7155
      %v7189 = vmul.f32 %v6931, %v7156
      %v7190 = vsub.f32 %v7173, %v7174
      %v7191 = vsub.f32 %v7173, %v7175
      %v7192 = vsub.f32 %v7173, %v7176
      %v7193 = vsub.f32 %v7173, %v7177
      %v7194 = vsub.f32 %v7173, %v7178
      %v7195 = vsub.f32 %v7173, %v7179
      %v7196 = vsub.f32 %v7173, %v7180
      %v7197 = vsub.f32 %v7173, %v7181
      %v7198 = vsub.f32 %v7173, %v7182
      %v7199 = vsub.f32 %v7173, %v7183
      %v7200 = vsub.f32 %v7173, %v7184
      %v7201 = vsub.f32 %v7173, %v7185
      %v7202 = vsub.f32 %v7173, %v7186
      %v7203 = vsub.f32 %v7173, %v7187
      %v7204 = vsub.f32 %v7173, %v7188
      %v7205 = vsub.f32 %v7173, %v7189
      %v7206 = vlaneseq
      %v7207 = vshrl.u32 %v7206, 7
      %v7208 = vsub.s32 0, %v7207
      %v7209 = vrot.slane %v7157, %v7208
      %v7210 = vlaneseq
      %v7211 = vshrl.u32 %v7210, 7
      %v7212 = vsub.s32 0, %v7211
      %v7213 = vrot.slane %v7158, %v7212
      %v7214 = vlaneseq
      %v7215 = vshrl.u32 %v7214, 7
      %v7216 = vsub.s32 0, %v7215
      %v7217 = vrot.slane %v7159, %v7216
      %v7218 = vlaneseq
      %v7219 = vshrl.u32 %v7218, 7
      %v7220 = vsub.s32 0, %v7219
      %v7221 = vrot.slane %v7160, %v7220
      %v7222 = vlaneseq
      %v7223 = vshrl.u32 %v7222, 7
      %v7224 = vsub.s32 0, %v7223
      %v7225 = vrot.slane %v7161, %v7224
      %v7226 = vlaneseq
      %v7227 = vshrl.u32 %v7226, 7
      %v7228 = vsub.s32 0, %v7227
      %v7229 = vrot.slane %v7162, %v7228
      %v7230 = vlaneseq
      %v7231 = vshrl.u32 %v7230, 7
      %v7232 = vsub.s32 0, %v7231
      %v7233 = vrot.slane %v7163, %v7232
      %v7234 = vlaneseq
      %v7235 = vshrl.u32 %v7234, 7
      %v7236 = vsub.s32 0, %v7235
      %v7237 = vrot.slane %v7164, %v7236
      %v7238 = vlaneseq
      %v7239 = vshrl.u32 %v7238, 7
      %v7240 = vsub.s32 0, %v7239
      %v7241 = vrot.slane %v7165, %v7240
      %v7242 = vlaneseq
      %v7243 = vshrl.u32 %v7242, 7
      %v7244 = vsub.s32 0, %v7243
      %v7245 = vrot.slane %v7166, %v7244
      %v7246 = vlaneseq
      %v7247 = vshrl.u32 %v7246, 7
      %v7248 = vsub.s32 0, %v7247
      %v7249 = vrot.slane %v7167, %v7248
      %v7250 = vlaneseq
      %v7251 = vshrl.u32 %v7250, 7
      %v7252 = vsub.s32 0, %v7251
      %v7253 = vrot.slane %v7168, %v7252
      %v7254 = vlaneseq
      %v7255 = vshrl.u32 %v7254, 7
      %v7256 = vsub.s32 0, %v7255
      %v7257 = vrot.slane %v7169, %v7256
      %v7258 = vlaneseq
      %v7259 = vshrl.u32 %v7258, 7
      %v7260 = vsub.s32 0, %v7259
      %v7261 = vrot.slane %v7170, %v7260
      %v7262 = vlaneseq
      %v7263 = vshrl.u32 %v7262, 7
      %v7264 = vsub.s32 0, %v7263
      %v7265 = vrot.slane %v7171, %v7264
      %v7266 = vlaneseq
      %v7267 = vshrl.u32 %v7266, 7
      %v7268 = vsub.s32 0, %v7267
      %v7269 = vrot.slane %v7172, %v7268
      %v7270 = vmul.f32 %v6758, %v7209
      %v7271 = vmul.f32 %v6763, %v7213
      %v7272 = vmul.f32 %v6768, %v7217
      %v7273 = vmul.f32 %v6773, %v7221
      %v7274 = vmul.f32 %v6778, %v7225
      %v7275 = vmul.f32 %v6783, %v7229
      %v7276 = vmul.f32 %v6788, %v7233
      %v7277 = vmul.f32 %v6793, %v7237
      %v7278 = vmul.f32 %v6798, %v7241
      %v7279 = vmul.f32 %v6803, %v7245
      %v7280 = vmul.f32 %v6808, %v7249
      %v7281 = vmul.f32 %v6813, %v7253
      %v7282 = vmul.f32 %v6818, %v7257
      %v7283 = vmul.f32 %v6823, %v7261
      %v7284 = vmul.f32 %v6828, %v7265
      %v7285 = vmul.f32 %v6833, %v7269
      %v7286 = vlaneseq
      %v7287 = vshrl.u32 %v7286, 7
      %v7288 = vsub.s32 0, %v7287
      %v7289 = vrot.slane %v7190, %v7288
      %v7290 = vlaneseq
      %v7291 = vshrl.u32 %v7290, 7
      %v7292 = vsub.s32 0, %v7291
      %v7293 = vrot.slane %v7191, %v7292
      %v7294 = vlaneseq
      %v7295 = vshrl.u32 %v7294, 7
      %v7296 = vsub.s32 0, %v7295
      %v7297 = vrot.slane %v7192, %v7296
      %v7298 = vlaneseq
      %v7299 = vshrl.u32 %v7298, 7
      %v7300 = vsub.s32 0, %v7299
      %v7301 = vrot.slane %v7193, %v7300
      %v7302 = vlaneseq
      %v7303 = vshrl.u32 %v7302, 7
      %v7304 = vsub.s32 0, %v7303
      %v7305 = vrot.slane %v7194, %v7304
      %v7306 = vlaneseq
      %v7307 = vshrl.u32 %v7306, 7
      %v7308 = vsub.s32 0, %v7307
      %v7309 = vrot.slane %v7195, %v7308
      %v7310 = vlaneseq
      %v7311 = vshrl.u32 %v7310, 7
      %v7312 = vsub.s32 0, %v7311
      %v7313 = vrot.slane %v7196, %v7312
      %v7314 = vlaneseq
      %v7315 = vshrl.u32 %v7314, 7
      %v7316 = vsub.s32 0, %v7315
      %v7317 = vrot.slane %v7197, %v7316
      %v7318 = vlaneseq
      %v7319 = vshrl.u32 %v7318, 7
      %v7320 = vsub.s32 0, %v7319
      %v7321 = vrot.slane %v7198, %v7320
      %v7322 = vlaneseq
      %v7323 = vshrl.u32 %v7322, 7
      %v7324 = vsub.s32 0, %v7323
      %v7325 = vrot.slane %v7199, %v7324
      %v7326 = vlaneseq
      %v7327 = vshrl.u32 %v7326, 7
      %v7328 = vsub.s32 0, %v7327
      %v7329 = vrot.slane %v7200, %v7328
      %v7330 = vlaneseq
      %v7331 = vshrl.u32 %v7330, 7
      %v7332 = vsub.s32 0, %v7331
      %v7333 = vrot.slane %v7201, %v7332
      %v7334 = vlaneseq
      %v7335 = vshrl.u32 %v7334, 7
      %v7336 = vsub.s32 0, %v7335
      %v7337 = vrot.slane %v7202, %v7336
      %v7338 = vlaneseq
      %v7339 = vshrl.u32 %v7338, 7
      %v7340 = vsub.s32 0, %v7339
      %v7341 = vrot.slane %v7203, %v7340
      %v7342 = vlaneseq
      %v7343 = vshrl.u32 %v7342, 7
      %v7344 = vsub.s32 0, %v7343
      %v7345 = vrot.slane %v7204, %v7344
      %v7346 = vlaneseq
      %v7347 = vshrl.u32 %v7346, 7
      %v7348 = vsub.s32 0, %v7347
      %v7349 = vrot.slane %v7205, %v7348
      %v7350 = vadd.f32 %v7270, %v7289
      %v7351 = vadd.f32 %v7271, %v7293
      %v7352 = vadd.f32 %v7272, %v7297
      %v7353 = vadd.f32 %v7273, %v7301
      %v7354 = vadd.f32 %v7274, %v7305
      %v7355 = vadd.f32 %v7275, %v7309
      %v7356 = vadd.f32 %v7276, %v7313
      %v7357 = vadd.f32 %v7277, %v7317
      %v7358 = vadd.f32 %v7278, %v7321
      %v7359 = vadd.f32 %v7279, %v7325
      %v7360 = vadd.f32 %v7280, %v7329
      %v7361 = vadd.f32 %v7281, %v7333
      %v7362 = vadd.f32 %v7282, %v7337
      %v7363 = vadd.f32 %v7283, %v7341
      %v7364 = vadd.f32 %v7284, %v7345
      %v7365 = vadd.f32 %v7285, %v7349
      %v7366 = vmax.f32 %v7350, 0.0
      %v7367 = vmax.f32 %v7351, 0.0
      %v7368 = vmax.f32 %v7352, 0.0
      %v7369 = vmax.f32 %v7353, 0.0
      %v7370 = vmax.f32 %v7354, 0.0
      %v7371 = vmax.f32 %v7355, 0.0
      %v7372 = vmax.f32 %v7356, 0.0
      %v7373 = vmax.f32 %v7357, 0.0
      %v7374 = vmax.f32 %v7358, 0.0
      %v7375 = vmax.f32 %v7359, 0.0
      %v7376 = vmax.f32 %v7360, 0.0
      %v7377 = vmax.f32 %v7361, 0.0
      %v7378 = vmax.f32 %v7362, 0.0
      %v7379 = vmax.f32 %v7363, 0.0
      %v7380 = vmax.f32 %v7364, 0.0
      %v7381 = vmax.f32 %v7365, 0.0
      %v7382 = vld [vmem:[%s5] sm:$0xf]
      %7383 = vmatprep.subr.mxu0 0.0
      %7384 = vmatpush1.xpose.msra.mxu0 %v7381
      %7385 = vmatprep.subr.mxu0 0.0
      %7386 = vmatpush1.xpose.msra.mxu0 %v7380
      %7387 = vmatprep.subr.mxu0 0.0
      %7388 = vmatpush1.xpose.msra.mxu0 %v7379
      %7389 = vmatprep.subr.mxu0 0.0
      %7390 = vmatpush1.xpose.msra.mxu0 %v7378
      %7391 = vmatprep.subr.mxu0 0.0
      %7392 = vmatpush1.xpose.msra.mxu0 %v7377
      %7393 = vmatprep.subr.mxu0 0.0
      %7394 = vmatpush1.xpose.msra.mxu0 %v7376
      %7395 = vmatprep.subr.mxu0 0.0
      %7396 = vmatpush1.xpose.msra.mxu0 %v7375
      %7397 = vmatprep.subr.mxu0 0.0
      %7398 = vmatpush1.xpose.msra.mxu0 %v7374
      %7399 = vmatprep.subr.mxu0 0.0
      %7400 = vmatpush1.xpose.msra.mxu0 %v7373
      %7401 = vmatprep.subr.mxu0 0.0
      %7402 = vmatpush1.xpose.msra.mxu0 %v7372
      %7403 = vmatprep.subr.mxu0 0.0
      %7404 = vmatpush1.xpose.msra.mxu0 %v7371
      %7405 = vmatprep.subr.mxu0 0.0
      %7406 = vmatpush1.xpose.msra.mxu0 %v7370
      %7407 = vmatprep.subr.mxu0 0.0
      %7408 = vmatpush1.xpose.msra.mxu0 %v7369
      %7409 = vmatprep.subr.mxu0 0.0
      %7410 = vmatpush1.xpose.msra.mxu0 %v7368
      %7411 = vmatprep.subr.mxu0 0.0
      %7412 = vmatpush1.xpose.msra.mxu0 %v7367
      %7413 = vmatprep.subr.mxu0 0.0
      %7414 = vmatpush1.xpose.msra.mxu0 %v7366
      %7415 = vmatprep.subr.mxu0 0.0
      %7416 = vmatpush2.xpose.msra.mxu0 0.0
      %7417 = vmatprep.subr.mxu0 0.0
      %7418 = vmatpush2.xpose.msra.mxu0 0.0
      %7419 = vmatprep.subr.mxu0 0.0
      %7420 = vmatpush2.xpose.msra.mxu0 0.0
      %7421 = vmatprep.subr.mxu0 0.0
      %7422 = vmatpush2.xpose.msra.mxu0 0.0
      %7423 = vmatprep.subr.mxu0 0.0
      %7424 = vmatpush2.xpose.msra.mxu0 0.0
      %7425 = vmatprep.subr.mxu0 0.0
      %7426 = vmatpush2.xpose.msra.mxu0 0.0
      %7427 = vmatprep.subr.mxu0 0.0
      %7428 = vmatpush2.xpose.msra.mxu0 0.0
      %7429 = vmatprep.subr.mxu0 0.0
      %7430 = vmatpush2.xpose.msra.mxu0 0.0
      %7431 = vmatprep.subr.mxu0 0.0
      %7432 = vmatpush2.xpose.msra.mxu0 0.0
      %7433 = vmatprep.subr.mxu0 0.0
      %7434 = vmatpush2.xpose.msra.mxu0 0.0
      %7435 = vmatprep.subr.mxu0 0.0
      %7436 = vmatpush2.xpose.msra.mxu0 0.0
      %7437 = vmatprep.subr.mxu0 0.0
      %7438 = vmatpush2.xpose.msra.mxu0 0.0
      %7439 = vmatprep.subr.mxu0 0.0
      %7440 = vmatpush2.xpose.msra.mxu0 0.0
      %7441 = vmatprep.subr.mxu0 0.0
      %7442 = vmatpush2.xpose.msra.mxu0 0.0
      %7443 = vmatprep.subr.mxu0 0.0
      %7444 = vmatpush2.xpose.msra.mxu0 0.0
      %7445 = vmatprep.subr.mxu0 0.0
      %7446 = vmatpush2.xpose.msra.mxu0 0.0
      %7447 = vmatprep.mubr.f32.mxu0 0.0
      %7448 = vmatmul.mubr.f32.gmra.mxu0 %v7382
      %v7449 = vpop.f32.mrf.mxu0
      %v7450 = vadd.f32 0.0, %v7449
      %v7451 = vpop.f32.mrf.mxu0
      %7452 = vdwg.mxu0
      %7453 = vst [vmem:[%s251] sm:$0xf] %v7450
      %p7454 = scmp.lt.s32.totalorder %s17, 1
      %s7455 = scalar_select %p7454, %s17, 1
      %s7456 = smul.addr %s7455, 4
      %s7457 = scalar_lea.vmem %s6, %s7456
      // Predicated region
      $region45: #{mlp_forward.1} parent=43 // pred_check
        %p7458 = pneg %p166
      $region46: #{mlp_forward.1} parent=43 // pred_check_branch
        %7460 = sbr.rel (%p7458) target = $region48
      $region47: #{mlp_forward.1} parent=43 // pred_region
        _
      $region48: #{mlp_forward.1} parent=43 // pred_fallthru
        _
    $region44: #{mlp_forward.1} parent=5 // pred_fallthru
      _
    %p7461 = scmp.le.s32.totalorder 2, %s12
    // Predicated region
    $region49: #{mlp_forward.1} parent=5 // pred_check
      %p7462 = pneg %p7461
    $region50: #{mlp_forward.1} parent=5 // pred_check_branch
      %7464 = sbr.rel (%p7462) target = $region52
    $region51: #{mlp_forward.1} parent=5 // pred_region
      %s7465 = ssub.s32 %s12, 2
      // Predicated region
      $region53: #{mlp_forward.1} parent=51 // pred_check
        %p7466 = pneg %p172
      $region54: #{mlp_forward.1} parent=51 // pred_check_branch
        %7468 = sbr.rel (%p7466) target = $region56
      $region55: #{mlp_forward.1} parent=51 // pred_region
        %p7469 = scmp.lt.s32.totalorder %s18, 1
        %s7470 = scalar_select %p7469, %s18, 1
        %s7471 = smul.addr %s7470, 4
        %s7472 = scalar_lea.vmem %s6, %s7471
      $region56: #{mlp_forward.1} parent=51 // pred_fallthru
        _
    $region52: #{mlp_forward.1} parent=5 // pred_fallthru
      _
  $region6: #{mlp_forward.1} parent=0 // loop_footer
    %s16 = sadd.s32 1, %s12
  $region7: #{mlp_forward.1} parent=0 // loop_footer_branch
    %11 = sbr.rel target = $region3
  $region8: #{mlp_forward.1} parent=0 // loop_exit
    _

</llo_original>
